<compile_context>
chip_gen: v5e
topology: v5e:2x2
jax: 0.10.0
libtpu: 0.0.40
codegen_flags: <defaults>
</compile_context>

<pallas_src>
import jax
import jax.numpy as jnp
from jax.experimental import pallas as pl
from jax.experimental.pallas import tpu as pltpu

N_EMB_DIMS = 10
HIDDEN = 64            # stands in for VGG's 4096
C1, C2 = 8, 16         # conv channel counts
LANES = 128

# conv1 geometry: 16x16 image, pad 1 -> 18x18, flattened with row stride 18.
H = W = 16
WP1 = W + 2            # 18
R1 = H * WP1           # 288 conv1 output rows (cols j in {16,17} are phantoms)
XROWS = 328            # >= (H+2)*WP1 = 324, rounded up to a multiple of 8
A1ROWS = 296           # >= R1 + 19 (pool1 window overrun), multiple of 8
M1ROWS = 272           # dense pool1 rows actually consumed downstream
M1PAD = 40             # leading zero rows in s_m1 (implements conv2 zero-pad)
SM1ROWS = 352          # >= M1PAD + M1ROWS + max conv2 tap offset (78)
A2ROWS = 272           # conv2 output rows on the dilated grid


# ---------------------------------------------------------------------------
# The single fused kernel (runs once per image; grid = (batch,))
# ---------------------------------------------------------------------------
def _fused_vgg_kernel(x_ref, mask_ref, w1_ref, b1_ref, w2_ref, b2_ref,
                      wf1_ref, bf1_ref, wf2_ref, bf2_ref, wc_ref, bc_ref,
                      out_ref, a1_s, m1_s, a2_s):
    f32 = jnp.float32

    # ---- conv1 (3x3, pad 1) + ReLU: implicit im2col, 9 shifted matmuls -----
    acc1 = None
    for kh in range(3):
        for kw in range(3):
            t = kh * 3 + kw
            lhs = x_ref[pl.ds(kh * WP1 + kw, R1), :]                  # (288, 8)
            p = jnp.dot(lhs, w1_ref[t], preferred_element_type=f32)   # (288, 128)
            acc1 = p if acc1 is None else acc1 + p
    # mask kills the two phantom columns (j in {16,17}) of the 18-wide layout.
    a1 = jnp.maximum(acc1 + b1_ref[...], 0.0) * mask_ref[...]         # (288, 128)
    a1_s[pl.ds(0, R1), :] = a1
    a1_s[pl.ds(R1, A1ROWS - R1), :] = jnp.zeros((A1ROWS - R1, LANES), f32)

    # ---- maxpool1 (2x2 / stride 2), kept on the dilated 18-stride grid -----
    # pooled(pi, pj) ends up at m1 row 36*pi + 2*pj.
    m1 = jnp.maximum(
        jnp.maximum(a1_s[pl.ds(0, M1ROWS), :], a1_s[pl.ds(1, M1ROWS), :]),
        jnp.maximum(a1_s[pl.ds(WP1, M1ROWS), :], a1_s[pl.ds(WP1 + 1, M1ROWS), :]))
    m1_s[pl.ds(0, M1PAD), :] = jnp.zeros((M1PAD, LANES), f32)
    tail = SM1ROWS - M1PAD - M1ROWS
    m1_s[pl.ds(M1PAD + M1ROWS, tail), :] = jnp.zeros((tail, LANES), f32)
    m1_s[pl.ds(M1PAD, M1ROWS), :] = m1
    # pooled(pi, pj) now sits at m1_s row M1PAD + 36*pi + 2*pj; anything a 3x3
    # conv2 tap can touch outside the valid 8x8 map reads exact zeros
    # (leading/trailing slabs or masked phantom columns).

    # ---- conv2 (3x3, pad 1) + ReLU on the dilated grid ---------------------
    acc2 = None
    for kh in range(3):
        for kw in range(3):
            t = kh * 3 + kw
            off = 36 * kh + 2 * kw + 2          # tap offset into m1_s
            lhs = m1_s[pl.ds(off, A2ROWS), :]                         # (272, 128)
            p = jnp.dot(lhs, w2_ref[t], preferred_element_type=f32)
            acc2 = p if acc2 is None else acc2 + p
    a2_s[...] = jnp.maximum(acc2 + b2_ref[...], 0.0)                  # (272, 128)
    # conv2 output (i2, j2) sits at row 36*i2 + 2*j2, channels in lanes 0..15.

    # ---- maxpool2 + flatten + fc1 (+ReLU), fused ---------------------------
    f1 = jnp.zeros((1, LANES), f32)
    for s in range(16):                          # s = qi*4 + qj (4x4 pooled map)
        qi, qj = s // 4, s % 4
        base = 72 * qi + 4 * qj
        pooled = jnp.maximum(
            jnp.maximum(a2_s[pl.ds(base, 1), :], a2_s[pl.ds(base + 2, 1), :]),
            jnp.maximum(a2_s[pl.ds(base + 36, 1), :], a2_s[pl.ds(base + 38, 1), :]))
        f1 = f1 + jnp.dot(pooled, wf1_ref[s], preferred_element_type=f32)
    f1 = jnp.maximum(f1 + bf1_ref[...], 0.0)                          # (1, 128)
    # TODO(synk): the Dropout layers of vgg.classifier are identity (eval mode).

    # ---- fc2 (+ReLU), classifier, Poincare-ball projection -----------------
    h2 = jnp.maximum(
        jnp.dot(f1, wf2_ref[...], preferred_element_type=f32) + bf2_ref[...], 0.0)
    y = jnp.dot(h2, wc_ref[...], preferred_element_type=f32) + bc_ref[...]
    # padded lanes of y are exactly 0, so the 128-lane norm == norm over the
    # N_EMB_DIMS real classes.
    norm = jnp.sqrt(jnp.sum(y * y, axis=1, keepdims=True))            # (1, 1)
    clamp = jnp.where(norm >= 1.0, 1.0, 0.0)                          # (norm>=1)
    denom = jnp.where(norm >= 1.0, norm, 1.0)                         # norm**clamp
    out_ref[...] = y / denom - clamp * 1e-5


# ---------------------------------------------------------------------------
# Host wrapper: one pallas_call per forward
# ---------------------------------------------------------------------------
@jax.jit
def poincare_vgg_forward(params, x):
    """x: (N, 3, 16, 16) float32, NCHW like PyTorch."""
    n = x.shape[0]
    # one-time input prep: NCHW -> zero-padded NHWC flattened with row stride 18,
    # rows padded to 328 and channels to 8 (the only HBM-side layout work left).
    xh = jnp.transpose(x, (0, 2, 3, 1))
    xh = jnp.pad(xh, ((0, 0), (1, 1), (1, 1), (0, 0)))
    xf = xh.reshape(n, (H + 2) * WP1, 3)
    xf = jnp.pad(xf, ((0, 0), (0, XROWS - (H + 2) * WP1), (0, C1 - 3)))

    # phantom-column mask for the 18-wide conv1 output layout (constant-folded).
    mask = ((jnp.arange(R1) % WP1) < W).astype(jnp.float32).reshape(R1, 1)

    def wspec2(shape):
        return pl.BlockSpec(shape, lambda nn: (0, 0))

    def wspec3(shape):
        return pl.BlockSpec(shape, lambda nn: (0, 0, 0))

    out = pl.pallas_call(
        _fused_vgg_kernel,
        out_shape=jax.ShapeDtypeStruct((n, 1, LANES), jnp.float32),
        grid_spec=pltpu.PrefetchScalarGridSpec(
            num_scalar_prefetch=0,
            grid=(n,),
            in_specs=[
                pl.BlockSpec((None, XROWS, C1), lambda nn: (nn, 0, 0)),  # image
                wspec2((R1, 1)),                                         # mask
                wspec3((9, C1, LANES)), wspec2((1, LANES)),              # conv1
                wspec3((9, LANES, LANES)), wspec2((1, LANES)),           # conv2
                wspec3((16, LANES, LANES)), wspec2((1, LANES)),          # fc1
                wspec2((LANES, LANES)), wspec2((1, LANES)),              # fc2
                wspec2((LANES, LANES)), wspec2((1, LANES)),              # cls
            ],
            out_specs=pl.BlockSpec((None, 1, LANES), lambda nn: (nn, 0, 0)),
            scratch_shapes=[
                pltpu.VMEM((A1ROWS, LANES), jnp.float32),   # conv1 activations
                pltpu.VMEM((SM1ROWS, LANES), jnp.float32),  # zero-framed pool1
                pltpu.VMEM((A2ROWS, LANES), jnp.float32),   # conv2 activations
            ],
        ),
        compiler_params=pltpu.CompilerParams(
            dimension_semantics=("parallel",)),  # v7x: one image per TensorCore
    )(xf, mask,
      params["w1"], params["b1"], params["w2"], params["b2"],
      params["wf1"], params["bf1"], params["wf2"], params["bf2"],
      params["wc"], params["bc"])
    return out.reshape(n, LANES)[:, :N_EMB_DIMS]


# ---------------------------------------------------------------------------
# Parameters: PyTorch-layout synthetic mini-VGG + one-time kernel re-layout
# ---------------------------------------------------------------------------
def init_raw_params(key):
    ks = jax.random.split(key, 5)
    return {
        "conv1_w": 0.1 * jax.random.normal(ks[0], (C1, 3, 3, 3), jnp.float32),
        "conv1_b": jnp.zeros((C1,), jnp.float32),
        "conv2_w": 0.1 * jax.random.normal(ks[1], (C2, C1, 3, 3), jnp.float32),
        "conv2_b": jnp.zeros((C2,), jnp.float32),
        # (HIDDEN, C, 4, 4): keeps PyTorch's channel-major flatten convention explicit.
        "fc1_w": 0.05 * jax.random.normal(ks[2], (HIDDEN, C2, 4, 4), jnp.float32),
        "fc1_b": jnp.zeros((HIDDEN,), jnp.float32),
        "fc2_w": 0.05 * jax.random.normal(ks[3], (HIDDEN, HIDDEN), jnp.float32),
        "fc2_b": jnp.zeros((HIDDEN,), jnp.float32),
        # classifier: uniform(-0.001, 0.001) weight, zero bias (as in PoincareVGG)
        "cls_w": jax.random.uniform(ks[4], (N_EMB_DIMS, HIDDEN), jnp.float32,
                                    -0.001, 0.001),
        "cls_b": jnp.zeros((N_EMB_DIMS,), jnp.float32),
    }


def prep_kernel_params(raw):
    """One-time weight re-layout: (tap, in, out) / (in, out), zero-padded to 128 lanes."""
    def pad_to(a, shape):
        return jnp.pad(a, [(0, s - d) for s, d in zip(shape, a.shape)])

    p = {}
    p["w1"] = pad_to(raw["conv1_w"].transpose(2, 3, 1, 0).reshape(9, 3, C1),
                     (9, C1, LANES))
    p["b1"] = pad_to(raw["conv1_b"].reshape(1, C1), (1, LANES))
    p["w2"] = pad_to(raw["conv2_w"].transpose(2, 3, 1, 0).reshape(9, C1, C2),
                     (9, LANES, LANES))
    p["b2"] = pad_to(raw["conv2_b"].reshape(1, C2), (1, LANES))
    p["wf1"] = pad_to(raw["fc1_w"].transpose(2, 3, 1, 0).reshape(16, C2, HIDDEN),
                      (16, LANES, LANES))
    p["bf1"] = pad_to(raw["fc1_b"].reshape(1, HIDDEN), (1, LANES))
    p["wf2"] = pad_to(raw["fc2_w"].T, (LANES, LANES))
    p["bf2"] = pad_to(raw["fc2_b"].reshape(1, HIDDEN), (1, LANES))
    p["wc"] = pad_to(raw["cls_w"].T, (LANES, LANES))
    p["bc"] = pad_to(raw["cls_b"].reshape(1, N_EMB_DIMS), (1, LANES))
    return p


# ---------------------------------------------------------------------------
# Pure-JAX reference (mirrors PoincareVGG.forward, eval mode) for validation
# ---------------------------------------------------------------------------
def reference_forward(raw, x):
    hp = jax.lax.Precision.HIGHEST

    def conv_relu(z, w, b):
        z = jax.lax.conv_general_dilated(
            z, w, window_strides=(1, 1), padding=((1, 1), (1, 1)),
            dimension_numbers=("NCHW", "OIHW", "NCHW"), precision=hp)
        return jax.nn.relu(z + b.reshape(1, -1, 1, 1))

    def pool(z):
        n, c, h, w = z.shape
        return jnp.max(z.reshape(n, c, h // 2, 2, w // 2, 2), axis=(3, 5))

    f = pool(conv_relu(x, raw["conv1_w"], raw["conv1_b"]))
    f = pool(conv_relu(f, raw["conv2_w"], raw["conv2_b"]))
    f = f.reshape(f.shape[0], -1)                  # channel-major, like .view
    f = jax.nn.relu(jnp.dot(f, raw["fc1_w"].reshape(HIDDEN, -1).T, precision=hp)
                    + raw["fc1_b"])
    f = jax.nn.relu(jnp.dot(f, raw["fc2_w"].T, precision=hp) + raw["fc2_b"])
    y = jnp.dot(f, raw["cls_w"].T, precision=hp) + raw["cls_b"]
    norm = jnp.sqrt(jnp.sum(y * y, axis=1, keepdims=True))
    clamp = (norm >= 1.0).astype(jnp.float32)
    return y / jnp.where(norm >= 1.0, norm, 1.0) - clamp * 1e-5


if __name__ == "__main__":
    key = jax.random.PRNGKey(0)
    pkey, xkey = jax.random.split(key)
    raw = init_raw_params(pkey)
    params = prep_kernel_params(raw)
    x = jax.random.normal(xkey, (2, 3, H, W), dtype=jnp.float32)   # NCHW like PyTorch

    y = poincare_vgg_forward(params, x)
    jax.block_until_ready(y)
    assert y.shape == (2, N_EMB_DIMS) and y.dtype == jnp.float32

    y_ref = reference_forward(raw, x)
    assert float(jnp.max(jnp.abs(y - y_ref))) < 1e-4, "kernel/reference mismatch"
    print("KERNEL_OK")
</pallas_src>

<mosaic_0001>
module attributes {stable_mosaic.version = 11 : i64} {
  func.func @_fused_vgg_kernel(%arg0: i32, %arg1: memref<1x328x8xf32, #tpu.memory_space<vmem>>, %arg2: memref<288x1xf32, #tpu.memory_space<vmem>>, %arg3: memref<9x8x128xf32, #tpu.memory_space<vmem>>, %arg4: memref<1x128xf32, #tpu.memory_space<vmem>>, %arg5: memref<9x128x128xf32, #tpu.memory_space<vmem>>, %arg6: memref<1x128xf32, #tpu.memory_space<vmem>>, %arg7: memref<16x128x128xf32, #tpu.memory_space<vmem>>, %arg8: memref<1x128xf32, #tpu.memory_space<vmem>>, %arg9: memref<128x128xf32, #tpu.memory_space<vmem>>, %arg10: memref<1x128xf32, #tpu.memory_space<vmem>>, %arg11: memref<128x128xf32, #tpu.memory_space<vmem>>, %arg12: memref<1x128xf32, #tpu.memory_space<vmem>>, %arg13: memref<1x1x128xf32, #tpu.memory_space<vmem>>, %arg14: memref<296x128xf32, #tpu.memory_space<vmem>>, %arg15: memref<352x128xf32, #tpu.memory_space<vmem>>, %arg16: memref<272x128xf32, #tpu.memory_space<vmem>>) attributes {dimension_semantics = [#tpu.dimension_semantics<parallel>], iteration_bounds = array<i64: 2>, scalar_prefetch = 0 : i64, scratch_operands = 3 : i64, tpu.core_type = #tpu.core_type<tc>, window_params = [{transform_indices = @transform_0, window_bounds = array<i64: 1, 328, 8>}, {pipeline_mode = #tpu.pipeline_mode<synchronous>, transform_indices = @transform_1, window_bounds = array<i64: 288, 1>}, {pipeline_mode = #tpu.pipeline_mode<synchronous>, transform_indices = @transform_2, window_bounds = array<i64: 9, 8, 128>}, {pipeline_mode = #tpu.pipeline_mode<synchronous>, transform_indices = @transform_3, window_bounds = array<i64: 1, 128>}, {pipeline_mode = #tpu.pipeline_mode<synchronous>, transform_indices = @transform_4, window_bounds = array<i64: 9, 128, 128>}, {pipeline_mode = #tpu.pipeline_mode<synchronous>, transform_indices = @transform_5, window_bounds = array<i64: 1, 128>}, {pipeline_mode = #tpu.pipeline_mode<synchronous>, transform_indices = @transform_6, window_bounds = array<i64: 16, 128, 128>}, {pipeline_mode = #tpu.pipeline_mode<synchronous>, transform_indices = @transform_7, window_bounds = array<i64: 1, 128>}, {pipeline_mode = #tpu.pipeline_mode<synchronous>, transform_indices = @transform_8, window_bounds = array<i64: 128, 128>}, {pipeline_mode = #tpu.pipeline_mode<synchronous>, transform_indices = @transform_9, window_bounds = array<i64: 1, 128>}, {pipeline_mode = #tpu.pipeline_mode<synchronous>, transform_indices = @transform_10, window_bounds = array<i64: 128, 128>}, {pipeline_mode = #tpu.pipeline_mode<synchronous>, transform_indices = @transform_11, window_bounds = array<i64: 1, 128>}, {transform_indices = @transform_12, window_bounds = array<i64: 1, 1, 128>}]} {
    %c0 = arith.constant 0 : index
    %c0_0 = arith.constant 0 : index
    %c0_1 = arith.constant 0 : index
    %0 = vector.load %arg1[%c0, %c0_0, %c0_1] : memref<1x328x8xf32, #tpu.memory_space<vmem>>, vector<1x288x8xf32>
    %1 = vector.shape_cast %0 : vector<1x288x8xf32> to vector<288x8xf32>
    %c0_2 = arith.constant 0 : index
    %c0_3 = arith.constant 0 : index
    %c0_4 = arith.constant 0 : index
    %2 = vector.load %arg3[%c0_2, %c0_3, %c0_4] : memref<9x8x128xf32, #tpu.memory_space<vmem>>, vector<1x8x128xf32>
    %3 = vector.shape_cast %2 : vector<1x8x128xf32> to vector<8x128xf32>
    %cst = arith.constant dense<0.000000e+00> : vector<288x128xf32>
    %4 = tpu.matmul %1, %3, %cst {dimension_numbers = #tpu.dot_dimension_numbers<[1], [0], [0], [1], [0, 0, 1, 1], [], []>} : vector<288x8xf32>, vector<8x128xf32>, vector<288x128xf32> -> vector<288x128xf32>
    %c0_5 = arith.constant 0 : index
    %c1 = arith.constant 1 : index
    %c0_6 = arith.constant 0 : index
    %5 = vector.load %arg1[%c0_5, %c1, %c0_6] : memref<1x328x8xf32, #tpu.memory_space<vmem>>, vector<1x288x8xf32>
    %6 = vector.shape_cast %5 : vector<1x288x8xf32> to vector<288x8xf32>
    %c1_7 = arith.constant 1 : index
    %c0_8 = arith.constant 0 : index
    %c0_9 = arith.constant 0 : index
    %7 = vector.load %arg3[%c1_7, %c0_8, %c0_9] : memref<9x8x128xf32, #tpu.memory_space<vmem>>, vector<1x8x128xf32>
    %8 = vector.shape_cast %7 : vector<1x8x128xf32> to vector<8x128xf32>
    %cst_10 = arith.constant dense<0.000000e+00> : vector<288x128xf32>
    %9 = tpu.matmul %6, %8, %cst_10 {dimension_numbers = #tpu.dot_dimension_numbers<[1], [0], [0], [1], [0, 0, 1, 1], [], []>} : vector<288x8xf32>, vector<8x128xf32>, vector<288x128xf32> -> vector<288x128xf32>
    %10 = arith.addf %4, %9 : vector<288x128xf32>
    %c0_11 = arith.constant 0 : index
    %c2 = arith.constant 2 : index
    %c0_12 = arith.constant 0 : index
    %11 = vector.load %arg1[%c0_11, %c2, %c0_12] : memref<1x328x8xf32, #tpu.memory_space<vmem>>, vector<1x288x8xf32>
    %12 = vector.shape_cast %11 : vector<1x288x8xf32> to vector<288x8xf32>
    %c2_13 = arith.constant 2 : index
    %c0_14 = arith.constant 0 : index
    %c0_15 = arith.constant 0 : index
    %13 = vector.load %arg3[%c2_13, %c0_14, %c0_15] : memref<9x8x128xf32, #tpu.memory_space<vmem>>, vector<1x8x128xf32>
    %14 = vector.shape_cast %13 : vector<1x8x128xf32> to vector<8x128xf32>
    %cst_16 = arith.constant dense<0.000000e+00> : vector<288x128xf32>
    %15 = tpu.matmul %12, %14, %cst_16 {dimension_numbers = #tpu.dot_dimension_numbers<[1], [0], [0], [1], [0, 0, 1, 1], [], []>} : vector<288x8xf32>, vector<8x128xf32>, vector<288x128xf32> -> vector<288x128xf32>
    %16 = arith.addf %10, %15 : vector<288x128xf32>
    %c0_17 = arith.constant 0 : index
    %c18 = arith.constant 18 : index
    %c0_18 = arith.constant 0 : index
    %17 = vector.load %arg1[%c0_17, %c18, %c0_18] : memref<1x328x8xf32, #tpu.memory_space<vmem>>, vector<1x288x8xf32>
    %18 = vector.shape_cast %17 : vector<1x288x8xf32> to vector<288x8xf32>
    %c3 = arith.constant 3 : index
    %c0_19 = arith.constant 0 : index
    %c0_20 = arith.constant 0 : index
    %19 = vector.load %arg3[%c3, %c0_19, %c0_20] : memref<9x8x128xf32, #tpu.memory_space<vmem>>, vector<1x8x128xf32>
    %20 = vector.shape_cast %19 : vector<1x8x128xf32> to vector<8x128xf32>
    %cst_21 = arith.constant dense<0.000000e+00> : vector<288x128xf32>
    %21 = tpu.matmul %18, %20, %cst_21 {dimension_numbers = #tpu.dot_dimension_numbers<[1], [0], [0], [1], [0, 0, 1, 1], [], []>} : vector<288x8xf32>, vector<8x128xf32>, vector<288x128xf32> -> vector<288x128xf32>
    %22 = arith.addf %16, %21 : vector<288x128xf32>
    %c0_22 = arith.constant 0 : index
    %c19 = arith.constant 19 : index
    %c0_23 = arith.constant 0 : index
    %23 = vector.load %arg1[%c0_22, %c19, %c0_23] : memref<1x328x8xf32, #tpu.memory_space<vmem>>, vector<1x288x8xf32>
    %24 = vector.shape_cast %23 : vector<1x288x8xf32> to vector<288x8xf32>
    %c4 = arith.constant 4 : index
    %c0_24 = arith.constant 0 : index
    %c0_25 = arith.constant 0 : index
    %25 = vector.load %arg3[%c4, %c0_24, %c0_25] : memref<9x8x128xf32, #tpu.memory_space<vmem>>, vector<1x8x128xf32>
    %26 = vector.shape_cast %25 : vector<1x8x128xf32> to vector<8x128xf32>
    %cst_26 = arith.constant dense<0.000000e+00> : vector<288x128xf32>
    %27 = tpu.matmul %24, %26, %cst_26 {dimension_numbers = #tpu.dot_dimension_numbers<[1], [0], [0], [1], [0, 0, 1, 1], [], []>} : vector<288x8xf32>, vector<8x128xf32>, vector<288x128xf32> -> vector<288x128xf32>
    %28 = arith.addf %22, %27 : vector<288x128xf32>
    %c0_27 = arith.constant 0 : index
    %c20 = arith.constant 20 : index
    %c0_28 = arith.constant 0 : index
    %29 = vector.load %arg1[%c0_27, %c20, %c0_28] : memref<1x328x8xf32, #tpu.memory_space<vmem>>, vector<1x288x8xf32>
    %30 = vector.shape_cast %29 : vector<1x288x8xf32> to vector<288x8xf32>
    %c5 = arith.constant 5 : index
    %c0_29 = arith.constant 0 : index
    %c0_30 = arith.constant 0 : index
    %31 = vector.load %arg3[%c5, %c0_29, %c0_30] : memref<9x8x128xf32, #tpu.memory_space<vmem>>, vector<1x8x128xf32>
    %32 = vector.shape_cast %31 : vector<1x8x128xf32> to vector<8x128xf32>
    %cst_31 = arith.constant dense<0.000000e+00> : vector<288x128xf32>
    %33 = tpu.matmul %30, %32, %cst_31 {dimension_numbers = #tpu.dot_dimension_numbers<[1], [0], [0], [1], [0, 0, 1, 1], [], []>} : vector<288x8xf32>, vector<8x128xf32>, vector<288x128xf32> -> vector<288x128xf32>
    %34 = arith.addf %28, %33 : vector<288x128xf32>
    %c0_32 = arith.constant 0 : index
    %c36 = arith.constant 36 : index
    %c0_33 = arith.constant 0 : index
    %35 = vector.load %arg1[%c0_32, %c36, %c0_33] : memref<1x328x8xf32, #tpu.memory_space<vmem>>, vector<1x288x8xf32>
    %36 = vector.shape_cast %35 : vector<1x288x8xf32> to vector<288x8xf32>
    %c6 = arith.constant 6 : index
    %c0_34 = arith.constant 0 : index
    %c0_35 = arith.constant 0 : index
    %37 = vector.load %arg3[%c6, %c0_34, %c0_35] : memref<9x8x128xf32, #tpu.memory_space<vmem>>, vector<1x8x128xf32>
    %38 = vector.shape_cast %37 : vector<1x8x128xf32> to vector<8x128xf32>
    %cst_36 = arith.constant dense<0.000000e+00> : vector<288x128xf32>
    %39 = tpu.matmul %36, %38, %cst_36 {dimension_numbers = #tpu.dot_dimension_numbers<[1], [0], [0], [1], [0, 0, 1, 1], [], []>} : vector<288x8xf32>, vector<8x128xf32>, vector<288x128xf32> -> vector<288x128xf32>
    %40 = arith.addf %34, %39 : vector<288x128xf32>
    %c0_37 = arith.constant 0 : index
    %c37 = arith.constant 37 : index
    %c0_38 = arith.constant 0 : index
    %41 = vector.load %arg1[%c0_37, %c37, %c0_38] : memref<1x328x8xf32, #tpu.memory_space<vmem>>, vector<1x288x8xf32>
    %42 = vector.shape_cast %41 : vector<1x288x8xf32> to vector<288x8xf32>
    %c7 = arith.constant 7 : index
    %c0_39 = arith.constant 0 : index
    %c0_40 = arith.constant 0 : index
    %43 = vector.load %arg3[%c7, %c0_39, %c0_40] : memref<9x8x128xf32, #tpu.memory_space<vmem>>, vector<1x8x128xf32>
    %44 = vector.shape_cast %43 : vector<1x8x128xf32> to vector<8x128xf32>
    %cst_41 = arith.constant dense<0.000000e+00> : vector<288x128xf32>
    %45 = tpu.matmul %42, %44, %cst_41 {dimension_numbers = #tpu.dot_dimension_numbers<[1], [0], [0], [1], [0, 0, 1, 1], [], []>} : vector<288x8xf32>, vector<8x128xf32>, vector<288x128xf32> -> vector<288x128xf32>
    %46 = arith.addf %40, %45 : vector<288x128xf32>
    %c0_42 = arith.constant 0 : index
    %c38 = arith.constant 38 : index
    %c0_43 = arith.constant 0 : index
    %47 = vector.load %arg1[%c0_42, %c38, %c0_43] : memref<1x328x8xf32, #tpu.memory_space<vmem>>, vector<1x288x8xf32>
    %48 = vector.shape_cast %47 : vector<1x288x8xf32> to vector<288x8xf32>
    %c8 = arith.constant 8 : index
    %c0_44 = arith.constant 0 : index
    %c0_45 = arith.constant 0 : index
    %49 = vector.load %arg3[%c8, %c0_44, %c0_45] : memref<9x8x128xf32, #tpu.memory_space<vmem>>, vector<1x8x128xf32>
    %50 = vector.shape_cast %49 : vector<1x8x128xf32> to vector<8x128xf32>
    %cst_46 = arith.constant dense<0.000000e+00> : vector<288x128xf32>
    %51 = tpu.matmul %48, %50, %cst_46 {dimension_numbers = #tpu.dot_dimension_numbers<[1], [0], [0], [1], [0, 0, 1, 1], [], []>} : vector<288x8xf32>, vector<8x128xf32>, vector<288x128xf32> -> vector<288x128xf32>
    %52 = arith.addf %46, %51 : vector<288x128xf32>
    %c0_47 = arith.constant 0 : index
    %c0_48 = arith.constant 0 : index
    %53 = vector.load %arg4[%c0_47, %c0_48] : memref<1x128xf32, #tpu.memory_space<vmem>>, vector<1x128xf32>
    %54 = vector.broadcast %53 : vector<1x128xf32> to vector<288x128xf32>
    %55 = arith.addf %52, %54 : vector<288x128xf32>
    %cst_49 = arith.constant 0.000000e+00 : f32
    %56 = vector.broadcast %cst_49 : f32 to vector<288x128xf32>
    %57 = arith.maximumf %55, %56 : vector<288x128xf32>
    %c0_50 = arith.constant 0 : index
    %c0_51 = arith.constant 0 : index
    %58 = vector.load %arg2[%c0_50, %c0_51] : memref<288x1xf32, #tpu.memory_space<vmem>>, vector<288x1xf32>
    %59 = vector.broadcast %58 : vector<288x1xf32> to vector<288x128xf32>
    %60 = arith.mulf %57, %59 : vector<288x128xf32>
    %c0_52 = arith.constant 0 : index
    %c0_53 = arith.constant 0 : index
    %61 = vector.load %arg14[%c0_52, %c0_53] : memref<296x128xf32, #tpu.memory_space<vmem>>, vector<288x128xf32>
    tpu.vector_store %arg14[%c0_52, %c0_53], %60 {strides = array<i32>} : memref<296x128xf32, #tpu.memory_space<vmem>>, vector<288x128xf32>,
    %cst_54 = arith.constant 0.000000e+00 : f32
    %62 = vector.broadcast %cst_54 : f32 to vector<8x128xf32>
    %c288 = arith.constant 288 : index
    %c0_55 = arith.constant 0 : index
    %63 = vector.load %arg14[%c288, %c0_55] : memref<296x128xf32, #tpu.memory_space<vmem>>, vector<8x128xf32>
    tpu.vector_store %arg14[%c288, %c0_55], %62 {strides = array<i32>} : memref<296x128xf32, #tpu.memory_space<vmem>>, vector<8x128xf32>,
    %c0_56 = arith.constant 0 : index
    %c0_57 = arith.constant 0 : index
    %64 = vector.load %arg14[%c0_56, %c0_57] : memref<296x128xf32, #tpu.memory_space<vmem>>, vector<272x128xf32>
    %c1_58 = arith.constant 1 : index
    %c0_59 = arith.constant 0 : index
    %65 = vector.load %arg14[%c1_58, %c0_59] : memref<296x128xf32, #tpu.memory_space<vmem>>, vector<272x128xf32>
    %66 = arith.maximumf %64, %65 : vector<272x128xf32>
    %c18_60 = arith.constant 18 : index
    %c0_61 = arith.constant 0 : index
    %67 = vector.load %arg14[%c18_60, %c0_61] : memref<296x128xf32, #tpu.memory_space<vmem>>, vector<272x128xf32>
    %c19_62 = arith.constant 19 : index
    %c0_63 = arith.constant 0 : index
    %68 = vector.load %arg14[%c19_62, %c0_63] : memref<296x128xf32, #tpu.memory_space<vmem>>, vector<272x128xf32>
    %69 = arith.maximumf %67, %68 : vector<272x128xf32>
    %70 = arith.maximumf %66, %69 : vector<272x128xf32>
    %cst_64 = arith.constant 0.000000e+00 : f32
    %71 = vector.broadcast %cst_64 : f32 to vector<40x128xf32>
    %c0_65 = arith.constant 0 : index
    %c0_66 = arith.constant 0 : index
    %72 = vector.load %arg15[%c0_65, %c0_66] : memref<352x128xf32, #tpu.memory_space<vmem>>, vector<40x128xf32>
    tpu.vector_store %arg15[%c0_65, %c0_66], %71 {strides = array<i32>} : memref<352x128xf32, #tpu.memory_space<vmem>>, vector<40x128xf32>,
    %cst_67 = arith.constant 0.000000e+00 : f32
    %73 = vector.broadcast %cst_67 : f32 to vector<40x128xf32>
    %c312 = arith.constant 312 : index
    %c0_68 = arith.constant 0 : index
    %74 = vector.load %arg15[%c312, %c0_68] : memref<352x128xf32, #tpu.memory_space<vmem>>, vector<40x128xf32>
    tpu.vector_store %arg15[%c312, %c0_68], %73 {strides = array<i32>} : memref<352x128xf32, #tpu.memory_space<vmem>>, vector<40x128xf32>,
    %c40 = arith.constant 40 : index
    %c0_69 = arith.constant 0 : index
    %75 = vector.load %arg15[%c40, %c0_69] : memref<352x128xf32, #tpu.memory_space<vmem>>, vector<272x128xf32>
    tpu.vector_store %arg15[%c40, %c0_69], %70 {strides = array<i32>} : memref<352x128xf32, #tpu.memory_space<vmem>>, vector<272x128xf32>,
    %c2_70 = arith.constant 2 : index
    %c0_71 = arith.constant 0 : index
    %76 = vector.load %arg15[%c2_70, %c0_71] : memref<352x128xf32, #tpu.memory_space<vmem>>, vector<272x128xf32>
    %c0_72 = arith.constant 0 : index
    %c0_73 = arith.constant 0 : index
    %c0_74 = arith.constant 0 : index
    %77 = vector.load %arg5[%c0_72, %c0_73, %c0_74] : memref<9x128x128xf32, #tpu.memory_space<vmem>>, vector<1x128x128xf32>
    %78 = vector.shape_cast %77 : vector<1x128x128xf32> to vector<128x128xf32>
    %cst_75 = arith.constant dense<0.000000e+00> : vector<272x128xf32>
    %79 = tpu.matmul %76, %78, %cst_75 {dimension_numbers = #tpu.dot_dimension_numbers<[1], [0], [0], [1], [0, 0, 1, 1], [], []>} : vector<272x128xf32>, vector<128x128xf32>, vector<272x128xf32> -> vector<272x128xf32>
    %c4_76 = arith.constant 4 : index
    %c0_77 = arith.constant 0 : index
    %80 = vector.load %arg15[%c4_76, %c0_77] : memref<352x128xf32, #tpu.memory_space<vmem>>, vector<272x128xf32>
    %c1_78 = arith.constant 1 : index
    %c0_79 = arith.constant 0 : index
    %c0_80 = arith.constant 0 : index
    %81 = vector.load %arg5[%c1_78, %c0_79, %c0_80] : memref<9x128x128xf32, #tpu.memory_space<vmem>>, vector<1x128x128xf32>
    %82 = vector.shape_cast %81 : vector<1x128x128xf32> to vector<128x128xf32>
    %cst_81 = arith.constant dense<0.000000e+00> : vector<272x128xf32>
    %83 = tpu.matmul %80, %82, %cst_81 {dimension_numbers = #tpu.dot_dimension_numbers<[1], [0], [0], [1], [0, 0, 1, 1], [], []>} : vector<272x128xf32>, vector<128x128xf32>, vector<272x128xf32> -> vector<272x128xf32>
    %84 = arith.addf %79, %83 : vector<272x128xf32>
    %c6_82 = arith.constant 6 : index
    %c0_83 = arith.constant 0 : index
    %85 = vector.load %arg15[%c6_82, %c0_83] : memref<352x128xf32, #tpu.memory_space<vmem>>, vector<272x128xf32>
    %c2_84 = arith.constant 2 : index
    %c0_85 = arith.constant 0 : index
    %c0_86 = arith.constant 0 : index
    %86 = vector.load %arg5[%c2_84, %c0_85, %c0_86] : memref<9x128x128xf32, #tpu.memory_space<vmem>>, vector<1x128x128xf32>
    %87 = vector.shape_cast %86 : vector<1x128x128xf32> to vector<128x128xf32>
    %cst_87 = arith.constant dense<0.000000e+00> : vector<272x128xf32>
    %88 = tpu.matmul %85, %87, %cst_87 {dimension_numbers = #tpu.dot_dimension_numbers<[1], [0], [0], [1], [0, 0, 1, 1], [], []>} : vector<272x128xf32>, vector<128x128xf32>, vector<272x128xf32> -> vector<272x128xf32>
    %89 = arith.addf %84, %88 : vector<272x128xf32>
    %c38_88 = arith.constant 38 : index
    %c0_89 = arith.constant 0 : index
    %90 = vector.load %arg15[%c38_88, %c0_89] : memref<352x128xf32, #tpu.memory_space<vmem>>, vector<272x128xf32>
    %c3_90 = arith.constant 3 : index
    %c0_91 = arith.constant 0 : index
    %c0_92 = arith.constant 0 : index
    %91 = vector.load %arg5[%c3_90, %c0_91, %c0_92] : memref<9x128x128xf32, #tpu.memory_space<vmem>>, vector<1x128x128xf32>
    %92 = vector.shape_cast %91 : vector<1x128x128xf32> to vector<128x128xf32>
    %cst_93 = arith.constant dense<0.000000e+00> : vector<272x128xf32>
    %93 = tpu.matmul %90, %92, %cst_93 {dimension_numbers = #tpu.dot_dimension_numbers<[1], [0], [0], [1], [0, 0, 1, 1], [], []>} : vector<272x128xf32>, vector<128x128xf32>, vector<272x128xf32> -> vector<272x128xf32>
    %94 = arith.addf %89, %93 : vector<272x128xf32>
    %c40_94 = arith.constant 40 : index
    %c0_95 = arith.constant 0 : index
    %95 = vector.load %arg15[%c40_94, %c0_95] : memref<352x128xf32, #tpu.memory_space<vmem>>, vector<272x128xf32>
    %c4_96 = arith.constant 4 : index
    %c0_97 = arith.constant 0 : index
    %c0_98 = arith.constant 0 : index
    %96 = vector.load %arg5[%c4_96, %c0_97, %c0_98] : memref<9x128x128xf32, #tpu.memory_space<vmem>>, vector<1x128x128xf32>
    %97 = vector.shape_cast %96 : vector<1x128x128xf32> to vector<128x128xf32>
    %cst_99 = arith.constant dense<0.000000e+00> : vector<272x128xf32>
    %98 = tpu.matmul %95, %97, %cst_99 {dimension_numbers = #tpu.dot_dimension_numbers<[1], [0], [0], [1], [0, 0, 1, 1], [], []>} : vector<272x128xf32>, vector<128x128xf32>, vector<272x128xf32> -> vector<272x128xf32>
    %99 = arith.addf %94, %98 : vector<272x128xf32>
    %c42 = arith.constant 42 : index
    %c0_100 = arith.constant 0 : index
    %100 = vector.load %arg15[%c42, %c0_100] : memref<352x128xf32, #tpu.memory_space<vmem>>, vector<272x128xf32>
    %c5_101 = arith.constant 5 : index
    %c0_102 = arith.constant 0 : index
    %c0_103 = arith.constant 0 : index
    %101 = vector.load %arg5[%c5_101, %c0_102, %c0_103] : memref<9x128x128xf32, #tpu.memory_space<vmem>>, vector<1x128x128xf32>
    %102 = vector.shape_cast %101 : vector<1x128x128xf32> to vector<128x128xf32>
    %cst_104 = arith.constant dense<0.000000e+00> : vector<272x128xf32>
    %103 = tpu.matmul %100, %102, %cst_104 {dimension_numbers = #tpu.dot_dimension_numbers<[1], [0], [0], [1], [0, 0, 1, 1], [], []>} : vector<272x128xf32>, vector<128x128xf32>, vector<272x128xf32> -> vector<272x128xf32>
    %104 = arith.addf %99, %103 : vector<272x128xf32>
    %c74 = arith.constant 74 : index
    %c0_105 = arith.constant 0 : index
    %105 = vector.load %arg15[%c74, %c0_105] : memref<352x128xf32, #tpu.memory_space<vmem>>, vector<272x128xf32>
    %c6_106 = arith.constant 6 : index
    %c0_107 = arith.constant 0 : index
    %c0_108 = arith.constant 0 : index
    %106 = vector.load %arg5[%c6_106, %c0_107, %c0_108] : memref<9x128x128xf32, #tpu.memory_space<vmem>>, vector<1x128x128xf32>
    %107 = vector.shape_cast %106 : vector<1x128x128xf32> to vector<128x128xf32>
    %cst_109 = arith.constant dense<0.000000e+00> : vector<272x128xf32>
    %108 = tpu.matmul %105, %107, %cst_109 {dimension_numbers = #tpu.dot_dimension_numbers<[1], [0], [0], [1], [0, 0, 1, 1], [], []>} : vector<272x128xf32>, vector<128x128xf32>, vector<272x128xf32> -> vector<272x128xf32>
    %109 = arith.addf %104, %108 : vector<272x128xf32>
    %c76 = arith.constant 76 : index
    %c0_110 = arith.constant 0 : index
    %110 = vector.load %arg15[%c76, %c0_110] : memref<352x128xf32, #tpu.memory_space<vmem>>, vector<272x128xf32>
    %c7_111 = arith.constant 7 : index
    %c0_112 = arith.constant 0 : index
    %c0_113 = arith.constant 0 : index
    %111 = vector.load %arg5[%c7_111, %c0_112, %c0_113] : memref<9x128x128xf32, #tpu.memory_space<vmem>>, vector<1x128x128xf32>
    %112 = vector.shape_cast %111 : vector<1x128x128xf32> to vector<128x128xf32>
    %cst_114 = arith.constant dense<0.000000e+00> : vector<272x128xf32>
    %113 = tpu.matmul %110, %112, %cst_114 {dimension_numbers = #tpu.dot_dimension_numbers<[1], [0], [0], [1], [0, 0, 1, 1], [], []>} : vector<272x128xf32>, vector<128x128xf32>, vector<272x128xf32> -> vector<272x128xf32>
    %114 = arith.addf %109, %113 : vector<272x128xf32>
    %c78 = arith.constant 78 : index
    %c0_115 = arith.constant 0 : index
    %115 = vector.load %arg15[%c78, %c0_115] : memref<352x128xf32, #tpu.memory_space<vmem>>, vector<272x128xf32>
    %c8_116 = arith.constant 8 : index
    %c0_117 = arith.constant 0 : index
    %c0_118 = arith.constant 0 : index
    %116 = vector.load %arg5[%c8_116, %c0_117, %c0_118] : memref<9x128x128xf32, #tpu.memory_space<vmem>>, vector<1x128x128xf32>
    %117 = vector.shape_cast %116 : vector<1x128x128xf32> to vector<128x128xf32>
    %cst_119 = arith.constant dense<0.000000e+00> : vector<272x128xf32>
    %118 = tpu.matmul %115, %117, %cst_119 {dimension_numbers = #tpu.dot_dimension_numbers<[1], [0], [0], [1], [0, 0, 1, 1], [], []>} : vector<272x128xf32>, vector<128x128xf32>, vector<272x128xf32> -> vector<272x128xf32>
    %119 = arith.addf %114, %118 : vector<272x128xf32>
    %c0_120 = arith.constant 0 : index
    %c0_121 = arith.constant 0 : index
    %120 = vector.load %arg6[%c0_120, %c0_121] : memref<1x128xf32, #tpu.memory_space<vmem>>, vector<1x128xf32>
    %121 = vector.broadcast %120 : vector<1x128xf32> to vector<272x128xf32>
    %122 = arith.addf %119, %121 : vector<272x128xf32>
    %cst_122 = arith.constant 0.000000e+00 : f32
    %123 = vector.broadcast %cst_122 : f32 to vector<272x128xf32>
    %124 = arith.maximumf %122, %123 : vector<272x128xf32>
    %c0_123 = arith.constant 0 : index
    %c0_124 = arith.constant 0 : index
    %125 = vector.load %arg16[%c0_123, %c0_124] : memref<272x128xf32, #tpu.memory_space<vmem>>, vector<272x128xf32>
    tpu.vector_store %arg16[%c0_123, %c0_124], %124 {strides = array<i32>} : memref<272x128xf32, #tpu.memory_space<vmem>>, vector<272x128xf32>,
    %cst_125 = arith.constant 0.000000e+00 : f32
    %126 = vector.broadcast %cst_125 : f32 to vector<1x128xf32>
    %c0_126 = arith.constant 0 : index
    %c0_127 = arith.constant 0 : index
    %127 = vector.load %arg16[%c0_126, %c0_127] : memref<272x128xf32, #tpu.memory_space<vmem>>, vector<1x128xf32>
    %c2_128 = arith.constant 2 : index
    %c0_129 = arith.constant 0 : index
    %128 = vector.load %arg16[%c2_128, %c0_129] : memref<272x128xf32, #tpu.memory_space<vmem>>, vector<1x128xf32>
    %129 = arith.maximumf %127, %128 : vector<1x128xf32>
    %c36_130 = arith.constant 36 : index
    %c0_131 = arith.constant 0 : index
    %130 = vector.load %arg16[%c36_130, %c0_131] : memref<272x128xf32, #tpu.memory_space<vmem>>, vector<1x128xf32>
    %c38_132 = arith.constant 38 : index
    %c0_133 = arith.constant 0 : index
    %131 = vector.load %arg16[%c38_132, %c0_133] : memref<272x128xf32, #tpu.memory_space<vmem>>, vector<1x128xf32>
    %132 = arith.maximumf %130, %131 : vector<1x128xf32>
    %133 = arith.maximumf %129, %132 : vector<1x128xf32>
    %c0_134 = arith.constant 0 : index
    %c0_135 = arith.constant 0 : index
    %c0_136 = arith.constant 0 : index
    %134 = vector.load %arg7[%c0_134, %c0_135, %c0_136] : memref<16x128x128xf32, #tpu.memory_space<vmem>>, vector<1x128x128xf32>
    %135 = vector.shape_cast %134 : vector<1x128x128xf32> to vector<128x128xf32>
    %cst_137 = arith.constant dense<0.000000e+00> : vector<1x128xf32>
    %136 = tpu.matmul %133, %135, %cst_137 {dimension_numbers = #tpu.dot_dimension_numbers<[1], [0], [0], [1], [0, 0, 1, 1], [], []>} : vector<1x128xf32>, vector<128x128xf32>, vector<1x128xf32> -> vector<1x128xf32>
    %137 = arith.addf %126, %136 : vector<1x128xf32>
    %c4_138 = arith.constant 4 : index
    %c0_139 = arith.constant 0 : index
    %138 = vector.load %arg16[%c4_138, %c0_139] : memref<272x128xf32, #tpu.memory_space<vmem>>, vector<1x128xf32>
    %c6_140 = arith.constant 6 : index
    %c0_141 = arith.constant 0 : index
    %139 = vector.load %arg16[%c6_140, %c0_141] : memref<272x128xf32, #tpu.memory_space<vmem>>, vector<1x128xf32>
    %140 = arith.maximumf %138, %139 : vector<1x128xf32>
    %c40_142 = arith.constant 40 : index
    %c0_143 = arith.constant 0 : index
    %141 = vector.load %arg16[%c40_142, %c0_143] : memref<272x128xf32, #tpu.memory_space<vmem>>, vector<1x128xf32>
    %c42_144 = arith.constant 42 : index
    %c0_145 = arith.constant 0 : index
    %142 = vector.load %arg16[%c42_144, %c0_145] : memref<272x128xf32, #tpu.memory_space<vmem>>, vector<1x128xf32>
    %143 = arith.maximumf %141, %142 : vector<1x128xf32>
    %144 = arith.maximumf %140, %143 : vector<1x128xf32>
    %c1_146 = arith.constant 1 : index
    %c0_147 = arith.constant 0 : index
    %c0_148 = arith.constant 0 : index
    %145 = vector.load %arg7[%c1_146, %c0_147, %c0_148] : memref<16x128x128xf32, #tpu.memory_space<vmem>>, vector<1x128x128xf32>
    %146 = vector.shape_cast %145 : vector<1x128x128xf32> to vector<128x128xf32>
    %cst_149 = arith.constant dense<0.000000e+00> : vector<1x128xf32>
    %147 = tpu.matmul %144, %146, %cst_149 {dimension_numbers = #tpu.dot_dimension_numbers<[1], [0], [0], [1], [0, 0, 1, 1], [], []>} : vector<1x128xf32>, vector<128x128xf32>, vector<1x128xf32> -> vector<1x128xf32>
    %148 = arith.addf %137, %147 : vector<1x128xf32>
    %c8_150 = arith.constant 8 : index
    %c0_151 = arith.constant 0 : index
    %149 = vector.load %arg16[%c8_150, %c0_151] : memref<272x128xf32, #tpu.memory_space<vmem>>, vector<1x128xf32>
    %c10 = arith.constant 10 : index
    %c0_152 = arith.constant 0 : index
    %150 = vector.load %arg16[%c10, %c0_152] : memref<272x128xf32, #tpu.memory_space<vmem>>, vector<1x128xf32>
    %151 = arith.maximumf %149, %150 : vector<1x128xf32>
    %c44 = arith.constant 44 : index
    %c0_153 = arith.constant 0 : index
    %152 = vector.load %arg16[%c44, %c0_153] : memref<272x128xf32, #tpu.memory_space<vmem>>, vector<1x128xf32>
    %c46 = arith.constant 46 : index
    %c0_154 = arith.constant 0 : index
    %153 = vector.load %arg16[%c46, %c0_154] : memref<272x128xf32, #tpu.memory_space<vmem>>, vector<1x128xf32>
    %154 = arith.maximumf %152, %153 : vector<1x128xf32>
    %155 = arith.maximumf %151, %154 : vector<1x128xf32>
    %c2_155 = arith.constant 2 : index
    %c0_156 = arith.constant 0 : index
    %c0_157 = arith.constant 0 : index
    %156 = vector.load %arg7[%c2_155, %c0_156, %c0_157] : memref<16x128x128xf32, #tpu.memory_space<vmem>>, vector<1x128x128xf32>
    %157 = vector.shape_cast %156 : vector<1x128x128xf32> to vector<128x128xf32>
    %cst_158 = arith.constant dense<0.000000e+00> : vector<1x128xf32>
    %158 = tpu.matmul %155, %157, %cst_158 {dimension_numbers = #tpu.dot_dimension_numbers<[1], [0], [0], [1], [0, 0, 1, 1], [], []>} : vector<1x128xf32>, vector<128x128xf32>, vector<1x128xf32> -> vector<1x128xf32>
    %159 = arith.addf %148, %158 : vector<1x128xf32>
    %c12 = arith.constant 12 : index
    %c0_159 = arith.constant 0 : index
    %160 = vector.load %arg16[%c12, %c0_159] : memref<272x128xf32, #tpu.memory_space<vmem>>, vector<1x128xf32>
    %c14 = arith.constant 14 : index
    %c0_160 = arith.constant 0 : index
    %161 = vector.load %arg16[%c14, %c0_160] : memref<272x128xf32, #tpu.memory_space<vmem>>, vector<1x128xf32>
    %162 = arith.maximumf %160, %161 : vector<1x128xf32>
    %c48 = arith.constant 48 : index
    %c0_161 = arith.constant 0 : index
    %163 = vector.load %arg16[%c48, %c0_161] : memref<272x128xf32, #tpu.memory_space<vmem>>, vector<1x128xf32>
    %c50 = arith.constant 50 : index
    %c0_162 = arith.constant 0 : index
    %164 = vector.load %arg16[%c50, %c0_162] : memref<272x128xf32, #tpu.memory_space<vmem>>, vector<1x128xf32>
    %165 = arith.maximumf %163, %164 : vector<1x128xf32>
    %166 = arith.maximumf %162, %165 : vector<1x128xf32>
    %c3_163 = arith.constant 3 : index
    %c0_164 = arith.constant 0 : index
    %c0_165 = arith.constant 0 : index
    %167 = vector.load %arg7[%c3_163, %c0_164, %c0_165] : memref<16x128x128xf32, #tpu.memory_space<vmem>>, vector<1x128x128xf32>
    %168 = vector.shape_cast %167 : vector<1x128x128xf32> to vector<128x128xf32>
    %cst_166 = arith.constant dense<0.000000e+00> : vector<1x128xf32>
    %169 = tpu.matmul %166, %168, %cst_166 {dimension_numbers = #tpu.dot_dimension_numbers<[1], [0], [0], [1], [0, 0, 1, 1], [], []>} : vector<1x128xf32>, vector<128x128xf32>, vector<1x128xf32> -> vector<1x128xf32>
    %170 = arith.addf %159, %169 : vector<1x128xf32>
    %c72 = arith.constant 72 : index
    %c0_167 = arith.constant 0 : index
    %171 = vector.load %arg16[%c72, %c0_167] : memref<272x128xf32, #tpu.memory_space<vmem>>, vector<1x128xf32>
    %c74_168 = arith.constant 74 : index
    %c0_169 = arith.constant 0 : index
    %172 = vector.load %arg16[%c74_168, %c0_169] : memref<272x128xf32, #tpu.memory_space<vmem>>, vector<1x128xf32>
    %173 = arith.maximumf %171, %172 : vector<1x128xf32>
    %c108 = arith.constant 108 : index
    %c0_170 = arith.constant 0 : index
    %174 = vector.load %arg16[%c108, %c0_170] : memref<272x128xf32, #tpu.memory_space<vmem>>, vector<1x128xf32>
    %c110 = arith.constant 110 : index
    %c0_171 = arith.constant 0 : index
    %175 = vector.load %arg16[%c110, %c0_171] : memref<272x128xf32, #tpu.memory_space<vmem>>, vector<1x128xf32>
    %176 = arith.maximumf %174, %175 : vector<1x128xf32>
    %177 = arith.maximumf %173, %176 : vector<1x128xf32>
    %c4_172 = arith.constant 4 : index
    %c0_173 = arith.constant 0 : index
    %c0_174 = arith.constant 0 : index
    %178 = vector.load %arg7[%c4_172, %c0_173, %c0_174] : memref<16x128x128xf32, #tpu.memory_space<vmem>>, vector<1x128x128xf32>
    %179 = vector.shape_cast %178 : vector<1x128x128xf32> to vector<128x128xf32>
    %cst_175 = arith.constant dense<0.000000e+00> : vector<1x128xf32>
    %180 = tpu.matmul %177, %179, %cst_175 {dimension_numbers = #tpu.dot_dimension_numbers<[1], [0], [0], [1], [0, 0, 1, 1], [], []>} : vector<1x128xf32>, vector<128x128xf32>, vector<1x128xf32> -> vector<1x128xf32>
    %181 = arith.addf %170, %180 : vector<1x128xf32>
    %c76_176 = arith.constant 76 : index
    %c0_177 = arith.constant 0 : index
    %182 = vector.load %arg16[%c76_176, %c0_177] : memref<272x128xf32, #tpu.memory_space<vmem>>, vector<1x128xf32>
    %c78_178 = arith.constant 78 : index
    %c0_179 = arith.constant 0 : index
    %183 = vector.load %arg16[%c78_178, %c0_179] : memref<272x128xf32, #tpu.memory_space<vmem>>, vector<1x128xf32>
    %184 = arith.maximumf %182, %183 : vector<1x128xf32>
    %c112 = arith.constant 112 : index
    %c0_180 = arith.constant 0 : index
    %185 = vector.load %arg16[%c112, %c0_180] : memref<272x128xf32, #tpu.memory_space<vmem>>, vector<1x128xf32>
    %c114 = arith.constant 114 : index
    %c0_181 = arith.constant 0 : index
    %186 = vector.load %arg16[%c114, %c0_181] : memref<272x128xf32, #tpu.memory_space<vmem>>, vector<1x128xf32>
    %187 = arith.maximumf %185, %186 : vector<1x128xf32>
    %188 = arith.maximumf %184, %187 : vector<1x128xf32>
    %c5_182 = arith.constant 5 : index
    %c0_183 = arith.constant 0 : index
    %c0_184 = arith.constant 0 : index
    %189 = vector.load %arg7[%c5_182, %c0_183, %c0_184] : memref<16x128x128xf32, #tpu.memory_space<vmem>>, vector<1x128x128xf32>
    %190 = vector.shape_cast %189 : vector<1x128x128xf32> to vector<128x128xf32>
    %cst_185 = arith.constant dense<0.000000e+00> : vector<1x128xf32>
    %191 = tpu.matmul %188, %190, %cst_185 {dimension_numbers = #tpu.dot_dimension_numbers<[1], [0], [0], [1], [0, 0, 1, 1], [], []>} : vector<1x128xf32>, vector<128x128xf32>, vector<1x128xf32> -> vector<1x128xf32>
    %192 = arith.addf %181, %191 : vector<1x128xf32>
    %c80 = arith.constant 80 : index
    %c0_186 = arith.constant 0 : index
    %193 = vector.load %arg16[%c80, %c0_186] : memref<272x128xf32, #tpu.memory_space<vmem>>, vector<1x128xf32>
    %c82 = arith.constant 82 : index
    %c0_187 = arith.constant 0 : index
    %194 = vector.load %arg16[%c82, %c0_187] : memref<272x128xf32, #tpu.memory_space<vmem>>, vector<1x128xf32>
    %195 = arith.maximumf %193, %194 : vector<1x128xf32>
    %c116 = arith.constant 116 : index
    %c0_188 = arith.constant 0 : index
    %196 = vector.load %arg16[%c116, %c0_188] : memref<272x128xf32, #tpu.memory_space<vmem>>, vector<1x128xf32>
    %c118 = arith.constant 118 : index
    %c0_189 = arith.constant 0 : index
    %197 = vector.load %arg16[%c118, %c0_189] : memref<272x128xf32, #tpu.memory_space<vmem>>, vector<1x128xf32>
    %198 = arith.maximumf %196, %197 : vector<1x128xf32>
    %199 = arith.maximumf %195, %198 : vector<1x128xf32>
    %c6_190 = arith.constant 6 : index
    %c0_191 = arith.constant 0 : index
    %c0_192 = arith.constant 0 : index
    %200 = vector.load %arg7[%c6_190, %c0_191, %c0_192] : memref<16x128x128xf32, #tpu.memory_space<vmem>>, vector<1x128x128xf32>
    %201 = vector.shape_cast %200 : vector<1x128x128xf32> to vector<128x128xf32>
    %cst_193 = arith.constant dense<0.000000e+00> : vector<1x128xf32>
    %202 = tpu.matmul %199, %201, %cst_193 {dimension_numbers = #tpu.dot_dimension_numbers<[1], [0], [0], [1], [0, 0, 1, 1], [], []>} : vector<1x128xf32>, vector<128x128xf32>, vector<1x128xf32> -> vector<1x128xf32>
    %203 = arith.addf %192, %202 : vector<1x128xf32>
    %c84 = arith.constant 84 : index
    %c0_194 = arith.constant 0 : index
    %204 = vector.load %arg16[%c84, %c0_194] : memref<272x128xf32, #tpu.memory_space<vmem>>, vector<1x128xf32>
    %c86 = arith.constant 86 : index
    %c0_195 = arith.constant 0 : index
    %205 = vector.load %arg16[%c86, %c0_195] : memref<272x128xf32, #tpu.memory_space<vmem>>, vector<1x128xf32>
    %206 = arith.maximumf %204, %205 : vector<1x128xf32>
    %c120 = arith.constant 120 : index
    %c0_196 = arith.constant 0 : index
    %207 = vector.load %arg16[%c120, %c0_196] : memref<272x128xf32, #tpu.memory_space<vmem>>, vector<1x128xf32>
    %c122 = arith.constant 122 : index
    %c0_197 = arith.constant 0 : index
    %208 = vector.load %arg16[%c122, %c0_197] : memref<272x128xf32, #tpu.memory_space<vmem>>, vector<1x128xf32>
    %209 = arith.maximumf %207, %208 : vector<1x128xf32>
    %210 = arith.maximumf %206, %209 : vector<1x128xf32>
    %c7_198 = arith.constant 7 : index
    %c0_199 = arith.constant 0 : index
    %c0_200 = arith.constant 0 : index
    %211 = vector.load %arg7[%c7_198, %c0_199, %c0_200] : memref<16x128x128xf32, #tpu.memory_space<vmem>>, vector<1x128x128xf32>
    %212 = vector.shape_cast %211 : vector<1x128x128xf32> to vector<128x128xf32>
    %cst_201 = arith.constant dense<0.000000e+00> : vector<1x128xf32>
    %213 = tpu.matmul %210, %212, %cst_201 {dimension_numbers = #tpu.dot_dimension_numbers<[1], [0], [0], [1], [0, 0, 1, 1], [], []>} : vector<1x128xf32>, vector<128x128xf32>, vector<1x128xf32> -> vector<1x128xf32>
    %214 = arith.addf %203, %213 : vector<1x128xf32>
    %c144 = arith.constant 144 : index
    %c0_202 = arith.constant 0 : index
    %215 = vector.load %arg16[%c144, %c0_202] : memref<272x128xf32, #tpu.memory_space<vmem>>, vector<1x128xf32>
    %c146 = arith.constant 146 : index
    %c0_203 = arith.constant 0 : index
    %216 = vector.load %arg16[%c146, %c0_203] : memref<272x128xf32, #tpu.memory_space<vmem>>, vector<1x128xf32>
    %217 = arith.maximumf %215, %216 : vector<1x128xf32>
    %c180 = arith.constant 180 : index
    %c0_204 = arith.constant 0 : index
    %218 = vector.load %arg16[%c180, %c0_204] : memref<272x128xf32, #tpu.memory_space<vmem>>, vector<1x128xf32>
    %c182 = arith.constant 182 : index
    %c0_205 = arith.constant 0 : index
    %219 = vector.load %arg16[%c182, %c0_205] : memref<272x128xf32, #tpu.memory_space<vmem>>, vector<1x128xf32>
    %220 = arith.maximumf %218, %219 : vector<1x128xf32>
    %221 = arith.maximumf %217, %220 : vector<1x128xf32>
    %c8_206 = arith.constant 8 : index
    %c0_207 = arith.constant 0 : index
    %c0_208 = arith.constant 0 : index
    %222 = vector.load %arg7[%c8_206, %c0_207, %c0_208] : memref<16x128x128xf32, #tpu.memory_space<vmem>>, vector<1x128x128xf32>
    %223 = vector.shape_cast %222 : vector<1x128x128xf32> to vector<128x128xf32>
    %cst_209 = arith.constant dense<0.000000e+00> : vector<1x128xf32>
    %224 = tpu.matmul %221, %223, %cst_209 {dimension_numbers = #tpu.dot_dimension_numbers<[1], [0], [0], [1], [0, 0, 1, 1], [], []>} : vector<1x128xf32>, vector<128x128xf32>, vector<1x128xf32> -> vector<1x128xf32>
    %225 = arith.addf %214, %224 : vector<1x128xf32>
    %c148 = arith.constant 148 : index
    %c0_210 = arith.constant 0 : index
    %226 = vector.load %arg16[%c148, %c0_210] : memref<272x128xf32, #tpu.memory_space<vmem>>, vector<1x128xf32>
    %c150 = arith.constant 150 : index
    %c0_211 = arith.constant 0 : index
    %227 = vector.load %arg16[%c150, %c0_211] : memref<272x128xf32, #tpu.memory_space<vmem>>, vector<1x128xf32>
    %228 = arith.maximumf %226, %227 : vector<1x128xf32>
    %c184 = arith.constant 184 : index
    %c0_212 = arith.constant 0 : index
    %229 = vector.load %arg16[%c184, %c0_212] : memref<272x128xf32, #tpu.memory_space<vmem>>, vector<1x128xf32>
    %c186 = arith.constant 186 : index
    %c0_213 = arith.constant 0 : index
    %230 = vector.load %arg16[%c186, %c0_213] : memref<272x128xf32, #tpu.memory_space<vmem>>, vector<1x128xf32>
    %231 = arith.maximumf %229, %230 : vector<1x128xf32>
    %232 = arith.maximumf %228, %231 : vector<1x128xf32>
    %c9 = arith.constant 9 : index
    %c0_214 = arith.constant 0 : index
    %c0_215 = arith.constant 0 : index
    %233 = vector.load %arg7[%c9, %c0_214, %c0_215] : memref<16x128x128xf32, #tpu.memory_space<vmem>>, vector<1x128x128xf32>
    %234 = vector.shape_cast %233 : vector<1x128x128xf32> to vector<128x128xf32>
    %cst_216 = arith.constant dense<0.000000e+00> : vector<1x128xf32>
    %235 = tpu.matmul %232, %234, %cst_216 {dimension_numbers = #tpu.dot_dimension_numbers<[1], [0], [0], [1], [0, 0, 1, 1], [], []>} : vector<1x128xf32>, vector<128x128xf32>, vector<1x128xf32> -> vector<1x128xf32>
    %236 = arith.addf %225, %235 : vector<1x128xf32>
    %c152 = arith.constant 152 : index
    %c0_217 = arith.constant 0 : index
    %237 = vector.load %arg16[%c152, %c0_217] : memref<272x128xf32, #tpu.memory_space<vmem>>, vector<1x128xf32>
    %c154 = arith.constant 154 : index
    %c0_218 = arith.constant 0 : index
    %238 = vector.load %arg16[%c154, %c0_218] : memref<272x128xf32, #tpu.memory_space<vmem>>, vector<1x128xf32>
    %239 = arith.maximumf %237, %238 : vector<1x128xf32>
    %c188 = arith.constant 188 : index
    %c0_219 = arith.constant 0 : index
    %240 = vector.load %arg16[%c188, %c0_219] : memref<272x128xf32, #tpu.memory_space<vmem>>, vector<1x128xf32>
    %c190 = arith.constant 190 : index
    %c0_220 = arith.constant 0 : index
    %241 = vector.load %arg16[%c190, %c0_220] : memref<272x128xf32, #tpu.memory_space<vmem>>, vector<1x128xf32>
    %242 = arith.maximumf %240, %241 : vector<1x128xf32>
    %243 = arith.maximumf %239, %242 : vector<1x128xf32>
    %c10_221 = arith.constant 10 : index
    %c0_222 = arith.constant 0 : index
    %c0_223 = arith.constant 0 : index
    %244 = vector.load %arg7[%c10_221, %c0_222, %c0_223] : memref<16x128x128xf32, #tpu.memory_space<vmem>>, vector<1x128x128xf32>
    %245 = vector.shape_cast %244 : vector<1x128x128xf32> to vector<128x128xf32>
    %cst_224 = arith.constant dense<0.000000e+00> : vector<1x128xf32>
    %246 = tpu.matmul %243, %245, %cst_224 {dimension_numbers = #tpu.dot_dimension_numbers<[1], [0], [0], [1], [0, 0, 1, 1], [], []>} : vector<1x128xf32>, vector<128x128xf32>, vector<1x128xf32> -> vector<1x128xf32>
    %247 = arith.addf %236, %246 : vector<1x128xf32>
    %c156 = arith.constant 156 : index
    %c0_225 = arith.constant 0 : index
    %248 = vector.load %arg16[%c156, %c0_225] : memref<272x128xf32, #tpu.memory_space<vmem>>, vector<1x128xf32>
    %c158 = arith.constant 158 : index
    %c0_226 = arith.constant 0 : index
    %249 = vector.load %arg16[%c158, %c0_226] : memref<272x128xf32, #tpu.memory_space<vmem>>, vector<1x128xf32>
    %250 = arith.maximumf %248, %249 : vector<1x128xf32>
    %c192 = arith.constant 192 : index
    %c0_227 = arith.constant 0 : index
    %251 = vector.load %arg16[%c192, %c0_227] : memref<272x128xf32, #tpu.memory_space<vmem>>, vector<1x128xf32>
    %c194 = arith.constant 194 : index
    %c0_228 = arith.constant 0 : index
    %252 = vector.load %arg16[%c194, %c0_228] : memref<272x128xf32, #tpu.memory_space<vmem>>, vector<1x128xf32>
    %253 = arith.maximumf %251, %252 : vector<1x128xf32>
    %254 = arith.maximumf %250, %253 : vector<1x128xf32>
    %c11 = arith.constant 11 : index
    %c0_229 = arith.constant 0 : index
    %c0_230 = arith.constant 0 : index
    %255 = vector.load %arg7[%c11, %c0_229, %c0_230] : memref<16x128x128xf32, #tpu.memory_space<vmem>>, vector<1x128x128xf32>
    %256 = vector.shape_cast %255 : vector<1x128x128xf32> to vector<128x128xf32>
    %cst_231 = arith.constant dense<0.000000e+00> : vector<1x128xf32>
    %257 = tpu.matmul %254, %256, %cst_231 {dimension_numbers = #tpu.dot_dimension_numbers<[1], [0], [0], [1], [0, 0, 1, 1], [], []>} : vector<1x128xf32>, vector<128x128xf32>, vector<1x128xf32> -> vector<1x128xf32>
    %258 = arith.addf %247, %257 : vector<1x128xf32>
    %c216 = arith.constant 216 : index
    %c0_232 = arith.constant 0 : index
    %259 = vector.load %arg16[%c216, %c0_232] : memref<272x128xf32, #tpu.memory_space<vmem>>, vector<1x128xf32>
    %c218 = arith.constant 218 : index
    %c0_233 = arith.constant 0 : index
    %260 = vector.load %arg16[%c218, %c0_233] : memref<272x128xf32, #tpu.memory_space<vmem>>, vector<1x128xf32>
    %261 = arith.maximumf %259, %260 : vector<1x128xf32>
    %c252 = arith.constant 252 : index
    %c0_234 = arith.constant 0 : index
    %262 = vector.load %arg16[%c252, %c0_234] : memref<272x128xf32, #tpu.memory_space<vmem>>, vector<1x128xf32>
    %c254 = arith.constant 254 : index
    %c0_235 = arith.constant 0 : index
    %263 = vector.load %arg16[%c254, %c0_235] : memref<272x128xf32, #tpu.memory_space<vmem>>, vector<1x128xf32>
    %264 = arith.maximumf %262, %263 : vector<1x128xf32>
    %265 = arith.maximumf %261, %264 : vector<1x128xf32>
    %c12_236 = arith.constant 12 : index
    %c0_237 = arith.constant 0 : index
    %c0_238 = arith.constant 0 : index
    %266 = vector.load %arg7[%c12_236, %c0_237, %c0_238] : memref<16x128x128xf32, #tpu.memory_space<vmem>>, vector<1x128x128xf32>
    %267 = vector.shape_cast %266 : vector<1x128x128xf32> to vector<128x128xf32>
    %cst_239 = arith.constant dense<0.000000e+00> : vector<1x128xf32>
    %268 = tpu.matmul %265, %267, %cst_239 {dimension_numbers = #tpu.dot_dimension_numbers<[1], [0], [0], [1], [0, 0, 1, 1], [], []>} : vector<1x128xf32>, vector<128x128xf32>, vector<1x128xf32> -> vector<1x128xf32>
    %269 = arith.addf %258, %268 : vector<1x128xf32>
    %c220 = arith.constant 220 : index
    %c0_240 = arith.constant 0 : index
    %270 = vector.load %arg16[%c220, %c0_240] : memref<272x128xf32, #tpu.memory_space<vmem>>, vector<1x128xf32>
    %c222 = arith.constant 222 : index
    %c0_241 = arith.constant 0 : index
    %271 = vector.load %arg16[%c222, %c0_241] : memref<272x128xf32, #tpu.memory_space<vmem>>, vector<1x128xf32>
    %272 = arith.maximumf %270, %271 : vector<1x128xf32>
    %c256 = arith.constant 256 : index
    %c0_242 = arith.constant 0 : index
    %273 = vector.load %arg16[%c256, %c0_242] : memref<272x128xf32, #tpu.memory_space<vmem>>, vector<1x128xf32>
    %c258 = arith.constant 258 : index
    %c0_243 = arith.constant 0 : index
    %274 = vector.load %arg16[%c258, %c0_243] : memref<272x128xf32, #tpu.memory_space<vmem>>, vector<1x128xf32>
    %275 = arith.maximumf %273, %274 : vector<1x128xf32>
    %276 = arith.maximumf %272, %275 : vector<1x128xf32>
    %c13 = arith.constant 13 : index
    %c0_244 = arith.constant 0 : index
    %c0_245 = arith.constant 0 : index
    %277 = vector.load %arg7[%c13, %c0_244, %c0_245] : memref<16x128x128xf32, #tpu.memory_space<vmem>>, vector<1x128x128xf32>
    %278 = vector.shape_cast %277 : vector<1x128x128xf32> to vector<128x128xf32>
    %cst_246 = arith.constant dense<0.000000e+00> : vector<1x128xf32>
    %279 = tpu.matmul %276, %278, %cst_246 {dimension_numbers = #tpu.dot_dimension_numbers<[1], [0], [0], [1], [0, 0, 1, 1], [], []>} : vector<1x128xf32>, vector<128x128xf32>, vector<1x128xf32> -> vector<1x128xf32>
    %280 = arith.addf %269, %279 : vector<1x128xf32>
    %c224 = arith.constant 224 : index
    %c0_247 = arith.constant 0 : index
    %281 = vector.load %arg16[%c224, %c0_247] : memref<272x128xf32, #tpu.memory_space<vmem>>, vector<1x128xf32>
    %c226 = arith.constant 226 : index
    %c0_248 = arith.constant 0 : index
    %282 = vector.load %arg16[%c226, %c0_248] : memref<272x128xf32, #tpu.memory_space<vmem>>, vector<1x128xf32>
    %283 = arith.maximumf %281, %282 : vector<1x128xf32>
    %c260 = arith.constant 260 : index
    %c0_249 = arith.constant 0 : index
    %284 = vector.load %arg16[%c260, %c0_249] : memref<272x128xf32, #tpu.memory_space<vmem>>, vector<1x128xf32>
    %c262 = arith.constant 262 : index
    %c0_250 = arith.constant 0 : index
    %285 = vector.load %arg16[%c262, %c0_250] : memref<272x128xf32, #tpu.memory_space<vmem>>, vector<1x128xf32>
    %286 = arith.maximumf %284, %285 : vector<1x128xf32>
    %287 = arith.maximumf %283, %286 : vector<1x128xf32>
    %c14_251 = arith.constant 14 : index
    %c0_252 = arith.constant 0 : index
    %c0_253 = arith.constant 0 : index
    %288 = vector.load %arg7[%c14_251, %c0_252, %c0_253] : memref<16x128x128xf32, #tpu.memory_space<vmem>>, vector<1x128x128xf32>
    %289 = vector.shape_cast %288 : vector<1x128x128xf32> to vector<128x128xf32>
    %cst_254 = arith.constant dense<0.000000e+00> : vector<1x128xf32>
    %290 = tpu.matmul %287, %289, %cst_254 {dimension_numbers = #tpu.dot_dimension_numbers<[1], [0], [0], [1], [0, 0, 1, 1], [], []>} : vector<1x128xf32>, vector<128x128xf32>, vector<1x128xf32> -> vector<1x128xf32>
    %291 = arith.addf %280, %290 : vector<1x128xf32>
    %c228 = arith.constant 228 : index
    %c0_255 = arith.constant 0 : index
    %292 = vector.load %arg16[%c228, %c0_255] : memref<272x128xf32, #tpu.memory_space<vmem>>, vector<1x128xf32>
    %c230 = arith.constant 230 : index
    %c0_256 = arith.constant 0 : index
    %293 = vector.load %arg16[%c230, %c0_256] : memref<272x128xf32, #tpu.memory_space<vmem>>, vector<1x128xf32>
    %294 = arith.maximumf %292, %293 : vector<1x128xf32>
    %c264 = arith.constant 264 : index
    %c0_257 = arith.constant 0 : index
    %295 = vector.load %arg16[%c264, %c0_257] : memref<272x128xf32, #tpu.memory_space<vmem>>, vector<1x128xf32>
    %c266 = arith.constant 266 : index
    %c0_258 = arith.constant 0 : index
    %296 = vector.load %arg16[%c266, %c0_258] : memref<272x128xf32, #tpu.memory_space<vmem>>, vector<1x128xf32>
    %297 = arith.maximumf %295, %296 : vector<1x128xf32>
    %298 = arith.maximumf %294, %297 : vector<1x128xf32>
    %c15 = arith.constant 15 : index
    %c0_259 = arith.constant 0 : index
    %c0_260 = arith.constant 0 : index
    %299 = vector.load %arg7[%c15, %c0_259, %c0_260] : memref<16x128x128xf32, #tpu.memory_space<vmem>>, vector<1x128x128xf32>
    %300 = vector.shape_cast %299 : vector<1x128x128xf32> to vector<128x128xf32>
    %cst_261 = arith.constant dense<0.000000e+00> : vector<1x128xf32>
    %301 = tpu.matmul %298, %300, %cst_261 {dimension_numbers = #tpu.dot_dimension_numbers<[1], [0], [0], [1], [0, 0, 1, 1], [], []>} : vector<1x128xf32>, vector<128x128xf32>, vector<1x128xf32> -> vector<1x128xf32>
    %302 = arith.addf %291, %301 : vector<1x128xf32>
    %c0_262 = arith.constant 0 : index
    %c0_263 = arith.constant 0 : index
    %303 = vector.load %arg8[%c0_262, %c0_263] : memref<1x128xf32, #tpu.memory_space<vmem>>, vector<1x128xf32>
    %304 = arith.addf %302, %303 : vector<1x128xf32>
    %cst_264 = arith.constant 0.000000e+00 : f32
    %305 = vector.broadcast %cst_264 : f32 to vector<1x128xf32>
    %306 = arith.maximumf %304, %305 : vector<1x128xf32>
    %c0_265 = arith.constant 0 : index
    %c0_266 = arith.constant 0 : index
    %307 = vector.load %arg9[%c0_265, %c0_266] : memref<128x128xf32, #tpu.memory_space<vmem>>, vector<128x128xf32>
    %cst_267 = arith.constant dense<0.000000e+00> : vector<1x128xf32>
    %308 = tpu.matmul %306, %307, %cst_267 {dimension_numbers = #tpu.dot_dimension_numbers<[1], [0], [0], [1], [0, 0, 1, 1], [], []>} : vector<1x128xf32>, vector<128x128xf32>, vector<1x128xf32> -> vector<1x128xf32>
    %c0_268 = arith.constant 0 : index
    %c0_269 = arith.constant 0 : index
    %309 = vector.load %arg10[%c0_268, %c0_269] : memref<1x128xf32, #tpu.memory_space<vmem>>, vector<1x128xf32>
    %310 = arith.addf %308, %309 : vector<1x128xf32>
    %cst_270 = arith.constant 0.000000e+00 : f32
    %311 = vector.broadcast %cst_270 : f32 to vector<1x128xf32>
    %312 = arith.maximumf %310, %311 : vector<1x128xf32>
    %c0_271 = arith.constant 0 : index
    %c0_272 = arith.constant 0 : index
    %313 = vector.load %arg11[%c0_271, %c0_272] : memref<128x128xf32, #tpu.memory_space<vmem>>, vector<128x128xf32>
    %cst_273 = arith.constant dense<0.000000e+00> : vector<1x128xf32>
    %314 = tpu.matmul %312, %313, %cst_273 {dimension_numbers = #tpu.dot_dimension_numbers<[1], [0], [0], [1], [0, 0, 1, 1], [], []>} : vector<1x128xf32>, vector<128x128xf32>, vector<1x128xf32> -> vector<1x128xf32>
    %c0_274 = arith.constant 0 : index
    %c0_275 = arith.constant 0 : index
    %315 = vector.load %arg12[%c0_274, %c0_275] : memref<1x128xf32, #tpu.memory_space<vmem>>, vector<1x128xf32>
    %316 = arith.addf %314, %315 : vector<1x128xf32>
    %317 = arith.mulf %316, %316 : vector<1x128xf32>
    %cst_276 = arith.constant dense<0.000000e+00> : vector<1xf32>
    %318 = vector.multi_reduction <add>, %317, %cst_276 [1] : vector<1x128xf32> to vector<1xf32>
    %319 = vector.shape_cast %318 : vector<1xf32> to vector<1x1xf32>
    %320 = math.sqrt %319 : vector<1x1xf32>
    %cst_277 = arith.constant 1.000000e+00 : f32
    %321 = vector.broadcast %cst_277 : f32 to vector<1x1xf32>
    %322 = arith.cmpf oge, %320, %321 : vector<1x1xf32>
    %cst_278 = arith.constant 1.000000e+00 : f32
    %cst_279 = arith.constant 0.000000e+00 : f32
    %323 = vector.broadcast %cst_278 : f32 to vector<1x1xf32>
    %324 = vector.broadcast %cst_279 : f32 to vector<1x1xf32>
    %325 = arith.select %322, %323, %324 : vector<1x1xi1>, vector<1x1xf32>
    %cst_280 = arith.constant 1.000000e+00 : f32
    %326 = vector.broadcast %cst_280 : f32 to vector<1x1xf32>
    %327 = arith.cmpf oge, %320, %326 : vector<1x1xf32>
    %cst_281 = arith.constant 1.000000e+00 : f32
    %328 = vector.broadcast %cst_281 : f32 to vector<1x1xf32>
    %329 = arith.select %327, %320, %328 : vector<1x1xi1>, vector<1x1xf32>
    %330 = vector.broadcast %329 : vector<1x1xf32> to vector<1x128xf32>
    %331 = arith.divf %316, %330 : vector<1x128xf32>
    %cst_282 = arith.constant 9.99999974E-6 : f32
    %332 = vector.broadcast %cst_282 : f32 to vector<1x1xf32>
    %333 = arith.mulf %325, %332 : vector<1x1xf32>
    %334 = vector.broadcast %333 : vector<1x1xf32> to vector<1x128xf32>
    %335 = arith.subf %331, %334 : vector<1x128xf32>
    %c0_283 = arith.constant 0 : index
    %c0_284 = arith.constant 0 : index
    %c0_285 = arith.constant 0 : index
    %336 = vector.load %arg13[%c0_283, %c0_284, %c0_285] : memref<1x1x128xf32, #tpu.memory_space<vmem>>, vector<1x1x128xf32>
    %337 = vector.shape_cast %336 : vector<1x1x128xf32> to vector<1x128xf32>
    %338 = vector.shape_cast %335 : vector<1x128xf32> to vector<1x1x128xf32>
    tpu.vector_store %arg13[%c0_283, %c0_284, %c0_285], %338 {strides = array<i32>} : memref<1x1x128xf32, #tpu.memory_space<vmem>>, vector<1x1x128xf32>,
    return
  }
  func.func @transform_0(%arg0: i32) -> (i32, i32, i32) {
    %c0_i32 = arith.constant 0 : i32
    %c0_i32_0 = arith.constant 0 : i32
    %c0_i32_1 = arith.constant 0 : i32
    return %arg0, %c0_i32, %c0_i32_0 : i32, i32, i32
  }
  func.func @transform_1(%arg0: i32) -> (i32, i32) {
    %c0_i32 = arith.constant 0 : i32
    %c0_i32_0 = arith.constant 0 : i32
    %c0_i32_1 = arith.constant 0 : i32
    return %c0_i32, %c0_i32_0 : i32, i32
  }
  func.func @transform_2(%arg0: i32) -> (i32, i32, i32) {
    %c0_i32 = arith.constant 0 : i32
    %c0_i32_0 = arith.constant 0 : i32
    %c0_i32_1 = arith.constant 0 : i32
    %c0_i32_2 = arith.constant 0 : i32
    return %c0_i32, %c0_i32_0, %c0_i32_1 : i32, i32, i32
  }
  func.func @transform_3(%arg0: i32) -> (i32, i32) {
    %c0_i32 = arith.constant 0 : i32
    %c0_i32_0 = arith.constant 0 : i32
    %c0_i32_1 = arith.constant 0 : i32
    return %c0_i32, %c0_i32_0 : i32, i32
  }
  func.func @transform_4(%arg0: i32) -> (i32, i32, i32) {
    %c0_i32 = arith.constant 0 : i32
    %c0_i32_0 = arith.constant 0 : i32
    %c0_i32_1 = arith.constant 0 : i32
    %c0_i32_2 = arith.constant 0 : i32
    return %c0_i32, %c0_i32_0, %c0_i32_1 : i32, i32, i32
  }
  func.func @transform_5(%arg0: i32) -> (i32, i32) {
    %c0_i32 = arith.constant 0 : i32
    %c0_i32_0 = arith.constant 0 : i32
    %c0_i32_1 = arith.constant 0 : i32
    return %c0_i32, %c0_i32_0 : i32, i32
  }
  func.func @transform_6(%arg0: i32) -> (i32, i32, i32) {
    %c0_i32 = arith.constant 0 : i32
    %c0_i32_0 = arith.constant 0 : i32
    %c0_i32_1 = arith.constant 0 : i32
    %c0_i32_2 = arith.constant 0 : i32
    return %c0_i32, %c0_i32_0, %c0_i32_1 : i32, i32, i32
  }
  func.func @transform_7(%arg0: i32) -> (i32, i32) {
    %c0_i32 = arith.constant 0 : i32
    %c0_i32_0 = arith.constant 0 : i32
    %c0_i32_1 = arith.constant 0 : i32
    return %c0_i32, %c0_i32_0 : i32, i32
  }
  func.func @transform_8(%arg0: i32) -> (i32, i32) {
    %c0_i32 = arith.constant 0 : i32
    %c0_i32_0 = arith.constant 0 : i32
    %c0_i32_1 = arith.constant 0 : i32
    return %c0_i32, %c0_i32_0 : i32, i32
  }
  func.func @transform_9(%arg0: i32) -> (i32, i32) {
    %c0_i32 = arith.constant 0 : i32
    %c0_i32_0 = arith.constant 0 : i32
    %c0_i32_1 = arith.constant 0 : i32
    return %c0_i32, %c0_i32_0 : i32, i32
  }
  func.func @transform_10(%arg0: i32) -> (i32, i32) {
    %c0_i32 = arith.constant 0 : i32
    %c0_i32_0 = arith.constant 0 : i32
    %c0_i32_1 = arith.constant 0 : i32
    return %c0_i32, %c0_i32_0 : i32, i32
  }
  func.func @transform_11(%arg0: i32) -> (i32, i32) {
    %c0_i32 = arith.constant 0 : i32
    %c0_i32_0 = arith.constant 0 : i32
    %c0_i32_1 = arith.constant 0 : i32
    return %c0_i32, %c0_i32_0 : i32, i32
  }
  func.func @transform_12(%arg0: i32) -> (i32, i32, i32) {
    %c0_i32 = arith.constant 0 : i32
    %c0_i32_0 = arith.constant 0 : i32
    %c0_i32_1 = arith.constant 0 : i32
    return %arg0, %c0_i32, %c0_i32_0 : i32, i32, i32
  }
}

</mosaic_0001>

<llo_original>
// kernel: poincare_vgg_forward.1
$region0: #{poincare_vgg_forward.1}
  #allocation0 [shape = 'u32[]', space=smem, size = 0x4, offset = 0x4, fixed_abs, tag = 'smem constant byte address 0x4 - core index']
  #allocation1 [shape = 'u32[72,128]{1,0:T(1,128)}', space=vmem, size = 0x9000, scoped, tag = 'internal scratch']
  #allocation2 [shape = 'f32[296,128]{1,0:T(8,128)}', space=vmem, size = 0x25000, scoped, tag = 'scratch operand']
  #allocation3 [shape = 'f32[352,128]{1,0:T(8,128)}', space=vmem, size = 0x2c000, scoped, tag = 'scratch operand']
  #allocation4 [shape = 'f32[272,128]{1,0:T(8,128)}', space=vmem, size = 0x22000, scoped, tag = 'scratch operand']
  %s0 = inlined_call_operand.vmem [shape: f32[2,328,8], index: 0, kind: input, shape index: {}]
  %s1 = inlined_call_operand.vmem [shape: f32[288,1], index: 1, kind: input, shape index: {}]
  %s2 = inlined_call_operand.vmem [shape: f32[9,8,128], index: 2, kind: input, shape index: {}]
  %s3 = inlined_call_operand.vmem [shape: f32[1,128], index: 3, kind: input, shape index: {}]
  %s4 = inlined_call_operand.hbm [shape: f32[9,128,128], index: 4, kind: input, shape index: {}]
  %s5 = inlined_call_operand.vmem [shape: f32[1,128], index: 5, kind: input, shape index: {}]
  %s6 = inlined_call_operand.vmem [shape: f32[16,128,128], index: 6, kind: input, shape index: {}]
  %s7 = inlined_call_operand.vmem [shape: f32[1,128], index: 7, kind: input, shape index: {}]
  %s8 = inlined_call_operand.vmem [shape: f32[128,128], index: 8, kind: input, shape index: {}]
  %s9 = inlined_call_operand.vmem [shape: f32[1,128], index: 9, kind: input, shape index: {}]
  %s10 = inlined_call_operand.vmem [shape: f32[128,128], index: 10, kind: input, shape index: {}]
  %s11 = inlined_call_operand.vmem [shape: f32[1,128], index: 11, kind: input, shape index: {}]
  %s12 = inlined_call_operand.hbm [shape: f32[2,1,128], index: 12, kind: output, shape index: {}]
  %s13 = sld [smem:[#allocation0]]
  $region85: #{poincare_vgg_forward.1} parent=0
    _
  %s15 = ssub.s32 1, %s13
  %s16 = scalar_select 0, %s15, %s13
  $region1: #{poincare_vgg_forward.1} parent=0
    #allocation5 [shape = 'u8[589824]{0}', space=vmem, size = 0x90000, scoped, tag = 'input window, operand 4, single buffered']
    #allocation6 [shape = 's32[2]{0}', space=sflag, size = 0x8, scoped, tag = 'scoped memory for poincare_vgg_forward.1']
    #allocation7 [shape = 's32[2]{0}', space=sflag, size = 0x8, scoped, tag = 'scoped memory for poincare_vgg_forward.1']
    #allocation8 [shape = 'u8[1024]{0}', space=vmem, size = 0x400, scoped, tag = 'output window, operand 0']
    %17 = vsyncpa [#allocation6], 0
    %18 = vsyncpa [#allocation7], 0
    %s19 = scalar_lea.sflag [#allocation7], 1
    %20 = vsyncpa %s19, 0
    loop: start=0, step=1, limit=4
    $region2: #{poincare_vgg_forward.1} parent=1 // loop_pre_header
      _
    $region3: #{poincare_vgg_forward.1} parent=1 // loop_header
      %s22 = sphi 0, %s26
      %p23 = scmp.ge.s32.totalorder %s22, 4
      %s32 = sphi 0, %s34
      %s35 = sphi 0, %s32
      %s36 = sphi 0, %s35
      %s52 = sphi 0, %s36
      %s56 = sphi 0, %s56
      %s58 = sphi 0, %s56
      %s59 = sphi 0, %s58
      %s73 = sphi 0, %s59
      %s77 = sphi 0, %s77
      %s79 = sphi 0, %s77
      %s80 = sphi 0, %s79
      %s94 = sphi 0, %s80
      %s98 = sphi 0, %s98
      %s100 = sphi 0, %s98
      %s101 = sphi 0, %s100
      %s115 = sphi 0, %s101
      %s119 = sphi 0, %s119
      %s121 = sphi 0, %s119
      %s122 = sphi 0, %s121
      %s136 = sphi 0, %s122
      %s140 = sphi 0, %s140
      %s142 = sphi 0, %s140
      %s143 = sphi 0, %s142
      %s157 = sphi 0, %s143
      %s161 = sphi 0, %s161
      %s163 = sphi 0, %s161
      %s164 = sphi 0, %s163
      %s178 = sphi 0, %s164
      %s182 = sphi 0, %s182
      %s184 = sphi 0, %s182
      %s185 = sphi 0, %s184
      %s199 = sphi 0, %s185
      %s203 = sphi 0, %s203
      %s205 = sphi 0, %s203
      %s206 = sphi 0, %s205
      %s220 = sphi 0, %s206
      %s224 = sphi 0, %s224
      %s226 = sphi 0, %s224
      %s227 = sphi 0, %s226
      %s241 = sphi 0, %s227
      %s245 = sphi 0, %s245
      %s247 = sphi 0, %s245
      %s248 = sphi 0, %s247
      %s262 = sphi 0, %s248
      %s266 = sphi 0, %s266
      %s268 = sphi 0, %s266
      %s269 = sphi 0, %s268
      %s283 = sphi 0, %s269
      %s289 = sphi 0, %s291
      %s292 = sphi 0, %s289
      %s293 = sphi 0, %s292
      %s309 = sphi 0, %s293
    $region4: #{poincare_vgg_forward.1} parent=1 // loop_header_branch
      %25 = sbr.rel (%p23) target = $region8
    $region5: #{poincare_vgg_forward.1} parent=1 // loop_body
      %s27 = ssub.s32 %s22, 1
      %s28 = ssub.s32 %s22, 2
      %s29 = sadd.s32 %s22, 1
      %s30 = ssub.s32 %s22, %s29
      %p31 = scmp.eq.s32.totalorder %s30, 0
      %s33 = sadd.s32 %s32, 1
      %s34 = scalar_select %p31, %s32, %s33
      %p37 = pneg %p31
      %p38 = scmp.eq.s32.totalorder %s22, 1
      %p39 = por %p37, %p38
      %p40 = scmp.ne.s32.totalorder %s32, %s35
      %p41 = scmp.eq.s32.totalorder %s22, 0
      %p42 = por %p40, %p41
      %p43 = scmp.ne.s32.totalorder %s32, %s35
      %p44 = scmp.eq.s32.totalorder %s27, 1
      %p45 = por %p43, %p44
      %p46 = scmp.ne.s32.totalorder %s35, %s36
      %p47 = scmp.eq.s32.totalorder %s27, 0
      %p48 = por %p46, %p47
      %p49 = scmp.ne.s32.totalorder %s35, %s36
      %p50 = scmp.eq.s32.totalorder %s28, 1
      %p51 = por %p49, %p50
      %p53 = scmp.ne.s32.totalorder %s36, %s52
      %p54 = scmp.eq.s32.totalorder %s28, 0
      %p55 = por %p53, %p54
      %s57 = sadd.s32 %s56, 1
      %p60 = scmp.eq.s32.totalorder %s22, 1
      %p61 = scmp.ne.s32.totalorder %s56, %s58
      %p62 = scmp.eq.s32.totalorder %s22, 0
      %p63 = por %p61, %p62
      %p64 = scmp.ne.s32.totalorder %s56, %s58
      %p65 = scmp.eq.s32.totalorder %s27, 1
      %p66 = por %p64, %p65
      %p67 = scmp.ne.s32.totalorder %s58, %s59
      %p68 = scmp.eq.s32.totalorder %s27, 0
      %p69 = por %p67, %p68
      %p70 = scmp.ne.s32.totalorder %s58, %s59
      %p71 = scmp.eq.s32.totalorder %s28, 1
      %p72 = por %p70, %p71
      %p74 = scmp.ne.s32.totalorder %s59, %s73
      %p75 = scmp.eq.s32.totalorder %s28, 0
      %p76 = por %p74, %p75
      %s78 = sadd.s32 %s77, 1
      %p81 = scmp.eq.s32.totalorder %s22, 1
      %p82 = scmp.ne.s32.totalorder %s77, %s79
      %p83 = scmp.eq.s32.totalorder %s22, 0
      %p84 = por %p82, %p83
      %p85 = scmp.ne.s32.totalorder %s77, %s79
      %p86 = scmp.eq.s32.totalorder %s27, 1
      %p87 = por %p85, %p86
      %p88 = scmp.ne.s32.totalorder %s79, %s80
      %p89 = scmp.eq.s32.totalorder %s27, 0
      %p90 = por %p88, %p89
      %p91 = scmp.ne.s32.totalorder %s79, %s80
      %p92 = scmp.eq.s32.totalorder %s28, 1
      %p93 = por %p91, %p92
      %p95 = scmp.ne.s32.totalorder %s80, %s94
      %p96 = scmp.eq.s32.totalorder %s28, 0
      %p97 = por %p95, %p96
      %s99 = sadd.s32 %s98, 1
      %p102 = scmp.eq.s32.totalorder %s22, 1
      %p103 = scmp.ne.s32.totalorder %s98, %s100
      %p104 = scmp.eq.s32.totalorder %s22, 0
      %p105 = por %p103, %p104
      %p106 = scmp.ne.s32.totalorder %s98, %s100
      %p107 = scmp.eq.s32.totalorder %s27, 1
      %p108 = por %p106, %p107
      %p109 = scmp.ne.s32.totalorder %s100, %s101
      %p110 = scmp.eq.s32.totalorder %s27, 0
      %p111 = por %p109, %p110
      %p112 = scmp.ne.s32.totalorder %s100, %s101
      %p113 = scmp.eq.s32.totalorder %s28, 1
      %p114 = por %p112, %p113
      %p116 = scmp.ne.s32.totalorder %s101, %s115
      %p117 = scmp.eq.s32.totalorder %s28, 0
      %p118 = por %p116, %p117
      %s120 = sadd.s32 %s119, 1
      %p123 = scmp.eq.s32.totalorder %s22, 1
      %p124 = scmp.ne.s32.totalorder %s119, %s121
      %p125 = scmp.eq.s32.totalorder %s22, 0
      %p126 = por %p124, %p125
      %p127 = scmp.ne.s32.totalorder %s119, %s121
      %p128 = scmp.eq.s32.totalorder %s27, 1
      %p129 = por %p127, %p128
      %p130 = scmp.ne.s32.totalorder %s121, %s122
      %p131 = scmp.eq.s32.totalorder %s27, 0
      %p132 = por %p130, %p131
      %p133 = scmp.ne.s32.totalorder %s121, %s122
      %p134 = scmp.eq.s32.totalorder %s28, 1
      %p135 = por %p133, %p134
      %p137 = scmp.ne.s32.totalorder %s122, %s136
      %p138 = scmp.eq.s32.totalorder %s28, 0
      %p139 = por %p137, %p138
      %s141 = sadd.s32 %s140, 1
      %p144 = scmp.eq.s32.totalorder %s22, 1
      %p145 = scmp.ne.s32.totalorder %s140, %s142
      %p146 = scmp.eq.s32.totalorder %s22, 0
      %p147 = por %p145, %p146
      %p148 = scmp.ne.s32.totalorder %s140, %s142
      %p149 = scmp.eq.s32.totalorder %s27, 1
      %p150 = por %p148, %p149
      %p151 = scmp.ne.s32.totalorder %s142, %s143
      %p152 = scmp.eq.s32.totalorder %s27, 0
      %p153 = por %p151, %p152
      %p154 = scmp.ne.s32.totalorder %s142, %s143
      %p155 = scmp.eq.s32.totalorder %s28, 1
      %p156 = por %p154, %p155
      %p158 = scmp.ne.s32.totalorder %s143, %s157
      %p159 = scmp.eq.s32.totalorder %s28, 0
      %p160 = por %p158, %p159
      %s162 = sadd.s32 %s161, 1
      %p165 = scmp.eq.s32.totalorder %s22, 1
      %p166 = scmp.ne.s32.totalorder %s161, %s163
      %p167 = scmp.eq.s32.totalorder %s22, 0
      %p168 = por %p166, %p167
      %p169 = scmp.ne.s32.totalorder %s161, %s163
      %p170 = scmp.eq.s32.totalorder %s27, 1
      %p171 = por %p169, %p170
      %p172 = scmp.ne.s32.totalorder %s163, %s164
      %p173 = scmp.eq.s32.totalorder %s27, 0
      %p174 = por %p172, %p173
      %p175 = scmp.ne.s32.totalorder %s163, %s164
      %p176 = scmp.eq.s32.totalorder %s28, 1
      %p177 = por %p175, %p176
      %p179 = scmp.ne.s32.totalorder %s164, %s178
      %p180 = scmp.eq.s32.totalorder %s28, 0
      %p181 = por %p179, %p180
      %s183 = sadd.s32 %s182, 1
      %p186 = scmp.eq.s32.totalorder %s22, 1
      %p187 = scmp.ne.s32.totalorder %s182, %s184
      %p188 = scmp.eq.s32.totalorder %s22, 0
      %p189 = por %p187, %p188
      %p190 = scmp.ne.s32.totalorder %s182, %s184
      %p191 = scmp.eq.s32.totalorder %s27, 1
      %p192 = por %p190, %p191
      %p193 = scmp.ne.s32.totalorder %s184, %s185
      %p194 = scmp.eq.s32.totalorder %s27, 0
      %p195 = por %p193, %p194
      %p196 = scmp.ne.s32.totalorder %s184, %s185
      %p197 = scmp.eq.s32.totalorder %s28, 1
      %p198 = por %p196, %p197
      %p200 = scmp.ne.s32.totalorder %s185, %s199
      %p201 = scmp.eq.s32.totalorder %s28, 0
      %p202 = por %p200, %p201
      %s204 = sadd.s32 %s203, 1
      %p207 = scmp.eq.s32.totalorder %s22, 1
      %p208 = scmp.ne.s32.totalorder %s203, %s205
      %p209 = scmp.eq.s32.totalorder %s22, 0
      %p210 = por %p208, %p209
      %p211 = scmp.ne.s32.totalorder %s203, %s205
      %p212 = scmp.eq.s32.totalorder %s27, 1
      %p213 = por %p211, %p212
      %p214 = scmp.ne.s32.totalorder %s205, %s206
      %p215 = scmp.eq.s32.totalorder %s27, 0
      %p216 = por %p214, %p215
      %p217 = scmp.ne.s32.totalorder %s205, %s206
      %p218 = scmp.eq.s32.totalorder %s28, 1
      %p219 = por %p217, %p218
      %p221 = scmp.ne.s32.totalorder %s206, %s220
      %p222 = scmp.eq.s32.totalorder %s28, 0
      %p223 = por %p221, %p222
      %s225 = sadd.s32 %s224, 1
      %p228 = scmp.eq.s32.totalorder %s22, 1
      %p229 = scmp.ne.s32.totalorder %s224, %s226
      %p230 = scmp.eq.s32.totalorder %s22, 0
      %p231 = por %p229, %p230
      %p232 = scmp.ne.s32.totalorder %s224, %s226
      %p233 = scmp.eq.s32.totalorder %s27, 1
      %p234 = por %p232, %p233
      %p235 = scmp.ne.s32.totalorder %s226, %s227
      %p236 = scmp.eq.s32.totalorder %s27, 0
      %p237 = por %p235, %p236
      %p238 = scmp.ne.s32.totalorder %s226, %s227
      %p239 = scmp.eq.s32.totalorder %s28, 1
      %p240 = por %p238, %p239
      %p242 = scmp.ne.s32.totalorder %s227, %s241
      %p243 = scmp.eq.s32.totalorder %s28, 0
      %p244 = por %p242, %p243
      %s246 = sadd.s32 %s245, 1
      %p249 = scmp.eq.s32.totalorder %s22, 1
      %p250 = scmp.ne.s32.totalorder %s245, %s247
      %p251 = scmp.eq.s32.totalorder %s22, 0
      %p252 = por %p250, %p251
      %p253 = scmp.ne.s32.totalorder %s245, %s247
      %p254 = scmp.eq.s32.totalorder %s27, 1
      %p255 = por %p253, %p254
      %p256 = scmp.ne.s32.totalorder %s247, %s248
      %p257 = scmp.eq.s32.totalorder %s27, 0
      %p258 = por %p256, %p257
      %p259 = scmp.ne.s32.totalorder %s247, %s248
      %p260 = scmp.eq.s32.totalorder %s28, 1
      %p261 = por %p259, %p260
      %p263 = scmp.ne.s32.totalorder %s248, %s262
      %p264 = scmp.eq.s32.totalorder %s28, 0
      %p265 = por %p263, %p264
      %s267 = sadd.s32 %s266, 1
      %p270 = scmp.eq.s32.totalorder %s22, 1
      %p271 = scmp.ne.s32.totalorder %s266, %s268
      %p272 = scmp.eq.s32.totalorder %s22, 0
      %p273 = por %p271, %p272
      %p274 = scmp.ne.s32.totalorder %s266, %s268
      %p275 = scmp.eq.s32.totalorder %s27, 1
      %p276 = por %p274, %p275
      %p277 = scmp.ne.s32.totalorder %s268, %s269
      %p278 = scmp.eq.s32.totalorder %s27, 0
      %p279 = por %p277, %p278
      %p280 = scmp.ne.s32.totalorder %s268, %s269
      %p281 = scmp.eq.s32.totalorder %s28, 1
      %p282 = por %p280, %p281
      %p284 = scmp.ne.s32.totalorder %s269, %s283
      %p285 = scmp.eq.s32.totalorder %s28, 0
      %p286 = por %p284, %p285
      %s287 = ssub.s32 %s22, %s29
      %p288 = scmp.eq.s32.totalorder %s287, 0
      %s290 = sadd.s32 %s289, 1
      %s291 = scalar_select %p288, %s289, %s290
      %p294 = pneg %p288
      %p295 = scmp.eq.s32.totalorder %s22, 1
      %p296 = por %p294, %p295
      %p297 = scmp.ne.s32.totalorder %s289, %s292
      %p298 = scmp.eq.s32.totalorder %s22, 0
      %p299 = por %p297, %p298
      %p300 = scmp.ne.s32.totalorder %s289, %s292
      %p301 = scmp.eq.s32.totalorder %s27, 1
      %p302 = por %p300, %p301
      %p303 = scmp.ne.s32.totalorder %s292, %s293
      %p304 = scmp.eq.s32.totalorder %s27, 0
      %p305 = por %p303, %p304
      %p306 = scmp.ne.s32.totalorder %s292, %s293
      %p307 = scmp.eq.s32.totalorder %s28, 1
      %p308 = por %p306, %p307
      %p310 = scmp.ne.s32.totalorder %s293, %s309
      %p311 = scmp.eq.s32.totalorder %s28, 0
      %p312 = por %p310, %p311
      %p313 = scmp.le.s32.totalorder 1, %s22
      %p314 = scmp.lt.s32.totalorder %s22, 3
      %p315 = pnand %p313, %p314
      %p316 = pneg %p315
      // Predicated region
      $region9: #{poincare_vgg_forward.1} parent=5 // pred_check
        _
      $region10: #{poincare_vgg_forward.1} parent=5 // pred_check_branch
        %318 = sbr.rel (%p315) target = $region12
      $region11: #{poincare_vgg_forward.1} parent=5 // pred_region
        %s319 = ssub.s32 %s22, 1
        // Predicated region
        $region13: #{poincare_vgg_forward.1} parent=11 // pred_check
          %p320 = pneg %p69
        $region14: #{poincare_vgg_forward.1} parent=11 // pred_check_branch
          %322 = sbr.rel (%p320) target = $region16
        $region15: #{poincare_vgg_forward.1} parent=11 // pred_region
          _
        $region16: #{poincare_vgg_forward.1} parent=11 // pred_fallthru
          _
        // Predicated region
        $region17: #{poincare_vgg_forward.1} parent=11 // pred_check
          %p323 = pneg %p90
        $region18: #{poincare_vgg_forward.1} parent=11 // pred_check_branch
          %325 = sbr.rel (%p323) target = $region20
        $region19: #{poincare_vgg_forward.1} parent=11 // pred_region
          _
        $region20: #{poincare_vgg_forward.1} parent=11 // pred_fallthru
          _
        // Predicated region
        $region21: #{poincare_vgg_forward.1} parent=11 // pred_check
          %p326 = pneg %p111
        $region22: #{poincare_vgg_forward.1} parent=11 // pred_check_branch
          %328 = sbr.rel (%p326) target = $region24
        $region23: #{poincare_vgg_forward.1} parent=11 // pred_region
          _
        $region24: #{poincare_vgg_forward.1} parent=11 // pred_fallthru
          _
        // Predicated region
        $region25: #{poincare_vgg_forward.1} parent=11 // pred_check
          %p329 = pneg %p132
        $region26: #{poincare_vgg_forward.1} parent=11 // pred_check_branch
          %331 = sbr.rel (%p329) target = $region28
        $region27: #{poincare_vgg_forward.1} parent=11 // pred_region
          %333 = vsyncadd [#allocation6], 0
          %s334 = sshll.u32 %s4, 4
          %s335 = int_to_ptr.hbm [resolvable:$true] %s334
          %s336 = sshll.u32 [#allocation5], 4
          %s337 = int_to_ptr.vmem [resolvable:$true] %s336
          %342 = dma.hbm_to_vmem [thread:$0]  %s335, 18432, %s337, [#allocation6], 128, 128, 8
        $region28: #{poincare_vgg_forward.1} parent=11 // pred_fallthru
          _
        // Predicated region
        $region29: #{poincare_vgg_forward.1} parent=11 // pred_check
          %p343 = pneg %p153
        $region30: #{poincare_vgg_forward.1} parent=11 // pred_check_branch
          %345 = sbr.rel (%p343) target = $region32
        $region31: #{poincare_vgg_forward.1} parent=11 // pred_region
          _
        $region32: #{poincare_vgg_forward.1} parent=11 // pred_fallthru
          _
        // Predicated region
        $region33: #{poincare_vgg_forward.1} parent=11 // pred_check
          %p346 = pneg %p174
        $region34: #{poincare_vgg_forward.1} parent=11 // pred_check_branch
          %348 = sbr.rel (%p346) target = $region36
        $region35: #{poincare_vgg_forward.1} parent=11 // pred_region
          _
        $region36: #{poincare_vgg_forward.1} parent=11 // pred_fallthru
          _
        // Predicated region
        $region37: #{poincare_vgg_forward.1} parent=11 // pred_check
          %p349 = pneg %p195
        $region38: #{poincare_vgg_forward.1} parent=11 // pred_check_branch
          %351 = sbr.rel (%p349) target = $region40
        $region39: #{poincare_vgg_forward.1} parent=11 // pred_region
          _
        $region40: #{poincare_vgg_forward.1} parent=11 // pred_fallthru
          _
        // Predicated region
        $region41: #{poincare_vgg_forward.1} parent=11 // pred_check
          %p352 = pneg %p216
        $region42: #{poincare_vgg_forward.1} parent=11 // pred_check_branch
          %354 = sbr.rel (%p352) target = $region44
        $region43: #{poincare_vgg_forward.1} parent=11 // pred_region
          _
        $region44: #{poincare_vgg_forward.1} parent=11 // pred_fallthru
          _
        // Predicated region
        $region45: #{poincare_vgg_forward.1} parent=11 // pred_check
          %p355 = pneg %p237
        $region46: #{poincare_vgg_forward.1} parent=11 // pred_check_branch
          %357 = sbr.rel (%p355) target = $region48
        $region47: #{poincare_vgg_forward.1} parent=11 // pred_region
          _
        $region48: #{poincare_vgg_forward.1} parent=11 // pred_fallthru
          _
        // Predicated region
        $region49: #{poincare_vgg_forward.1} parent=11 // pred_check
          %p358 = pneg %p258
        $region50: #{poincare_vgg_forward.1} parent=11 // pred_check_branch
          %360 = sbr.rel (%p358) target = $region52
        $region51: #{poincare_vgg_forward.1} parent=11 // pred_region
          _
        $region52: #{poincare_vgg_forward.1} parent=11 // pred_fallthru
          _
        // Predicated region
        $region53: #{poincare_vgg_forward.1} parent=11 // pred_check
          %p361 = pneg %p279
        $region54: #{poincare_vgg_forward.1} parent=11 // pred_check_branch
          %363 = sbr.rel (%p361) target = $region56
        $region55: #{poincare_vgg_forward.1} parent=11 // pred_region
          _
        $region56: #{poincare_vgg_forward.1} parent=11 // pred_fallthru
          _
      $region12: #{poincare_vgg_forward.1} parent=5 // pred_fallthru
        _
      %p364 = scmp.lt.s32.totalorder %s22, 2
      // Predicated region
      $region57: #{poincare_vgg_forward.1} parent=5 // pred_check
        %p365 = pneg %p364
      $region58: #{poincare_vgg_forward.1} parent=5 // pred_check_branch
        %367 = sbr.rel (%p365) target = $region60
      $region59: #{poincare_vgg_forward.1} parent=5 // pred_region
        // Predicated region
        $region61: #{poincare_vgg_forward.1} parent=59 // pred_check
          %p368 = pneg %p42
        $region62: #{poincare_vgg_forward.1} parent=59 // pred_check_branch
          %370 = sbr.rel (%p368) target = $region64
        $region63: #{poincare_vgg_forward.1} parent=59 // pred_region
          %p371 = scmp.lt.s32.totalorder %s22, 1
          %s372 = scalar_select %p371, %s22, 1
          %s373 = smul.addr %s372, 41
          %s374 = smul.addr %s373, 8
          %s375 = scalar_lea.vmem %s0, %s374
        $region64: #{poincare_vgg_forward.1} parent=59 // pred_fallthru
          _
      $region60: #{poincare_vgg_forward.1} parent=5 // pred_fallthru
        _
      %p376 = scmp.le.s32.totalorder 1, %s22
      %p377 = scmp.lt.s32.totalorder %s22, 3
      %p378 = pnand %p376, %p377
      %p379 = pneg %p378
      // Predicated region
      $region65: #{poincare_vgg_forward.1} parent=5 // pred_check
        _
      $region66: #{poincare_vgg_forward.1} parent=5 // pred_check_branch
        %381 = sbr.rel (%p378) target = $region68
      $region67: #{poincare_vgg_forward.1} parent=5 // pred_region
        %s382 = ssub.s32 %s22, 1
        // Predicated region
        $region69: #{poincare_vgg_forward.1} parent=67 // pred_check
          %p383 = pneg %p132
        $region70: #{poincare_vgg_forward.1} parent=67 // pred_check_branch
          %385 = sbr.rel (%p383) target = $region72
        $region71: #{poincare_vgg_forward.1} parent=67 // pred_region
          %387 = dma.done [#allocation6], 18432
        $region72: #{poincare_vgg_forward.1} parent=67 // pred_fallthru
          _
        %p388 = scmp.lt.s32.totalorder %s27, 1
        %s389 = scalar_select %p388, %s27, 1
        %s390 = smul.addr %s389, 41
        %s391 = smul.addr %s390, 8
        %s392 = scalar_lea.vmem %s0, %s391
        %p393 = pneg %p48
        %p394 = pneg %p45
        %p395 = pneg %p69
        %p396 = pneg %p66
        %p397 = pneg %p90
        %p398 = pneg %p87
        %p399 = pneg %p111
        %p400 = pneg %p108
        %p401 = pneg %p132
        %p402 = pneg %p129
        %p403 = pneg %p153
        %p404 = pneg %p150
        %p405 = pneg %p174
        %p406 = pneg %p171
        %p407 = pneg %p195
        %p408 = pneg %p192
        %p409 = pneg %p216
        %p410 = pneg %p213
        %p411 = pneg %p237
        %p412 = pneg %p234
        %p413 = pneg %p258
        %p414 = pneg %p255
        %p415 = pneg %p279
        %p416 = pneg %p276
        %p417 = pneg %p305
        %p418 = pneg %p302
        %s419 = sand.u32 %s292, 1
        %s420 = scalar_lea.sflag [#allocation7], %s419
        %s421 = sand.u32 %s292, 1
        %s422 = scalar_lea.vmem [#allocation8], %s421
        %p423 = scmp.lt.s32.totalorder %s27, 1
        %s424 = scalar_select %p423, %s27, 1
        %s425 = smul.addr %s424, 41
        %s426 = smul.addr %s425, 8
        %s427 = scalar_lea.vmem %s0, %s426
        %v428 = vld [vmem:[%s427] sm:$0xff]
        %v429 = vld [vmem:[%s427 + $0x8] sm:$0xff]
        %v430 = vld [vmem:[%s427 + $0x10] sm:$0xff]
        %v431 = vld [vmem:[%s427 + $0x18] sm:$0xff]
        %v432 = vld [vmem:[%s427 + $0x20] sm:$0xff]
        %v433 = vld [vmem:[%s427 + $0x28] sm:$0xff]
        %v434 = vld [vmem:[%s427 + $0x30] sm:$0xff]
        %v435 = vld [vmem:[%s427 + $0x38] sm:$0xff]
        %v436 = vld [vmem:[%s427 + $0x40] sm:$0xff]
        %v437 = vld [vmem:[%s427 + $0x48] sm:$0xff]
        %v438 = vld [vmem:[%s427 + $0x50] sm:$0xff]
        %v439 = vld [vmem:[%s427 + $0x58] sm:$0xff]
        %v440 = vld [vmem:[%s427 + $0x60] sm:$0xff]
        %v441 = vld [vmem:[%s427 + $0x68] sm:$0xff]
        %v442 = vld [vmem:[%s427 + $0x70] sm:$0xff]
        %v443 = vld [vmem:[%s427 + $0x78] sm:$0xff]
        %v444 = vld [vmem:[%s427 + $0x80] sm:$0xff]
        %v445 = vld [vmem:[%s427 + $0x88] sm:$0xff]
        %v446 = vld [vmem:[%s427 + $0x90] sm:$0xff]
        %v447 = vld [vmem:[%s427 + $0x98] sm:$0xff]
        %v448 = vld [vmem:[%s427 + $0xa0] sm:$0xff]
        %v449 = vld [vmem:[%s427 + $0xa8] sm:$0xff]
        %v450 = vld [vmem:[%s427 + $0xb0] sm:$0xff]
        %v451 = vld [vmem:[%s427 + $0xb8] sm:$0xff]
        %v452 = vld [vmem:[%s427 + $0xc0] sm:$0xff]
        %v453 = vld [vmem:[%s427 + $0xc8] sm:$0xff]
        %v454 = vld [vmem:[%s427 + $0xd0] sm:$0xff]
        %v455 = vld [vmem:[%s427 + $0xd8] sm:$0xff]
        %v456 = vld [vmem:[%s427 + $0xe0] sm:$0xff]
        %v457 = vld [vmem:[%s427 + $0xe8] sm:$0xff]
        %v458 = vld [vmem:[%s427 + $0xf0] sm:$0xff]
        %v459 = vld [vmem:[%s427 + $0xf8] sm:$0xff]
        %v460 = vld [vmem:[%s427 + $0x100] sm:$0xff]
        %v461 = vld [vmem:[%s427 + $0x108] sm:$0xff]
        %v462 = vld [vmem:[%s427 + $0x110] sm:$0xff]
        %v463 = vld [vmem:[%s427 + $0x118] sm:$0xff]
        %v464 = vld [vmem:[%s2] sm:$0xff]
        %v465 = vld [vmem:[%s427 + $0x1] sm:$0xff]
        %v466 = vld [vmem:[%s427 + $0x9] sm:$0xff]
        %v467 = vld [vmem:[%s427 + $0x11] sm:$0xff]
        %v468 = vld [vmem:[%s427 + $0x19] sm:$0xff]
        %v469 = vld [vmem:[%s427 + $0x21] sm:$0xff]
        %v470 = vld [vmem:[%s427 + $0x29] sm:$0xff]
        %v471 = vld [vmem:[%s427 + $0x31] sm:$0xff]
        %v472 = vld [vmem:[%s427 + $0x39] sm:$0xff]
        %v473 = vld [vmem:[%s427 + $0x41] sm:$0xff]
        %v474 = vld [vmem:[%s427 + $0x49] sm:$0xff]
        %v475 = vld [vmem:[%s427 + $0x51] sm:$0xff]
        %v476 = vld [vmem:[%s427 + $0x59] sm:$0xff]
        %v477 = vld [vmem:[%s427 + $0x61] sm:$0xff]
        %v478 = vld [vmem:[%s427 + $0x69] sm:$0xff]
        %v479 = vld [vmem:[%s427 + $0x71] sm:$0xff]
        %v480 = vld [vmem:[%s427 + $0x79] sm:$0xff]
        %v481 = vld [vmem:[%s427 + $0x81] sm:$0xff]
        %v482 = vld [vmem:[%s427 + $0x89] sm:$0xff]
        %v483 = vld [vmem:[%s427 + $0x91] sm:$0xff]
        %v484 = vld [vmem:[%s427 + $0x99] sm:$0xff]
        %v485 = vld [vmem:[%s427 + $0xa1] sm:$0xff]
        %v486 = vld [vmem:[%s427 + $0xa9] sm:$0xff]
        %v487 = vld [vmem:[%s427 + $0xb1] sm:$0xff]
        %v488 = vld [vmem:[%s427 + $0xb9] sm:$0xff]
        %v489 = vld [vmem:[%s427 + $0xc1] sm:$0xff]
        %v490 = vld [vmem:[%s427 + $0xc9] sm:$0xff]
        %v491 = vld [vmem:[%s427 + $0xd1] sm:$0xff]
        %v492 = vld [vmem:[%s427 + $0xd9] sm:$0xff]
        %v493 = vld [vmem:[%s427 + $0xe1] sm:$0xff]
        %v494 = vld [vmem:[%s427 + $0xe9] sm:$0xff]
        %v495 = vld [vmem:[%s427 + $0xf1] sm:$0xff]
        %v496 = vld [vmem:[%s427 + $0xf9] sm:$0xff]
        %v497 = vld [vmem:[%s427 + $0x101] sm:$0xff]
        %v498 = vld [vmem:[%s427 + $0x109] sm:$0xff]
        %v499 = vld [vmem:[%s427 + $0x111] sm:$0xff]
        %v500 = vld [vmem:[%s427 + $0x119] sm:$0xff]
        %s501 = scalar_lea.vmem %s2, 8
        %v502 = vld [vmem:[%s501] sm:$0xff]
        %vm503 = vcmask 64512
        %v505 = vsel %vm503, %v465, 0
        %v508 = vsel %vm503, %v466, 0
        %v511 = vsel %vm503, %v467, 0
        %v514 = vsel %vm503, %v468, 0
        %v517 = vsel %vm503, %v469, 0
        %v520 = vsel %vm503, %v470, 0
        %v523 = vsel %vm503, %v471, 0
        %v526 = vsel %vm503, %v472, 0
        %v529 = vsel %vm503, %v473, 0
        %v532 = vsel %vm503, %v474, 0
        %v535 = vsel %vm503, %v475, 0
        %v538 = vsel %vm503, %v476, 0
        %v541 = vsel %vm503, %v477, 0
        %v544 = vsel %vm503, %v478, 0
        %v547 = vsel %vm503, %v479, 0
        %v550 = vsel %vm503, %v480, 0
        %v553 = vsel %vm503, %v481, 0
        %v556 = vsel %vm503, %v482, 0
        %v559 = vsel %vm503, %v483, 0
        %v562 = vsel %vm503, %v484, 0
        %v565 = vsel %vm503, %v485, 0
        %v568 = vsel %vm503, %v486, 0
        %v571 = vsel %vm503, %v487, 0
        %v574 = vsel %vm503, %v488, 0
        %v577 = vsel %vm503, %v489, 0
        %v580 = vsel %vm503, %v490, 0
        %v583 = vsel %vm503, %v491, 0
        %v586 = vsel %vm503, %v492, 0
        %v589 = vsel %vm503, %v493, 0
        %v592 = vsel %vm503, %v494, 0
        %v595 = vsel %vm503, %v495, 0
        %v598 = vsel %vm503, %v496, 0
        %v601 = vsel %vm503, %v497, 0
        %v604 = vsel %vm503, %v498, 0
        %v607 = vsel %vm503, %v499, 0
        %v610 = vsel %vm503, %v500, 0
        %612 = vmatpush.msra.mxu0 0.0
        %613 = vmatpush.msra.mxu0 0.0
        %614 = vmatpush.msra.mxu0 0.0
        %615 = vmatpush.msra.mxu0 0.0
        %616 = vmatpush.msra.mxu0 0.0
        %617 = vmatpush.msra.mxu0 0.0
        %618 = vmatpush.msra.mxu0 0.0
        %619 = vmatpush.msra.mxu0 0.0
        %620 = vmatpush.msra.mxu0 0.0
        %621 = vmatpush.msra.mxu0 0.0
        %622 = vmatpush.msra.mxu0 0.0
        %623 = vmatpush.msra.mxu0 0.0
        %624 = vmatpush.msra.mxu0 0.0
        %625 = vmatpush.msra.mxu0 0.0
        %626 = vmatpush.msra.mxu0 0.0
        %627 = vmatpush.msra.mxu0 %v502
        %628 = vmatmul.f32.gmra.mxu0 %v505
        %v629 = vpop.f32.mrf.mxu0
        %v630 = vadd.f32 0.0, %v629
        %631 = vmatmul.f32.gmra.mxu0 %v508
        %v632 = vpop.f32.mrf.mxu0
        %v633 = vadd.f32 0.0, %v632
        %634 = vmatmul.f32.gmra.mxu0 %v511
        %v635 = vpop.f32.mrf.mxu0
        %v636 = vadd.f32 0.0, %v635
        %637 = vmatmul.f32.gmra.mxu0 %v514
        %v638 = vpop.f32.mrf.mxu0
        %v639 = vadd.f32 0.0, %v638
        %640 = vmatmul.f32.gmra.mxu0 %v517
        %v641 = vpop.f32.mrf.mxu0
        %v642 = vadd.f32 0.0, %v641
        %643 = vmatmul.f32.gmra.mxu0 %v520
        %v644 = vpop.f32.mrf.mxu0
        %v645 = vadd.f32 0.0, %v644
        %646 = vmatmul.f32.gmra.mxu0 %v523
        %v647 = vpop.f32.mrf.mxu0
        %v648 = vadd.f32 0.0, %v647
        %649 = vmatmul.f32.gmra.mxu0 %v526
        %v650 = vpop.f32.mrf.mxu0
        %v651 = vadd.f32 0.0, %v650
        %652 = vmatmul.f32.gmra.mxu0 %v529
        %v653 = vpop.f32.mrf.mxu0
        %v654 = vadd.f32 0.0, %v653
        %655 = vmatmul.f32.gmra.mxu0 %v532
        %v656 = vpop.f32.mrf.mxu0
        %v657 = vadd.f32 0.0, %v656
        %658 = vmatmul.f32.gmra.mxu0 %v535
        %v659 = vpop.f32.mrf.mxu0
        %v660 = vadd.f32 0.0, %v659
        %661 = vmatmul.f32.gmra.mxu0 %v538
        %v662 = vpop.f32.mrf.mxu0
        %v663 = vadd.f32 0.0, %v662
        %664 = vmatmul.f32.gmra.mxu0 %v541
        %v665 = vpop.f32.mrf.mxu0
        %v666 = vadd.f32 0.0, %v665
        %667 = vmatmul.f32.gmra.mxu0 %v544
        %v668 = vpop.f32.mrf.mxu0
        %v669 = vadd.f32 0.0, %v668
        %670 = vmatmul.f32.gmra.mxu0 %v547
        %v671 = vpop.f32.mrf.mxu0
        %v672 = vadd.f32 0.0, %v671
        %673 = vmatmul.f32.gmra.mxu0 %v550
        %v674 = vpop.f32.mrf.mxu0
        %v675 = vadd.f32 0.0, %v674
        %676 = vmatmul.f32.gmra.mxu0 %v553
        %v677 = vpop.f32.mrf.mxu0
        %v678 = vadd.f32 0.0, %v677
        %679 = vmatmul.f32.gmra.mxu0 %v556
        %v680 = vpop.f32.mrf.mxu0
        %v681 = vadd.f32 0.0, %v680
        %682 = vmatmul.f32.gmra.mxu0 %v559
        %v683 = vpop.f32.mrf.mxu0
        %v684 = vadd.f32 0.0, %v683
        %685 = vmatmul.f32.gmra.mxu0 %v562
        %v686 = vpop.f32.mrf.mxu0
        %v687 = vadd.f32 0.0, %v686
        %688 = vmatmul.f32.gmra.mxu0 %v565
        %v689 = vpop.f32.mrf.mxu0
        %v690 = vadd.f32 0.0, %v689
        %691 = vmatmul.f32.gmra.mxu0 %v568
        %v692 = vpop.f32.mrf.mxu0
        %v693 = vadd.f32 0.0, %v692
        %694 = vmatmul.f32.gmra.mxu0 %v571
        %v695 = vpop.f32.mrf.mxu0
        %v696 = vadd.f32 0.0, %v695
        %697 = vmatmul.f32.gmra.mxu0 %v574
        %v698 = vpop.f32.mrf.mxu0
        %v699 = vadd.f32 0.0, %v698
        %700 = vmatmul.f32.gmra.mxu0 %v577
        %v701 = vpop.f32.mrf.mxu0
        %v702 = vadd.f32 0.0, %v701
        %703 = vmatmul.f32.gmra.mxu0 %v580
        %v704 = vpop.f32.mrf.mxu0
        %v705 = vadd.f32 0.0, %v704
        %706 = vmatmul.f32.gmra.mxu0 %v583
        %v707 = vpop.f32.mrf.mxu0
        %v708 = vadd.f32 0.0, %v707
        %709 = vmatmul.f32.gmra.mxu0 %v586
        %v710 = vpop.f32.mrf.mxu0
        %v711 = vadd.f32 0.0, %v710
        %712 = vmatmul.f32.gmra.mxu0 %v589
        %v713 = vpop.f32.mrf.mxu0
        %v714 = vadd.f32 0.0, %v713
        %715 = vmatmul.f32.gmra.mxu0 %v592
        %v716 = vpop.f32.mrf.mxu0
        %v717 = vadd.f32 0.0, %v716
        %718 = vmatmul.f32.gmra.mxu0 %v595
        %v719 = vpop.f32.mrf.mxu0
        %v720 = vadd.f32 0.0, %v719
        %721 = vmatmul.f32.gmra.mxu0 %v598
        %v722 = vpop.f32.mrf.mxu0
        %v723 = vadd.f32 0.0, %v722
        %724 = vmatmul.f32.gmra.mxu0 %v601
        %v725 = vpop.f32.mrf.mxu0
        %v726 = vadd.f32 0.0, %v725
        %727 = vmatmul.f32.gmra.mxu0 %v604
        %v728 = vpop.f32.mrf.mxu0
        %v729 = vadd.f32 0.0, %v728
        %730 = vmatmul.f32.gmra.mxu0 %v607
        %v731 = vpop.f32.mrf.mxu0
        %v732 = vadd.f32 0.0, %v731
        %733 = vmatmul.f32.gmra.mxu0 %v610
        %v734 = vpop.f32.mrf.mxu0
        %v735 = vadd.f32 0.0, %v734
        %736 = vdwg.mxu0
        %v738 = vsel %vm503, %v428, 0
        %v741 = vsel %vm503, %v429, 0
        %v744 = vsel %vm503, %v430, 0
        %v747 = vsel %vm503, %v431, 0
        %v750 = vsel %vm503, %v432, 0
        %v753 = vsel %vm503, %v433, 0
        %v756 = vsel %vm503, %v434, 0
        %v759 = vsel %vm503, %v435, 0
        %v762 = vsel %vm503, %v436, 0
        %v765 = vsel %vm503, %v437, 0
        %v768 = vsel %vm503, %v438, 0
        %v771 = vsel %vm503, %v439, 0
        %v774 = vsel %vm503, %v440, 0
        %v777 = vsel %vm503, %v441, 0
        %v780 = vsel %vm503, %v442, 0
        %v783 = vsel %vm503, %v443, 0
        %v786 = vsel %vm503, %v444, 0
        %v789 = vsel %vm503, %v445, 0
        %v792 = vsel %vm503, %v446, 0
        %v795 = vsel %vm503, %v447, 0
        %v798 = vsel %vm503, %v448, 0
        %v801 = vsel %vm503, %v449, 0
        %v804 = vsel %vm503, %v450, 0
        %v807 = vsel %vm503, %v451, 0
        %v810 = vsel %vm503, %v452, 0
        %v813 = vsel %vm503, %v453, 0
        %v816 = vsel %vm503, %v454, 0
        %v819 = vsel %vm503, %v455, 0
        %v822 = vsel %vm503, %v456, 0
        %v825 = vsel %vm503, %v457, 0
        %v828 = vsel %vm503, %v458, 0
        %v831 = vsel %vm503, %v459, 0
        %v834 = vsel %vm503, %v460, 0
        %v837 = vsel %vm503, %v461, 0
        %v840 = vsel %vm503, %v462, 0
        %v843 = vsel %vm503, %v463, 0
        %845 = vmatpush.msra.mxu0 0.0
        %846 = vmatpush.msra.mxu0 0.0
        %847 = vmatpush.msra.mxu0 0.0
        %848 = vmatpush.msra.mxu0 0.0
        %849 = vmatpush.msra.mxu0 0.0
        %850 = vmatpush.msra.mxu0 0.0
        %851 = vmatpush.msra.mxu0 0.0
        %852 = vmatpush.msra.mxu0 0.0
        %853 = vmatpush.msra.mxu0 0.0
        %854 = vmatpush.msra.mxu0 0.0
        %855 = vmatpush.msra.mxu0 0.0
        %856 = vmatpush.msra.mxu0 0.0
        %857 = vmatpush.msra.mxu0 0.0
        %858 = vmatpush.msra.mxu0 0.0
        %859 = vmatpush.msra.mxu0 0.0
        %860 = vmatpush.msra.mxu0 %v464
        %861 = vmatmul.f32.gmra.mxu0 %v738
        %v862 = vpop.f32.mrf.mxu0
        %v863 = vadd.f32 %v630, %v862
        %864 = vmatmul.f32.gmra.mxu0 %v741
        %v865 = vpop.f32.mrf.mxu0
        %v866 = vadd.f32 %v633, %v865
        %867 = vmatmul.f32.gmra.mxu0 %v744
        %v868 = vpop.f32.mrf.mxu0
        %v869 = vadd.f32 %v636, %v868
        %870 = vmatmul.f32.gmra.mxu0 %v747
        %v871 = vpop.f32.mrf.mxu0
        %v872 = vadd.f32 %v639, %v871
        %873 = vmatmul.f32.gmra.mxu0 %v750
        %v874 = vpop.f32.mrf.mxu0
        %v875 = vadd.f32 %v642, %v874
        %876 = vmatmul.f32.gmra.mxu0 %v753
        %v877 = vpop.f32.mrf.mxu0
        %v878 = vadd.f32 %v645, %v877
        %879 = vmatmul.f32.gmra.mxu0 %v756
        %v880 = vpop.f32.mrf.mxu0
        %v881 = vadd.f32 %v648, %v880
        %882 = vmatmul.f32.gmra.mxu0 %v759
        %v883 = vpop.f32.mrf.mxu0
        %v884 = vadd.f32 %v651, %v883
        %885 = vmatmul.f32.gmra.mxu0 %v762
        %v886 = vpop.f32.mrf.mxu0
        %v887 = vadd.f32 %v654, %v886
        %888 = vmatmul.f32.gmra.mxu0 %v765
        %v889 = vpop.f32.mrf.mxu0
        %v890 = vadd.f32 %v657, %v889
        %891 = vmatmul.f32.gmra.mxu0 %v768
        %v892 = vpop.f32.mrf.mxu0
        %v893 = vadd.f32 %v660, %v892
        %894 = vmatmul.f32.gmra.mxu0 %v771
        %v895 = vpop.f32.mrf.mxu0
        %v896 = vadd.f32 %v663, %v895
        %897 = vmatmul.f32.gmra.mxu0 %v774
        %v898 = vpop.f32.mrf.mxu0
        %v899 = vadd.f32 %v666, %v898
        %900 = vmatmul.f32.gmra.mxu0 %v777
        %v901 = vpop.f32.mrf.mxu0
        %v902 = vadd.f32 %v669, %v901
        %903 = vmatmul.f32.gmra.mxu0 %v780
        %v904 = vpop.f32.mrf.mxu0
        %v905 = vadd.f32 %v672, %v904
        %906 = vmatmul.f32.gmra.mxu0 %v783
        %v907 = vpop.f32.mrf.mxu0
        %v908 = vadd.f32 %v675, %v907
        %909 = vmatmul.f32.gmra.mxu0 %v786
        %v910 = vpop.f32.mrf.mxu0
        %v911 = vadd.f32 %v678, %v910
        %912 = vmatmul.f32.gmra.mxu0 %v789
        %v913 = vpop.f32.mrf.mxu0
        %v914 = vadd.f32 %v681, %v913
        %915 = vmatmul.f32.gmra.mxu0 %v792
        %v916 = vpop.f32.mrf.mxu0
        %v917 = vadd.f32 %v684, %v916
        %918 = vmatmul.f32.gmra.mxu0 %v795
        %v919 = vpop.f32.mrf.mxu0
        %v920 = vadd.f32 %v687, %v919
        %921 = vmatmul.f32.gmra.mxu0 %v798
        %v922 = vpop.f32.mrf.mxu0
        %v923 = vadd.f32 %v690, %v922
        %924 = vmatmul.f32.gmra.mxu0 %v801
        %v925 = vpop.f32.mrf.mxu0
        %v926 = vadd.f32 %v693, %v925
        %927 = vmatmul.f32.gmra.mxu0 %v804
        %v928 = vpop.f32.mrf.mxu0
        %v929 = vadd.f32 %v696, %v928
        %930 = vmatmul.f32.gmra.mxu0 %v807
        %v931 = vpop.f32.mrf.mxu0
        %v932 = vadd.f32 %v699, %v931
        %933 = vmatmul.f32.gmra.mxu0 %v810
        %v934 = vpop.f32.mrf.mxu0
        %v935 = vadd.f32 %v702, %v934
        %936 = vmatmul.f32.gmra.mxu0 %v813
        %v937 = vpop.f32.mrf.mxu0
        %v938 = vadd.f32 %v705, %v937
        %939 = vmatmul.f32.gmra.mxu0 %v816
        %v940 = vpop.f32.mrf.mxu0
        %v941 = vadd.f32 %v708, %v940
        %942 = vmatmul.f32.gmra.mxu0 %v819
        %v943 = vpop.f32.mrf.mxu0
        %v944 = vadd.f32 %v711, %v943
        %945 = vmatmul.f32.gmra.mxu0 %v822
        %v946 = vpop.f32.mrf.mxu0
        %v947 = vadd.f32 %v714, %v946
        %948 = vmatmul.f32.gmra.mxu0 %v825
        %v949 = vpop.f32.mrf.mxu0
        %v950 = vadd.f32 %v717, %v949
        %951 = vmatmul.f32.gmra.mxu0 %v828
        %v952 = vpop.f32.mrf.mxu0
        %v953 = vadd.f32 %v720, %v952
        %954 = vmatmul.f32.gmra.mxu0 %v831
        %v955 = vpop.f32.mrf.mxu0
        %v956 = vadd.f32 %v723, %v955
        %957 = vmatmul.f32.gmra.mxu0 %v834
        %v958 = vpop.f32.mrf.mxu0
        %v959 = vadd.f32 %v726, %v958
        %960 = vmatmul.f32.gmra.mxu0 %v837
        %v961 = vpop.f32.mrf.mxu0
        %v962 = vadd.f32 %v729, %v961
        %963 = vmatmul.f32.gmra.mxu0 %v840
        %v964 = vpop.f32.mrf.mxu0
        %v965 = vadd.f32 %v732, %v964
        %966 = vmatmul.f32.gmra.mxu0 %v843
        %v967 = vpop.f32.mrf.mxu0
        %v968 = vadd.f32 %v735, %v967
        %969 = vdwg.mxu0
        %v970 = vld [vmem:[%s427 + $0x2] sm:$0xff]
        %v971 = vld [vmem:[%s427 + $0xa] sm:$0xff]
        %v972 = vld [vmem:[%s427 + $0x12] sm:$0xff]
        %v973 = vld [vmem:[%s427 + $0x1a] sm:$0xff]
        %v974 = vld [vmem:[%s427 + $0x22] sm:$0xff]
        %v975 = vld [vmem:[%s427 + $0x2a] sm:$0xff]
        %v976 = vld [vmem:[%s427 + $0x32] sm:$0xff]
        %v977 = vld [vmem:[%s427 + $0x3a] sm:$0xff]
        %v978 = vld [vmem:[%s427 + $0x42] sm:$0xff]
        %v979 = vld [vmem:[%s427 + $0x4a] sm:$0xff]
        %v980 = vld [vmem:[%s427 + $0x52] sm:$0xff]
        %v981 = vld [vmem:[%s427 + $0x5a] sm:$0xff]
        %v982 = vld [vmem:[%s427 + $0x62] sm:$0xff]
        %v983 = vld [vmem:[%s427 + $0x6a] sm:$0xff]
        %v984 = vld [vmem:[%s427 + $0x72] sm:$0xff]
        %v985 = vld [vmem:[%s427 + $0x7a] sm:$0xff]
        %v986 = vld [vmem:[%s427 + $0x82] sm:$0xff]
        %v987 = vld [vmem:[%s427 + $0x8a] sm:$0xff]
        %v988 = vld [vmem:[%s427 + $0x92] sm:$0xff]
        %v989 = vld [vmem:[%s427 + $0x9a] sm:$0xff]
        %v990 = vld [vmem:[%s427 + $0xa2] sm:$0xff]
        %v991 = vld [vmem:[%s427 + $0xaa] sm:$0xff]
        %v992 = vld [vmem:[%s427 + $0xb2] sm:$0xff]
        %v993 = vld [vmem:[%s427 + $0xba] sm:$0xff]
        %v994 = vld [vmem:[%s427 + $0xc2] sm:$0xff]
        %v995 = vld [vmem:[%s427 + $0xca] sm:$0xff]
        %v996 = vld [vmem:[%s427 + $0xd2] sm:$0xff]
        %v997 = vld [vmem:[%s427 + $0xda] sm:$0xff]
        %v998 = vld [vmem:[%s427 + $0xe2] sm:$0xff]
        %v999 = vld [vmem:[%s427 + $0xea] sm:$0xff]
        %v1000 = vld [vmem:[%s427 + $0xf2] sm:$0xff]
        %v1001 = vld [vmem:[%s427 + $0xfa] sm:$0xff]
        %v1002 = vld [vmem:[%s427 + $0x102] sm:$0xff]
        %v1003 = vld [vmem:[%s427 + $0x10a] sm:$0xff]
        %v1004 = vld [vmem:[%s427 + $0x112] sm:$0xff]
        %v1005 = vld [vmem:[%s427 + $0x11a] sm:$0xff]
        %s1006 = scalar_lea.vmem %s2, 16
        %v1007 = vld [vmem:[%s1006] sm:$0xff]
        %v1009 = vsel %vm503, %v970, 0
        %v1012 = vsel %vm503, %v971, 0
        %v1015 = vsel %vm503, %v972, 0
        %v1018 = vsel %vm503, %v973, 0
        %v1021 = vsel %vm503, %v974, 0
        %v1024 = vsel %vm503, %v975, 0
        %v1027 = vsel %vm503, %v976, 0
        %v1030 = vsel %vm503, %v977, 0
        %v1033 = vsel %vm503, %v978, 0
        %v1036 = vsel %vm503, %v979, 0
        %v1039 = vsel %vm503, %v980, 0
        %v1042 = vsel %vm503, %v981, 0
        %v1045 = vsel %vm503, %v982, 0
        %v1048 = vsel %vm503, %v983, 0
        %v1051 = vsel %vm503, %v984, 0
        %v1054 = vsel %vm503, %v985, 0
        %v1057 = vsel %vm503, %v986, 0
        %v1060 = vsel %vm503, %v987, 0
        %v1063 = vsel %vm503, %v988, 0
        %v1066 = vsel %vm503, %v989, 0
        %v1069 = vsel %vm503, %v990, 0
        %v1072 = vsel %vm503, %v991, 0
        %v1075 = vsel %vm503, %v992, 0
        %v1078 = vsel %vm503, %v993, 0
        %v1081 = vsel %vm503, %v994, 0
        %v1084 = vsel %vm503, %v995, 0
        %v1087 = vsel %vm503, %v996, 0
        %v1090 = vsel %vm503, %v997, 0
        %v1093 = vsel %vm503, %v998, 0
        %v1096 = vsel %vm503, %v999, 0
        %v1099 = vsel %vm503, %v1000, 0
        %v1102 = vsel %vm503, %v1001, 0
        %v1105 = vsel %vm503, %v1002, 0
        %v1108 = vsel %vm503, %v1003, 0
        %v1111 = vsel %vm503, %v1004, 0
        %v1114 = vsel %vm503, %v1005, 0
        %1116 = vmatpush.msra.mxu0 0.0
        %1117 = vmatpush.msra.mxu0 0.0
        %1118 = vmatpush.msra.mxu0 0.0
        %1119 = vmatpush.msra.mxu0 0.0
        %1120 = vmatpush.msra.mxu0 0.0
        %1121 = vmatpush.msra.mxu0 0.0
        %1122 = vmatpush.msra.mxu0 0.0
        %1123 = vmatpush.msra.mxu0 0.0
        %1124 = vmatpush.msra.mxu0 0.0
        %1125 = vmatpush.msra.mxu0 0.0
        %1126 = vmatpush.msra.mxu0 0.0
        %1127 = vmatpush.msra.mxu0 0.0
        %1128 = vmatpush.msra.mxu0 0.0
        %1129 = vmatpush.msra.mxu0 0.0
        %1130 = vmatpush.msra.mxu0 0.0
        %1131 = vmatpush.msra.mxu0 %v1007
        %1132 = vmatmul.f32.gmra.mxu0 %v1009
        %v1133 = vpop.f32.mrf.mxu0
        %v1134 = vadd.f32 0.0, %v1133
        %1135 = vmatmul.f32.gmra.mxu0 %v1012
        %v1136 = vpop.f32.mrf.mxu0
        %v1137 = vadd.f32 0.0, %v1136
        %1138 = vmatmul.f32.gmra.mxu0 %v1015
        %v1139 = vpop.f32.mrf.mxu0
        %v1140 = vadd.f32 0.0, %v1139
        %1141 = vmatmul.f32.gmra.mxu0 %v1018
        %v1142 = vpop.f32.mrf.mxu0
        %v1143 = vadd.f32 0.0, %v1142
        %1144 = vmatmul.f32.gmra.mxu0 %v1021
        %v1145 = vpop.f32.mrf.mxu0
        %v1146 = vadd.f32 0.0, %v1145
        %1147 = vmatmul.f32.gmra.mxu0 %v1024
        %v1148 = vpop.f32.mrf.mxu0
        %v1149 = vadd.f32 0.0, %v1148
        %1150 = vmatmul.f32.gmra.mxu0 %v1027
        %v1151 = vpop.f32.mrf.mxu0
        %v1152 = vadd.f32 0.0, %v1151
        %1153 = vmatmul.f32.gmra.mxu0 %v1030
        %v1154 = vpop.f32.mrf.mxu0
        %v1155 = vadd.f32 0.0, %v1154
        %1156 = vmatmul.f32.gmra.mxu0 %v1033
        %v1157 = vpop.f32.mrf.mxu0
        %v1158 = vadd.f32 0.0, %v1157
        %1159 = vmatmul.f32.gmra.mxu0 %v1036
        %v1160 = vpop.f32.mrf.mxu0
        %v1161 = vadd.f32 0.0, %v1160
        %1162 = vmatmul.f32.gmra.mxu0 %v1039
        %v1163 = vpop.f32.mrf.mxu0
        %v1164 = vadd.f32 0.0, %v1163
        %1165 = vmatmul.f32.gmra.mxu0 %v1042
        %v1166 = vpop.f32.mrf.mxu0
        %v1167 = vadd.f32 0.0, %v1166
        %1168 = vmatmul.f32.gmra.mxu0 %v1045
        %v1169 = vpop.f32.mrf.mxu0
        %v1170 = vadd.f32 0.0, %v1169
        %1171 = vmatmul.f32.gmra.mxu0 %v1048
        %v1172 = vpop.f32.mrf.mxu0
        %v1173 = vadd.f32 0.0, %v1172
        %1174 = vmatmul.f32.gmra.mxu0 %v1051
        %v1175 = vpop.f32.mrf.mxu0
        %v1176 = vadd.f32 0.0, %v1175
        %1177 = vmatmul.f32.gmra.mxu0 %v1054
        %v1178 = vpop.f32.mrf.mxu0
        %v1179 = vadd.f32 0.0, %v1178
        %1180 = vmatmul.f32.gmra.mxu0 %v1057
        %v1181 = vpop.f32.mrf.mxu0
        %v1182 = vadd.f32 0.0, %v1181
        %1183 = vmatmul.f32.gmra.mxu0 %v1060
        %v1184 = vpop.f32.mrf.mxu0
        %v1185 = vadd.f32 0.0, %v1184
        %1186 = vmatmul.f32.gmra.mxu0 %v1063
        %v1187 = vpop.f32.mrf.mxu0
        %v1188 = vadd.f32 0.0, %v1187
        %1189 = vmatmul.f32.gmra.mxu0 %v1066
        %v1190 = vpop.f32.mrf.mxu0
        %v1191 = vadd.f32 0.0, %v1190
        %1192 = vmatmul.f32.gmra.mxu0 %v1069
        %v1193 = vpop.f32.mrf.mxu0
        %v1194 = vadd.f32 0.0, %v1193
        %1195 = vmatmul.f32.gmra.mxu0 %v1072
        %v1196 = vpop.f32.mrf.mxu0
        %v1197 = vadd.f32 0.0, %v1196
        %1198 = vmatmul.f32.gmra.mxu0 %v1075
        %v1199 = vpop.f32.mrf.mxu0
        %v1200 = vadd.f32 0.0, %v1199
        %1201 = vmatmul.f32.gmra.mxu0 %v1078
        %v1202 = vpop.f32.mrf.mxu0
        %v1203 = vadd.f32 0.0, %v1202
        %1204 = vmatmul.f32.gmra.mxu0 %v1081
        %v1205 = vpop.f32.mrf.mxu0
        %v1206 = vadd.f32 0.0, %v1205
        %1207 = vmatmul.f32.gmra.mxu0 %v1084
        %v1208 = vpop.f32.mrf.mxu0
        %v1209 = vadd.f32 0.0, %v1208
        %1210 = vmatmul.f32.gmra.mxu0 %v1087
        %v1211 = vpop.f32.mrf.mxu0
        %v1212 = vadd.f32 0.0, %v1211
        %1213 = vmatmul.f32.gmra.mxu0 %v1090
        %v1214 = vpop.f32.mrf.mxu0
        %v1215 = vadd.f32 0.0, %v1214
        %1216 = vmatmul.f32.gmra.mxu0 %v1093
        %v1217 = vpop.f32.mrf.mxu0
        %v1218 = vadd.f32 0.0, %v1217
        %1219 = vmatmul.f32.gmra.mxu0 %v1096
        %v1220 = vpop.f32.mrf.mxu0
        %v1221 = vadd.f32 0.0, %v1220
        %1222 = vmatmul.f32.gmra.mxu0 %v1099
        %v1223 = vpop.f32.mrf.mxu0
        %v1224 = vadd.f32 0.0, %v1223
        %1225 = vmatmul.f32.gmra.mxu0 %v1102
        %v1226 = vpop.f32.mrf.mxu0
        %v1227 = vadd.f32 0.0, %v1226
        %1228 = vmatmul.f32.gmra.mxu0 %v1105
        %v1229 = vpop.f32.mrf.mxu0
        %v1230 = vadd.f32 0.0, %v1229
        %1231 = vmatmul.f32.gmra.mxu0 %v1108
        %v1232 = vpop.f32.mrf.mxu0
        %v1233 = vadd.f32 0.0, %v1232
        %1234 = vmatmul.f32.gmra.mxu0 %v1111
        %v1235 = vpop.f32.mrf.mxu0
        %v1236 = vadd.f32 0.0, %v1235
        %1237 = vmatmul.f32.gmra.mxu0 %v1114
        %v1238 = vpop.f32.mrf.mxu0
        %v1239 = vadd.f32 0.0, %v1238
        %1240 = vdwg.mxu0
        %v1241 = vadd.f32 %v863, %v1134
        %v1242 = vadd.f32 %v866, %v1137
        %v1243 = vadd.f32 %v869, %v1140
        %v1244 = vadd.f32 %v872, %v1143
        %v1245 = vadd.f32 %v875, %v1146
        %v1246 = vadd.f32 %v878, %v1149
        %v1247 = vadd.f32 %v881, %v1152
        %v1248 = vadd.f32 %v884, %v1155
        %v1249 = vadd.f32 %v887, %v1158
        %v1250 = vadd.f32 %v890, %v1161
        %v1251 = vadd.f32 %v893, %v1164
        %v1252 = vadd.f32 %v896, %v1167
        %v1253 = vadd.f32 %v899, %v1170
        %v1254 = vadd.f32 %v902, %v1173
        %v1255 = vadd.f32 %v905, %v1176
        %v1256 = vadd.f32 %v908, %v1179
        %v1257 = vadd.f32 %v911, %v1182
        %v1258 = vadd.f32 %v914, %v1185
        %v1259 = vadd.f32 %v917, %v1188
        %v1260 = vadd.f32 %v920, %v1191
        %v1261 = vadd.f32 %v923, %v1194
        %v1262 = vadd.f32 %v926, %v1197
        %v1263 = vadd.f32 %v929, %v1200
        %v1264 = vadd.f32 %v932, %v1203
        %v1265 = vadd.f32 %v935, %v1206
        %v1266 = vadd.f32 %v938, %v1209
        %v1267 = vadd.f32 %v941, %v1212
        %v1268 = vadd.f32 %v944, %v1215
        %v1269 = vadd.f32 %v947, %v1218
        %v1270 = vadd.f32 %v950, %v1221
        %v1271 = vadd.f32 %v953, %v1224
        %v1272 = vadd.f32 %v956, %v1227
        %v1273 = vadd.f32 %v959, %v1230
        %v1274 = vadd.f32 %v962, %v1233
        %v1275 = vadd.f32 %v965, %v1236
        %v1276 = vadd.f32 %v968, %v1239
        %v1277 = vld [vmem:[%s427 + $0x12] sm:$0xff]
        %v1278 = vld [vmem:[%s427 + $0x1a] sm:$0xff]
        %v1279 = vld [vmem:[%s427 + $0x22] sm:$0xff]
        %v1280 = vld [vmem:[%s427 + $0x2a] sm:$0xff]
        %v1281 = vld [vmem:[%s427 + $0x32] sm:$0xff]
        %v1282 = vld [vmem:[%s427 + $0x3a] sm:$0xff]
        %v1283 = vld [vmem:[%s427 + $0x42] sm:$0xff]
        %v1284 = vld [vmem:[%s427 + $0x4a] sm:$0xff]
        %v1285 = vld [vmem:[%s427 + $0x52] sm:$0xff]
        %v1286 = vld [vmem:[%s427 + $0x5a] sm:$0xff]
        %v1287 = vld [vmem:[%s427 + $0x62] sm:$0xff]
        %v1288 = vld [vmem:[%s427 + $0x6a] sm:$0xff]
        %v1289 = vld [vmem:[%s427 + $0x72] sm:$0xff]
        %v1290 = vld [vmem:[%s427 + $0x7a] sm:$0xff]
        %v1291 = vld [vmem:[%s427 + $0x82] sm:$0xff]
        %v1292 = vld [vmem:[%s427 + $0x8a] sm:$0xff]
        %v1293 = vld [vmem:[%s427 + $0x92] sm:$0xff]
        %v1294 = vld [vmem:[%s427 + $0x9a] sm:$0xff]
        %v1295 = vld [vmem:[%s427 + $0xa2] sm:$0xff]
        %v1296 = vld [vmem:[%s427 + $0xaa] sm:$0xff]
        %v1297 = vld [vmem:[%s427 + $0xb2] sm:$0xff]
        %v1298 = vld [vmem:[%s427 + $0xba] sm:$0xff]
        %v1299 = vld [vmem:[%s427 + $0xc2] sm:$0xff]
        %v1300 = vld [vmem:[%s427 + $0xca] sm:$0xff]
        %v1301 = vld [vmem:[%s427 + $0xd2] sm:$0xff]
        %v1302 = vld [vmem:[%s427 + $0xda] sm:$0xff]
        %v1303 = vld [vmem:[%s427 + $0xe2] sm:$0xff]
        %v1304 = vld [vmem:[%s427 + $0xea] sm:$0xff]
        %v1305 = vld [vmem:[%s427 + $0xf2] sm:$0xff]
        %v1306 = vld [vmem:[%s427 + $0xfa] sm:$0xff]
        %v1307 = vld [vmem:[%s427 + $0x102] sm:$0xff]
        %v1308 = vld [vmem:[%s427 + $0x10a] sm:$0xff]
        %v1309 = vld [vmem:[%s427 + $0x112] sm:$0xff]
        %v1310 = vld [vmem:[%s427 + $0x11a] sm:$0xff]
        %v1311 = vld [vmem:[%s427 + $0x122] sm:$0xff]
        %v1312 = vld [vmem:[%s427 + $0x12a] sm:$0xff]
        %s1313 = scalar_lea.vmem %s2, 24
        %v1314 = vld [vmem:[%s1313] sm:$0xff]
        %v1316 = vsel %vm503, %v1277, 0
        %v1319 = vsel %vm503, %v1278, 0
        %v1322 = vsel %vm503, %v1279, 0
        %v1325 = vsel %vm503, %v1280, 0
        %v1328 = vsel %vm503, %v1281, 0
        %v1331 = vsel %vm503, %v1282, 0
        %v1334 = vsel %vm503, %v1283, 0
        %v1337 = vsel %vm503, %v1284, 0
        %v1340 = vsel %vm503, %v1285, 0
        %v1343 = vsel %vm503, %v1286, 0
        %v1346 = vsel %vm503, %v1287, 0
        %v1349 = vsel %vm503, %v1288, 0
        %v1352 = vsel %vm503, %v1289, 0
        %v1355 = vsel %vm503, %v1290, 0
        %v1358 = vsel %vm503, %v1291, 0
        %v1361 = vsel %vm503, %v1292, 0
        %v1364 = vsel %vm503, %v1293, 0
        %v1367 = vsel %vm503, %v1294, 0
        %v1370 = vsel %vm503, %v1295, 0
        %v1373 = vsel %vm503, %v1296, 0
        %v1376 = vsel %vm503, %v1297, 0
        %v1379 = vsel %vm503, %v1298, 0
        %v1382 = vsel %vm503, %v1299, 0
        %v1385 = vsel %vm503, %v1300, 0
        %v1388 = vsel %vm503, %v1301, 0
        %v1391 = vsel %vm503, %v1302, 0
        %v1394 = vsel %vm503, %v1303, 0
        %v1397 = vsel %vm503, %v1304, 0
        %v1400 = vsel %vm503, %v1305, 0
        %v1403 = vsel %vm503, %v1306, 0
        %v1406 = vsel %vm503, %v1307, 0
        %v1409 = vsel %vm503, %v1308, 0
        %v1412 = vsel %vm503, %v1309, 0
        %v1415 = vsel %vm503, %v1310, 0
        %v1418 = vsel %vm503, %v1311, 0
        %v1421 = vsel %vm503, %v1312, 0
        %1423 = vmatpush.msra.mxu0 0.0
        %1424 = vmatpush.msra.mxu0 0.0
        %1425 = vmatpush.msra.mxu0 0.0
        %1426 = vmatpush.msra.mxu0 0.0
        %1427 = vmatpush.msra.mxu0 0.0
        %1428 = vmatpush.msra.mxu0 0.0
        %1429 = vmatpush.msra.mxu0 0.0
        %1430 = vmatpush.msra.mxu0 0.0
        %1431 = vmatpush.msra.mxu0 0.0
        %1432 = vmatpush.msra.mxu0 0.0
        %1433 = vmatpush.msra.mxu0 0.0
        %1434 = vmatpush.msra.mxu0 0.0
        %1435 = vmatpush.msra.mxu0 0.0
        %1436 = vmatpush.msra.mxu0 0.0
        %1437 = vmatpush.msra.mxu0 0.0
        %1438 = vmatpush.msra.mxu0 %v1314
        %1439 = vmatmul.f32.gmra.mxu0 %v1316
        %v1440 = vpop.f32.mrf.mxu0
        %v1441 = vadd.f32 0.0, %v1440
        %1442 = vmatmul.f32.gmra.mxu0 %v1319
        %v1443 = vpop.f32.mrf.mxu0
        %v1444 = vadd.f32 0.0, %v1443
        %1445 = vmatmul.f32.gmra.mxu0 %v1322
        %v1446 = vpop.f32.mrf.mxu0
        %v1447 = vadd.f32 0.0, %v1446
        %1448 = vmatmul.f32.gmra.mxu0 %v1325
        %v1449 = vpop.f32.mrf.mxu0
        %v1450 = vadd.f32 0.0, %v1449
        %1451 = vmatmul.f32.gmra.mxu0 %v1328
        %v1452 = vpop.f32.mrf.mxu0
        %v1453 = vadd.f32 0.0, %v1452
        %1454 = vmatmul.f32.gmra.mxu0 %v1331
        %v1455 = vpop.f32.mrf.mxu0
        %v1456 = vadd.f32 0.0, %v1455
        %1457 = vmatmul.f32.gmra.mxu0 %v1334
        %v1458 = vpop.f32.mrf.mxu0
        %v1459 = vadd.f32 0.0, %v1458
        %1460 = vmatmul.f32.gmra.mxu0 %v1337
        %v1461 = vpop.f32.mrf.mxu0
        %v1462 = vadd.f32 0.0, %v1461
        %1463 = vmatmul.f32.gmra.mxu0 %v1340
        %v1464 = vpop.f32.mrf.mxu0
        %v1465 = vadd.f32 0.0, %v1464
        %1466 = vmatmul.f32.gmra.mxu0 %v1343
        %v1467 = vpop.f32.mrf.mxu0
        %v1468 = vadd.f32 0.0, %v1467
        %1469 = vmatmul.f32.gmra.mxu0 %v1346
        %v1470 = vpop.f32.mrf.mxu0
        %v1471 = vadd.f32 0.0, %v1470
        %1472 = vmatmul.f32.gmra.mxu0 %v1349
        %v1473 = vpop.f32.mrf.mxu0
        %v1474 = vadd.f32 0.0, %v1473
        %1475 = vmatmul.f32.gmra.mxu0 %v1352
        %v1476 = vpop.f32.mrf.mxu0
        %v1477 = vadd.f32 0.0, %v1476
        %1478 = vmatmul.f32.gmra.mxu0 %v1355
        %v1479 = vpop.f32.mrf.mxu0
        %v1480 = vadd.f32 0.0, %v1479
        %1481 = vmatmul.f32.gmra.mxu0 %v1358
        %v1482 = vpop.f32.mrf.mxu0
        %v1483 = vadd.f32 0.0, %v1482
        %1484 = vmatmul.f32.gmra.mxu0 %v1361
        %v1485 = vpop.f32.mrf.mxu0
        %v1486 = vadd.f32 0.0, %v1485
        %1487 = vmatmul.f32.gmra.mxu0 %v1364
        %v1488 = vpop.f32.mrf.mxu0
        %v1489 = vadd.f32 0.0, %v1488
        %1490 = vmatmul.f32.gmra.mxu0 %v1367
        %v1491 = vpop.f32.mrf.mxu0
        %v1492 = vadd.f32 0.0, %v1491
        %1493 = vmatmul.f32.gmra.mxu0 %v1370
        %v1494 = vpop.f32.mrf.mxu0
        %v1495 = vadd.f32 0.0, %v1494
        %1496 = vmatmul.f32.gmra.mxu0 %v1373
        %v1497 = vpop.f32.mrf.mxu0
        %v1498 = vadd.f32 0.0, %v1497
        %1499 = vmatmul.f32.gmra.mxu0 %v1376
        %v1500 = vpop.f32.mrf.mxu0
        %v1501 = vadd.f32 0.0, %v1500
        %1502 = vmatmul.f32.gmra.mxu0 %v1379
        %v1503 = vpop.f32.mrf.mxu0
        %v1504 = vadd.f32 0.0, %v1503
        %1505 = vmatmul.f32.gmra.mxu0 %v1382
        %v1506 = vpop.f32.mrf.mxu0
        %v1507 = vadd.f32 0.0, %v1506
        %1508 = vmatmul.f32.gmra.mxu0 %v1385
        %v1509 = vpop.f32.mrf.mxu0
        %v1510 = vadd.f32 0.0, %v1509
        %1511 = vmatmul.f32.gmra.mxu0 %v1388
        %v1512 = vpop.f32.mrf.mxu0
        %v1513 = vadd.f32 0.0, %v1512
        %1514 = vmatmul.f32.gmra.mxu0 %v1391
        %v1515 = vpop.f32.mrf.mxu0
        %v1516 = vadd.f32 0.0, %v1515
        %1517 = vmatmul.f32.gmra.mxu0 %v1394
        %v1518 = vpop.f32.mrf.mxu0
        %v1519 = vadd.f32 0.0, %v1518
        %1520 = vmatmul.f32.gmra.mxu0 %v1397
        %v1521 = vpop.f32.mrf.mxu0
        %v1522 = vadd.f32 0.0, %v1521
        %1523 = vmatmul.f32.gmra.mxu0 %v1400
        %v1524 = vpop.f32.mrf.mxu0
        %v1525 = vadd.f32 0.0, %v1524
        %1526 = vmatmul.f32.gmra.mxu0 %v1403
        %v1527 = vpop.f32.mrf.mxu0
        %v1528 = vadd.f32 0.0, %v1527
        %1529 = vmatmul.f32.gmra.mxu0 %v1406
        %v1530 = vpop.f32.mrf.mxu0
        %v1531 = vadd.f32 0.0, %v1530
        %1532 = vmatmul.f32.gmra.mxu0 %v1409
        %v1533 = vpop.f32.mrf.mxu0
        %v1534 = vadd.f32 0.0, %v1533
        %1535 = vmatmul.f32.gmra.mxu0 %v1412
        %v1536 = vpop.f32.mrf.mxu0
        %v1537 = vadd.f32 0.0, %v1536
        %1538 = vmatmul.f32.gmra.mxu0 %v1415
        %v1539 = vpop.f32.mrf.mxu0
        %v1540 = vadd.f32 0.0, %v1539
        %1541 = vmatmul.f32.gmra.mxu0 %v1418
        %v1542 = vpop.f32.mrf.mxu0
        %v1543 = vadd.f32 0.0, %v1542
        %1544 = vmatmul.f32.gmra.mxu0 %v1421
        %v1545 = vpop.f32.mrf.mxu0
        %v1546 = vadd.f32 0.0, %v1545
        %1547 = vdwg.mxu0
        %v1548 = vadd.f32 %v1241, %v1441
        %v1549 = vadd.f32 %v1242, %v1444
        %v1550 = vadd.f32 %v1243, %v1447
        %v1551 = vadd.f32 %v1244, %v1450
        %v1552 = vadd.f32 %v1245, %v1453
        %v1553 = vadd.f32 %v1246, %v1456
        %v1554 = vadd.f32 %v1247, %v1459
        %v1555 = vadd.f32 %v1248, %v1462
        %v1556 = vadd.f32 %v1249, %v1465
        %v1557 = vadd.f32 %v1250, %v1468
        %v1558 = vadd.f32 %v1251, %v1471
        %v1559 = vadd.f32 %v1252, %v1474
        %v1560 = vadd.f32 %v1253, %v1477
        %v1561 = vadd.f32 %v1254, %v1480
        %v1562 = vadd.f32 %v1255, %v1483
        %v1563 = vadd.f32 %v1256, %v1486
        %v1564 = vadd.f32 %v1257, %v1489
        %v1565 = vadd.f32 %v1258, %v1492
        %v1566 = vadd.f32 %v1259, %v1495
        %v1567 = vadd.f32 %v1260, %v1498
        %v1568 = vadd.f32 %v1261, %v1501
        %v1569 = vadd.f32 %v1262, %v1504
        %v1570 = vadd.f32 %v1263, %v1507
        %v1571 = vadd.f32 %v1264, %v1510
        %v1572 = vadd.f32 %v1265, %v1513
        %v1573 = vadd.f32 %v1266, %v1516
        %v1574 = vadd.f32 %v1267, %v1519
        %v1575 = vadd.f32 %v1268, %v1522
        %v1576 = vadd.f32 %v1269, %v1525
        %v1577 = vadd.f32 %v1270, %v1528
        %v1578 = vadd.f32 %v1271, %v1531
        %v1579 = vadd.f32 %v1272, %v1534
        %v1580 = vadd.f32 %v1273, %v1537
        %v1581 = vadd.f32 %v1274, %v1540
        %v1582 = vadd.f32 %v1275, %v1543
        %v1583 = vadd.f32 %v1276, %v1546
        %v1584 = vld [vmem:[%s427 + $0x13] sm:$0xff]
        %v1585 = vld [vmem:[%s427 + $0x1b] sm:$0xff]
        %v1586 = vld [vmem:[%s427 + $0x23] sm:$0xff]
        %v1587 = vld [vmem:[%s427 + $0x2b] sm:$0xff]
        %v1588 = vld [vmem:[%s427 + $0x33] sm:$0xff]
        %v1589 = vld [vmem:[%s427 + $0x3b] sm:$0xff]
        %v1590 = vld [vmem:[%s427 + $0x43] sm:$0xff]
        %v1591 = vld [vmem:[%s427 + $0x4b] sm:$0xff]
        %v1592 = vld [vmem:[%s427 + $0x53] sm:$0xff]
        %v1593 = vld [vmem:[%s427 + $0x5b] sm:$0xff]
        %v1594 = vld [vmem:[%s427 + $0x63] sm:$0xff]
        %v1595 = vld [vmem:[%s427 + $0x6b] sm:$0xff]
        %v1596 = vld [vmem:[%s427 + $0x73] sm:$0xff]
        %v1597 = vld [vmem:[%s427 + $0x7b] sm:$0xff]
        %v1598 = vld [vmem:[%s427 + $0x83] sm:$0xff]
        %v1599 = vld [vmem:[%s427 + $0x8b] sm:$0xff]
        %v1600 = vld [vmem:[%s427 + $0x93] sm:$0xff]
        %v1601 = vld [vmem:[%s427 + $0x9b] sm:$0xff]
        %v1602 = vld [vmem:[%s427 + $0xa3] sm:$0xff]
        %v1603 = vld [vmem:[%s427 + $0xab] sm:$0xff]
        %v1604 = vld [vmem:[%s427 + $0xb3] sm:$0xff]
        %v1605 = vld [vmem:[%s427 + $0xbb] sm:$0xff]
        %v1606 = vld [vmem:[%s427 + $0xc3] sm:$0xff]
        %v1607 = vld [vmem:[%s427 + $0xcb] sm:$0xff]
        %v1608 = vld [vmem:[%s427 + $0xd3] sm:$0xff]
        %v1609 = vld [vmem:[%s427 + $0xdb] sm:$0xff]
        %v1610 = vld [vmem:[%s427 + $0xe3] sm:$0xff]
        %v1611 = vld [vmem:[%s427 + $0xeb] sm:$0xff]
        %v1612 = vld [vmem:[%s427 + $0xf3] sm:$0xff]
        %v1613 = vld [vmem:[%s427 + $0xfb] sm:$0xff]
        %v1614 = vld [vmem:[%s427 + $0x103] sm:$0xff]
        %v1615 = vld [vmem:[%s427 + $0x10b] sm:$0xff]
        %v1616 = vld [vmem:[%s427 + $0x113] sm:$0xff]
        %v1617 = vld [vmem:[%s427 + $0x11b] sm:$0xff]
        %v1618 = vld [vmem:[%s427 + $0x123] sm:$0xff]
        %v1619 = vld [vmem:[%s427 + $0x12b] sm:$0xff]
        %s1620 = scalar_lea.vmem %s2, 32
        %v1621 = vld [vmem:[%s1620] sm:$0xff]
        %v1623 = vsel %vm503, %v1584, 0
        %v1626 = vsel %vm503, %v1585, 0
        %v1629 = vsel %vm503, %v1586, 0
        %v1632 = vsel %vm503, %v1587, 0
        %v1635 = vsel %vm503, %v1588, 0
        %v1638 = vsel %vm503, %v1589, 0
        %v1641 = vsel %vm503, %v1590, 0
        %v1644 = vsel %vm503, %v1591, 0
        %v1647 = vsel %vm503, %v1592, 0
        %v1650 = vsel %vm503, %v1593, 0
        %v1653 = vsel %vm503, %v1594, 0
        %v1656 = vsel %vm503, %v1595, 0
        %v1659 = vsel %vm503, %v1596, 0
        %v1662 = vsel %vm503, %v1597, 0
        %v1665 = vsel %vm503, %v1598, 0
        %v1668 = vsel %vm503, %v1599, 0
        %v1671 = vsel %vm503, %v1600, 0
        %v1674 = vsel %vm503, %v1601, 0
        %v1677 = vsel %vm503, %v1602, 0
        %v1680 = vsel %vm503, %v1603, 0
        %v1683 = vsel %vm503, %v1604, 0
        %v1686 = vsel %vm503, %v1605, 0
        %v1689 = vsel %vm503, %v1606, 0
        %v1692 = vsel %vm503, %v1607, 0
        %v1695 = vsel %vm503, %v1608, 0
        %v1698 = vsel %vm503, %v1609, 0
        %v1701 = vsel %vm503, %v1610, 0
        %v1704 = vsel %vm503, %v1611, 0
        %v1707 = vsel %vm503, %v1612, 0
        %v1710 = vsel %vm503, %v1613, 0
        %v1713 = vsel %vm503, %v1614, 0
        %v1716 = vsel %vm503, %v1615, 0
        %v1719 = vsel %vm503, %v1616, 0
        %v1722 = vsel %vm503, %v1617, 0
        %v1725 = vsel %vm503, %v1618, 0
        %v1728 = vsel %vm503, %v1619, 0
        %1730 = vmatpush.msra.mxu0 0.0
        %1731 = vmatpush.msra.mxu0 0.0
        %1732 = vmatpush.msra.mxu0 0.0
        %1733 = vmatpush.msra.mxu0 0.0
        %1734 = vmatpush.msra.mxu0 0.0
        %1735 = vmatpush.msra.mxu0 0.0
        %1736 = vmatpush.msra.mxu0 0.0
        %1737 = vmatpush.msra.mxu0 0.0
        %1738 = vmatpush.msra.mxu0 0.0
        %1739 = vmatpush.msra.mxu0 0.0
        %1740 = vmatpush.msra.mxu0 0.0
        %1741 = vmatpush.msra.mxu0 0.0
        %1742 = vmatpush.msra.mxu0 0.0
        %1743 = vmatpush.msra.mxu0 0.0
        %1744 = vmatpush.msra.mxu0 0.0
        %1745 = vmatpush.msra.mxu0 %v1621
        %1746 = vmatmul.f32.gmra.mxu0 %v1623
        %v1747 = vpop.f32.mrf.mxu0
        %v1748 = vadd.f32 0.0, %v1747
        %1749 = vmatmul.f32.gmra.mxu0 %v1626
        %v1750 = vpop.f32.mrf.mxu0
        %v1751 = vadd.f32 0.0, %v1750
        %1752 = vmatmul.f32.gmra.mxu0 %v1629
        %v1753 = vpop.f32.mrf.mxu0
        %v1754 = vadd.f32 0.0, %v1753
        %1755 = vmatmul.f32.gmra.mxu0 %v1632
        %v1756 = vpop.f32.mrf.mxu0
        %v1757 = vadd.f32 0.0, %v1756
        %1758 = vmatmul.f32.gmra.mxu0 %v1635
        %v1759 = vpop.f32.mrf.mxu0
        %v1760 = vadd.f32 0.0, %v1759
        %1761 = vmatmul.f32.gmra.mxu0 %v1638
        %v1762 = vpop.f32.mrf.mxu0
        %v1763 = vadd.f32 0.0, %v1762
        %1764 = vmatmul.f32.gmra.mxu0 %v1641
        %v1765 = vpop.f32.mrf.mxu0
        %v1766 = vadd.f32 0.0, %v1765
        %1767 = vmatmul.f32.gmra.mxu0 %v1644
        %v1768 = vpop.f32.mrf.mxu0
        %v1769 = vadd.f32 0.0, %v1768
        %1770 = vmatmul.f32.gmra.mxu0 %v1647
        %v1771 = vpop.f32.mrf.mxu0
        %v1772 = vadd.f32 0.0, %v1771
        %1773 = vmatmul.f32.gmra.mxu0 %v1650
        %v1774 = vpop.f32.mrf.mxu0
        %v1775 = vadd.f32 0.0, %v1774
        %1776 = vmatmul.f32.gmra.mxu0 %v1653
        %v1777 = vpop.f32.mrf.mxu0
        %v1778 = vadd.f32 0.0, %v1777
        %1779 = vmatmul.f32.gmra.mxu0 %v1656
        %v1780 = vpop.f32.mrf.mxu0
        %v1781 = vadd.f32 0.0, %v1780
        %1782 = vmatmul.f32.gmra.mxu0 %v1659
        %v1783 = vpop.f32.mrf.mxu0
        %v1784 = vadd.f32 0.0, %v1783
        %1785 = vmatmul.f32.gmra.mxu0 %v1662
        %v1786 = vpop.f32.mrf.mxu0
        %v1787 = vadd.f32 0.0, %v1786
        %1788 = vmatmul.f32.gmra.mxu0 %v1665
        %v1789 = vpop.f32.mrf.mxu0
        %v1790 = vadd.f32 0.0, %v1789
        %1791 = vmatmul.f32.gmra.mxu0 %v1668
        %v1792 = vpop.f32.mrf.mxu0
        %v1793 = vadd.f32 0.0, %v1792
        %1794 = vmatmul.f32.gmra.mxu0 %v1671
        %v1795 = vpop.f32.mrf.mxu0
        %v1796 = vadd.f32 0.0, %v1795
        %1797 = vmatmul.f32.gmra.mxu0 %v1674
        %v1798 = vpop.f32.mrf.mxu0
        %v1799 = vadd.f32 0.0, %v1798
        %1800 = vmatmul.f32.gmra.mxu0 %v1677
        %v1801 = vpop.f32.mrf.mxu0
        %v1802 = vadd.f32 0.0, %v1801
        %1803 = vmatmul.f32.gmra.mxu0 %v1680
        %v1804 = vpop.f32.mrf.mxu0
        %v1805 = vadd.f32 0.0, %v1804
        %1806 = vmatmul.f32.gmra.mxu0 %v1683
        %v1807 = vpop.f32.mrf.mxu0
        %v1808 = vadd.f32 0.0, %v1807
        %1809 = vmatmul.f32.gmra.mxu0 %v1686
        %v1810 = vpop.f32.mrf.mxu0
        %v1811 = vadd.f32 0.0, %v1810
        %1812 = vmatmul.f32.gmra.mxu0 %v1689
        %v1813 = vpop.f32.mrf.mxu0
        %v1814 = vadd.f32 0.0, %v1813
        %1815 = vmatmul.f32.gmra.mxu0 %v1692
        %v1816 = vpop.f32.mrf.mxu0
        %v1817 = vadd.f32 0.0, %v1816
        %1818 = vmatmul.f32.gmra.mxu0 %v1695
        %v1819 = vpop.f32.mrf.mxu0
        %v1820 = vadd.f32 0.0, %v1819
        %1821 = vmatmul.f32.gmra.mxu0 %v1698
        %v1822 = vpop.f32.mrf.mxu0
        %v1823 = vadd.f32 0.0, %v1822
        %1824 = vmatmul.f32.gmra.mxu0 %v1701
        %v1825 = vpop.f32.mrf.mxu0
        %v1826 = vadd.f32 0.0, %v1825
        %1827 = vmatmul.f32.gmra.mxu0 %v1704
        %v1828 = vpop.f32.mrf.mxu0
        %v1829 = vadd.f32 0.0, %v1828
        %1830 = vmatmul.f32.gmra.mxu0 %v1707
        %v1831 = vpop.f32.mrf.mxu0
        %v1832 = vadd.f32 0.0, %v1831
        %1833 = vmatmul.f32.gmra.mxu0 %v1710
        %v1834 = vpop.f32.mrf.mxu0
        %v1835 = vadd.f32 0.0, %v1834
        %1836 = vmatmul.f32.gmra.mxu0 %v1713
        %v1837 = vpop.f32.mrf.mxu0
        %v1838 = vadd.f32 0.0, %v1837
        %1839 = vmatmul.f32.gmra.mxu0 %v1716
        %v1840 = vpop.f32.mrf.mxu0
        %v1841 = vadd.f32 0.0, %v1840
        %1842 = vmatmul.f32.gmra.mxu0 %v1719
        %v1843 = vpop.f32.mrf.mxu0
        %v1844 = vadd.f32 0.0, %v1843
        %1845 = vmatmul.f32.gmra.mxu0 %v1722
        %v1846 = vpop.f32.mrf.mxu0
        %v1847 = vadd.f32 0.0, %v1846
        %1848 = vmatmul.f32.gmra.mxu0 %v1725
        %v1849 = vpop.f32.mrf.mxu0
        %v1850 = vadd.f32 0.0, %v1849
        %1851 = vmatmul.f32.gmra.mxu0 %v1728
        %v1852 = vpop.f32.mrf.mxu0
        %v1853 = vadd.f32 0.0, %v1852
        %1854 = vdwg.mxu0
        %v1855 = vadd.f32 %v1548, %v1748
        %v1856 = vadd.f32 %v1549, %v1751
        %v1857 = vadd.f32 %v1550, %v1754
        %v1858 = vadd.f32 %v1551, %v1757
        %v1859 = vadd.f32 %v1552, %v1760
        %v1860 = vadd.f32 %v1553, %v1763
        %v1861 = vadd.f32 %v1554, %v1766
        %v1862 = vadd.f32 %v1555, %v1769
        %v1863 = vadd.f32 %v1556, %v1772
        %v1864 = vadd.f32 %v1557, %v1775
        %v1865 = vadd.f32 %v1558, %v1778
        %v1866 = vadd.f32 %v1559, %v1781
        %v1867 = vadd.f32 %v1560, %v1784
        %v1868 = vadd.f32 %v1561, %v1787
        %v1869 = vadd.f32 %v1562, %v1790
        %v1870 = vadd.f32 %v1563, %v1793
        %v1871 = vadd.f32 %v1564, %v1796
        %v1872 = vadd.f32 %v1565, %v1799
        %v1873 = vadd.f32 %v1566, %v1802
        %v1874 = vadd.f32 %v1567, %v1805
        %v1875 = vadd.f32 %v1568, %v1808
        %v1876 = vadd.f32 %v1569, %v1811
        %v1877 = vadd.f32 %v1570, %v1814
        %v1878 = vadd.f32 %v1571, %v1817
        %v1879 = vadd.f32 %v1572, %v1820
        %v1880 = vadd.f32 %v1573, %v1823
        %v1881 = vadd.f32 %v1574, %v1826
        %v1882 = vadd.f32 %v1575, %v1829
        %v1883 = vadd.f32 %v1576, %v1832
        %v1884 = vadd.f32 %v1577, %v1835
        %v1885 = vadd.f32 %v1578, %v1838
        %v1886 = vadd.f32 %v1579, %v1841
        %v1887 = vadd.f32 %v1580, %v1844
        %v1888 = vadd.f32 %v1581, %v1847
        %v1889 = vadd.f32 %v1582, %v1850
        %v1890 = vadd.f32 %v1583, %v1853
        %v1891 = vld [vmem:[%s427 + $0x14] sm:$0xff]
        %v1892 = vld [vmem:[%s427 + $0x1c] sm:$0xff]
        %v1893 = vld [vmem:[%s427 + $0x24] sm:$0xff]
        %v1894 = vld [vmem:[%s427 + $0x2c] sm:$0xff]
        %v1895 = vld [vmem:[%s427 + $0x34] sm:$0xff]
        %v1896 = vld [vmem:[%s427 + $0x3c] sm:$0xff]
        %v1897 = vld [vmem:[%s427 + $0x44] sm:$0xff]
        %v1898 = vld [vmem:[%s427 + $0x4c] sm:$0xff]
        %v1899 = vld [vmem:[%s427 + $0x54] sm:$0xff]
        %v1900 = vld [vmem:[%s427 + $0x5c] sm:$0xff]
        %v1901 = vld [vmem:[%s427 + $0x64] sm:$0xff]
        %v1902 = vld [vmem:[%s427 + $0x6c] sm:$0xff]
        %v1903 = vld [vmem:[%s427 + $0x74] sm:$0xff]
        %v1904 = vld [vmem:[%s427 + $0x7c] sm:$0xff]
        %v1905 = vld [vmem:[%s427 + $0x84] sm:$0xff]
        %v1906 = vld [vmem:[%s427 + $0x8c] sm:$0xff]
        %v1907 = vld [vmem:[%s427 + $0x94] sm:$0xff]
        %v1908 = vld [vmem:[%s427 + $0x9c] sm:$0xff]
        %v1909 = vld [vmem:[%s427 + $0xa4] sm:$0xff]
        %v1910 = vld [vmem:[%s427 + $0xac] sm:$0xff]
        %v1911 = vld [vmem:[%s427 + $0xb4] sm:$0xff]
        %v1912 = vld [vmem:[%s427 + $0xbc] sm:$0xff]
        %v1913 = vld [vmem:[%s427 + $0xc4] sm:$0xff]
        %v1914 = vld [vmem:[%s427 + $0xcc] sm:$0xff]
        %v1915 = vld [vmem:[%s427 + $0xd4] sm:$0xff]
        %v1916 = vld [vmem:[%s427 + $0xdc] sm:$0xff]
        %v1917 = vld [vmem:[%s427 + $0xe4] sm:$0xff]
        %v1918 = vld [vmem:[%s427 + $0xec] sm:$0xff]
        %v1919 = vld [vmem:[%s427 + $0xf4] sm:$0xff]
        %v1920 = vld [vmem:[%s427 + $0xfc] sm:$0xff]
        %v1921 = vld [vmem:[%s427 + $0x104] sm:$0xff]
        %v1922 = vld [vmem:[%s427 + $0x10c] sm:$0xff]
        %v1923 = vld [vmem:[%s427 + $0x114] sm:$0xff]
        %v1924 = vld [vmem:[%s427 + $0x11c] sm:$0xff]
        %v1925 = vld [vmem:[%s427 + $0x124] sm:$0xff]
        %v1926 = vld [vmem:[%s427 + $0x12c] sm:$0xff]
        %s1927 = scalar_lea.vmem %s2, 40
        %v1928 = vld [vmem:[%s1927] sm:$0xff]
        %v1930 = vsel %vm503, %v1891, 0
        %v1933 = vsel %vm503, %v1892, 0
        %v1936 = vsel %vm503, %v1893, 0
        %v1939 = vsel %vm503, %v1894, 0
        %v1942 = vsel %vm503, %v1895, 0
        %v1945 = vsel %vm503, %v1896, 0
        %v1948 = vsel %vm503, %v1897, 0
        %v1951 = vsel %vm503, %v1898, 0
        %v1954 = vsel %vm503, %v1899, 0
        %v1957 = vsel %vm503, %v1900, 0
        %v1960 = vsel %vm503, %v1901, 0
        %v1963 = vsel %vm503, %v1902, 0
        %v1966 = vsel %vm503, %v1903, 0
        %v1969 = vsel %vm503, %v1904, 0
        %v1972 = vsel %vm503, %v1905, 0
        %v1975 = vsel %vm503, %v1906, 0
        %v1978 = vsel %vm503, %v1907, 0
        %v1981 = vsel %vm503, %v1908, 0
        %v1984 = vsel %vm503, %v1909, 0
        %v1987 = vsel %vm503, %v1910, 0
        %v1990 = vsel %vm503, %v1911, 0
        %v1993 = vsel %vm503, %v1912, 0
        %v1996 = vsel %vm503, %v1913, 0
        %v1999 = vsel %vm503, %v1914, 0
        %v2002 = vsel %vm503, %v1915, 0
        %v2005 = vsel %vm503, %v1916, 0
        %v2008 = vsel %vm503, %v1917, 0
        %v2011 = vsel %vm503, %v1918, 0
        %v2014 = vsel %vm503, %v1919, 0
        %v2017 = vsel %vm503, %v1920, 0
        %v2020 = vsel %vm503, %v1921, 0
        %v2023 = vsel %vm503, %v1922, 0
        %v2026 = vsel %vm503, %v1923, 0
        %v2029 = vsel %vm503, %v1924, 0
        %v2032 = vsel %vm503, %v1925, 0
        %v2035 = vsel %vm503, %v1926, 0
        %2037 = vmatpush.msra.mxu0 0.0
        %2038 = vmatpush.msra.mxu0 0.0
        %2039 = vmatpush.msra.mxu0 0.0
        %2040 = vmatpush.msra.mxu0 0.0
        %2041 = vmatpush.msra.mxu0 0.0
        %2042 = vmatpush.msra.mxu0 0.0
        %2043 = vmatpush.msra.mxu0 0.0
        %2044 = vmatpush.msra.mxu0 0.0
        %2045 = vmatpush.msra.mxu0 0.0
        %2046 = vmatpush.msra.mxu0 0.0
        %2047 = vmatpush.msra.mxu0 0.0
        %2048 = vmatpush.msra.mxu0 0.0
        %2049 = vmatpush.msra.mxu0 0.0
        %2050 = vmatpush.msra.mxu0 0.0
        %2051 = vmatpush.msra.mxu0 0.0
        %2052 = vmatpush.msra.mxu0 %v1928
        %2053 = vmatmul.f32.gmra.mxu0 %v1930
        %v2054 = vpop.f32.mrf.mxu0
        %v2055 = vadd.f32 0.0, %v2054
        %2056 = vmatmul.f32.gmra.mxu0 %v1933
        %v2057 = vpop.f32.mrf.mxu0
        %v2058 = vadd.f32 0.0, %v2057
        %2059 = vmatmul.f32.gmra.mxu0 %v1936
        %v2060 = vpop.f32.mrf.mxu0
        %v2061 = vadd.f32 0.0, %v2060
        %2062 = vmatmul.f32.gmra.mxu0 %v1939
        %v2063 = vpop.f32.mrf.mxu0
        %v2064 = vadd.f32 0.0, %v2063
        %2065 = vmatmul.f32.gmra.mxu0 %v1942
        %v2066 = vpop.f32.mrf.mxu0
        %v2067 = vadd.f32 0.0, %v2066
        %2068 = vmatmul.f32.gmra.mxu0 %v1945
        %v2069 = vpop.f32.mrf.mxu0
        %v2070 = vadd.f32 0.0, %v2069
        %2071 = vmatmul.f32.gmra.mxu0 %v1948
        %v2072 = vpop.f32.mrf.mxu0
        %v2073 = vadd.f32 0.0, %v2072
        %2074 = vmatmul.f32.gmra.mxu0 %v1951
        %v2075 = vpop.f32.mrf.mxu0
        %v2076 = vadd.f32 0.0, %v2075
        %2077 = vmatmul.f32.gmra.mxu0 %v1954
        %v2078 = vpop.f32.mrf.mxu0
        %v2079 = vadd.f32 0.0, %v2078
        %2080 = vmatmul.f32.gmra.mxu0 %v1957
        %v2081 = vpop.f32.mrf.mxu0
        %v2082 = vadd.f32 0.0, %v2081
        %2083 = vmatmul.f32.gmra.mxu0 %v1960
        %v2084 = vpop.f32.mrf.mxu0
        %v2085 = vadd.f32 0.0, %v2084
        %2086 = vmatmul.f32.gmra.mxu0 %v1963
        %v2087 = vpop.f32.mrf.mxu0
        %v2088 = vadd.f32 0.0, %v2087
        %2089 = vmatmul.f32.gmra.mxu0 %v1966
        %v2090 = vpop.f32.mrf.mxu0
        %v2091 = vadd.f32 0.0, %v2090
        %2092 = vmatmul.f32.gmra.mxu0 %v1969
        %v2093 = vpop.f32.mrf.mxu0
        %v2094 = vadd.f32 0.0, %v2093
        %2095 = vmatmul.f32.gmra.mxu0 %v1972
        %v2096 = vpop.f32.mrf.mxu0
        %v2097 = vadd.f32 0.0, %v2096
        %2098 = vmatmul.f32.gmra.mxu0 %v1975
        %v2099 = vpop.f32.mrf.mxu0
        %v2100 = vadd.f32 0.0, %v2099
        %2101 = vmatmul.f32.gmra.mxu0 %v1978
        %v2102 = vpop.f32.mrf.mxu0
        %v2103 = vadd.f32 0.0, %v2102
        %2104 = vmatmul.f32.gmra.mxu0 %v1981
        %v2105 = vpop.f32.mrf.mxu0
        %v2106 = vadd.f32 0.0, %v2105
        %2107 = vmatmul.f32.gmra.mxu0 %v1984
        %v2108 = vpop.f32.mrf.mxu0
        %v2109 = vadd.f32 0.0, %v2108
        %2110 = vmatmul.f32.gmra.mxu0 %v1987
        %v2111 = vpop.f32.mrf.mxu0
        %v2112 = vadd.f32 0.0, %v2111
        %2113 = vmatmul.f32.gmra.mxu0 %v1990
        %v2114 = vpop.f32.mrf.mxu0
        %v2115 = vadd.f32 0.0, %v2114
        %2116 = vmatmul.f32.gmra.mxu0 %v1993
        %v2117 = vpop.f32.mrf.mxu0
        %v2118 = vadd.f32 0.0, %v2117
        %2119 = vmatmul.f32.gmra.mxu0 %v1996
        %v2120 = vpop.f32.mrf.mxu0
        %v2121 = vadd.f32 0.0, %v2120
        %2122 = vmatmul.f32.gmra.mxu0 %v1999
        %v2123 = vpop.f32.mrf.mxu0
        %v2124 = vadd.f32 0.0, %v2123
        %2125 = vmatmul.f32.gmra.mxu0 %v2002
        %v2126 = vpop.f32.mrf.mxu0
        %v2127 = vadd.f32 0.0, %v2126
        %2128 = vmatmul.f32.gmra.mxu0 %v2005
        %v2129 = vpop.f32.mrf.mxu0
        %v2130 = vadd.f32 0.0, %v2129
        %2131 = vmatmul.f32.gmra.mxu0 %v2008
        %v2132 = vpop.f32.mrf.mxu0
        %v2133 = vadd.f32 0.0, %v2132
        %2134 = vmatmul.f32.gmra.mxu0 %v2011
        %v2135 = vpop.f32.mrf.mxu0
        %v2136 = vadd.f32 0.0, %v2135
        %2137 = vmatmul.f32.gmra.mxu0 %v2014
        %v2138 = vpop.f32.mrf.mxu0
        %v2139 = vadd.f32 0.0, %v2138
        %2140 = vmatmul.f32.gmra.mxu0 %v2017
        %v2141 = vpop.f32.mrf.mxu0
        %v2142 = vadd.f32 0.0, %v2141
        %2143 = vmatmul.f32.gmra.mxu0 %v2020
        %v2144 = vpop.f32.mrf.mxu0
        %v2145 = vadd.f32 0.0, %v2144
        %2146 = vmatmul.f32.gmra.mxu0 %v2023
        %v2147 = vpop.f32.mrf.mxu0
        %v2148 = vadd.f32 0.0, %v2147
        %2149 = vmatmul.f32.gmra.mxu0 %v2026
        %v2150 = vpop.f32.mrf.mxu0
        %v2151 = vadd.f32 0.0, %v2150
        %2152 = vmatmul.f32.gmra.mxu0 %v2029
        %v2153 = vpop.f32.mrf.mxu0
        %v2154 = vadd.f32 0.0, %v2153
        %2155 = vmatmul.f32.gmra.mxu0 %v2032
        %v2156 = vpop.f32.mrf.mxu0
        %v2157 = vadd.f32 0.0, %v2156
        %2158 = vmatmul.f32.gmra.mxu0 %v2035
        %v2159 = vpop.f32.mrf.mxu0
        %v2160 = vadd.f32 0.0, %v2159
        %2161 = vdwg.mxu0
        %v2162 = vadd.f32 %v1855, %v2055
        %v2163 = vadd.f32 %v1856, %v2058
        %v2164 = vadd.f32 %v1857, %v2061
        %v2165 = vadd.f32 %v1858, %v2064
        %v2166 = vadd.f32 %v1859, %v2067
        %v2167 = vadd.f32 %v1860, %v2070
        %v2168 = vadd.f32 %v1861, %v2073
        %v2169 = vadd.f32 %v1862, %v2076
        %v2170 = vadd.f32 %v1863, %v2079
        %v2171 = vadd.f32 %v1864, %v2082
        %v2172 = vadd.f32 %v1865, %v2085
        %v2173 = vadd.f32 %v1866, %v2088
        %v2174 = vadd.f32 %v1867, %v2091
        %v2175 = vadd.f32 %v1868, %v2094
        %v2176 = vadd.f32 %v1869, %v2097
        %v2177 = vadd.f32 %v1870, %v2100
        %v2178 = vadd.f32 %v1871, %v2103
        %v2179 = vadd.f32 %v1872, %v2106
        %v2180 = vadd.f32 %v1873, %v2109
        %v2181 = vadd.f32 %v1874, %v2112
        %v2182 = vadd.f32 %v1875, %v2115
        %v2183 = vadd.f32 %v1876, %v2118
        %v2184 = vadd.f32 %v1877, %v2121
        %v2185 = vadd.f32 %v1878, %v2124
        %v2186 = vadd.f32 %v1879, %v2127
        %v2187 = vadd.f32 %v1880, %v2130
        %v2188 = vadd.f32 %v1881, %v2133
        %v2189 = vadd.f32 %v1882, %v2136
        %v2190 = vadd.f32 %v1883, %v2139
        %v2191 = vadd.f32 %v1884, %v2142
        %v2192 = vadd.f32 %v1885, %v2145
        %v2193 = vadd.f32 %v1886, %v2148
        %v2194 = vadd.f32 %v1887, %v2151
        %v2195 = vadd.f32 %v1888, %v2154
        %v2196 = vadd.f32 %v1889, %v2157
        %v2197 = vadd.f32 %v1890, %v2160
        %v2198 = vld [vmem:[%s427 + $0x24] sm:$0xff]
        %v2199 = vld [vmem:[%s427 + $0x2c] sm:$0xff]
        %v2200 = vld [vmem:[%s427 + $0x34] sm:$0xff]
        %v2201 = vld [vmem:[%s427 + $0x3c] sm:$0xff]
        %v2202 = vld [vmem:[%s427 + $0x44] sm:$0xff]
        %v2203 = vld [vmem:[%s427 + $0x4c] sm:$0xff]
        %v2204 = vld [vmem:[%s427 + $0x54] sm:$0xff]
        %v2205 = vld [vmem:[%s427 + $0x5c] sm:$0xff]
        %v2206 = vld [vmem:[%s427 + $0x64] sm:$0xff]
        %v2207 = vld [vmem:[%s427 + $0x6c] sm:$0xff]
        %v2208 = vld [vmem:[%s427 + $0x74] sm:$0xff]
        %v2209 = vld [vmem:[%s427 + $0x7c] sm:$0xff]
        %v2210 = vld [vmem:[%s427 + $0x84] sm:$0xff]
        %v2211 = vld [vmem:[%s427 + $0x8c] sm:$0xff]
        %v2212 = vld [vmem:[%s427 + $0x94] sm:$0xff]
        %v2213 = vld [vmem:[%s427 + $0x9c] sm:$0xff]
        %v2214 = vld [vmem:[%s427 + $0xa4] sm:$0xff]
        %v2215 = vld [vmem:[%s427 + $0xac] sm:$0xff]
        %v2216 = vld [vmem:[%s427 + $0xb4] sm:$0xff]
        %v2217 = vld [vmem:[%s427 + $0xbc] sm:$0xff]
        %v2218 = vld [vmem:[%s427 + $0xc4] sm:$0xff]
        %v2219 = vld [vmem:[%s427 + $0xcc] sm:$0xff]
        %v2220 = vld [vmem:[%s427 + $0xd4] sm:$0xff]
        %v2221 = vld [vmem:[%s427 + $0xdc] sm:$0xff]
        %v2222 = vld [vmem:[%s427 + $0xe4] sm:$0xff]
        %v2223 = vld [vmem:[%s427 + $0xec] sm:$0xff]
        %v2224 = vld [vmem:[%s427 + $0xf4] sm:$0xff]
        %v2225 = vld [vmem:[%s427 + $0xfc] sm:$0xff]
        %v2226 = vld [vmem:[%s427 + $0x104] sm:$0xff]
        %v2227 = vld [vmem:[%s427 + $0x10c] sm:$0xff]
        %v2228 = vld [vmem:[%s427 + $0x114] sm:$0xff]
        %v2229 = vld [vmem:[%s427 + $0x11c] sm:$0xff]
        %v2230 = vld [vmem:[%s427 + $0x124] sm:$0xff]
        %v2231 = vld [vmem:[%s427 + $0x12c] sm:$0xff]
        %v2232 = vld [vmem:[%s427 + $0x134] sm:$0xff]
        %v2233 = vld [vmem:[%s427 + $0x13c] sm:$0xff]
        %s2234 = scalar_lea.vmem %s2, 48
        %v2235 = vld [vmem:[%s2234] sm:$0xff]
        %v2237 = vsel %vm503, %v2198, 0
        %v2240 = vsel %vm503, %v2199, 0
        %v2243 = vsel %vm503, %v2200, 0
        %v2246 = vsel %vm503, %v2201, 0
        %v2249 = vsel %vm503, %v2202, 0
        %v2252 = vsel %vm503, %v2203, 0
        %v2255 = vsel %vm503, %v2204, 0
        %v2258 = vsel %vm503, %v2205, 0
        %v2261 = vsel %vm503, %v2206, 0
        %v2264 = vsel %vm503, %v2207, 0
        %v2267 = vsel %vm503, %v2208, 0
        %v2270 = vsel %vm503, %v2209, 0
        %v2273 = vsel %vm503, %v2210, 0
        %v2276 = vsel %vm503, %v2211, 0
        %v2279 = vsel %vm503, %v2212, 0
        %v2282 = vsel %vm503, %v2213, 0
        %v2285 = vsel %vm503, %v2214, 0
        %v2288 = vsel %vm503, %v2215, 0
        %v2291 = vsel %vm503, %v2216, 0
        %v2294 = vsel %vm503, %v2217, 0
        %v2297 = vsel %vm503, %v2218, 0
        %v2300 = vsel %vm503, %v2219, 0
        %v2303 = vsel %vm503, %v2220, 0
        %v2306 = vsel %vm503, %v2221, 0
        %v2309 = vsel %vm503, %v2222, 0
        %v2312 = vsel %vm503, %v2223, 0
        %v2315 = vsel %vm503, %v2224, 0
        %v2318 = vsel %vm503, %v2225, 0
        %v2321 = vsel %vm503, %v2226, 0
        %v2324 = vsel %vm503, %v2227, 0
        %v2327 = vsel %vm503, %v2228, 0
        %v2330 = vsel %vm503, %v2229, 0
        %v2333 = vsel %vm503, %v2230, 0
        %v2336 = vsel %vm503, %v2231, 0
        %v2339 = vsel %vm503, %v2232, 0
        %v2342 = vsel %vm503, %v2233, 0
        %2344 = vmatpush.msra.mxu0 0.0
        %2345 = vmatpush.msra.mxu0 0.0
        %2346 = vmatpush.msra.mxu0 0.0
        %2347 = vmatpush.msra.mxu0 0.0
        %2348 = vmatpush.msra.mxu0 0.0
        %2349 = vmatpush.msra.mxu0 0.0
        %2350 = vmatpush.msra.mxu0 0.0
        %2351 = vmatpush.msra.mxu0 0.0
        %2352 = vmatpush.msra.mxu0 0.0
        %2353 = vmatpush.msra.mxu0 0.0
        %2354 = vmatpush.msra.mxu0 0.0
        %2355 = vmatpush.msra.mxu0 0.0
        %2356 = vmatpush.msra.mxu0 0.0
        %2357 = vmatpush.msra.mxu0 0.0
        %2358 = vmatpush.msra.mxu0 0.0
        %2359 = vmatpush.msra.mxu0 %v2235
        %2360 = vmatmul.f32.gmra.mxu0 %v2237
        %v2361 = vpop.f32.mrf.mxu0
        %v2362 = vadd.f32 0.0, %v2361
        %2363 = vmatmul.f32.gmra.mxu0 %v2240
        %v2364 = vpop.f32.mrf.mxu0
        %v2365 = vadd.f32 0.0, %v2364
        %2366 = vmatmul.f32.gmra.mxu0 %v2243
        %v2367 = vpop.f32.mrf.mxu0
        %v2368 = vadd.f32 0.0, %v2367
        %2369 = vmatmul.f32.gmra.mxu0 %v2246
        %v2370 = vpop.f32.mrf.mxu0
        %v2371 = vadd.f32 0.0, %v2370
        %2372 = vmatmul.f32.gmra.mxu0 %v2249
        %v2373 = vpop.f32.mrf.mxu0
        %v2374 = vadd.f32 0.0, %v2373
        %2375 = vmatmul.f32.gmra.mxu0 %v2252
        %v2376 = vpop.f32.mrf.mxu0
        %v2377 = vadd.f32 0.0, %v2376
        %2378 = vmatmul.f32.gmra.mxu0 %v2255
        %v2379 = vpop.f32.mrf.mxu0
        %v2380 = vadd.f32 0.0, %v2379
        %2381 = vmatmul.f32.gmra.mxu0 %v2258
        %v2382 = vpop.f32.mrf.mxu0
        %v2383 = vadd.f32 0.0, %v2382
        %2384 = vmatmul.f32.gmra.mxu0 %v2261
        %v2385 = vpop.f32.mrf.mxu0
        %v2386 = vadd.f32 0.0, %v2385
        %2387 = vmatmul.f32.gmra.mxu0 %v2264
        %v2388 = vpop.f32.mrf.mxu0
        %v2389 = vadd.f32 0.0, %v2388
        %2390 = vmatmul.f32.gmra.mxu0 %v2267
        %v2391 = vpop.f32.mrf.mxu0
        %v2392 = vadd.f32 0.0, %v2391
        %2393 = vmatmul.f32.gmra.mxu0 %v2270
        %v2394 = vpop.f32.mrf.mxu0
        %v2395 = vadd.f32 0.0, %v2394
        %2396 = vmatmul.f32.gmra.mxu0 %v2273
        %v2397 = vpop.f32.mrf.mxu0
        %v2398 = vadd.f32 0.0, %v2397
        %2399 = vmatmul.f32.gmra.mxu0 %v2276
        %v2400 = vpop.f32.mrf.mxu0
        %v2401 = vadd.f32 0.0, %v2400
        %2402 = vmatmul.f32.gmra.mxu0 %v2279
        %v2403 = vpop.f32.mrf.mxu0
        %v2404 = vadd.f32 0.0, %v2403
        %2405 = vmatmul.f32.gmra.mxu0 %v2282
        %v2406 = vpop.f32.mrf.mxu0
        %v2407 = vadd.f32 0.0, %v2406
        %2408 = vmatmul.f32.gmra.mxu0 %v2285
        %v2409 = vpop.f32.mrf.mxu0
        %v2410 = vadd.f32 0.0, %v2409
        %2411 = vmatmul.f32.gmra.mxu0 %v2288
        %v2412 = vpop.f32.mrf.mxu0
        %v2413 = vadd.f32 0.0, %v2412
        %2414 = vmatmul.f32.gmra.mxu0 %v2291
        %v2415 = vpop.f32.mrf.mxu0
        %v2416 = vadd.f32 0.0, %v2415
        %2417 = vmatmul.f32.gmra.mxu0 %v2294
        %v2418 = vpop.f32.mrf.mxu0
        %v2419 = vadd.f32 0.0, %v2418
        %2420 = vmatmul.f32.gmra.mxu0 %v2297
        %v2421 = vpop.f32.mrf.mxu0
        %v2422 = vadd.f32 0.0, %v2421
        %2423 = vmatmul.f32.gmra.mxu0 %v2300
        %v2424 = vpop.f32.mrf.mxu0
        %v2425 = vadd.f32 0.0, %v2424
        %2426 = vmatmul.f32.gmra.mxu0 %v2303
        %v2427 = vpop.f32.mrf.mxu0
        %v2428 = vadd.f32 0.0, %v2427
        %2429 = vmatmul.f32.gmra.mxu0 %v2306
        %v2430 = vpop.f32.mrf.mxu0
        %v2431 = vadd.f32 0.0, %v2430
        %2432 = vmatmul.f32.gmra.mxu0 %v2309
        %v2433 = vpop.f32.mrf.mxu0
        %v2434 = vadd.f32 0.0, %v2433
        %2435 = vmatmul.f32.gmra.mxu0 %v2312
        %v2436 = vpop.f32.mrf.mxu0
        %v2437 = vadd.f32 0.0, %v2436
        %2438 = vmatmul.f32.gmra.mxu0 %v2315
        %v2439 = vpop.f32.mrf.mxu0
        %v2440 = vadd.f32 0.0, %v2439
        %2441 = vmatmul.f32.gmra.mxu0 %v2318
        %v2442 = vpop.f32.mrf.mxu0
        %v2443 = vadd.f32 0.0, %v2442
        %2444 = vmatmul.f32.gmra.mxu0 %v2321
        %v2445 = vpop.f32.mrf.mxu0
        %v2446 = vadd.f32 0.0, %v2445
        %2447 = vmatmul.f32.gmra.mxu0 %v2324
        %v2448 = vpop.f32.mrf.mxu0
        %v2449 = vadd.f32 0.0, %v2448
        %2450 = vmatmul.f32.gmra.mxu0 %v2327
        %v2451 = vpop.f32.mrf.mxu0
        %v2452 = vadd.f32 0.0, %v2451
        %2453 = vmatmul.f32.gmra.mxu0 %v2330
        %v2454 = vpop.f32.mrf.mxu0
        %v2455 = vadd.f32 0.0, %v2454
        %2456 = vmatmul.f32.gmra.mxu0 %v2333
        %v2457 = vpop.f32.mrf.mxu0
        %v2458 = vadd.f32 0.0, %v2457
        %2459 = vmatmul.f32.gmra.mxu0 %v2336
        %v2460 = vpop.f32.mrf.mxu0
        %v2461 = vadd.f32 0.0, %v2460
        %2462 = vmatmul.f32.gmra.mxu0 %v2339
        %v2463 = vpop.f32.mrf.mxu0
        %v2464 = vadd.f32 0.0, %v2463
        %2465 = vmatmul.f32.gmra.mxu0 %v2342
        %v2466 = vpop.f32.mrf.mxu0
        %v2467 = vadd.f32 0.0, %v2466
        %2468 = vdwg.mxu0
        %v2469 = vadd.f32 %v2162, %v2362
        %v2470 = vadd.f32 %v2163, %v2365
        %v2471 = vadd.f32 %v2164, %v2368
        %v2472 = vadd.f32 %v2165, %v2371
        %v2473 = vadd.f32 %v2166, %v2374
        %v2474 = vadd.f32 %v2167, %v2377
        %v2475 = vadd.f32 %v2168, %v2380
        %v2476 = vadd.f32 %v2169, %v2383
        %v2477 = vadd.f32 %v2170, %v2386
        %v2478 = vadd.f32 %v2171, %v2389
        %v2479 = vadd.f32 %v2172, %v2392
        %v2480 = vadd.f32 %v2173, %v2395
        %v2481 = vadd.f32 %v2174, %v2398
        %v2482 = vadd.f32 %v2175, %v2401
        %v2483 = vadd.f32 %v2176, %v2404
        %v2484 = vadd.f32 %v2177, %v2407
        %v2485 = vadd.f32 %v2178, %v2410
        %v2486 = vadd.f32 %v2179, %v2413
        %v2487 = vadd.f32 %v2180, %v2416
        %v2488 = vadd.f32 %v2181, %v2419
        %v2489 = vadd.f32 %v2182, %v2422
        %v2490 = vadd.f32 %v2183, %v2425
        %v2491 = vadd.f32 %v2184, %v2428
        %v2492 = vadd.f32 %v2185, %v2431
        %v2493 = vadd.f32 %v2186, %v2434
        %v2494 = vadd.f32 %v2187, %v2437
        %v2495 = vadd.f32 %v2188, %v2440
        %v2496 = vadd.f32 %v2189, %v2443
        %v2497 = vadd.f32 %v2190, %v2446
        %v2498 = vadd.f32 %v2191, %v2449
        %v2499 = vadd.f32 %v2192, %v2452
        %v2500 = vadd.f32 %v2193, %v2455
        %v2501 = vadd.f32 %v2194, %v2458
        %v2502 = vadd.f32 %v2195, %v2461
        %v2503 = vadd.f32 %v2196, %v2464
        %v2504 = vadd.f32 %v2197, %v2467
        %v2505 = vld [vmem:[%s427 + $0x25] sm:$0xff]
        %v2506 = vld [vmem:[%s427 + $0x2d] sm:$0xff]
        %v2507 = vld [vmem:[%s427 + $0x35] sm:$0xff]
        %v2508 = vld [vmem:[%s427 + $0x3d] sm:$0xff]
        %v2509 = vld [vmem:[%s427 + $0x45] sm:$0xff]
        %v2510 = vld [vmem:[%s427 + $0x4d] sm:$0xff]
        %v2511 = vld [vmem:[%s427 + $0x55] sm:$0xff]
        %v2512 = vld [vmem:[%s427 + $0x5d] sm:$0xff]
        %v2513 = vld [vmem:[%s427 + $0x65] sm:$0xff]
        %v2514 = vld [vmem:[%s427 + $0x6d] sm:$0xff]
        %v2515 = vld [vmem:[%s427 + $0x75] sm:$0xff]
        %v2516 = vld [vmem:[%s427 + $0x7d] sm:$0xff]
        %v2517 = vld [vmem:[%s427 + $0x85] sm:$0xff]
        %v2518 = vld [vmem:[%s427 + $0x8d] sm:$0xff]
        %v2519 = vld [vmem:[%s427 + $0x95] sm:$0xff]
        %v2520 = vld [vmem:[%s427 + $0x9d] sm:$0xff]
        %v2521 = vld [vmem:[%s427 + $0xa5] sm:$0xff]
        %v2522 = vld [vmem:[%s427 + $0xad] sm:$0xff]
        %v2523 = vld [vmem:[%s427 + $0xb5] sm:$0xff]
        %v2524 = vld [vmem:[%s427 + $0xbd] sm:$0xff]
        %v2525 = vld [vmem:[%s427 + $0xc5] sm:$0xff]
        %v2526 = vld [vmem:[%s427 + $0xcd] sm:$0xff]
        %v2527 = vld [vmem:[%s427 + $0xd5] sm:$0xff]
        %v2528 = vld [vmem:[%s427 + $0xdd] sm:$0xff]
        %v2529 = vld [vmem:[%s427 + $0xe5] sm:$0xff]
        %v2530 = vld [vmem:[%s427 + $0xed] sm:$0xff]
        %v2531 = vld [vmem:[%s427 + $0xf5] sm:$0xff]
        %v2532 = vld [vmem:[%s427 + $0xfd] sm:$0xff]
        %v2533 = vld [vmem:[%s427 + $0x105] sm:$0xff]
        %v2534 = vld [vmem:[%s427 + $0x10d] sm:$0xff]
        %v2535 = vld [vmem:[%s427 + $0x115] sm:$0xff]
        %v2536 = vld [vmem:[%s427 + $0x11d] sm:$0xff]
        %v2537 = vld [vmem:[%s427 + $0x125] sm:$0xff]
        %v2538 = vld [vmem:[%s427 + $0x12d] sm:$0xff]
        %v2539 = vld [vmem:[%s427 + $0x135] sm:$0xff]
        %v2540 = vld [vmem:[%s427 + $0x13d] sm:$0xff]
        %s2541 = scalar_lea.vmem %s2, 56
        %v2542 = vld [vmem:[%s2541] sm:$0xff]
        %v2544 = vsel %vm503, %v2505, 0
        %v2547 = vsel %vm503, %v2506, 0
        %v2550 = vsel %vm503, %v2507, 0
        %v2553 = vsel %vm503, %v2508, 0
        %v2556 = vsel %vm503, %v2509, 0
        %v2559 = vsel %vm503, %v2510, 0
        %v2562 = vsel %vm503, %v2511, 0
        %v2565 = vsel %vm503, %v2512, 0
        %v2568 = vsel %vm503, %v2513, 0
        %v2571 = vsel %vm503, %v2514, 0
        %v2574 = vsel %vm503, %v2515, 0
        %v2577 = vsel %vm503, %v2516, 0
        %v2580 = vsel %vm503, %v2517, 0
        %v2583 = vsel %vm503, %v2518, 0
        %v2586 = vsel %vm503, %v2519, 0
        %v2589 = vsel %vm503, %v2520, 0
        %v2592 = vsel %vm503, %v2521, 0
        %v2595 = vsel %vm503, %v2522, 0
        %v2598 = vsel %vm503, %v2523, 0
        %v2601 = vsel %vm503, %v2524, 0
        %v2604 = vsel %vm503, %v2525, 0
        %v2607 = vsel %vm503, %v2526, 0
        %v2610 = vsel %vm503, %v2527, 0
        %v2613 = vsel %vm503, %v2528, 0
        %v2616 = vsel %vm503, %v2529, 0
        %v2619 = vsel %vm503, %v2530, 0
        %v2622 = vsel %vm503, %v2531, 0
        %v2625 = vsel %vm503, %v2532, 0
        %v2628 = vsel %vm503, %v2533, 0
        %v2631 = vsel %vm503, %v2534, 0
        %v2634 = vsel %vm503, %v2535, 0
        %v2637 = vsel %vm503, %v2536, 0
        %v2640 = vsel %vm503, %v2537, 0
        %v2643 = vsel %vm503, %v2538, 0
        %v2646 = vsel %vm503, %v2539, 0
        %v2649 = vsel %vm503, %v2540, 0
        %2651 = vmatpush.msra.mxu0 0.0
        %2652 = vmatpush.msra.mxu0 0.0
        %2653 = vmatpush.msra.mxu0 0.0
        %2654 = vmatpush.msra.mxu0 0.0
        %2655 = vmatpush.msra.mxu0 0.0
        %2656 = vmatpush.msra.mxu0 0.0
        %2657 = vmatpush.msra.mxu0 0.0
        %2658 = vmatpush.msra.mxu0 0.0
        %2659 = vmatpush.msra.mxu0 0.0
        %2660 = vmatpush.msra.mxu0 0.0
        %2661 = vmatpush.msra.mxu0 0.0
        %2662 = vmatpush.msra.mxu0 0.0
        %2663 = vmatpush.msra.mxu0 0.0
        %2664 = vmatpush.msra.mxu0 0.0
        %2665 = vmatpush.msra.mxu0 0.0
        %2666 = vmatpush.msra.mxu0 %v2542
        %2667 = vmatmul.f32.gmra.mxu0 %v2544
        %v2668 = vpop.f32.mrf.mxu0
        %v2669 = vadd.f32 0.0, %v2668
        %2670 = vmatmul.f32.gmra.mxu0 %v2547
        %v2671 = vpop.f32.mrf.mxu0
        %v2672 = vadd.f32 0.0, %v2671
        %2673 = vmatmul.f32.gmra.mxu0 %v2550
        %v2674 = vpop.f32.mrf.mxu0
        %v2675 = vadd.f32 0.0, %v2674
        %2676 = vmatmul.f32.gmra.mxu0 %v2553
        %v2677 = vpop.f32.mrf.mxu0
        %v2678 = vadd.f32 0.0, %v2677
        %2679 = vmatmul.f32.gmra.mxu0 %v2556
        %v2680 = vpop.f32.mrf.mxu0
        %v2681 = vadd.f32 0.0, %v2680
        %2682 = vmatmul.f32.gmra.mxu0 %v2559
        %v2683 = vpop.f32.mrf.mxu0
        %v2684 = vadd.f32 0.0, %v2683
        %2685 = vmatmul.f32.gmra.mxu0 %v2562
        %v2686 = vpop.f32.mrf.mxu0
        %v2687 = vadd.f32 0.0, %v2686
        %2688 = vmatmul.f32.gmra.mxu0 %v2565
        %v2689 = vpop.f32.mrf.mxu0
        %v2690 = vadd.f32 0.0, %v2689
        %2691 = vmatmul.f32.gmra.mxu0 %v2568
        %v2692 = vpop.f32.mrf.mxu0
        %v2693 = vadd.f32 0.0, %v2692
        %2694 = vmatmul.f32.gmra.mxu0 %v2571
        %v2695 = vpop.f32.mrf.mxu0
        %v2696 = vadd.f32 0.0, %v2695
        %2697 = vmatmul.f32.gmra.mxu0 %v2574
        %v2698 = vpop.f32.mrf.mxu0
        %v2699 = vadd.f32 0.0, %v2698
        %2700 = vmatmul.f32.gmra.mxu0 %v2577
        %v2701 = vpop.f32.mrf.mxu0
        %v2702 = vadd.f32 0.0, %v2701
        %2703 = vmatmul.f32.gmra.mxu0 %v2580
        %v2704 = vpop.f32.mrf.mxu0
        %v2705 = vadd.f32 0.0, %v2704
        %2706 = vmatmul.f32.gmra.mxu0 %v2583
        %v2707 = vpop.f32.mrf.mxu0
        %v2708 = vadd.f32 0.0, %v2707
        %2709 = vmatmul.f32.gmra.mxu0 %v2586
        %v2710 = vpop.f32.mrf.mxu0
        %v2711 = vadd.f32 0.0, %v2710
        %2712 = vmatmul.f32.gmra.mxu0 %v2589
        %v2713 = vpop.f32.mrf.mxu0
        %v2714 = vadd.f32 0.0, %v2713
        %2715 = vmatmul.f32.gmra.mxu0 %v2592
        %v2716 = vpop.f32.mrf.mxu0
        %v2717 = vadd.f32 0.0, %v2716
        %2718 = vmatmul.f32.gmra.mxu0 %v2595
        %v2719 = vpop.f32.mrf.mxu0
        %v2720 = vadd.f32 0.0, %v2719
        %2721 = vmatmul.f32.gmra.mxu0 %v2598
        %v2722 = vpop.f32.mrf.mxu0
        %v2723 = vadd.f32 0.0, %v2722
        %2724 = vmatmul.f32.gmra.mxu0 %v2601
        %v2725 = vpop.f32.mrf.mxu0
        %v2726 = vadd.f32 0.0, %v2725
        %2727 = vmatmul.f32.gmra.mxu0 %v2604
        %v2728 = vpop.f32.mrf.mxu0
        %v2729 = vadd.f32 0.0, %v2728
        %2730 = vmatmul.f32.gmra.mxu0 %v2607
        %v2731 = vpop.f32.mrf.mxu0
        %v2732 = vadd.f32 0.0, %v2731
        %2733 = vmatmul.f32.gmra.mxu0 %v2610
        %v2734 = vpop.f32.mrf.mxu0
        %v2735 = vadd.f32 0.0, %v2734
        %2736 = vmatmul.f32.gmra.mxu0 %v2613
        %v2737 = vpop.f32.mrf.mxu0
        %v2738 = vadd.f32 0.0, %v2737
        %2739 = vmatmul.f32.gmra.mxu0 %v2616
        %v2740 = vpop.f32.mrf.mxu0
        %v2741 = vadd.f32 0.0, %v2740
        %2742 = vmatmul.f32.gmra.mxu0 %v2619
        %v2743 = vpop.f32.mrf.mxu0
        %v2744 = vadd.f32 0.0, %v2743
        %2745 = vmatmul.f32.gmra.mxu0 %v2622
        %v2746 = vpop.f32.mrf.mxu0
        %v2747 = vadd.f32 0.0, %v2746
        %2748 = vmatmul.f32.gmra.mxu0 %v2625
        %v2749 = vpop.f32.mrf.mxu0
        %v2750 = vadd.f32 0.0, %v2749
        %2751 = vmatmul.f32.gmra.mxu0 %v2628
        %v2752 = vpop.f32.mrf.mxu0
        %v2753 = vadd.f32 0.0, %v2752
        %2754 = vmatmul.f32.gmra.mxu0 %v2631
        %v2755 = vpop.f32.mrf.mxu0
        %v2756 = vadd.f32 0.0, %v2755
        %2757 = vmatmul.f32.gmra.mxu0 %v2634
        %v2758 = vpop.f32.mrf.mxu0
        %v2759 = vadd.f32 0.0, %v2758
        %2760 = vmatmul.f32.gmra.mxu0 %v2637
        %v2761 = vpop.f32.mrf.mxu0
        %v2762 = vadd.f32 0.0, %v2761
        %2763 = vmatmul.f32.gmra.mxu0 %v2640
        %v2764 = vpop.f32.mrf.mxu0
        %v2765 = vadd.f32 0.0, %v2764
        %2766 = vmatmul.f32.gmra.mxu0 %v2643
        %v2767 = vpop.f32.mrf.mxu0
        %v2768 = vadd.f32 0.0, %v2767
        %2769 = vmatmul.f32.gmra.mxu0 %v2646
        %v2770 = vpop.f32.mrf.mxu0
        %v2771 = vadd.f32 0.0, %v2770
        %2772 = vmatmul.f32.gmra.mxu0 %v2649
        %v2773 = vpop.f32.mrf.mxu0
        %v2774 = vadd.f32 0.0, %v2773
        %2775 = vdwg.mxu0
        %v2776 = vadd.f32 %v2469, %v2669
        %v2777 = vadd.f32 %v2470, %v2672
        %v2778 = vadd.f32 %v2471, %v2675
        %v2779 = vadd.f32 %v2472, %v2678
        %v2780 = vadd.f32 %v2473, %v2681
        %v2781 = vadd.f32 %v2474, %v2684
        %v2782 = vadd.f32 %v2475, %v2687
        %v2783 = vadd.f32 %v2476, %v2690
        %v2784 = vadd.f32 %v2477, %v2693
        %v2785 = vadd.f32 %v2478, %v2696
        %v2786 = vadd.f32 %v2479, %v2699
        %v2787 = vadd.f32 %v2480, %v2702
        %v2788 = vadd.f32 %v2481, %v2705
        %v2789 = vadd.f32 %v2482, %v2708
        %v2790 = vadd.f32 %v2483, %v2711
        %v2791 = vadd.f32 %v2484, %v2714
        %v2792 = vadd.f32 %v2485, %v2717
        %v2793 = vadd.f32 %v2486, %v2720
        %v2794 = vadd.f32 %v2487, %v2723
        %v2795 = vadd.f32 %v2488, %v2726
        %v2796 = vadd.f32 %v2489, %v2729
        %v2797 = vadd.f32 %v2490, %v2732
        %v2798 = vadd.f32 %v2491, %v2735
        %v2799 = vadd.f32 %v2492, %v2738
        %v2800 = vadd.f32 %v2493, %v2741
        %v2801 = vadd.f32 %v2494, %v2744
        %v2802 = vadd.f32 %v2495, %v2747
        %v2803 = vadd.f32 %v2496, %v2750
        %v2804 = vadd.f32 %v2497, %v2753
        %v2805 = vadd.f32 %v2498, %v2756
        %v2806 = vadd.f32 %v2499, %v2759
        %v2807 = vadd.f32 %v2500, %v2762
        %v2808 = vadd.f32 %v2501, %v2765
        %v2809 = vadd.f32 %v2502, %v2768
        %v2810 = vadd.f32 %v2503, %v2771
        %v2811 = vadd.f32 %v2504, %v2774
        %v2812 = vld [vmem:[%s427 + $0x26] sm:$0xff]
        %v2813 = vld [vmem:[%s427 + $0x2e] sm:$0xff]
        %v2814 = vld [vmem:[%s427 + $0x36] sm:$0xff]
        %v2815 = vld [vmem:[%s427 + $0x3e] sm:$0xff]
        %v2816 = vld [vmem:[%s427 + $0x46] sm:$0xff]
        %v2817 = vld [vmem:[%s427 + $0x4e] sm:$0xff]
        %v2818 = vld [vmem:[%s427 + $0x56] sm:$0xff]
        %v2819 = vld [vmem:[%s427 + $0x5e] sm:$0xff]
        %v2820 = vld [vmem:[%s427 + $0x66] sm:$0xff]
        %v2821 = vld [vmem:[%s427 + $0x6e] sm:$0xff]
        %v2822 = vld [vmem:[%s427 + $0x76] sm:$0xff]
        %v2823 = vld [vmem:[%s427 + $0x7e] sm:$0xff]
        %v2824 = vld [vmem:[%s427 + $0x86] sm:$0xff]
        %v2825 = vld [vmem:[%s427 + $0x8e] sm:$0xff]
        %v2826 = vld [vmem:[%s427 + $0x96] sm:$0xff]
        %v2827 = vld [vmem:[%s427 + $0x9e] sm:$0xff]
        %v2828 = vld [vmem:[%s427 + $0xa6] sm:$0xff]
        %v2829 = vld [vmem:[%s427 + $0xae] sm:$0xff]
        %v2830 = vld [vmem:[%s427 + $0xb6] sm:$0xff]
        %v2831 = vld [vmem:[%s427 + $0xbe] sm:$0xff]
        %v2832 = vld [vmem:[%s427 + $0xc6] sm:$0xff]
        %v2833 = vld [vmem:[%s427 + $0xce] sm:$0xff]
        %v2834 = vld [vmem:[%s427 + $0xd6] sm:$0xff]
        %v2835 = vld [vmem:[%s427 + $0xde] sm:$0xff]
        %v2836 = vld [vmem:[%s427 + $0xe6] sm:$0xff]
        %v2837 = vld [vmem:[%s427 + $0xee] sm:$0xff]
        %v2838 = vld [vmem:[%s427 + $0xf6] sm:$0xff]
        %v2839 = vld [vmem:[%s427 + $0xfe] sm:$0xff]
        %v2840 = vld [vmem:[%s427 + $0x106] sm:$0xff]
        %v2841 = vld [vmem:[%s427 + $0x10e] sm:$0xff]
        %v2842 = vld [vmem:[%s427 + $0x116] sm:$0xff]
        %v2843 = vld [vmem:[%s427 + $0x11e] sm:$0xff]
        %v2844 = vld [vmem:[%s427 + $0x126] sm:$0xff]
        %v2845 = vld [vmem:[%s427 + $0x12e] sm:$0xff]
        %v2846 = vld [vmem:[%s427 + $0x136] sm:$0xff]
        %v2847 = vld [vmem:[%s427 + $0x13e] sm:$0xff]
        %s2848 = scalar_lea.vmem %s2, 64
        %v2849 = vld [vmem:[%s2848] sm:$0xff]
        %v2851 = vsel %vm503, %v2812, 0
        %v2854 = vsel %vm503, %v2813, 0
        %v2857 = vsel %vm503, %v2814, 0
        %v2860 = vsel %vm503, %v2815, 0
        %v2863 = vsel %vm503, %v2816, 0
        %v2866 = vsel %vm503, %v2817, 0
        %v2869 = vsel %vm503, %v2818, 0
        %v2872 = vsel %vm503, %v2819, 0
        %v2875 = vsel %vm503, %v2820, 0
        %v2878 = vsel %vm503, %v2821, 0
        %v2881 = vsel %vm503, %v2822, 0
        %v2884 = vsel %vm503, %v2823, 0
        %v2887 = vsel %vm503, %v2824, 0
        %v2890 = vsel %vm503, %v2825, 0
        %v2893 = vsel %vm503, %v2826, 0
        %v2896 = vsel %vm503, %v2827, 0
        %v2899 = vsel %vm503, %v2828, 0
        %v2902 = vsel %vm503, %v2829, 0
        %v2905 = vsel %vm503, %v2830, 0
        %v2908 = vsel %vm503, %v2831, 0
        %v2911 = vsel %vm503, %v2832, 0
        %v2914 = vsel %vm503, %v2833, 0
        %v2917 = vsel %vm503, %v2834, 0
        %v2920 = vsel %vm503, %v2835, 0
        %v2923 = vsel %vm503, %v2836, 0
        %v2926 = vsel %vm503, %v2837, 0
        %v2929 = vsel %vm503, %v2838, 0
        %v2932 = vsel %vm503, %v2839, 0
        %v2935 = vsel %vm503, %v2840, 0
        %v2938 = vsel %vm503, %v2841, 0
        %v2941 = vsel %vm503, %v2842, 0
        %v2944 = vsel %vm503, %v2843, 0
        %v2947 = vsel %vm503, %v2844, 0
        %v2950 = vsel %vm503, %v2845, 0
        %v2953 = vsel %vm503, %v2846, 0
        %v2956 = vsel %vm503, %v2847, 0
        %2958 = vmatpush.msra.mxu0 0.0
        %2959 = vmatpush.msra.mxu0 0.0
        %2960 = vmatpush.msra.mxu0 0.0
        %2961 = vmatpush.msra.mxu0 0.0
        %2962 = vmatpush.msra.mxu0 0.0
        %2963 = vmatpush.msra.mxu0 0.0
        %2964 = vmatpush.msra.mxu0 0.0
        %2965 = vmatpush.msra.mxu0 0.0
        %2966 = vmatpush.msra.mxu0 0.0
        %2967 = vmatpush.msra.mxu0 0.0
        %2968 = vmatpush.msra.mxu0 0.0
        %2969 = vmatpush.msra.mxu0 0.0
        %2970 = vmatpush.msra.mxu0 0.0
        %2971 = vmatpush.msra.mxu0 0.0
        %2972 = vmatpush.msra.mxu0 0.0
        %2973 = vmatpush.msra.mxu0 %v2849
        %2974 = vmatmul.f32.gmra.mxu0 %v2851
        %v2975 = vpop.f32.mrf.mxu0
        %v2976 = vadd.f32 0.0, %v2975
        %2977 = vmatmul.f32.gmra.mxu0 %v2854
        %v2978 = vpop.f32.mrf.mxu0
        %v2979 = vadd.f32 0.0, %v2978
        %2980 = vmatmul.f32.gmra.mxu0 %v2857
        %v2981 = vpop.f32.mrf.mxu0
        %v2982 = vadd.f32 0.0, %v2981
        %2983 = vmatmul.f32.gmra.mxu0 %v2860
        %v2984 = vpop.f32.mrf.mxu0
        %v2985 = vadd.f32 0.0, %v2984
        %2986 = vmatmul.f32.gmra.mxu0 %v2863
        %v2987 = vpop.f32.mrf.mxu0
        %v2988 = vadd.f32 0.0, %v2987
        %2989 = vmatmul.f32.gmra.mxu0 %v2866
        %v2990 = vpop.f32.mrf.mxu0
        %v2991 = vadd.f32 0.0, %v2990
        %2992 = vmatmul.f32.gmra.mxu0 %v2869
        %v2993 = vpop.f32.mrf.mxu0
        %v2994 = vadd.f32 0.0, %v2993
        %2995 = vmatmul.f32.gmra.mxu0 %v2872
        %v2996 = vpop.f32.mrf.mxu0
        %v2997 = vadd.f32 0.0, %v2996
        %2998 = vmatmul.f32.gmra.mxu0 %v2875
        %v2999 = vpop.f32.mrf.mxu0
        %v3000 = vadd.f32 0.0, %v2999
        %3001 = vmatmul.f32.gmra.mxu0 %v2878
        %v3002 = vpop.f32.mrf.mxu0
        %v3003 = vadd.f32 0.0, %v3002
        %3004 = vmatmul.f32.gmra.mxu0 %v2881
        %v3005 = vpop.f32.mrf.mxu0
        %v3006 = vadd.f32 0.0, %v3005
        %3007 = vmatmul.f32.gmra.mxu0 %v2884
        %v3008 = vpop.f32.mrf.mxu0
        %v3009 = vadd.f32 0.0, %v3008
        %3010 = vmatmul.f32.gmra.mxu0 %v2887
        %v3011 = vpop.f32.mrf.mxu0
        %v3012 = vadd.f32 0.0, %v3011
        %3013 = vmatmul.f32.gmra.mxu0 %v2890
        %v3014 = vpop.f32.mrf.mxu0
        %v3015 = vadd.f32 0.0, %v3014
        %3016 = vmatmul.f32.gmra.mxu0 %v2893
        %v3017 = vpop.f32.mrf.mxu0
        %v3018 = vadd.f32 0.0, %v3017
        %3019 = vmatmul.f32.gmra.mxu0 %v2896
        %v3020 = vpop.f32.mrf.mxu0
        %v3021 = vadd.f32 0.0, %v3020
        %3022 = vmatmul.f32.gmra.mxu0 %v2899
        %v3023 = vpop.f32.mrf.mxu0
        %v3024 = vadd.f32 0.0, %v3023
        %3025 = vmatmul.f32.gmra.mxu0 %v2902
        %v3026 = vpop.f32.mrf.mxu0
        %v3027 = vadd.f32 0.0, %v3026
        %3028 = vmatmul.f32.gmra.mxu0 %v2905
        %v3029 = vpop.f32.mrf.mxu0
        %v3030 = vadd.f32 0.0, %v3029
        %3031 = vmatmul.f32.gmra.mxu0 %v2908
        %v3032 = vpop.f32.mrf.mxu0
        %v3033 = vadd.f32 0.0, %v3032
        %3034 = vmatmul.f32.gmra.mxu0 %v2911
        %v3035 = vpop.f32.mrf.mxu0
        %v3036 = vadd.f32 0.0, %v3035
        %3037 = vmatmul.f32.gmra.mxu0 %v2914
        %v3038 = vpop.f32.mrf.mxu0
        %v3039 = vadd.f32 0.0, %v3038
        %3040 = vmatmul.f32.gmra.mxu0 %v2917
        %v3041 = vpop.f32.mrf.mxu0
        %v3042 = vadd.f32 0.0, %v3041
        %3043 = vmatmul.f32.gmra.mxu0 %v2920
        %v3044 = vpop.f32.mrf.mxu0
        %v3045 = vadd.f32 0.0, %v3044
        %3046 = vmatmul.f32.gmra.mxu0 %v2923
        %v3047 = vpop.f32.mrf.mxu0
        %v3048 = vadd.f32 0.0, %v3047
        %3049 = vmatmul.f32.gmra.mxu0 %v2926
        %v3050 = vpop.f32.mrf.mxu0
        %v3051 = vadd.f32 0.0, %v3050
        %3052 = vmatmul.f32.gmra.mxu0 %v2929
        %v3053 = vpop.f32.mrf.mxu0
        %v3054 = vadd.f32 0.0, %v3053
        %3055 = vmatmul.f32.gmra.mxu0 %v2932
        %v3056 = vpop.f32.mrf.mxu0
        %v3057 = vadd.f32 0.0, %v3056
        %3058 = vmatmul.f32.gmra.mxu0 %v2935
        %v3059 = vpop.f32.mrf.mxu0
        %v3060 = vadd.f32 0.0, %v3059
        %3061 = vmatmul.f32.gmra.mxu0 %v2938
        %v3062 = vpop.f32.mrf.mxu0
        %v3063 = vadd.f32 0.0, %v3062
        %3064 = vmatmul.f32.gmra.mxu0 %v2941
        %v3065 = vpop.f32.mrf.mxu0
        %v3066 = vadd.f32 0.0, %v3065
        %3067 = vmatmul.f32.gmra.mxu0 %v2944
        %v3068 = vpop.f32.mrf.mxu0
        %v3069 = vadd.f32 0.0, %v3068
        %3070 = vmatmul.f32.gmra.mxu0 %v2947
        %v3071 = vpop.f32.mrf.mxu0
        %v3072 = vadd.f32 0.0, %v3071
        %3073 = vmatmul.f32.gmra.mxu0 %v2950
        %v3074 = vpop.f32.mrf.mxu0
        %v3075 = vadd.f32 0.0, %v3074
        %3076 = vmatmul.f32.gmra.mxu0 %v2953
        %v3077 = vpop.f32.mrf.mxu0
        %v3078 = vadd.f32 0.0, %v3077
        %3079 = vmatmul.f32.gmra.mxu0 %v2956
        %v3080 = vpop.f32.mrf.mxu0
        %v3081 = vadd.f32 0.0, %v3080
        %3082 = vdwg.mxu0
        %v3083 = vadd.f32 %v2776, %v2976
        %v3084 = vadd.f32 %v2777, %v2979
        %v3085 = vadd.f32 %v2778, %v2982
        %v3086 = vadd.f32 %v2779, %v2985
        %v3087 = vadd.f32 %v2780, %v2988
        %v3088 = vadd.f32 %v2781, %v2991
        %v3089 = vadd.f32 %v2782, %v2994
        %v3090 = vadd.f32 %v2783, %v2997
        %v3091 = vadd.f32 %v2784, %v3000
        %v3092 = vadd.f32 %v2785, %v3003
        %v3093 = vadd.f32 %v2786, %v3006
        %v3094 = vadd.f32 %v2787, %v3009
        %v3095 = vadd.f32 %v2788, %v3012
        %v3096 = vadd.f32 %v2789, %v3015
        %v3097 = vadd.f32 %v2790, %v3018
        %v3098 = vadd.f32 %v2791, %v3021
        %v3099 = vadd.f32 %v2792, %v3024
        %v3100 = vadd.f32 %v2793, %v3027
        %v3101 = vadd.f32 %v2794, %v3030
        %v3102 = vadd.f32 %v2795, %v3033
        %v3103 = vadd.f32 %v2796, %v3036
        %v3104 = vadd.f32 %v2797, %v3039
        %v3105 = vadd.f32 %v2798, %v3042
        %v3106 = vadd.f32 %v2799, %v3045
        %v3107 = vadd.f32 %v2800, %v3048
        %v3108 = vadd.f32 %v2801, %v3051
        %v3109 = vadd.f32 %v2802, %v3054
        %v3110 = vadd.f32 %v2803, %v3057
        %v3111 = vadd.f32 %v2804, %v3060
        %v3112 = vadd.f32 %v2805, %v3063
        %v3113 = vadd.f32 %v2806, %v3066
        %v3114 = vadd.f32 %v2807, %v3069
        %v3115 = vadd.f32 %v2808, %v3072
        %v3116 = vadd.f32 %v2809, %v3075
        %v3117 = vadd.f32 %v2810, %v3078
        %v3118 = vadd.f32 %v2811, %v3081
        %v3119 = vld [vmem:[%s3] sm:$0x1]
        %v3121 = vperm.slane %v3119, 0
        %v3123 = vadd.f32 %v3083, %v3121
        %v3124 = vadd.f32 %v3084, %v3121
        %v3125 = vadd.f32 %v3085, %v3121
        %v3126 = vadd.f32 %v3086, %v3121
        %v3127 = vadd.f32 %v3087, %v3121
        %v3128 = vadd.f32 %v3088, %v3121
        %v3129 = vadd.f32 %v3089, %v3121
        %v3130 = vadd.f32 %v3090, %v3121
        %v3131 = vadd.f32 %v3091, %v3121
        %v3132 = vadd.f32 %v3092, %v3121
        %v3133 = vadd.f32 %v3093, %v3121
        %v3134 = vadd.f32 %v3094, %v3121
        %v3135 = vadd.f32 %v3095, %v3121
        %v3136 = vadd.f32 %v3096, %v3121
        %v3137 = vadd.f32 %v3097, %v3121
        %v3138 = vadd.f32 %v3098, %v3121
        %v3139 = vadd.f32 %v3099, %v3121
        %v3140 = vadd.f32 %v3100, %v3121
        %v3141 = vadd.f32 %v3101, %v3121
        %v3142 = vadd.f32 %v3102, %v3121
        %v3143 = vadd.f32 %v3103, %v3121
        %v3144 = vadd.f32 %v3104, %v3121
        %v3145 = vadd.f32 %v3105, %v3121
        %v3146 = vadd.f32 %v3106, %v3121
        %v3147 = vadd.f32 %v3107, %v3121
        %v3148 = vadd.f32 %v3108, %v3121
        %v3149 = vadd.f32 %v3109, %v3121
        %v3150 = vadd.f32 %v3110, %v3121
        %v3151 = vadd.f32 %v3111, %v3121
        %v3152 = vadd.f32 %v3112, %v3121
        %v3153 = vadd.f32 %v3113, %v3121
        %v3154 = vadd.f32 %v3114, %v3121
        %v3155 = vadd.f32 %v3115, %v3121
        %v3156 = vadd.f32 %v3116, %v3121
        %v3157 = vadd.f32 %v3117, %v3121
        %v3158 = vadd.f32 %v3118, %v3121
        %v3159 = vmax.f32 %v3123, 0.0
        %v3160 = vmax.f32 %v3124, 0.0
        %v3161 = vmax.f32 %v3125, 0.0
        %v3162 = vmax.f32 %v3126, 0.0
        %v3163 = vmax.f32 %v3127, 0.0
        %v3164 = vmax.f32 %v3128, 0.0
        %v3165 = vmax.f32 %v3129, 0.0
        %v3166 = vmax.f32 %v3130, 0.0
        %v3167 = vmax.f32 %v3131, 0.0
        %v3168 = vmax.f32 %v3132, 0.0
        %v3169 = vmax.f32 %v3133, 0.0
        %v3170 = vmax.f32 %v3134, 0.0
        %v3171 = vmax.f32 %v3135, 0.0
        %v3172 = vmax.f32 %v3136, 0.0
        %v3173 = vmax.f32 %v3137, 0.0
        %v3174 = vmax.f32 %v3138, 0.0
        %v3175 = vmax.f32 %v3139, 0.0
        %v3176 = vmax.f32 %v3140, 0.0
        %v3177 = vmax.f32 %v3141, 0.0
        %v3178 = vmax.f32 %v3142, 0.0
        %v3179 = vmax.f32 %v3143, 0.0
        %v3180 = vmax.f32 %v3144, 0.0
        %v3181 = vmax.f32 %v3145, 0.0
        %v3182 = vmax.f32 %v3146, 0.0
        %v3183 = vmax.f32 %v3147, 0.0
        %v3184 = vmax.f32 %v3148, 0.0
        %v3185 = vmax.f32 %v3149, 0.0
        %v3186 = vmax.f32 %v3150, 0.0
        %v3187 = vmax.f32 %v3151, 0.0
        %v3188 = vmax.f32 %v3152, 0.0
        %v3189 = vmax.f32 %v3153, 0.0
        %v3190 = vmax.f32 %v3154, 0.0
        %v3191 = vmax.f32 %v3155, 0.0
        %v3192 = vmax.f32 %v3156, 0.0
        %v3193 = vmax.f32 %v3157, 0.0
        %v3194 = vmax.f32 %v3158, 0.0
        %v3195 = vld [vmem:[%s1] sm:$0xff]
        %v3196 = vld [vmem:[%s1 + $0x8] sm:$0xff]
        %v3197 = vld [vmem:[%s1 + $0x10] sm:$0xff]
        %v3198 = vld [vmem:[%s1 + $0x18] sm:$0xff]
        %v3199 = vld [vmem:[%s1 + $0x20] sm:$0xff]
        %v3200 = vld [vmem:[%s1 + $0x28] sm:$0xff]
        %v3201 = vld [vmem:[%s1 + $0x30] sm:$0xff]
        %v3202 = vld [vmem:[%s1 + $0x38] sm:$0xff]
        %v3203 = vld [vmem:[%s1 + $0x40] sm:$0xff]
        %v3204 = vld [vmem:[%s1 + $0x48] sm:$0xff]
        %v3205 = vld [vmem:[%s1 + $0x50] sm:$0xff]
        %v3206 = vld [vmem:[%s1 + $0x58] sm:$0xff]
        %v3207 = vld [vmem:[%s1 + $0x60] sm:$0xff]
        %v3208 = vld [vmem:[%s1 + $0x68] sm:$0xff]
        %v3209 = vld [vmem:[%s1 + $0x70] sm:$0xff]
        %v3210 = vld [vmem:[%s1 + $0x78] sm:$0xff]
        %v3211 = vld [vmem:[%s1 + $0x80] sm:$0xff]
        %v3212 = vld [vmem:[%s1 + $0x88] sm:$0xff]
        %v3213 = vld [vmem:[%s1 + $0x90] sm:$0xff]
        %v3214 = vld [vmem:[%s1 + $0x98] sm:$0xff]
        %v3215 = vld [vmem:[%s1 + $0xa0] sm:$0xff]
        %v3216 = vld [vmem:[%s1 + $0xa8] sm:$0xff]
        %v3217 = vld [vmem:[%s1 + $0xb0] sm:$0xff]
        %v3218 = vld [vmem:[%s1 + $0xb8] sm:$0xff]
        %v3219 = vld [vmem:[%s1 + $0xc0] sm:$0xff]
        %v3220 = vld [vmem:[%s1 + $0xc8] sm:$0xff]
        %v3221 = vld [vmem:[%s1 + $0xd0] sm:$0xff]
        %v3222 = vld [vmem:[%s1 + $0xd8] sm:$0xff]
        %v3223 = vld [vmem:[%s1 + $0xe0] sm:$0xff]
        %v3224 = vld [vmem:[%s1 + $0xe8] sm:$0xff]
        %v3225 = vld [vmem:[%s1 + $0xf0] sm:$0xff]
        %v3226 = vld [vmem:[%s1 + $0xf8] sm:$0xff]
        %v3227 = vld [vmem:[%s1 + $0x100] sm:$0xff]
        %v3228 = vld [vmem:[%s1 + $0x108] sm:$0xff]
        %v3229 = vld [vmem:[%s1 + $0x110] sm:$0xff]
        %v3230 = vld [vmem:[%s1 + $0x118] sm:$0xff]
        %3232 = vset.pattern.permute.xlu0 0
        %3233 = vperm.xlu0 %3232, %v3195
        %v3234 = vpop.permute.xlu0 %3233
        %3237 = vset.pattern.permute.xlu0 0
        %3238 = vperm.xlu0 %3237, %v3196
        %v3239 = vpop.permute.xlu0 %3238
        %3242 = vset.pattern.permute.xlu0 0
        %3243 = vperm.xlu0 %3242, %v3197
        %v3244 = vpop.permute.xlu0 %3243
        %3247 = vset.pattern.permute.xlu0 0
        %3248 = vperm.xlu0 %3247, %v3198
        %v3249 = vpop.permute.xlu0 %3248
        %3252 = vset.pattern.permute.xlu0 0
        %3253 = vperm.xlu0 %3252, %v3199
        %v3254 = vpop.permute.xlu0 %3253
        %3257 = vset.pattern.permute.xlu0 0
        %3258 = vperm.xlu0 %3257, %v3200
        %v3259 = vpop.permute.xlu0 %3258
        %3262 = vset.pattern.permute.xlu0 0
        %3263 = vperm.xlu0 %3262, %v3201
        %v3264 = vpop.permute.xlu0 %3263
        %3267 = vset.pattern.permute.xlu0 0
        %3268 = vperm.xlu0 %3267, %v3202
        %v3269 = vpop.permute.xlu0 %3268
        %3272 = vset.pattern.permute.xlu0 0
        %3273 = vperm.xlu0 %3272, %v3203
        %v3274 = vpop.permute.xlu0 %3273
        %3277 = vset.pattern.permute.xlu0 0
        %3278 = vperm.xlu0 %3277, %v3204
        %v3279 = vpop.permute.xlu0 %3278
        %3282 = vset.pattern.permute.xlu0 0
        %3283 = vperm.xlu0 %3282, %v3205
        %v3284 = vpop.permute.xlu0 %3283
        %3287 = vset.pattern.permute.xlu0 0
        %3288 = vperm.xlu0 %3287, %v3206
        %v3289 = vpop.permute.xlu0 %3288
        %3292 = vset.pattern.permute.xlu0 0
        %3293 = vperm.xlu0 %3292, %v3207
        %v3294 = vpop.permute.xlu0 %3293
        %3297 = vset.pattern.permute.xlu0 0
        %3298 = vperm.xlu0 %3297, %v3208
        %v3299 = vpop.permute.xlu0 %3298
        %3302 = vset.pattern.permute.xlu0 0
        %3303 = vperm.xlu0 %3302, %v3209
        %v3304 = vpop.permute.xlu0 %3303
        %3307 = vset.pattern.permute.xlu0 0
        %3308 = vperm.xlu0 %3307, %v3210
        %v3309 = vpop.permute.xlu0 %3308
        %3312 = vset.pattern.permute.xlu0 0
        %3313 = vperm.xlu0 %3312, %v3211
        %v3314 = vpop.permute.xlu0 %3313
        %3317 = vset.pattern.permute.xlu0 0
        %3318 = vperm.xlu0 %3317, %v3212
        %v3319 = vpop.permute.xlu0 %3318
        %3322 = vset.pattern.permute.xlu0 0
        %3323 = vperm.xlu0 %3322, %v3213
        %v3324 = vpop.permute.xlu0 %3323
        %3327 = vset.pattern.permute.xlu0 0
        %3328 = vperm.xlu0 %3327, %v3214
        %v3329 = vpop.permute.xlu0 %3328
        %3332 = vset.pattern.permute.xlu0 0
        %3333 = vperm.xlu0 %3332, %v3215
        %v3334 = vpop.permute.xlu0 %3333
        %3337 = vset.pattern.permute.xlu0 0
        %3338 = vperm.xlu0 %3337, %v3216
        %v3339 = vpop.permute.xlu0 %3338
        %3342 = vset.pattern.permute.xlu0 0
        %3343 = vperm.xlu0 %3342, %v3217
        %v3344 = vpop.permute.xlu0 %3343
        %3347 = vset.pattern.permute.xlu0 0
        %3348 = vperm.xlu0 %3347, %v3218
        %v3349 = vpop.permute.xlu0 %3348
        %3352 = vset.pattern.permute.xlu0 0
        %3353 = vperm.xlu0 %3352, %v3219
        %v3354 = vpop.permute.xlu0 %3353
        %3357 = vset.pattern.permute.xlu0 0
        %3358 = vperm.xlu0 %3357, %v3220
        %v3359 = vpop.permute.xlu0 %3358
        %3362 = vset.pattern.permute.xlu0 0
        %3363 = vperm.xlu0 %3362, %v3221
        %v3364 = vpop.permute.xlu0 %3363
        %3367 = vset.pattern.permute.xlu0 0
        %3368 = vperm.xlu0 %3367, %v3222
        %v3369 = vpop.permute.xlu0 %3368
        %3372 = vset.pattern.permute.xlu0 0
        %3373 = vperm.xlu0 %3372, %v3223
        %v3374 = vpop.permute.xlu0 %3373
        %3377 = vset.pattern.permute.xlu0 0
        %3378 = vperm.xlu0 %3377, %v3224
        %v3379 = vpop.permute.xlu0 %3378
        %3382 = vset.pattern.permute.xlu0 0
        %3383 = vperm.xlu0 %3382, %v3225
        %v3384 = vpop.permute.xlu0 %3383
        %3387 = vset.pattern.permute.xlu0 0
        %3388 = vperm.xlu0 %3387, %v3226
        %v3389 = vpop.permute.xlu0 %3388
        %3392 = vset.pattern.permute.xlu0 0
        %3393 = vperm.xlu0 %3392, %v3227
        %v3394 = vpop.permute.xlu0 %3393
        %3397 = vset.pattern.permute.xlu0 0
        %3398 = vperm.xlu0 %3397, %v3228
        %v3399 = vpop.permute.xlu0 %3398
        %3402 = vset.pattern.permute.xlu0 0
        %3403 = vperm.xlu0 %3402, %v3229
        %v3404 = vpop.permute.xlu0 %3403
        %3407 = vset.pattern.permute.xlu0 0
        %3408 = vperm.xlu0 %3407, %v3230
        %v3409 = vpop.permute.xlu0 %3408
        %v3411 = vmul.f32 %v3159, %v3234
        %v3412 = vmul.f32 %v3160, %v3239
        %v3413 = vmul.f32 %v3161, %v3244
        %v3414 = vmul.f32 %v3162, %v3249
        %v3415 = vmul.f32 %v3163, %v3254
        %v3416 = vmul.f32 %v3164, %v3259
        %v3417 = vmul.f32 %v3165, %v3264
        %v3418 = vmul.f32 %v3166, %v3269
        %v3419 = vmul.f32 %v3167, %v3274
        %v3420 = vmul.f32 %v3168, %v3279
        %v3421 = vmul.f32 %v3169, %v3284
        %v3422 = vmul.f32 %v3170, %v3289
        %v3423 = vmul.f32 %v3171, %v3294
        %v3424 = vmul.f32 %v3172, %v3299
        %v3425 = vmul.f32 %v3173, %v3304
        %v3426 = vmul.f32 %v3174, %v3309
        %v3427 = vmul.f32 %v3175, %v3314
        %v3428 = vmul.f32 %v3176, %v3319
        %v3429 = vmul.f32 %v3177, %v3324
        %v3430 = vmul.f32 %v3178, %v3329
        %v3431 = vmul.f32 %v3179, %v3334
        %v3432 = vmul.f32 %v3180, %v3339
        %v3433 = vmul.f32 %v3181, %v3344
        %v3434 = vmul.f32 %v3182, %v3349
        %v3435 = vmul.f32 %v3183, %v3354
        %v3436 = vmul.f32 %v3184, %v3359
        %v3437 = vmul.f32 %v3185, %v3364
        %v3438 = vmul.f32 %v3186, %v3369
        %v3439 = vmul.f32 %v3187, %v3374
        %v3440 = vmul.f32 %v3188, %v3379
        %v3441 = vmul.f32 %v3189, %v3384
        %v3442 = vmul.f32 %v3190, %v3389
        %v3443 = vmul.f32 %v3191, %v3394
        %v3444 = vmul.f32 %v3192, %v3399
        %v3445 = vmul.f32 %v3193, %v3404
        %v3446 = vmul.f32 %v3194, %v3409
        %3447 = vst [vmem:[#allocation2] sm:$0xff] %v3411
        %3448 = vst [vmem:[#allocation2 + $0x8] sm:$0xff] %v3412
        %3449 = vst [vmem:[#allocation2 + $0x10] sm:$0xff] %v3413
        %3450 = vst [vmem:[#allocation2 + $0x18] sm:$0xff] %v3414
        %3451 = vst [vmem:[#allocation2 + $0x20] sm:$0xff] %v3415
        %3452 = vst [vmem:[#allocation2 + $0x28] sm:$0xff] %v3416
        %3453 = vst [vmem:[#allocation2 + $0x30] sm:$0xff] %v3417
        %3454 = vst [vmem:[#allocation2 + $0x38] sm:$0xff] %v3418
        %3455 = vst [vmem:[#allocation2 + $0x40] sm:$0xff] %v3419
        %3456 = vst [vmem:[#allocation2 + $0x48] sm:$0xff] %v3420
        %3457 = vst [vmem:[#allocation2 + $0x50] sm:$0xff] %v3421
        %3458 = vst [vmem:[#allocation2 + $0x58] sm:$0xff] %v3422
        %3459 = vst [vmem:[#allocation2 + $0x60] sm:$0xff] %v3423
        %3460 = vst [vmem:[#allocation2 + $0x68] sm:$0xff] %v3424
        %3461 = vst [vmem:[#allocation2 + $0x70] sm:$0xff] %v3425
        %3462 = vst [vmem:[#allocation2 + $0x78] sm:$0xff] %v3426
        %3463 = vst [vmem:[#allocation2 + $0x80] sm:$0xff] %v3427
        %3464 = vst [vmem:[#allocation2 + $0x88] sm:$0xff] %v3428
        %3465 = vst [vmem:[#allocation2 + $0x90] sm:$0xff] %v3429
        %3466 = vst [vmem:[#allocation2 + $0x98] sm:$0xff] %v3430
        %3467 = vst [vmem:[#allocation2 + $0xa0] sm:$0xff] %v3431
        %3468 = vst [vmem:[#allocation2 + $0xa8] sm:$0xff] %v3432
        %3469 = vst [vmem:[#allocation2 + $0xb0] sm:$0xff] %v3433
        %3470 = vst [vmem:[#allocation2 + $0xb8] sm:$0xff] %v3434
        %3471 = vst [vmem:[#allocation2 + $0xc0] sm:$0xff] %v3435
        %3472 = vst [vmem:[#allocation2 + $0xc8] sm:$0xff] %v3436
        %3473 = vst [vmem:[#allocation2 + $0xd0] sm:$0xff] %v3437
        %3474 = vst [vmem:[#allocation2 + $0xd8] sm:$0xff] %v3438
        %3475 = vst [vmem:[#allocation2 + $0xe0] sm:$0xff] %v3439
        %3476 = vst [vmem:[#allocation2 + $0xe8] sm:$0xff] %v3440
        %3477 = vst [vmem:[#allocation2 + $0xf0] sm:$0xff] %v3441
        %3478 = vst [vmem:[#allocation2 + $0xf8] sm:$0xff] %v3442
        %3479 = vst [vmem:[#allocation2 + $0x100] sm:$0xff] %v3443
        %3480 = vst [vmem:[#allocation2 + $0x108] sm:$0xff] %v3444
        %3481 = vst [vmem:[#allocation2 + $0x110] sm:$0xff] %v3445
        %3482 = vst [vmem:[#allocation2 + $0x118] sm:$0xff] %v3446
        %3483 = vst [vmem:[#allocation2 + $0x120] sm:$0xff] 0.0
        %v3484 = vld [vmem:[#allocation2] sm:$0xff]
        %v3485 = vld [vmem:[#allocation2 + $0x8] sm:$0xff]
        %v3486 = vld [vmem:[#allocation2 + $0x10] sm:$0xff]
        %v3487 = vld [vmem:[#allocation2 + $0x18] sm:$0xff]
        %v3488 = vld [vmem:[#allocation2 + $0x20] sm:$0xff]
        %v3489 = vld [vmem:[#allocation2 + $0x28] sm:$0xff]
        %v3490 = vld [vmem:[#allocation2 + $0x30] sm:$0xff]
        %v3491 = vld [vmem:[#allocation2 + $0x38] sm:$0xff]
        %v3492 = vld [vmem:[#allocation2 + $0x40] sm:$0xff]
        %v3493 = vld [vmem:[#allocation2 + $0x48] sm:$0xff]
        %v3494 = vld [vmem:[#allocation2 + $0x50] sm:$0xff]
        %v3495 = vld [vmem:[#allocation2 + $0x58] sm:$0xff]
        %v3496 = vld [vmem:[#allocation2 + $0x60] sm:$0xff]
        %v3497 = vld [vmem:[#allocation2 + $0x68] sm:$0xff]
        %v3498 = vld [vmem:[#allocation2 + $0x70] sm:$0xff]
        %v3499 = vld [vmem:[#allocation2 + $0x78] sm:$0xff]
        %v3500 = vld [vmem:[#allocation2 + $0x80] sm:$0xff]
        %v3501 = vld [vmem:[#allocation2 + $0x88] sm:$0xff]
        %v3502 = vld [vmem:[#allocation2 + $0x90] sm:$0xff]
        %v3503 = vld [vmem:[#allocation2 + $0x98] sm:$0xff]
        %v3504 = vld [vmem:[#allocation2 + $0xa0] sm:$0xff]
        %v3505 = vld [vmem:[#allocation2 + $0xa8] sm:$0xff]
        %v3506 = vld [vmem:[#allocation2 + $0xb0] sm:$0xff]
        %v3507 = vld [vmem:[#allocation2 + $0xb8] sm:$0xff]
        %v3508 = vld [vmem:[#allocation2 + $0xc0] sm:$0xff]
        %v3509 = vld [vmem:[#allocation2 + $0xc8] sm:$0xff]
        %v3510 = vld [vmem:[#allocation2 + $0xd0] sm:$0xff]
        %v3511 = vld [vmem:[#allocation2 + $0xd8] sm:$0xff]
        %v3512 = vld [vmem:[#allocation2 + $0xe0] sm:$0xff]
        %v3513 = vld [vmem:[#allocation2 + $0xe8] sm:$0xff]
        %v3514 = vld [vmem:[#allocation2 + $0xf0] sm:$0xff]
        %v3515 = vld [vmem:[#allocation2 + $0xf8] sm:$0xff]
        %v3516 = vld [vmem:[#allocation2 + $0x100] sm:$0xff]
        %v3517 = vld [vmem:[#allocation2 + $0x108] sm:$0xff]
        %v3518 = vld [vmem:[#allocation2 + $0x1] sm:$0xff]
        %v3519 = vld [vmem:[#allocation2 + $0x9] sm:$0xff]
        %v3520 = vld [vmem:[#allocation2 + $0x11] sm:$0xff]
        %v3521 = vld [vmem:[#allocation2 + $0x19] sm:$0xff]
        %v3522 = vld [vmem:[#allocation2 + $0x21] sm:$0xff]
        %v3523 = vld [vmem:[#allocation2 + $0x29] sm:$0xff]
        %v3524 = vld [vmem:[#allocation2 + $0x31] sm:$0xff]
        %v3525 = vld [vmem:[#allocation2 + $0x39] sm:$0xff]
        %v3526 = vld [vmem:[#allocation2 + $0x41] sm:$0xff]
        %v3527 = vld [vmem:[#allocation2 + $0x49] sm:$0xff]
        %v3528 = vld [vmem:[#allocation2 + $0x51] sm:$0xff]
        %v3529 = vld [vmem:[#allocation2 + $0x59] sm:$0xff]
        %v3530 = vld [vmem:[#allocation2 + $0x61] sm:$0xff]
        %v3531 = vld [vmem:[#allocation2 + $0x69] sm:$0xff]
        %v3532 = vld [vmem:[#allocation2 + $0x71] sm:$0xff]
        %v3533 = vld [vmem:[#allocation2 + $0x79] sm:$0xff]
        %v3534 = vld [vmem:[#allocation2 + $0x81] sm:$0xff]
        %v3535 = vld [vmem:[#allocation2 + $0x89] sm:$0xff]
        %v3536 = vld [vmem:[#allocation2 + $0x91] sm:$0xff]
        %v3537 = vld [vmem:[#allocation2 + $0x99] sm:$0xff]
        %v3538 = vld [vmem:[#allocation2 + $0xa1] sm:$0xff]
        %v3539 = vld [vmem:[#allocation2 + $0xa9] sm:$0xff]
        %v3540 = vld [vmem:[#allocation2 + $0xb1] sm:$0xff]
        %v3541 = vld [vmem:[#allocation2 + $0xb9] sm:$0xff]
        %v3542 = vld [vmem:[#allocation2 + $0xc1] sm:$0xff]
        %v3543 = vld [vmem:[#allocation2 + $0xc9] sm:$0xff]
        %v3544 = vld [vmem:[#allocation2 + $0xd1] sm:$0xff]
        %v3545 = vld [vmem:[#allocation2 + $0xd9] sm:$0xff]
        %v3546 = vld [vmem:[#allocation2 + $0xe1] sm:$0xff]
        %v3547 = vld [vmem:[#allocation2 + $0xe9] sm:$0xff]
        %v3548 = vld [vmem:[#allocation2 + $0xf1] sm:$0xff]
        %v3549 = vld [vmem:[#allocation2 + $0xf9] sm:$0xff]
        %v3550 = vld [vmem:[#allocation2 + $0x101] sm:$0xff]
        %v3551 = vld [vmem:[#allocation2 + $0x109] sm:$0xff]
        %v3552 = vmax.f32 %v3484, %v3518
        %v3553 = vmax.f32 %v3485, %v3519
        %v3554 = vmax.f32 %v3486, %v3520
        %v3555 = vmax.f32 %v3487, %v3521
        %v3556 = vmax.f32 %v3488, %v3522
        %v3557 = vmax.f32 %v3489, %v3523
        %v3558 = vmax.f32 %v3490, %v3524
        %v3559 = vmax.f32 %v3491, %v3525
        %v3560 = vmax.f32 %v3492, %v3526
        %v3561 = vmax.f32 %v3493, %v3527
        %v3562 = vmax.f32 %v3494, %v3528
        %v3563 = vmax.f32 %v3495, %v3529
        %v3564 = vmax.f32 %v3496, %v3530
        %v3565 = vmax.f32 %v3497, %v3531
        %v3566 = vmax.f32 %v3498, %v3532
        %v3567 = vmax.f32 %v3499, %v3533
        %v3568 = vmax.f32 %v3500, %v3534
        %v3569 = vmax.f32 %v3501, %v3535
        %v3570 = vmax.f32 %v3502, %v3536
        %v3571 = vmax.f32 %v3503, %v3537
        %v3572 = vmax.f32 %v3504, %v3538
        %v3573 = vmax.f32 %v3505, %v3539
        %v3574 = vmax.f32 %v3506, %v3540
        %v3575 = vmax.f32 %v3507, %v3541
        %v3576 = vmax.f32 %v3508, %v3542
        %v3577 = vmax.f32 %v3509, %v3543
        %v3578 = vmax.f32 %v3510, %v3544
        %v3579 = vmax.f32 %v3511, %v3545
        %v3580 = vmax.f32 %v3512, %v3546
        %v3581 = vmax.f32 %v3513, %v3547
        %v3582 = vmax.f32 %v3514, %v3548
        %v3583 = vmax.f32 %v3515, %v3549
        %v3584 = vmax.f32 %v3516, %v3550
        %v3585 = vmax.f32 %v3517, %v3551
        %v3586 = vld [vmem:[#allocation2 + $0x12] sm:$0xff]
        %v3587 = vld [vmem:[#allocation2 + $0x1a] sm:$0xff]
        %v3588 = vld [vmem:[#allocation2 + $0x22] sm:$0xff]
        %v3589 = vld [vmem:[#allocation2 + $0x2a] sm:$0xff]
        %v3590 = vld [vmem:[#allocation2 + $0x32] sm:$0xff]
        %v3591 = vld [vmem:[#allocation2 + $0x3a] sm:$0xff]
        %v3592 = vld [vmem:[#allocation2 + $0x42] sm:$0xff]
        %v3593 = vld [vmem:[#allocation2 + $0x4a] sm:$0xff]
        %v3594 = vld [vmem:[#allocation2 + $0x52] sm:$0xff]
        %v3595 = vld [vmem:[#allocation2 + $0x5a] sm:$0xff]
        %v3596 = vld [vmem:[#allocation2 + $0x62] sm:$0xff]
        %v3597 = vld [vmem:[#allocation2 + $0x6a] sm:$0xff]
        %v3598 = vld [vmem:[#allocation2 + $0x72] sm:$0xff]
        %v3599 = vld [vmem:[#allocation2 + $0x7a] sm:$0xff]
        %v3600 = vld [vmem:[#allocation2 + $0x82] sm:$0xff]
        %v3601 = vld [vmem:[#allocation2 + $0x8a] sm:$0xff]
        %v3602 = vld [vmem:[#allocation2 + $0x92] sm:$0xff]
        %v3603 = vld [vmem:[#allocation2 + $0x9a] sm:$0xff]
        %v3604 = vld [vmem:[#allocation2 + $0xa2] sm:$0xff]
        %v3605 = vld [vmem:[#allocation2 + $0xaa] sm:$0xff]
        %v3606 = vld [vmem:[#allocation2 + $0xb2] sm:$0xff]
        %v3607 = vld [vmem:[#allocation2 + $0xba] sm:$0xff]
        %v3608 = vld [vmem:[#allocation2 + $0xc2] sm:$0xff]
        %v3609 = vld [vmem:[#allocation2 + $0xca] sm:$0xff]
        %v3610 = vld [vmem:[#allocation2 + $0xd2] sm:$0xff]
        %v3611 = vld [vmem:[#allocation2 + $0xda] sm:$0xff]
        %v3612 = vld [vmem:[#allocation2 + $0xe2] sm:$0xff]
        %v3613 = vld [vmem:[#allocation2 + $0xea] sm:$0xff]
        %v3614 = vld [vmem:[#allocation2 + $0xf2] sm:$0xff]
        %v3615 = vld [vmem:[#allocation2 + $0xfa] sm:$0xff]
        %v3616 = vld [vmem:[#allocation2 + $0x102] sm:$0xff]
        %v3617 = vld [vmem:[#allocation2 + $0x10a] sm:$0xff]
        %v3618 = vld [vmem:[#allocation2 + $0x112] sm:$0xff]
        %v3619 = vld [vmem:[#allocation2 + $0x11a] sm:$0xff]
        %v3620 = vld [vmem:[#allocation2 + $0x13] sm:$0xff]
        %v3621 = vld [vmem:[#allocation2 + $0x1b] sm:$0xff]
        %v3622 = vld [vmem:[#allocation2 + $0x23] sm:$0xff]
        %v3623 = vld [vmem:[#allocation2 + $0x2b] sm:$0xff]
        %v3624 = vld [vmem:[#allocation2 + $0x33] sm:$0xff]
        %v3625 = vld [vmem:[#allocation2 + $0x3b] sm:$0xff]
        %v3626 = vld [vmem:[#allocation2 + $0x43] sm:$0xff]
        %v3627 = vld [vmem:[#allocation2 + $0x4b] sm:$0xff]
        %v3628 = vld [vmem:[#allocation2 + $0x53] sm:$0xff]
        %v3629 = vld [vmem:[#allocation2 + $0x5b] sm:$0xff]
        %v3630 = vld [vmem:[#allocation2 + $0x63] sm:$0xff]
        %v3631 = vld [vmem:[#allocation2 + $0x6b] sm:$0xff]
        %v3632 = vld [vmem:[#allocation2 + $0x73] sm:$0xff]
        %v3633 = vld [vmem:[#allocation2 + $0x7b] sm:$0xff]
        %v3634 = vld [vmem:[#allocation2 + $0x83] sm:$0xff]
        %v3635 = vld [vmem:[#allocation2 + $0x8b] sm:$0xff]
        %v3636 = vld [vmem:[#allocation2 + $0x93] sm:$0xff]
        %v3637 = vld [vmem:[#allocation2 + $0x9b] sm:$0xff]
        %v3638 = vld [vmem:[#allocation2 + $0xa3] sm:$0xff]
        %v3639 = vld [vmem:[#allocation2 + $0xab] sm:$0xff]
        %v3640 = vld [vmem:[#allocation2 + $0xb3] sm:$0xff]
        %v3641 = vld [vmem:[#allocation2 + $0xbb] sm:$0xff]
        %v3642 = vld [vmem:[#allocation2 + $0xc3] sm:$0xff]
        %v3643 = vld [vmem:[#allocation2 + $0xcb] sm:$0xff]
        %v3644 = vld [vmem:[#allocation2 + $0xd3] sm:$0xff]
        %v3645 = vld [vmem:[#allocation2 + $0xdb] sm:$0xff]
        %v3646 = vld [vmem:[#allocation2 + $0xe3] sm:$0xff]
        %v3647 = vld [vmem:[#allocation2 + $0xeb] sm:$0xff]
        %v3648 = vld [vmem:[#allocation2 + $0xf3] sm:$0xff]
        %v3649 = vld [vmem:[#allocation2 + $0xfb] sm:$0xff]
        %v3650 = vld [vmem:[#allocation2 + $0x103] sm:$0xff]
        %v3651 = vld [vmem:[#allocation2 + $0x10b] sm:$0xff]
        %v3652 = vld [vmem:[#allocation2 + $0x113] sm:$0xff]
        %v3653 = vld [vmem:[#allocation2 + $0x11b] sm:$0xff]
        %v3654 = vmax.f32 %v3586, %v3620
        %v3655 = vmax.f32 %v3587, %v3621
        %v3656 = vmax.f32 %v3588, %v3622
        %v3657 = vmax.f32 %v3589, %v3623
        %v3658 = vmax.f32 %v3590, %v3624
        %v3659 = vmax.f32 %v3591, %v3625
        %v3660 = vmax.f32 %v3592, %v3626
        %v3661 = vmax.f32 %v3593, %v3627
        %v3662 = vmax.f32 %v3594, %v3628
        %v3663 = vmax.f32 %v3595, %v3629
        %v3664 = vmax.f32 %v3596, %v3630
        %v3665 = vmax.f32 %v3597, %v3631
        %v3666 = vmax.f32 %v3598, %v3632
        %v3667 = vmax.f32 %v3599, %v3633
        %v3668 = vmax.f32 %v3600, %v3634
        %v3669 = vmax.f32 %v3601, %v3635
        %v3670 = vmax.f32 %v3602, %v3636
        %v3671 = vmax.f32 %v3603, %v3637
        %v3672 = vmax.f32 %v3604, %v3638
        %v3673 = vmax.f32 %v3605, %v3639
        %v3674 = vmax.f32 %v3606, %v3640
        %v3675 = vmax.f32 %v3607, %v3641
        %v3676 = vmax.f32 %v3608, %v3642
        %v3677 = vmax.f32 %v3609, %v3643
        %v3678 = vmax.f32 %v3610, %v3644
        %v3679 = vmax.f32 %v3611, %v3645
        %v3680 = vmax.f32 %v3612, %v3646
        %v3681 = vmax.f32 %v3613, %v3647
        %v3682 = vmax.f32 %v3614, %v3648
        %v3683 = vmax.f32 %v3615, %v3649
        %v3684 = vmax.f32 %v3616, %v3650
        %v3685 = vmax.f32 %v3617, %v3651
        %v3686 = vmax.f32 %v3618, %v3652
        %v3687 = vmax.f32 %v3619, %v3653
        %v3688 = vmax.f32 %v3552, %v3654
        %v3689 = vmax.f32 %v3553, %v3655
        %v3690 = vmax.f32 %v3554, %v3656
        %v3691 = vmax.f32 %v3555, %v3657
        %v3692 = vmax.f32 %v3556, %v3658
        %v3693 = vmax.f32 %v3557, %v3659
        %v3694 = vmax.f32 %v3558, %v3660
        %v3695 = vmax.f32 %v3559, %v3661
        %v3696 = vmax.f32 %v3560, %v3662
        %v3697 = vmax.f32 %v3561, %v3663
        %v3698 = vmax.f32 %v3562, %v3664
        %v3699 = vmax.f32 %v3563, %v3665
        %v3700 = vmax.f32 %v3564, %v3666
        %v3701 = vmax.f32 %v3565, %v3667
        %v3702 = vmax.f32 %v3566, %v3668
        %v3703 = vmax.f32 %v3567, %v3669
        %v3704 = vmax.f32 %v3568, %v3670
        %v3705 = vmax.f32 %v3569, %v3671
        %v3706 = vmax.f32 %v3570, %v3672
        %v3707 = vmax.f32 %v3571, %v3673
        %v3708 = vmax.f32 %v3572, %v3674
        %v3709 = vmax.f32 %v3573, %v3675
        %v3710 = vmax.f32 %v3574, %v3676
        %v3711 = vmax.f32 %v3575, %v3677
        %v3712 = vmax.f32 %v3576, %v3678
        %v3713 = vmax.f32 %v3577, %v3679
        %v3714 = vmax.f32 %v3578, %v3680
        %v3715 = vmax.f32 %v3579, %v3681
        %v3716 = vmax.f32 %v3580, %v3682
        %v3717 = vmax.f32 %v3581, %v3683
        %v3718 = vmax.f32 %v3582, %v3684
        %v3719 = vmax.f32 %v3583, %v3685
        %v3720 = vmax.f32 %v3584, %v3686
        %v3721 = vmax.f32 %v3585, %v3687
        %3722 = vst [vmem:[#allocation3] sm:$0xff] 0.0
        %3723 = vst [vmem:[#allocation3 + $0x8] sm:$0xff] 0.0
        %3724 = vst [vmem:[#allocation3 + $0x10] sm:$0xff] 0.0
        %3725 = vst [vmem:[#allocation3 + $0x18] sm:$0xff] 0.0
        %3726 = vst [vmem:[#allocation3 + $0x20] sm:$0xff] 0.0
        %3727 = vst [vmem:[#allocation3 + $0x138] sm:$0xff] 0.0
        %3728 = vst [vmem:[#allocation3 + $0x140] sm:$0xff] 0.0
        %3729 = vst [vmem:[#allocation3 + $0x148] sm:$0xff] 0.0
        %3730 = vst [vmem:[#allocation3 + $0x150] sm:$0xff] 0.0
        %3731 = vst [vmem:[#allocation3 + $0x158] sm:$0xff] 0.0
        %3732 = vst [vmem:[#allocation3 + $0x28] sm:$0xff] %v3688
        %3733 = vst [vmem:[#allocation3 + $0x30] sm:$0xff] %v3689
        %3734 = vst [vmem:[#allocation3 + $0x38] sm:$0xff] %v3690
        %3735 = vst [vmem:[#allocation3 + $0x40] sm:$0xff] %v3691
        %3736 = vst [vmem:[#allocation3 + $0x48] sm:$0xff] %v3692
        %3737 = vst [vmem:[#allocation3 + $0x50] sm:$0xff] %v3693
        %3738 = vst [vmem:[#allocation3 + $0x58] sm:$0xff] %v3694
        %3739 = vst [vmem:[#allocation3 + $0x60] sm:$0xff] %v3695
        %3740 = vst [vmem:[#allocation3 + $0x68] sm:$0xff] %v3696
        %3741 = vst [vmem:[#allocation3 + $0x70] sm:$0xff] %v3697
        %3742 = vst [vmem:[#allocation3 + $0x78] sm:$0xff] %v3698
        %3743 = vst [vmem:[#allocation3 + $0x80] sm:$0xff] %v3699
        %3744 = vst [vmem:[#allocation3 + $0x88] sm:$0xff] %v3700
        %3745 = vst [vmem:[#allocation3 + $0x90] sm:$0xff] %v3701
        %3746 = vst [vmem:[#allocation3 + $0x98] sm:$0xff] %v3702
        %3747 = vst [vmem:[#allocation3 + $0xa0] sm:$0xff] %v3703
        %3748 = vst [vmem:[#allocation3 + $0xa8] sm:$0xff] %v3704
        %3749 = vst [vmem:[#allocation3 + $0xb0] sm:$0xff] %v3705
        %3750 = vst [vmem:[#allocation3 + $0xb8] sm:$0xff] %v3706
        %3751 = vst [vmem:[#allocation3 + $0xc0] sm:$0xff] %v3707
        %3752 = vst [vmem:[#allocation3 + $0xc8] sm:$0xff] %v3708
        %3753 = vst [vmem:[#allocation3 + $0xd0] sm:$0xff] %v3709
        %3754 = vst [vmem:[#allocation3 + $0xd8] sm:$0xff] %v3710
        %3755 = vst [vmem:[#allocation3 + $0xe0] sm:$0xff] %v3711
        %3756 = vst [vmem:[#allocation3 + $0xe8] sm:$0xff] %v3712
        %3757 = vst [vmem:[#allocation3 + $0xf0] sm:$0xff] %v3713
        %3758 = vst [vmem:[#allocation3 + $0xf8] sm:$0xff] %v3714
        %3759 = vst [vmem:[#allocation3 + $0x100] sm:$0xff] %v3715
        %3760 = vst [vmem:[#allocation3 + $0x108] sm:$0xff] %v3716
        %3761 = vst [vmem:[#allocation3 + $0x110] sm:$0xff] %v3717
        %3762 = vst [vmem:[#allocation3 + $0x118] sm:$0xff] %v3718
        %3763 = vst [vmem:[#allocation3 + $0x120] sm:$0xff] %v3719
        %3764 = vst [vmem:[#allocation3 + $0x128] sm:$0xff] %v3720
        %3765 = vst [vmem:[#allocation3 + $0x130] sm:$0xff] %v3721
        %v3766 = vld [vmem:[#allocation3 + $0x2] sm:$0xff]
        %v3767 = vld [vmem:[#allocation3 + $0xa] sm:$0xff]
        %v3768 = vld [vmem:[#allocation3 + $0x12] sm:$0xff]
        %v3769 = vld [vmem:[#allocation3 + $0x1a] sm:$0xff]
        %v3770 = vld [vmem:[#allocation3 + $0x22] sm:$0xff]
        %v3771 = vld [vmem:[#allocation3 + $0x2a] sm:$0xff]
        %v3772 = vld [vmem:[#allocation3 + $0x32] sm:$0xff]
        %v3773 = vld [vmem:[#allocation3 + $0x3a] sm:$0xff]
        %v3774 = vld [vmem:[#allocation3 + $0x42] sm:$0xff]
        %v3775 = vld [vmem:[#allocation3 + $0x4a] sm:$0xff]
        %v3776 = vld [vmem:[#allocation3 + $0x52] sm:$0xff]
        %v3777 = vld [vmem:[#allocation3 + $0x5a] sm:$0xff]
        %v3778 = vld [vmem:[#allocation3 + $0x62] sm:$0xff]
        %v3779 = vld [vmem:[#allocation3 + $0x6a] sm:$0xff]
        %v3780 = vld [vmem:[#allocation3 + $0x72] sm:$0xff]
        %v3781 = vld [vmem:[#allocation3 + $0x7a] sm:$0xff]
        %v3782 = vld [vmem:[#allocation3 + $0x82] sm:$0xff]
        %v3783 = vld [vmem:[#allocation3 + $0x8a] sm:$0xff]
        %v3784 = vld [vmem:[#allocation3 + $0x92] sm:$0xff]
        %v3785 = vld [vmem:[#allocation3 + $0x9a] sm:$0xff]
        %v3786 = vld [vmem:[#allocation3 + $0xa2] sm:$0xff]
        %v3787 = vld [vmem:[#allocation3 + $0xaa] sm:$0xff]
        %v3788 = vld [vmem:[#allocation3 + $0xb2] sm:$0xff]
        %v3789 = vld [vmem:[#allocation3 + $0xba] sm:$0xff]
        %v3790 = vld [vmem:[#allocation3 + $0xc2] sm:$0xff]
        %v3791 = vld [vmem:[#allocation3 + $0xca] sm:$0xff]
        %v3792 = vld [vmem:[#allocation3 + $0xd2] sm:$0xff]
        %v3793 = vld [vmem:[#allocation3 + $0xda] sm:$0xff]
        %v3794 = vld [vmem:[#allocation3 + $0xe2] sm:$0xff]
        %v3795 = vld [vmem:[#allocation3 + $0xea] sm:$0xff]
        %v3796 = vld [vmem:[#allocation3 + $0xf2] sm:$0xff]
        %v3797 = vld [vmem:[#allocation3 + $0xfa] sm:$0xff]
        %v3798 = vld [vmem:[#allocation3 + $0x102] sm:$0xff]
        %v3799 = vld [vmem:[#allocation3 + $0x10a] sm:$0xff]
        %v3800 = vld [vmem:[#allocation5] sm:$0xff]
        %v3801 = vld [vmem:[#allocation5 + $0x8] sm:$0xff]
        %v3802 = vld [vmem:[#allocation5 + $0x10] sm:$0xff]
        %v3803 = vld [vmem:[#allocation5 + $0x18] sm:$0xff]
        %v3804 = vld [vmem:[#allocation5 + $0x20] sm:$0xff]
        %v3805 = vld [vmem:[#allocation5 + $0x28] sm:$0xff]
        %v3806 = vld [vmem:[#allocation5 + $0x30] sm:$0xff]
        %v3807 = vld [vmem:[#allocation5 + $0x38] sm:$0xff]
        %v3808 = vld [vmem:[#allocation5 + $0x40] sm:$0xff]
        %v3809 = vld [vmem:[#allocation5 + $0x48] sm:$0xff]
        %v3810 = vld [vmem:[#allocation5 + $0x50] sm:$0xff]
        %v3811 = vld [vmem:[#allocation5 + $0x58] sm:$0xff]
        %v3812 = vld [vmem:[#allocation5 + $0x60] sm:$0xff]
        %v3813 = vld [vmem:[#allocation5 + $0x68] sm:$0xff]
        %v3814 = vld [vmem:[#allocation5 + $0x70] sm:$0xff]
        %v3815 = vld [vmem:[#allocation5 + $0x78] sm:$0xff]
        %v3816 = vld [vmem:[#allocation3 + $0x4] sm:$0xff]
        %v3817 = vld [vmem:[#allocation3 + $0xc] sm:$0xff]
        %v3818 = vld [vmem:[#allocation3 + $0x14] sm:$0xff]
        %v3819 = vld [vmem:[#allocation3 + $0x1c] sm:$0xff]
        %v3820 = vld [vmem:[#allocation3 + $0x24] sm:$0xff]
        %v3821 = vld [vmem:[#allocation3 + $0x2c] sm:$0xff]
        %v3822 = vld [vmem:[#allocation3 + $0x34] sm:$0xff]
        %v3823 = vld [vmem:[#allocation3 + $0x3c] sm:$0xff]
        %v3824 = vld [vmem:[#allocation3 + $0x44] sm:$0xff]
        %v3825 = vld [vmem:[#allocation3 + $0x4c] sm:$0xff]
        %v3826 = vld [vmem:[#allocation3 + $0x54] sm:$0xff]
        %v3827 = vld [vmem:[#allocation3 + $0x5c] sm:$0xff]
        %v3828 = vld [vmem:[#allocation3 + $0x64] sm:$0xff]
        %v3829 = vld [vmem:[#allocation3 + $0x6c] sm:$0xff]
        %v3830 = vld [vmem:[#allocation3 + $0x74] sm:$0xff]
        %v3831 = vld [vmem:[#allocation3 + $0x7c] sm:$0xff]
        %v3832 = vld [vmem:[#allocation3 + $0x84] sm:$0xff]
        %v3833 = vld [vmem:[#allocation3 + $0x8c] sm:$0xff]
        %v3834 = vld [vmem:[#allocation3 + $0x94] sm:$0xff]
        %v3835 = vld [vmem:[#allocation3 + $0x9c] sm:$0xff]
        %v3836 = vld [vmem:[#allocation3 + $0xa4] sm:$0xff]
        %v3837 = vld [vmem:[#allocation3 + $0xac] sm:$0xff]
        %v3838 = vld [vmem:[#allocation3 + $0xb4] sm:$0xff]
        %v3839 = vld [vmem:[#allocation3 + $0xbc] sm:$0xff]
        %v3840 = vld [vmem:[#allocation3 + $0xc4] sm:$0xff]
        %v3841 = vld [vmem:[#allocation3 + $0xcc] sm:$0xff]
        %v3842 = vld [vmem:[#allocation3 + $0xd4] sm:$0xff]
        %v3843 = vld [vmem:[#allocation3 + $0xdc] sm:$0xff]
        %v3844 = vld [vmem:[#allocation3 + $0xe4] sm:$0xff]
        %v3845 = vld [vmem:[#allocation3 + $0xec] sm:$0xff]
        %v3846 = vld [vmem:[#allocation3 + $0xf4] sm:$0xff]
        %v3847 = vld [vmem:[#allocation3 + $0xfc] sm:$0xff]
        %v3848 = vld [vmem:[#allocation3 + $0x104] sm:$0xff]
        %v3849 = vld [vmem:[#allocation3 + $0x10c] sm:$0xff]
        %s3850 = scalar_lea.vmem [#allocation5], 128
        %v3851 = vld [vmem:[%s3850] sm:$0xff]
        %v3852 = vld [vmem:[%s3850 + $0x8] sm:$0xff]
        %v3853 = vld [vmem:[%s3850 + $0x10] sm:$0xff]
        %v3854 = vld [vmem:[%s3850 + $0x18] sm:$0xff]
        %v3855 = vld [vmem:[%s3850 + $0x20] sm:$0xff]
        %v3856 = vld [vmem:[%s3850 + $0x28] sm:$0xff]
        %v3857 = vld [vmem:[%s3850 + $0x30] sm:$0xff]
        %v3858 = vld [vmem:[%s3850 + $0x38] sm:$0xff]
        %v3859 = vld [vmem:[%s3850 + $0x40] sm:$0xff]
        %v3860 = vld [vmem:[%s3850 + $0x48] sm:$0xff]
        %v3861 = vld [vmem:[%s3850 + $0x50] sm:$0xff]
        %v3862 = vld [vmem:[%s3850 + $0x58] sm:$0xff]
        %v3863 = vld [vmem:[%s3850 + $0x60] sm:$0xff]
        %v3864 = vld [vmem:[%s3850 + $0x68] sm:$0xff]
        %v3865 = vld [vmem:[%s3850 + $0x70] sm:$0xff]
        %v3866 = vld [vmem:[%s3850 + $0x78] sm:$0xff]
        %3867 = vmatpush.msra.mxu0 %v3866
        %3868 = vmatpush.msra.mxu0 %v3865
        %3869 = vmatpush.msra.mxu0 %v3864
        %3870 = vmatpush.msra.mxu0 %v3863
        %3871 = vmatpush.msra.mxu0 %v3862
        %3872 = vmatpush.msra.mxu0 %v3861
        %3873 = vmatpush.msra.mxu0 %v3860
        %3874 = vmatpush.msra.mxu0 %v3859
        %3875 = vmatpush.msra.mxu0 %v3858
        %3876 = vmatpush.msra.mxu0 %v3857
        %3877 = vmatpush.msra.mxu0 %v3856
        %3878 = vmatpush.msra.mxu0 %v3855
        %3879 = vmatpush.msra.mxu0 %v3854
        %3880 = vmatpush.msra.mxu0 %v3853
        %3881 = vmatpush.msra.mxu0 %v3852
        %3882 = vmatpush.msra.mxu0 %v3851
        %3883 = vmatmul.f32.gmra.mxu0 %v3816
        %v3884 = vpop.f32.mrf.mxu0
        %v3885 = vadd.f32 0.0, %v3884
        %3886 = vmatmul.f32.gmra.mxu0 %v3817
        %v3887 = vpop.f32.mrf.mxu0
        %v3888 = vadd.f32 0.0, %v3887
        %3889 = vmatmul.f32.gmra.mxu0 %v3818
        %v3890 = vpop.f32.mrf.mxu0
        %v3891 = vadd.f32 0.0, %v3890
        %3892 = vmatmul.f32.gmra.mxu0 %v3819
        %v3893 = vpop.f32.mrf.mxu0
        %v3894 = vadd.f32 0.0, %v3893
        %3895 = vmatmul.f32.gmra.mxu0 %v3820
        %v3896 = vpop.f32.mrf.mxu0
        %v3897 = vadd.f32 0.0, %v3896
        %3898 = vmatmul.f32.gmra.mxu0 %v3821
        %v3899 = vpop.f32.mrf.mxu0
        %v3900 = vadd.f32 0.0, %v3899
        %3901 = vmatmul.f32.gmra.mxu0 %v3822
        %v3902 = vpop.f32.mrf.mxu0
        %v3903 = vadd.f32 0.0, %v3902
        %3904 = vmatmul.f32.gmra.mxu0 %v3823
        %v3905 = vpop.f32.mrf.mxu0
        %v3906 = vadd.f32 0.0, %v3905
        %3907 = vmatmul.f32.gmra.mxu0 %v3824
        %v3908 = vpop.f32.mrf.mxu0
        %v3909 = vadd.f32 0.0, %v3908
        %3910 = vmatmul.f32.gmra.mxu0 %v3825
        %v3911 = vpop.f32.mrf.mxu0
        %v3912 = vadd.f32 0.0, %v3911
        %3913 = vmatmul.f32.gmra.mxu0 %v3826
        %v3914 = vpop.f32.mrf.mxu0
        %v3915 = vadd.f32 0.0, %v3914
        %3916 = vmatmul.f32.gmra.mxu0 %v3827
        %v3917 = vpop.f32.mrf.mxu0
        %v3918 = vadd.f32 0.0, %v3917
        %3919 = vmatmul.f32.gmra.mxu0 %v3828
        %v3920 = vpop.f32.mrf.mxu0
        %v3921 = vadd.f32 0.0, %v3920
        %3922 = vmatmul.f32.gmra.mxu0 %v3829
        %v3923 = vpop.f32.mrf.mxu0
        %v3924 = vadd.f32 0.0, %v3923
        %3925 = vmatmul.f32.gmra.mxu0 %v3830
        %v3926 = vpop.f32.mrf.mxu0
        %v3927 = vadd.f32 0.0, %v3926
        %3928 = vmatmul.f32.gmra.mxu0 %v3831
        %v3929 = vpop.f32.mrf.mxu0
        %v3930 = vadd.f32 0.0, %v3929
        %3931 = vmatmul.f32.gmra.mxu0 %v3832
        %v3932 = vpop.f32.mrf.mxu0
        %v3933 = vadd.f32 0.0, %v3932
        %3934 = vmatmul.f32.gmra.mxu0 %v3833
        %v3935 = vpop.f32.mrf.mxu0
        %v3936 = vadd.f32 0.0, %v3935
        %3937 = vmatmul.f32.gmra.mxu0 %v3834
        %v3938 = vpop.f32.mrf.mxu0
        %v3939 = vadd.f32 0.0, %v3938
        %3940 = vmatmul.f32.gmra.mxu0 %v3835
        %v3941 = vpop.f32.mrf.mxu0
        %v3942 = vadd.f32 0.0, %v3941
        %3943 = vmatmul.f32.gmra.mxu0 %v3836
        %v3944 = vpop.f32.mrf.mxu0
        %v3945 = vadd.f32 0.0, %v3944
        %3946 = vmatmul.f32.gmra.mxu0 %v3837
        %v3947 = vpop.f32.mrf.mxu0
        %v3948 = vadd.f32 0.0, %v3947
        %3949 = vmatmul.f32.gmra.mxu0 %v3838
        %v3950 = vpop.f32.mrf.mxu0
        %v3951 = vadd.f32 0.0, %v3950
        %3952 = vmatmul.f32.gmra.mxu0 %v3839
        %v3953 = vpop.f32.mrf.mxu0
        %v3954 = vadd.f32 0.0, %v3953
        %3955 = vmatmul.f32.gmra.mxu0 %v3840
        %v3956 = vpop.f32.mrf.mxu0
        %v3957 = vadd.f32 0.0, %v3956
        %3958 = vmatmul.f32.gmra.mxu0 %v3841
        %v3959 = vpop.f32.mrf.mxu0
        %v3960 = vadd.f32 0.0, %v3959
        %3961 = vmatmul.f32.gmra.mxu0 %v3842
        %v3962 = vpop.f32.mrf.mxu0
        %v3963 = vadd.f32 0.0, %v3962
        %3964 = vmatmul.f32.gmra.mxu0 %v3843
        %v3965 = vpop.f32.mrf.mxu0
        %v3966 = vadd.f32 0.0, %v3965
        %3967 = vmatmul.f32.gmra.mxu0 %v3844
        %v3968 = vpop.f32.mrf.mxu0
        %v3969 = vadd.f32 0.0, %v3968
        %3970 = vmatmul.f32.gmra.mxu0 %v3845
        %v3971 = vpop.f32.mrf.mxu0
        %v3972 = vadd.f32 0.0, %v3971
        %3973 = vmatmul.f32.gmra.mxu0 %v3846
        %v3974 = vpop.f32.mrf.mxu0
        %v3975 = vadd.f32 0.0, %v3974
        %3976 = vmatmul.f32.gmra.mxu0 %v3847
        %v3977 = vpop.f32.mrf.mxu0
        %v3978 = vadd.f32 0.0, %v3977
        %3979 = vmatmul.f32.gmra.mxu0 %v3848
        %v3980 = vpop.f32.mrf.mxu0
        %v3981 = vadd.f32 0.0, %v3980
        %3982 = vmatmul.f32.gmra.mxu0 %v3849
        %v3983 = vpop.f32.mrf.mxu0
        %v3984 = vadd.f32 0.0, %v3983
        %3985 = vdwg.mxu0
        %3986 = vmatpush.msra.mxu0 %v3815
        %3987 = vmatpush.msra.mxu0 %v3814
        %3988 = vmatpush.msra.mxu0 %v3813
        %3989 = vmatpush.msra.mxu0 %v3812
        %3990 = vmatpush.msra.mxu0 %v3811
        %3991 = vmatpush.msra.mxu0 %v3810
        %3992 = vmatpush.msra.mxu0 %v3809
        %3993 = vmatpush.msra.mxu0 %v3808
        %3994 = vmatpush.msra.mxu0 %v3807
        %3995 = vmatpush.msra.mxu0 %v3806
        %3996 = vmatpush.msra.mxu0 %v3805
        %3997 = vmatpush.msra.mxu0 %v3804
        %3998 = vmatpush.msra.mxu0 %v3803
        %3999 = vmatpush.msra.mxu0 %v3802
        %4000 = vmatpush.msra.mxu0 %v3801
        %4001 = vmatpush.msra.mxu0 %v3800
        %4002 = vmatmul.f32.gmra.mxu0 %v3766
        %v4003 = vpop.f32.mrf.mxu0
        %v4004 = vadd.f32 %v3885, %v4003
        %4005 = vmatmul.f32.gmra.mxu0 %v3767
        %v4006 = vpop.f32.mrf.mxu0
        %v4007 = vadd.f32 %v3888, %v4006
        %4008 = vmatmul.f32.gmra.mxu0 %v3768
        %v4009 = vpop.f32.mrf.mxu0
        %v4010 = vadd.f32 %v3891, %v4009
        %4011 = vmatmul.f32.gmra.mxu0 %v3769
        %v4012 = vpop.f32.mrf.mxu0
        %v4013 = vadd.f32 %v3894, %v4012
        %4014 = vmatmul.f32.gmra.mxu0 %v3770
        %v4015 = vpop.f32.mrf.mxu0
        %v4016 = vadd.f32 %v3897, %v4015
        %4017 = vmatmul.f32.gmra.mxu0 %v3771
        %v4018 = vpop.f32.mrf.mxu0
        %v4019 = vadd.f32 %v3900, %v4018
        %4020 = vmatmul.f32.gmra.mxu0 %v3772
        %v4021 = vpop.f32.mrf.mxu0
        %v4022 = vadd.f32 %v3903, %v4021
        %4023 = vmatmul.f32.gmra.mxu0 %v3773
        %v4024 = vpop.f32.mrf.mxu0
        %v4025 = vadd.f32 %v3906, %v4024
        %4026 = vmatmul.f32.gmra.mxu0 %v3774
        %v4027 = vpop.f32.mrf.mxu0
        %v4028 = vadd.f32 %v3909, %v4027
        %4029 = vmatmul.f32.gmra.mxu0 %v3775
        %v4030 = vpop.f32.mrf.mxu0
        %v4031 = vadd.f32 %v3912, %v4030
        %4032 = vmatmul.f32.gmra.mxu0 %v3776
        %v4033 = vpop.f32.mrf.mxu0
        %v4034 = vadd.f32 %v3915, %v4033
        %4035 = vmatmul.f32.gmra.mxu0 %v3777
        %v4036 = vpop.f32.mrf.mxu0
        %v4037 = vadd.f32 %v3918, %v4036
        %4038 = vmatmul.f32.gmra.mxu0 %v3778
        %v4039 = vpop.f32.mrf.mxu0
        %v4040 = vadd.f32 %v3921, %v4039
        %4041 = vmatmul.f32.gmra.mxu0 %v3779
        %v4042 = vpop.f32.mrf.mxu0
        %v4043 = vadd.f32 %v3924, %v4042
        %4044 = vmatmul.f32.gmra.mxu0 %v3780
        %v4045 = vpop.f32.mrf.mxu0
        %v4046 = vadd.f32 %v3927, %v4045
        %4047 = vmatmul.f32.gmra.mxu0 %v3781
        %v4048 = vpop.f32.mrf.mxu0
        %v4049 = vadd.f32 %v3930, %v4048
        %4050 = vmatmul.f32.gmra.mxu0 %v3782
        %v4051 = vpop.f32.mrf.mxu0
        %v4052 = vadd.f32 %v3933, %v4051
        %4053 = vmatmul.f32.gmra.mxu0 %v3783
        %v4054 = vpop.f32.mrf.mxu0
        %v4055 = vadd.f32 %v3936, %v4054
        %4056 = vmatmul.f32.gmra.mxu0 %v3784
        %v4057 = vpop.f32.mrf.mxu0
        %v4058 = vadd.f32 %v3939, %v4057
        %4059 = vmatmul.f32.gmra.mxu0 %v3785
        %v4060 = vpop.f32.mrf.mxu0
        %v4061 = vadd.f32 %v3942, %v4060
        %4062 = vmatmul.f32.gmra.mxu0 %v3786
        %v4063 = vpop.f32.mrf.mxu0
        %v4064 = vadd.f32 %v3945, %v4063
        %4065 = vmatmul.f32.gmra.mxu0 %v3787
        %v4066 = vpop.f32.mrf.mxu0
        %v4067 = vadd.f32 %v3948, %v4066
        %4068 = vmatmul.f32.gmra.mxu0 %v3788
        %v4069 = vpop.f32.mrf.mxu0
        %v4070 = vadd.f32 %v3951, %v4069
        %4071 = vmatmul.f32.gmra.mxu0 %v3789
        %v4072 = vpop.f32.mrf.mxu0
        %v4073 = vadd.f32 %v3954, %v4072
        %4074 = vmatmul.f32.gmra.mxu0 %v3790
        %v4075 = vpop.f32.mrf.mxu0
        %v4076 = vadd.f32 %v3957, %v4075
        %4077 = vmatmul.f32.gmra.mxu0 %v3791
        %v4078 = vpop.f32.mrf.mxu0
        %v4079 = vadd.f32 %v3960, %v4078
        %4080 = vmatmul.f32.gmra.mxu0 %v3792
        %v4081 = vpop.f32.mrf.mxu0
        %v4082 = vadd.f32 %v3963, %v4081
        %4083 = vmatmul.f32.gmra.mxu0 %v3793
        %v4084 = vpop.f32.mrf.mxu0
        %v4085 = vadd.f32 %v3966, %v4084
        %4086 = vmatmul.f32.gmra.mxu0 %v3794
        %v4087 = vpop.f32.mrf.mxu0
        %v4088 = vadd.f32 %v3969, %v4087
        %4089 = vmatmul.f32.gmra.mxu0 %v3795
        %v4090 = vpop.f32.mrf.mxu0
        %v4091 = vadd.f32 %v3972, %v4090
        %4092 = vmatmul.f32.gmra.mxu0 %v3796
        %v4093 = vpop.f32.mrf.mxu0
        %v4094 = vadd.f32 %v3975, %v4093
        %4095 = vmatmul.f32.gmra.mxu0 %v3797
        %v4096 = vpop.f32.mrf.mxu0
        %v4097 = vadd.f32 %v3978, %v4096
        %4098 = vmatmul.f32.gmra.mxu0 %v3798
        %v4099 = vpop.f32.mrf.mxu0
        %v4100 = vadd.f32 %v3981, %v4099
        %4101 = vmatmul.f32.gmra.mxu0 %v3799
        %v4102 = vpop.f32.mrf.mxu0
        %v4103 = vadd.f32 %v3984, %v4102
        %4104 = vdwg.mxu0
        %v4105 = vld [vmem:[#allocation3 + $0x6] sm:$0xff]
        %v4106 = vld [vmem:[#allocation3 + $0xe] sm:$0xff]
        %v4107 = vld [vmem:[#allocation3 + $0x16] sm:$0xff]
        %v4108 = vld [vmem:[#allocation3 + $0x1e] sm:$0xff]
        %v4109 = vld [vmem:[#allocation3 + $0x26] sm:$0xff]
        %v4110 = vld [vmem:[#allocation3 + $0x2e] sm:$0xff]
        %v4111 = vld [vmem:[#allocation3 + $0x36] sm:$0xff]
        %v4112 = vld [vmem:[#allocation3 + $0x3e] sm:$0xff]
        %v4113 = vld [vmem:[#allocation3 + $0x46] sm:$0xff]
        %v4114 = vld [vmem:[#allocation3 + $0x4e] sm:$0xff]
        %v4115 = vld [vmem:[#allocation3 + $0x56] sm:$0xff]
        %v4116 = vld [vmem:[#allocation3 + $0x5e] sm:$0xff]
        %v4117 = vld [vmem:[#allocation3 + $0x66] sm:$0xff]
        %v4118 = vld [vmem:[#allocation3 + $0x6e] sm:$0xff]
        %v4119 = vld [vmem:[#allocation3 + $0x76] sm:$0xff]
        %v4120 = vld [vmem:[#allocation3 + $0x7e] sm:$0xff]
        %v4121 = vld [vmem:[#allocation3 + $0x86] sm:$0xff]
        %v4122 = vld [vmem:[#allocation3 + $0x8e] sm:$0xff]
        %v4123 = vld [vmem:[#allocation3 + $0x96] sm:$0xff]
        %v4124 = vld [vmem:[#allocation3 + $0x9e] sm:$0xff]
        %v4125 = vld [vmem:[#allocation3 + $0xa6] sm:$0xff]
        %v4126 = vld [vmem:[#allocation3 + $0xae] sm:$0xff]
        %v4127 = vld [vmem:[#allocation3 + $0xb6] sm:$0xff]
        %v4128 = vld [vmem:[#allocation3 + $0xbe] sm:$0xff]
        %v4129 = vld [vmem:[#allocation3 + $0xc6] sm:$0xff]
        %v4130 = vld [vmem:[#allocation3 + $0xce] sm:$0xff]
        %v4131 = vld [vmem:[#allocation3 + $0xd6] sm:$0xff]
        %v4132 = vld [vmem:[#allocation3 + $0xde] sm:$0xff]
        %v4133 = vld [vmem:[#allocation3 + $0xe6] sm:$0xff]
        %v4134 = vld [vmem:[#allocation3 + $0xee] sm:$0xff]
        %v4135 = vld [vmem:[#allocation3 + $0xf6] sm:$0xff]
        %v4136 = vld [vmem:[#allocation3 + $0xfe] sm:$0xff]
        %v4137 = vld [vmem:[#allocation3 + $0x106] sm:$0xff]
        %v4138 = vld [vmem:[#allocation3 + $0x10e] sm:$0xff]
        %s4139 = scalar_lea.vmem [#allocation5], 256
        %v4140 = vld [vmem:[%s4139] sm:$0xff]
        %v4141 = vld [vmem:[%s4139 + $0x8] sm:$0xff]
        %v4142 = vld [vmem:[%s4139 + $0x10] sm:$0xff]
        %v4143 = vld [vmem:[%s4139 + $0x18] sm:$0xff]
        %v4144 = vld [vmem:[%s4139 + $0x20] sm:$0xff]
        %v4145 = vld [vmem:[%s4139 + $0x28] sm:$0xff]
        %v4146 = vld [vmem:[%s4139 + $0x30] sm:$0xff]
        %v4147 = vld [vmem:[%s4139 + $0x38] sm:$0xff]
        %v4148 = vld [vmem:[%s4139 + $0x40] sm:$0xff]
        %v4149 = vld [vmem:[%s4139 + $0x48] sm:$0xff]
        %v4150 = vld [vmem:[%s4139 + $0x50] sm:$0xff]
        %v4151 = vld [vmem:[%s4139 + $0x58] sm:$0xff]
        %v4152 = vld [vmem:[%s4139 + $0x60] sm:$0xff]
        %v4153 = vld [vmem:[%s4139 + $0x68] sm:$0xff]
        %v4154 = vld [vmem:[%s4139 + $0x70] sm:$0xff]
        %v4155 = vld [vmem:[%s4139 + $0x78] sm:$0xff]
        %4156 = vmatpush.msra.mxu0 %v4155
        %4157 = vmatpush.msra.mxu0 %v4154
        %4158 = vmatpush.msra.mxu0 %v4153
        %4159 = vmatpush.msra.mxu0 %v4152
        %4160 = vmatpush.msra.mxu0 %v4151
        %4161 = vmatpush.msra.mxu0 %v4150
        %4162 = vmatpush.msra.mxu0 %v4149
        %4163 = vmatpush.msra.mxu0 %v4148
        %4164 = vmatpush.msra.mxu0 %v4147
        %4165 = vmatpush.msra.mxu0 %v4146
        %4166 = vmatpush.msra.mxu0 %v4145
        %4167 = vmatpush.msra.mxu0 %v4144
        %4168 = vmatpush.msra.mxu0 %v4143
        %4169 = vmatpush.msra.mxu0 %v4142
        %4170 = vmatpush.msra.mxu0 %v4141
        %4171 = vmatpush.msra.mxu0 %v4140
        %4172 = vmatmul.f32.gmra.mxu0 %v4105
        %v4173 = vpop.f32.mrf.mxu0
        %v4174 = vadd.f32 0.0, %v4173
        %4175 = vmatmul.f32.gmra.mxu0 %v4106
        %v4176 = vpop.f32.mrf.mxu0
        %v4177 = vadd.f32 0.0, %v4176
        %4178 = vmatmul.f32.gmra.mxu0 %v4107
        %v4179 = vpop.f32.mrf.mxu0
        %v4180 = vadd.f32 0.0, %v4179
        %4181 = vmatmul.f32.gmra.mxu0 %v4108
        %v4182 = vpop.f32.mrf.mxu0
        %v4183 = vadd.f32 0.0, %v4182
        %4184 = vmatmul.f32.gmra.mxu0 %v4109
        %v4185 = vpop.f32.mrf.mxu0
        %v4186 = vadd.f32 0.0, %v4185
        %4187 = vmatmul.f32.gmra.mxu0 %v4110
        %v4188 = vpop.f32.mrf.mxu0
        %v4189 = vadd.f32 0.0, %v4188
        %4190 = vmatmul.f32.gmra.mxu0 %v4111
        %v4191 = vpop.f32.mrf.mxu0
        %v4192 = vadd.f32 0.0, %v4191
        %4193 = vmatmul.f32.gmra.mxu0 %v4112
        %v4194 = vpop.f32.mrf.mxu0
        %v4195 = vadd.f32 0.0, %v4194
        %4196 = vmatmul.f32.gmra.mxu0 %v4113
        %v4197 = vpop.f32.mrf.mxu0
        %v4198 = vadd.f32 0.0, %v4197
        %4199 = vmatmul.f32.gmra.mxu0 %v4114
        %v4200 = vpop.f32.mrf.mxu0
        %v4201 = vadd.f32 0.0, %v4200
        %4202 = vmatmul.f32.gmra.mxu0 %v4115
        %v4203 = vpop.f32.mrf.mxu0
        %v4204 = vadd.f32 0.0, %v4203
        %4205 = vmatmul.f32.gmra.mxu0 %v4116
        %v4206 = vpop.f32.mrf.mxu0
        %v4207 = vadd.f32 0.0, %v4206
        %4208 = vmatmul.f32.gmra.mxu0 %v4117
        %v4209 = vpop.f32.mrf.mxu0
        %v4210 = vadd.f32 0.0, %v4209
        %4211 = vmatmul.f32.gmra.mxu0 %v4118
        %v4212 = vpop.f32.mrf.mxu0
        %v4213 = vadd.f32 0.0, %v4212
        %4214 = vmatmul.f32.gmra.mxu0 %v4119
        %v4215 = vpop.f32.mrf.mxu0
        %v4216 = vadd.f32 0.0, %v4215
        %4217 = vmatmul.f32.gmra.mxu0 %v4120
        %v4218 = vpop.f32.mrf.mxu0
        %v4219 = vadd.f32 0.0, %v4218
        %4220 = vmatmul.f32.gmra.mxu0 %v4121
        %v4221 = vpop.f32.mrf.mxu0
        %v4222 = vadd.f32 0.0, %v4221
        %4223 = vmatmul.f32.gmra.mxu0 %v4122
        %v4224 = vpop.f32.mrf.mxu0
        %v4225 = vadd.f32 0.0, %v4224
        %4226 = vmatmul.f32.gmra.mxu0 %v4123
        %v4227 = vpop.f32.mrf.mxu0
        %v4228 = vadd.f32 0.0, %v4227
        %4229 = vmatmul.f32.gmra.mxu0 %v4124
        %v4230 = vpop.f32.mrf.mxu0
        %v4231 = vadd.f32 0.0, %v4230
        %4232 = vmatmul.f32.gmra.mxu0 %v4125
        %v4233 = vpop.f32.mrf.mxu0
        %v4234 = vadd.f32 0.0, %v4233
        %4235 = vmatmul.f32.gmra.mxu0 %v4126
        %v4236 = vpop.f32.mrf.mxu0
        %v4237 = vadd.f32 0.0, %v4236
        %4238 = vmatmul.f32.gmra.mxu0 %v4127
        %v4239 = vpop.f32.mrf.mxu0
        %v4240 = vadd.f32 0.0, %v4239
        %4241 = vmatmul.f32.gmra.mxu0 %v4128
        %v4242 = vpop.f32.mrf.mxu0
        %v4243 = vadd.f32 0.0, %v4242
        %4244 = vmatmul.f32.gmra.mxu0 %v4129
        %v4245 = vpop.f32.mrf.mxu0
        %v4246 = vadd.f32 0.0, %v4245
        %4247 = vmatmul.f32.gmra.mxu0 %v4130
        %v4248 = vpop.f32.mrf.mxu0
        %v4249 = vadd.f32 0.0, %v4248
        %4250 = vmatmul.f32.gmra.mxu0 %v4131
        %v4251 = vpop.f32.mrf.mxu0
        %v4252 = vadd.f32 0.0, %v4251
        %4253 = vmatmul.f32.gmra.mxu0 %v4132
        %v4254 = vpop.f32.mrf.mxu0
        %v4255 = vadd.f32 0.0, %v4254
        %4256 = vmatmul.f32.gmra.mxu0 %v4133
        %v4257 = vpop.f32.mrf.mxu0
        %v4258 = vadd.f32 0.0, %v4257
        %4259 = vmatmul.f32.gmra.mxu0 %v4134
        %v4260 = vpop.f32.mrf.mxu0
        %v4261 = vadd.f32 0.0, %v4260
        %4262 = vmatmul.f32.gmra.mxu0 %v4135
        %v4263 = vpop.f32.mrf.mxu0
        %v4264 = vadd.f32 0.0, %v4263
        %4265 = vmatmul.f32.gmra.mxu0 %v4136
        %v4266 = vpop.f32.mrf.mxu0
        %v4267 = vadd.f32 0.0, %v4266
        %4268 = vmatmul.f32.gmra.mxu0 %v4137
        %v4269 = vpop.f32.mrf.mxu0
        %v4270 = vadd.f32 0.0, %v4269
        %4271 = vmatmul.f32.gmra.mxu0 %v4138
        %v4272 = vpop.f32.mrf.mxu0
        %v4273 = vadd.f32 0.0, %v4272
        %4274 = vdwg.mxu0
        %v4275 = vadd.f32 %v4004, %v4174
        %v4276 = vadd.f32 %v4007, %v4177
        %v4277 = vadd.f32 %v4010, %v4180
        %v4278 = vadd.f32 %v4013, %v4183
        %v4279 = vadd.f32 %v4016, %v4186
        %v4280 = vadd.f32 %v4019, %v4189
        %v4281 = vadd.f32 %v4022, %v4192
        %v4282 = vadd.f32 %v4025, %v4195
        %v4283 = vadd.f32 %v4028, %v4198
        %v4284 = vadd.f32 %v4031, %v4201
        %v4285 = vadd.f32 %v4034, %v4204
        %v4286 = vadd.f32 %v4037, %v4207
        %v4287 = vadd.f32 %v4040, %v4210
        %v4288 = vadd.f32 %v4043, %v4213
        %v4289 = vadd.f32 %v4046, %v4216
        %v4290 = vadd.f32 %v4049, %v4219
        %v4291 = vadd.f32 %v4052, %v4222
        %v4292 = vadd.f32 %v4055, %v4225
        %v4293 = vadd.f32 %v4058, %v4228
        %v4294 = vadd.f32 %v4061, %v4231
        %v4295 = vadd.f32 %v4064, %v4234
        %v4296 = vadd.f32 %v4067, %v4237
        %v4297 = vadd.f32 %v4070, %v4240
        %v4298 = vadd.f32 %v4073, %v4243
        %v4299 = vadd.f32 %v4076, %v4246
        %v4300 = vadd.f32 %v4079, %v4249
        %v4301 = vadd.f32 %v4082, %v4252
        %v4302 = vadd.f32 %v4085, %v4255
        %v4303 = vadd.f32 %v4088, %v4258
        %v4304 = vadd.f32 %v4091, %v4261
        %v4305 = vadd.f32 %v4094, %v4264
        %v4306 = vadd.f32 %v4097, %v4267
        %v4307 = vadd.f32 %v4100, %v4270
        %v4308 = vadd.f32 %v4103, %v4273
        %v4309 = vld [vmem:[#allocation3 + $0x26] sm:$0xff]
        %v4310 = vld [vmem:[#allocation3 + $0x2e] sm:$0xff]
        %v4311 = vld [vmem:[#allocation3 + $0x36] sm:$0xff]
        %v4312 = vld [vmem:[#allocation3 + $0x3e] sm:$0xff]
        %v4313 = vld [vmem:[#allocation3 + $0x46] sm:$0xff]
        %v4314 = vld [vmem:[#allocation3 + $0x4e] sm:$0xff]
        %v4315 = vld [vmem:[#allocation3 + $0x56] sm:$0xff]
        %v4316 = vld [vmem:[#allocation3 + $0x5e] sm:$0xff]
        %v4317 = vld [vmem:[#allocation3 + $0x66] sm:$0xff]
        %v4318 = vld [vmem:[#allocation3 + $0x6e] sm:$0xff]
        %v4319 = vld [vmem:[#allocation3 + $0x76] sm:$0xff]
        %v4320 = vld [vmem:[#allocation3 + $0x7e] sm:$0xff]
        %v4321 = vld [vmem:[#allocation3 + $0x86] sm:$0xff]
        %v4322 = vld [vmem:[#allocation3 + $0x8e] sm:$0xff]
        %v4323 = vld [vmem:[#allocation3 + $0x96] sm:$0xff]
        %v4324 = vld [vmem:[#allocation3 + $0x9e] sm:$0xff]
        %v4325 = vld [vmem:[#allocation3 + $0xa6] sm:$0xff]
        %v4326 = vld [vmem:[#allocation3 + $0xae] sm:$0xff]
        %v4327 = vld [vmem:[#allocation3 + $0xb6] sm:$0xff]
        %v4328 = vld [vmem:[#allocation3 + $0xbe] sm:$0xff]
        %v4329 = vld [vmem:[#allocation3 + $0xc6] sm:$0xff]
        %v4330 = vld [vmem:[#allocation3 + $0xce] sm:$0xff]
        %v4331 = vld [vmem:[#allocation3 + $0xd6] sm:$0xff]
        %v4332 = vld [vmem:[#allocation3 + $0xde] sm:$0xff]
        %v4333 = vld [vmem:[#allocation3 + $0xe6] sm:$0xff]
        %v4334 = vld [vmem:[#allocation3 + $0xee] sm:$0xff]
        %v4335 = vld [vmem:[#allocation3 + $0xf6] sm:$0xff]
        %v4336 = vld [vmem:[#allocation3 + $0xfe] sm:$0xff]
        %v4337 = vld [vmem:[#allocation3 + $0x106] sm:$0xff]
        %v4338 = vld [vmem:[#allocation3 + $0x10e] sm:$0xff]
        %v4339 = vld [vmem:[#allocation3 + $0x116] sm:$0xff]
        %v4340 = vld [vmem:[#allocation3 + $0x11e] sm:$0xff]
        %v4341 = vld [vmem:[#allocation3 + $0x126] sm:$0xff]
        %v4342 = vld [vmem:[#allocation3 + $0x12e] sm:$0xff]
        %s4343 = scalar_lea.vmem [#allocation5], 384
        %v4344 = vld [vmem:[%s4343] sm:$0xff]
        %v4345 = vld [vmem:[%s4343 + $0x8] sm:$0xff]
        %v4346 = vld [vmem:[%s4343 + $0x10] sm:$0xff]
        %v4347 = vld [vmem:[%s4343 + $0x18] sm:$0xff]
        %v4348 = vld [vmem:[%s4343 + $0x20] sm:$0xff]
        %v4349 = vld [vmem:[%s4343 + $0x28] sm:$0xff]
        %v4350 = vld [vmem:[%s4343 + $0x30] sm:$0xff]
        %v4351 = vld [vmem:[%s4343 + $0x38] sm:$0xff]
        %v4352 = vld [vmem:[%s4343 + $0x40] sm:$0xff]
        %v4353 = vld [vmem:[%s4343 + $0x48] sm:$0xff]
        %v4354 = vld [vmem:[%s4343 + $0x50] sm:$0xff]
        %v4355 = vld [vmem:[%s4343 + $0x58] sm:$0xff]
        %v4356 = vld [vmem:[%s4343 + $0x60] sm:$0xff]
        %v4357 = vld [vmem:[%s4343 + $0x68] sm:$0xff]
        %v4358 = vld [vmem:[%s4343 + $0x70] sm:$0xff]
        %v4359 = vld [vmem:[%s4343 + $0x78] sm:$0xff]
        %4360 = vmatpush.msra.mxu0 %v4359
        %4361 = vmatpush.msra.mxu0 %v4358
        %4362 = vmatpush.msra.mxu0 %v4357
        %4363 = vmatpush.msra.mxu0 %v4356
        %4364 = vmatpush.msra.mxu0 %v4355
        %4365 = vmatpush.msra.mxu0 %v4354
        %4366 = vmatpush.msra.mxu0 %v4353
        %4367 = vmatpush.msra.mxu0 %v4352
        %4368 = vmatpush.msra.mxu0 %v4351
        %4369 = vmatpush.msra.mxu0 %v4350
        %4370 = vmatpush.msra.mxu0 %v4349
        %4371 = vmatpush.msra.mxu0 %v4348
        %4372 = vmatpush.msra.mxu0 %v4347
        %4373 = vmatpush.msra.mxu0 %v4346
        %4374 = vmatpush.msra.mxu0 %v4345
        %4375 = vmatpush.msra.mxu0 %v4344
        %4376 = vmatmul.f32.gmra.mxu0 %v4309
        %v4377 = vpop.f32.mrf.mxu0
        %v4378 = vadd.f32 0.0, %v4377
        %4379 = vmatmul.f32.gmra.mxu0 %v4310
        %v4380 = vpop.f32.mrf.mxu0
        %v4381 = vadd.f32 0.0, %v4380
        %4382 = vmatmul.f32.gmra.mxu0 %v4311
        %v4383 = vpop.f32.mrf.mxu0
        %v4384 = vadd.f32 0.0, %v4383
        %4385 = vmatmul.f32.gmra.mxu0 %v4312
        %v4386 = vpop.f32.mrf.mxu0
        %v4387 = vadd.f32 0.0, %v4386
        %4388 = vmatmul.f32.gmra.mxu0 %v4313
        %v4389 = vpop.f32.mrf.mxu0
        %v4390 = vadd.f32 0.0, %v4389
        %4391 = vmatmul.f32.gmra.mxu0 %v4314
        %v4392 = vpop.f32.mrf.mxu0
        %v4393 = vadd.f32 0.0, %v4392
        %4394 = vmatmul.f32.gmra.mxu0 %v4315
        %v4395 = vpop.f32.mrf.mxu0
        %v4396 = vadd.f32 0.0, %v4395
        %4397 = vmatmul.f32.gmra.mxu0 %v4316
        %v4398 = vpop.f32.mrf.mxu0
        %v4399 = vadd.f32 0.0, %v4398
        %4400 = vmatmul.f32.gmra.mxu0 %v4317
        %v4401 = vpop.f32.mrf.mxu0
        %v4402 = vadd.f32 0.0, %v4401
        %4403 = vmatmul.f32.gmra.mxu0 %v4318
        %v4404 = vpop.f32.mrf.mxu0
        %v4405 = vadd.f32 0.0, %v4404
        %4406 = vmatmul.f32.gmra.mxu0 %v4319
        %v4407 = vpop.f32.mrf.mxu0
        %v4408 = vadd.f32 0.0, %v4407
        %4409 = vmatmul.f32.gmra.mxu0 %v4320
        %v4410 = vpop.f32.mrf.mxu0
        %v4411 = vadd.f32 0.0, %v4410
        %4412 = vmatmul.f32.gmra.mxu0 %v4321
        %v4413 = vpop.f32.mrf.mxu0
        %v4414 = vadd.f32 0.0, %v4413
        %4415 = vmatmul.f32.gmra.mxu0 %v4322
        %v4416 = vpop.f32.mrf.mxu0
        %v4417 = vadd.f32 0.0, %v4416
        %4418 = vmatmul.f32.gmra.mxu0 %v4323
        %v4419 = vpop.f32.mrf.mxu0
        %v4420 = vadd.f32 0.0, %v4419
        %4421 = vmatmul.f32.gmra.mxu0 %v4324
        %v4422 = vpop.f32.mrf.mxu0
        %v4423 = vadd.f32 0.0, %v4422
        %4424 = vmatmul.f32.gmra.mxu0 %v4325
        %v4425 = vpop.f32.mrf.mxu0
        %v4426 = vadd.f32 0.0, %v4425
        %4427 = vmatmul.f32.gmra.mxu0 %v4326
        %v4428 = vpop.f32.mrf.mxu0
        %v4429 = vadd.f32 0.0, %v4428
        %4430 = vmatmul.f32.gmra.mxu0 %v4327
        %v4431 = vpop.f32.mrf.mxu0
        %v4432 = vadd.f32 0.0, %v4431
        %4433 = vmatmul.f32.gmra.mxu0 %v4328
        %v4434 = vpop.f32.mrf.mxu0
        %v4435 = vadd.f32 0.0, %v4434
        %4436 = vmatmul.f32.gmra.mxu0 %v4329
        %v4437 = vpop.f32.mrf.mxu0
        %v4438 = vadd.f32 0.0, %v4437
        %4439 = vmatmul.f32.gmra.mxu0 %v4330
        %v4440 = vpop.f32.mrf.mxu0
        %v4441 = vadd.f32 0.0, %v4440
        %4442 = vmatmul.f32.gmra.mxu0 %v4331
        %v4443 = vpop.f32.mrf.mxu0
        %v4444 = vadd.f32 0.0, %v4443
        %4445 = vmatmul.f32.gmra.mxu0 %v4332
        %v4446 = vpop.f32.mrf.mxu0
        %v4447 = vadd.f32 0.0, %v4446
        %4448 = vmatmul.f32.gmra.mxu0 %v4333
        %v4449 = vpop.f32.mrf.mxu0
        %v4450 = vadd.f32 0.0, %v4449
        %4451 = vmatmul.f32.gmra.mxu0 %v4334
        %v4452 = vpop.f32.mrf.mxu0
        %v4453 = vadd.f32 0.0, %v4452
        %4454 = vmatmul.f32.gmra.mxu0 %v4335
        %v4455 = vpop.f32.mrf.mxu0
        %v4456 = vadd.f32 0.0, %v4455
        %4457 = vmatmul.f32.gmra.mxu0 %v4336
        %v4458 = vpop.f32.mrf.mxu0
        %v4459 = vadd.f32 0.0, %v4458
        %4460 = vmatmul.f32.gmra.mxu0 %v4337
        %v4461 = vpop.f32.mrf.mxu0
        %v4462 = vadd.f32 0.0, %v4461
        %4463 = vmatmul.f32.gmra.mxu0 %v4338
        %v4464 = vpop.f32.mrf.mxu0
        %v4465 = vadd.f32 0.0, %v4464
        %4466 = vmatmul.f32.gmra.mxu0 %v4339
        %v4467 = vpop.f32.mrf.mxu0
        %v4468 = vadd.f32 0.0, %v4467
        %4469 = vmatmul.f32.gmra.mxu0 %v4340
        %v4470 = vpop.f32.mrf.mxu0
        %v4471 = vadd.f32 0.0, %v4470
        %4472 = vmatmul.f32.gmra.mxu0 %v4341
        %v4473 = vpop.f32.mrf.mxu0
        %v4474 = vadd.f32 0.0, %v4473
        %4475 = vmatmul.f32.gmra.mxu0 %v4342
        %v4476 = vpop.f32.mrf.mxu0
        %v4477 = vadd.f32 0.0, %v4476
        %4478 = vdwg.mxu0
        %v4479 = vadd.f32 %v4275, %v4378
        %v4480 = vadd.f32 %v4276, %v4381
        %v4481 = vadd.f32 %v4277, %v4384
        %v4482 = vadd.f32 %v4278, %v4387
        %v4483 = vadd.f32 %v4279, %v4390
        %v4484 = vadd.f32 %v4280, %v4393
        %v4485 = vadd.f32 %v4281, %v4396
        %v4486 = vadd.f32 %v4282, %v4399
        %v4487 = vadd.f32 %v4283, %v4402
        %v4488 = vadd.f32 %v4284, %v4405
        %v4489 = vadd.f32 %v4285, %v4408
        %v4490 = vadd.f32 %v4286, %v4411
        %v4491 = vadd.f32 %v4287, %v4414
        %v4492 = vadd.f32 %v4288, %v4417
        %v4493 = vadd.f32 %v4289, %v4420
        %v4494 = vadd.f32 %v4290, %v4423
        %v4495 = vadd.f32 %v4291, %v4426
        %v4496 = vadd.f32 %v4292, %v4429
        %v4497 = vadd.f32 %v4293, %v4432
        %v4498 = vadd.f32 %v4294, %v4435
        %v4499 = vadd.f32 %v4295, %v4438
        %v4500 = vadd.f32 %v4296, %v4441
        %v4501 = vadd.f32 %v4297, %v4444
        %v4502 = vadd.f32 %v4298, %v4447
        %v4503 = vadd.f32 %v4299, %v4450
        %v4504 = vadd.f32 %v4300, %v4453
        %v4505 = vadd.f32 %v4301, %v4456
        %v4506 = vadd.f32 %v4302, %v4459
        %v4507 = vadd.f32 %v4303, %v4462
        %v4508 = vadd.f32 %v4304, %v4465
        %v4509 = vadd.f32 %v4305, %v4468
        %v4510 = vadd.f32 %v4306, %v4471
        %v4511 = vadd.f32 %v4307, %v4474
        %v4512 = vadd.f32 %v4308, %v4477
        %v4513 = vld [vmem:[#allocation3 + $0x28] sm:$0xff]
        %v4514 = vld [vmem:[#allocation3 + $0x30] sm:$0xff]
        %v4515 = vld [vmem:[#allocation3 + $0x38] sm:$0xff]
        %v4516 = vld [vmem:[#allocation3 + $0x40] sm:$0xff]
        %v4517 = vld [vmem:[#allocation3 + $0x48] sm:$0xff]
        %v4518 = vld [vmem:[#allocation3 + $0x50] sm:$0xff]
        %v4519 = vld [vmem:[#allocation3 + $0x58] sm:$0xff]
        %v4520 = vld [vmem:[#allocation3 + $0x60] sm:$0xff]
        %v4521 = vld [vmem:[#allocation3 + $0x68] sm:$0xff]
        %v4522 = vld [vmem:[#allocation3 + $0x70] sm:$0xff]
        %v4523 = vld [vmem:[#allocation3 + $0x78] sm:$0xff]
        %v4524 = vld [vmem:[#allocation3 + $0x80] sm:$0xff]
        %v4525 = vld [vmem:[#allocation3 + $0x88] sm:$0xff]
        %v4526 = vld [vmem:[#allocation3 + $0x90] sm:$0xff]
        %v4527 = vld [vmem:[#allocation3 + $0x98] sm:$0xff]
        %v4528 = vld [vmem:[#allocation3 + $0xa0] sm:$0xff]
        %v4529 = vld [vmem:[#allocation3 + $0xa8] sm:$0xff]
        %v4530 = vld [vmem:[#allocation3 + $0xb0] sm:$0xff]
        %v4531 = vld [vmem:[#allocation3 + $0xb8] sm:$0xff]
        %v4532 = vld [vmem:[#allocation3 + $0xc0] sm:$0xff]
        %v4533 = vld [vmem:[#allocation3 + $0xc8] sm:$0xff]
        %v4534 = vld [vmem:[#allocation3 + $0xd0] sm:$0xff]
        %v4535 = vld [vmem:[#allocation3 + $0xd8] sm:$0xff]
        %v4536 = vld [vmem:[#allocation3 + $0xe0] sm:$0xff]
        %v4537 = vld [vmem:[#allocation3 + $0xe8] sm:$0xff]
        %v4538 = vld [vmem:[#allocation3 + $0xf0] sm:$0xff]
        %v4539 = vld [vmem:[#allocation3 + $0xf8] sm:$0xff]
        %v4540 = vld [vmem:[#allocation3 + $0x100] sm:$0xff]
        %v4541 = vld [vmem:[#allocation3 + $0x108] sm:$0xff]
        %v4542 = vld [vmem:[#allocation3 + $0x110] sm:$0xff]
        %v4543 = vld [vmem:[#allocation3 + $0x118] sm:$0xff]
        %v4544 = vld [vmem:[#allocation3 + $0x120] sm:$0xff]
        %v4545 = vld [vmem:[#allocation3 + $0x128] sm:$0xff]
        %v4546 = vld [vmem:[#allocation3 + $0x130] sm:$0xff]
        %s4547 = scalar_lea.vmem [#allocation5], 512
        %v4548 = vld [vmem:[%s4547] sm:$0xff]
        %v4549 = vld [vmem:[%s4547 + $0x8] sm:$0xff]
        %v4550 = vld [vmem:[%s4547 + $0x10] sm:$0xff]
        %v4551 = vld [vmem:[%s4547 + $0x18] sm:$0xff]
        %v4552 = vld [vmem:[%s4547 + $0x20] sm:$0xff]
        %v4553 = vld [vmem:[%s4547 + $0x28] sm:$0xff]
        %v4554 = vld [vmem:[%s4547 + $0x30] sm:$0xff]
        %v4555 = vld [vmem:[%s4547 + $0x38] sm:$0xff]
        %v4556 = vld [vmem:[%s4547 + $0x40] sm:$0xff]
        %v4557 = vld [vmem:[%s4547 + $0x48] sm:$0xff]
        %v4558 = vld [vmem:[%s4547 + $0x50] sm:$0xff]
        %v4559 = vld [vmem:[%s4547 + $0x58] sm:$0xff]
        %v4560 = vld [vmem:[%s4547 + $0x60] sm:$0xff]
        %v4561 = vld [vmem:[%s4547 + $0x68] sm:$0xff]
        %v4562 = vld [vmem:[%s4547 + $0x70] sm:$0xff]
        %v4563 = vld [vmem:[%s4547 + $0x78] sm:$0xff]
        %4564 = vmatpush.msra.mxu0 %v4563
        %4565 = vmatpush.msra.mxu0 %v4562
        %4566 = vmatpush.msra.mxu0 %v4561
        %4567 = vmatpush.msra.mxu0 %v4560
        %4568 = vmatpush.msra.mxu0 %v4559
        %4569 = vmatpush.msra.mxu0 %v4558
        %4570 = vmatpush.msra.mxu0 %v4557
        %4571 = vmatpush.msra.mxu0 %v4556
        %4572 = vmatpush.msra.mxu0 %v4555
        %4573 = vmatpush.msra.mxu0 %v4554
        %4574 = vmatpush.msra.mxu0 %v4553
        %4575 = vmatpush.msra.mxu0 %v4552
        %4576 = vmatpush.msra.mxu0 %v4551
        %4577 = vmatpush.msra.mxu0 %v4550
        %4578 = vmatpush.msra.mxu0 %v4549
        %4579 = vmatpush.msra.mxu0 %v4548
        %4580 = vmatmul.f32.gmra.mxu0 %v4513
        %v4581 = vpop.f32.mrf.mxu0
        %v4582 = vadd.f32 0.0, %v4581
        %4583 = vmatmul.f32.gmra.mxu0 %v4514
        %v4584 = vpop.f32.mrf.mxu0
        %v4585 = vadd.f32 0.0, %v4584
        %4586 = vmatmul.f32.gmra.mxu0 %v4515
        %v4587 = vpop.f32.mrf.mxu0
        %v4588 = vadd.f32 0.0, %v4587
        %4589 = vmatmul.f32.gmra.mxu0 %v4516
        %v4590 = vpop.f32.mrf.mxu0
        %v4591 = vadd.f32 0.0, %v4590
        %4592 = vmatmul.f32.gmra.mxu0 %v4517
        %v4593 = vpop.f32.mrf.mxu0
        %v4594 = vadd.f32 0.0, %v4593
        %4595 = vmatmul.f32.gmra.mxu0 %v4518
        %v4596 = vpop.f32.mrf.mxu0
        %v4597 = vadd.f32 0.0, %v4596
        %4598 = vmatmul.f32.gmra.mxu0 %v4519
        %v4599 = vpop.f32.mrf.mxu0
        %v4600 = vadd.f32 0.0, %v4599
        %4601 = vmatmul.f32.gmra.mxu0 %v4520
        %v4602 = vpop.f32.mrf.mxu0
        %v4603 = vadd.f32 0.0, %v4602
        %4604 = vmatmul.f32.gmra.mxu0 %v4521
        %v4605 = vpop.f32.mrf.mxu0
        %v4606 = vadd.f32 0.0, %v4605
        %4607 = vmatmul.f32.gmra.mxu0 %v4522
        %v4608 = vpop.f32.mrf.mxu0
        %v4609 = vadd.f32 0.0, %v4608
        %4610 = vmatmul.f32.gmra.mxu0 %v4523
        %v4611 = vpop.f32.mrf.mxu0
        %v4612 = vadd.f32 0.0, %v4611
        %4613 = vmatmul.f32.gmra.mxu0 %v4524
        %v4614 = vpop.f32.mrf.mxu0
        %v4615 = vadd.f32 0.0, %v4614
        %4616 = vmatmul.f32.gmra.mxu0 %v4525
        %v4617 = vpop.f32.mrf.mxu0
        %v4618 = vadd.f32 0.0, %v4617
        %4619 = vmatmul.f32.gmra.mxu0 %v4526
        %v4620 = vpop.f32.mrf.mxu0
        %v4621 = vadd.f32 0.0, %v4620
        %4622 = vmatmul.f32.gmra.mxu0 %v4527
        %v4623 = vpop.f32.mrf.mxu0
        %v4624 = vadd.f32 0.0, %v4623
        %4625 = vmatmul.f32.gmra.mxu0 %v4528
        %v4626 = vpop.f32.mrf.mxu0
        %v4627 = vadd.f32 0.0, %v4626
        %4628 = vmatmul.f32.gmra.mxu0 %v4529
        %v4629 = vpop.f32.mrf.mxu0
        %v4630 = vadd.f32 0.0, %v4629
        %4631 = vmatmul.f32.gmra.mxu0 %v4530
        %v4632 = vpop.f32.mrf.mxu0
        %v4633 = vadd.f32 0.0, %v4632
        %4634 = vmatmul.f32.gmra.mxu0 %v4531
        %v4635 = vpop.f32.mrf.mxu0
        %v4636 = vadd.f32 0.0, %v4635
        %4637 = vmatmul.f32.gmra.mxu0 %v4532
        %v4638 = vpop.f32.mrf.mxu0
        %v4639 = vadd.f32 0.0, %v4638
        %4640 = vmatmul.f32.gmra.mxu0 %v4533
        %v4641 = vpop.f32.mrf.mxu0
        %v4642 = vadd.f32 0.0, %v4641
        %4643 = vmatmul.f32.gmra.mxu0 %v4534
        %v4644 = vpop.f32.mrf.mxu0
        %v4645 = vadd.f32 0.0, %v4644
        %4646 = vmatmul.f32.gmra.mxu0 %v4535
        %v4647 = vpop.f32.mrf.mxu0
        %v4648 = vadd.f32 0.0, %v4647
        %4649 = vmatmul.f32.gmra.mxu0 %v4536
        %v4650 = vpop.f32.mrf.mxu0
        %v4651 = vadd.f32 0.0, %v4650
        %4652 = vmatmul.f32.gmra.mxu0 %v4537
        %v4653 = vpop.f32.mrf.mxu0
        %v4654 = vadd.f32 0.0, %v4653
        %4655 = vmatmul.f32.gmra.mxu0 %v4538
        %v4656 = vpop.f32.mrf.mxu0
        %v4657 = vadd.f32 0.0, %v4656
        %4658 = vmatmul.f32.gmra.mxu0 %v4539
        %v4659 = vpop.f32.mrf.mxu0
        %v4660 = vadd.f32 0.0, %v4659
        %4661 = vmatmul.f32.gmra.mxu0 %v4540
        %v4662 = vpop.f32.mrf.mxu0
        %v4663 = vadd.f32 0.0, %v4662
        %4664 = vmatmul.f32.gmra.mxu0 %v4541
        %v4665 = vpop.f32.mrf.mxu0
        %v4666 = vadd.f32 0.0, %v4665
        %4667 = vmatmul.f32.gmra.mxu0 %v4542
        %v4668 = vpop.f32.mrf.mxu0
        %v4669 = vadd.f32 0.0, %v4668
        %4670 = vmatmul.f32.gmra.mxu0 %v4543
        %v4671 = vpop.f32.mrf.mxu0
        %v4672 = vadd.f32 0.0, %v4671
        %4673 = vmatmul.f32.gmra.mxu0 %v4544
        %v4674 = vpop.f32.mrf.mxu0
        %v4675 = vadd.f32 0.0, %v4674
        %4676 = vmatmul.f32.gmra.mxu0 %v4545
        %v4677 = vpop.f32.mrf.mxu0
        %v4678 = vadd.f32 0.0, %v4677
        %4679 = vmatmul.f32.gmra.mxu0 %v4546
        %v4680 = vpop.f32.mrf.mxu0
        %v4681 = vadd.f32 0.0, %v4680
        %4682 = vdwg.mxu0
        %v4683 = vadd.f32 %v4479, %v4582
        %v4684 = vadd.f32 %v4480, %v4585
        %v4685 = vadd.f32 %v4481, %v4588
        %v4686 = vadd.f32 %v4482, %v4591
        %v4687 = vadd.f32 %v4483, %v4594
        %v4688 = vadd.f32 %v4484, %v4597
        %v4689 = vadd.f32 %v4485, %v4600
        %v4690 = vadd.f32 %v4486, %v4603
        %v4691 = vadd.f32 %v4487, %v4606
        %v4692 = vadd.f32 %v4488, %v4609
        %v4693 = vadd.f32 %v4489, %v4612
        %v4694 = vadd.f32 %v4490, %v4615
        %v4695 = vadd.f32 %v4491, %v4618
        %v4696 = vadd.f32 %v4492, %v4621
        %v4697 = vadd.f32 %v4493, %v4624
        %v4698 = vadd.f32 %v4494, %v4627
        %v4699 = vadd.f32 %v4495, %v4630
        %v4700 = vadd.f32 %v4496, %v4633
        %v4701 = vadd.f32 %v4497, %v4636
        %v4702 = vadd.f32 %v4498, %v4639
        %v4703 = vadd.f32 %v4499, %v4642
        %v4704 = vadd.f32 %v4500, %v4645
        %v4705 = vadd.f32 %v4501, %v4648
        %v4706 = vadd.f32 %v4502, %v4651
        %v4707 = vadd.f32 %v4503, %v4654
        %v4708 = vadd.f32 %v4504, %v4657
        %v4709 = vadd.f32 %v4505, %v4660
        %v4710 = vadd.f32 %v4506, %v4663
        %v4711 = vadd.f32 %v4507, %v4666
        %v4712 = vadd.f32 %v4508, %v4669
        %v4713 = vadd.f32 %v4509, %v4672
        %v4714 = vadd.f32 %v4510, %v4675
        %v4715 = vadd.f32 %v4511, %v4678
        %v4716 = vadd.f32 %v4512, %v4681
        %v4717 = vld [vmem:[#allocation3 + $0x2a] sm:$0xff]
        %v4718 = vld [vmem:[#allocation3 + $0x32] sm:$0xff]
        %v4719 = vld [vmem:[#allocation3 + $0x3a] sm:$0xff]
        %v4720 = vld [vmem:[#allocation3 + $0x42] sm:$0xff]
        %v4721 = vld [vmem:[#allocation3 + $0x4a] sm:$0xff]
        %v4722 = vld [vmem:[#allocation3 + $0x52] sm:$0xff]
        %v4723 = vld [vmem:[#allocation3 + $0x5a] sm:$0xff]
        %v4724 = vld [vmem:[#allocation3 + $0x62] sm:$0xff]
        %v4725 = vld [vmem:[#allocation3 + $0x6a] sm:$0xff]
        %v4726 = vld [vmem:[#allocation3 + $0x72] sm:$0xff]
        %v4727 = vld [vmem:[#allocation3 + $0x7a] sm:$0xff]
        %v4728 = vld [vmem:[#allocation3 + $0x82] sm:$0xff]
        %v4729 = vld [vmem:[#allocation3 + $0x8a] sm:$0xff]
        %v4730 = vld [vmem:[#allocation3 + $0x92] sm:$0xff]
        %v4731 = vld [vmem:[#allocation3 + $0x9a] sm:$0xff]
        %v4732 = vld [vmem:[#allocation3 + $0xa2] sm:$0xff]
        %v4733 = vld [vmem:[#allocation3 + $0xaa] sm:$0xff]
        %v4734 = vld [vmem:[#allocation3 + $0xb2] sm:$0xff]
        %v4735 = vld [vmem:[#allocation3 + $0xba] sm:$0xff]
        %v4736 = vld [vmem:[#allocation3 + $0xc2] sm:$0xff]
        %v4737 = vld [vmem:[#allocation3 + $0xca] sm:$0xff]
        %v4738 = vld [vmem:[#allocation3 + $0xd2] sm:$0xff]
        %v4739 = vld [vmem:[#allocation3 + $0xda] sm:$0xff]
        %v4740 = vld [vmem:[#allocation3 + $0xe2] sm:$0xff]
        %v4741 = vld [vmem:[#allocation3 + $0xea] sm:$0xff]
        %v4742 = vld [vmem:[#allocation3 + $0xf2] sm:$0xff]
        %v4743 = vld [vmem:[#allocation3 + $0xfa] sm:$0xff]
        %v4744 = vld [vmem:[#allocation3 + $0x102] sm:$0xff]
        %v4745 = vld [vmem:[#allocation3 + $0x10a] sm:$0xff]
        %v4746 = vld [vmem:[#allocation3 + $0x112] sm:$0xff]
        %v4747 = vld [vmem:[#allocation3 + $0x11a] sm:$0xff]
        %v4748 = vld [vmem:[#allocation3 + $0x122] sm:$0xff]
        %v4749 = vld [vmem:[#allocation3 + $0x12a] sm:$0xff]
        %v4750 = vld [vmem:[#allocation3 + $0x132] sm:$0xff]
        %s4751 = scalar_lea.vmem [#allocation5], 640
        %v4752 = vld [vmem:[%s4751] sm:$0xff]
        %v4753 = vld [vmem:[%s4751 + $0x8] sm:$0xff]
        %v4754 = vld [vmem:[%s4751 + $0x10] sm:$0xff]
        %v4755 = vld [vmem:[%s4751 + $0x18] sm:$0xff]
        %v4756 = vld [vmem:[%s4751 + $0x20] sm:$0xff]
        %v4757 = vld [vmem:[%s4751 + $0x28] sm:$0xff]
        %v4758 = vld [vmem:[%s4751 + $0x30] sm:$0xff]
        %v4759 = vld [vmem:[%s4751 + $0x38] sm:$0xff]
        %v4760 = vld [vmem:[%s4751 + $0x40] sm:$0xff]
        %v4761 = vld [vmem:[%s4751 + $0x48] sm:$0xff]
        %v4762 = vld [vmem:[%s4751 + $0x50] sm:$0xff]
        %v4763 = vld [vmem:[%s4751 + $0x58] sm:$0xff]
        %v4764 = vld [vmem:[%s4751 + $0x60] sm:$0xff]
        %v4765 = vld [vmem:[%s4751 + $0x68] sm:$0xff]
        %v4766 = vld [vmem:[%s4751 + $0x70] sm:$0xff]
        %v4767 = vld [vmem:[%s4751 + $0x78] sm:$0xff]
        %4768 = vmatpush.msra.mxu0 %v4767
        %4769 = vmatpush.msra.mxu0 %v4766
        %4770 = vmatpush.msra.mxu0 %v4765
        %4771 = vmatpush.msra.mxu0 %v4764
        %4772 = vmatpush.msra.mxu0 %v4763
        %4773 = vmatpush.msra.mxu0 %v4762
        %4774 = vmatpush.msra.mxu0 %v4761
        %4775 = vmatpush.msra.mxu0 %v4760
        %4776 = vmatpush.msra.mxu0 %v4759
        %4777 = vmatpush.msra.mxu0 %v4758
        %4778 = vmatpush.msra.mxu0 %v4757
        %4779 = vmatpush.msra.mxu0 %v4756
        %4780 = vmatpush.msra.mxu0 %v4755
        %4781 = vmatpush.msra.mxu0 %v4754
        %4782 = vmatpush.msra.mxu0 %v4753
        %4783 = vmatpush.msra.mxu0 %v4752
        %4784 = vmatmul.f32.gmra.mxu0 %v4717
        %v4785 = vpop.f32.mrf.mxu0
        %v4786 = vadd.f32 0.0, %v4785
        %4787 = vmatmul.f32.gmra.mxu0 %v4718
        %v4788 = vpop.f32.mrf.mxu0
        %v4789 = vadd.f32 0.0, %v4788
        %4790 = vmatmul.f32.gmra.mxu0 %v4719
        %v4791 = vpop.f32.mrf.mxu0
        %v4792 = vadd.f32 0.0, %v4791
        %4793 = vmatmul.f32.gmra.mxu0 %v4720
        %v4794 = vpop.f32.mrf.mxu0
        %v4795 = vadd.f32 0.0, %v4794
        %4796 = vmatmul.f32.gmra.mxu0 %v4721
        %v4797 = vpop.f32.mrf.mxu0
        %v4798 = vadd.f32 0.0, %v4797
        %4799 = vmatmul.f32.gmra.mxu0 %v4722
        %v4800 = vpop.f32.mrf.mxu0
        %v4801 = vadd.f32 0.0, %v4800
        %4802 = vmatmul.f32.gmra.mxu0 %v4723
        %v4803 = vpop.f32.mrf.mxu0
        %v4804 = vadd.f32 0.0, %v4803
        %4805 = vmatmul.f32.gmra.mxu0 %v4724
        %v4806 = vpop.f32.mrf.mxu0
        %v4807 = vadd.f32 0.0, %v4806
        %4808 = vmatmul.f32.gmra.mxu0 %v4725
        %v4809 = vpop.f32.mrf.mxu0
        %v4810 = vadd.f32 0.0, %v4809
        %4811 = vmatmul.f32.gmra.mxu0 %v4726
        %v4812 = vpop.f32.mrf.mxu0
        %v4813 = vadd.f32 0.0, %v4812
        %4814 = vmatmul.f32.gmra.mxu0 %v4727
        %v4815 = vpop.f32.mrf.mxu0
        %v4816 = vadd.f32 0.0, %v4815
        %4817 = vmatmul.f32.gmra.mxu0 %v4728
        %v4818 = vpop.f32.mrf.mxu0
        %v4819 = vadd.f32 0.0, %v4818
        %4820 = vmatmul.f32.gmra.mxu0 %v4729
        %v4821 = vpop.f32.mrf.mxu0
        %v4822 = vadd.f32 0.0, %v4821
        %4823 = vmatmul.f32.gmra.mxu0 %v4730
        %v4824 = vpop.f32.mrf.mxu0
        %v4825 = vadd.f32 0.0, %v4824
        %4826 = vmatmul.f32.gmra.mxu0 %v4731
        %v4827 = vpop.f32.mrf.mxu0
        %v4828 = vadd.f32 0.0, %v4827
        %4829 = vmatmul.f32.gmra.mxu0 %v4732
        %v4830 = vpop.f32.mrf.mxu0
        %v4831 = vadd.f32 0.0, %v4830
        %4832 = vmatmul.f32.gmra.mxu0 %v4733
        %v4833 = vpop.f32.mrf.mxu0
        %v4834 = vadd.f32 0.0, %v4833
        %4835 = vmatmul.f32.gmra.mxu0 %v4734
        %v4836 = vpop.f32.mrf.mxu0
        %v4837 = vadd.f32 0.0, %v4836
        %4838 = vmatmul.f32.gmra.mxu0 %v4735
        %v4839 = vpop.f32.mrf.mxu0
        %v4840 = vadd.f32 0.0, %v4839
        %4841 = vmatmul.f32.gmra.mxu0 %v4736
        %v4842 = vpop.f32.mrf.mxu0
        %v4843 = vadd.f32 0.0, %v4842
        %4844 = vmatmul.f32.gmra.mxu0 %v4737
        %v4845 = vpop.f32.mrf.mxu0
        %v4846 = vadd.f32 0.0, %v4845
        %4847 = vmatmul.f32.gmra.mxu0 %v4738
        %v4848 = vpop.f32.mrf.mxu0
        %v4849 = vadd.f32 0.0, %v4848
        %4850 = vmatmul.f32.gmra.mxu0 %v4739
        %v4851 = vpop.f32.mrf.mxu0
        %v4852 = vadd.f32 0.0, %v4851
        %4853 = vmatmul.f32.gmra.mxu0 %v4740
        %v4854 = vpop.f32.mrf.mxu0
        %v4855 = vadd.f32 0.0, %v4854
        %4856 = vmatmul.f32.gmra.mxu0 %v4741
        %v4857 = vpop.f32.mrf.mxu0
        %v4858 = vadd.f32 0.0, %v4857
        %4859 = vmatmul.f32.gmra.mxu0 %v4742
        %v4860 = vpop.f32.mrf.mxu0
        %v4861 = vadd.f32 0.0, %v4860
        %4862 = vmatmul.f32.gmra.mxu0 %v4743
        %v4863 = vpop.f32.mrf.mxu0
        %v4864 = vadd.f32 0.0, %v4863
        %4865 = vmatmul.f32.gmra.mxu0 %v4744
        %v4866 = vpop.f32.mrf.mxu0
        %v4867 = vadd.f32 0.0, %v4866
        %4868 = vmatmul.f32.gmra.mxu0 %v4745
        %v4869 = vpop.f32.mrf.mxu0
        %v4870 = vadd.f32 0.0, %v4869
        %4871 = vmatmul.f32.gmra.mxu0 %v4746
        %v4872 = vpop.f32.mrf.mxu0
        %v4873 = vadd.f32 0.0, %v4872
        %4874 = vmatmul.f32.gmra.mxu0 %v4747
        %v4875 = vpop.f32.mrf.mxu0
        %v4876 = vadd.f32 0.0, %v4875
        %4877 = vmatmul.f32.gmra.mxu0 %v4748
        %v4878 = vpop.f32.mrf.mxu0
        %v4879 = vadd.f32 0.0, %v4878
        %4880 = vmatmul.f32.gmra.mxu0 %v4749
        %v4881 = vpop.f32.mrf.mxu0
        %v4882 = vadd.f32 0.0, %v4881
        %4883 = vmatmul.f32.gmra.mxu0 %v4750
        %v4884 = vpop.f32.mrf.mxu0
        %v4885 = vadd.f32 0.0, %v4884
        %4886 = vdwg.mxu0
        %v4887 = vadd.f32 %v4683, %v4786
        %v4888 = vadd.f32 %v4684, %v4789
        %v4889 = vadd.f32 %v4685, %v4792
        %v4890 = vadd.f32 %v4686, %v4795
        %v4891 = vadd.f32 %v4687, %v4798
        %v4892 = vadd.f32 %v4688, %v4801
        %v4893 = vadd.f32 %v4689, %v4804
        %v4894 = vadd.f32 %v4690, %v4807
        %v4895 = vadd.f32 %v4691, %v4810
        %v4896 = vadd.f32 %v4692, %v4813
        %v4897 = vadd.f32 %v4693, %v4816
        %v4898 = vadd.f32 %v4694, %v4819
        %v4899 = vadd.f32 %v4695, %v4822
        %v4900 = vadd.f32 %v4696, %v4825
        %v4901 = vadd.f32 %v4697, %v4828
        %v4902 = vadd.f32 %v4698, %v4831
        %v4903 = vadd.f32 %v4699, %v4834
        %v4904 = vadd.f32 %v4700, %v4837
        %v4905 = vadd.f32 %v4701, %v4840
        %v4906 = vadd.f32 %v4702, %v4843
        %v4907 = vadd.f32 %v4703, %v4846
        %v4908 = vadd.f32 %v4704, %v4849
        %v4909 = vadd.f32 %v4705, %v4852
        %v4910 = vadd.f32 %v4706, %v4855
        %v4911 = vadd.f32 %v4707, %v4858
        %v4912 = vadd.f32 %v4708, %v4861
        %v4913 = vadd.f32 %v4709, %v4864
        %v4914 = vadd.f32 %v4710, %v4867
        %v4915 = vadd.f32 %v4711, %v4870
        %v4916 = vadd.f32 %v4712, %v4873
        %v4917 = vadd.f32 %v4713, %v4876
        %v4918 = vadd.f32 %v4714, %v4879
        %v4919 = vadd.f32 %v4715, %v4882
        %v4920 = vadd.f32 %v4716, %v4885
        %v4921 = vld [vmem:[#allocation3 + $0x4a] sm:$0xff]
        %v4922 = vld [vmem:[#allocation3 + $0x52] sm:$0xff]
        %v4923 = vld [vmem:[#allocation3 + $0x5a] sm:$0xff]
        %v4924 = vld [vmem:[#allocation3 + $0x62] sm:$0xff]
        %v4925 = vld [vmem:[#allocation3 + $0x6a] sm:$0xff]
        %v4926 = vld [vmem:[#allocation3 + $0x72] sm:$0xff]
        %v4927 = vld [vmem:[#allocation3 + $0x7a] sm:$0xff]
        %v4928 = vld [vmem:[#allocation3 + $0x82] sm:$0xff]
        %v4929 = vld [vmem:[#allocation3 + $0x8a] sm:$0xff]
        %v4930 = vld [vmem:[#allocation3 + $0x92] sm:$0xff]
        %v4931 = vld [vmem:[#allocation3 + $0x9a] sm:$0xff]
        %v4932 = vld [vmem:[#allocation3 + $0xa2] sm:$0xff]
        %v4933 = vld [vmem:[#allocation3 + $0xaa] sm:$0xff]
        %v4934 = vld [vmem:[#allocation3 + $0xb2] sm:$0xff]
        %v4935 = vld [vmem:[#allocation3 + $0xba] sm:$0xff]
        %v4936 = vld [vmem:[#allocation3 + $0xc2] sm:$0xff]
        %v4937 = vld [vmem:[#allocation3 + $0xca] sm:$0xff]
        %v4938 = vld [vmem:[#allocation3 + $0xd2] sm:$0xff]
        %v4939 = vld [vmem:[#allocation3 + $0xda] sm:$0xff]
        %v4940 = vld [vmem:[#allocation3 + $0xe2] sm:$0xff]
        %v4941 = vld [vmem:[#allocation3 + $0xea] sm:$0xff]
        %v4942 = vld [vmem:[#allocation3 + $0xf2] sm:$0xff]
        %v4943 = vld [vmem:[#allocation3 + $0xfa] sm:$0xff]
        %v4944 = vld [vmem:[#allocation3 + $0x102] sm:$0xff]
        %v4945 = vld [vmem:[#allocation3 + $0x10a] sm:$0xff]
        %v4946 = vld [vmem:[#allocation3 + $0x112] sm:$0xff]
        %v4947 = vld [vmem:[#allocation3 + $0x11a] sm:$0xff]
        %v4948 = vld [vmem:[#allocation3 + $0x122] sm:$0xff]
        %v4949 = vld [vmem:[#allocation3 + $0x12a] sm:$0xff]
        %v4950 = vld [vmem:[#allocation3 + $0x132] sm:$0xff]
        %v4951 = vld [vmem:[#allocation3 + $0x13a] sm:$0xff]
        %v4952 = vld [vmem:[#allocation3 + $0x142] sm:$0xff]
        %v4953 = vld [vmem:[#allocation3 + $0x14a] sm:$0xff]
        %v4954 = vld [vmem:[#allocation3 + $0x152] sm:$0xff]
        %s4955 = scalar_lea.vmem [#allocation5], 768
        %v4956 = vld [vmem:[%s4955] sm:$0xff]
        %v4957 = vld [vmem:[%s4955 + $0x8] sm:$0xff]
        %v4958 = vld [vmem:[%s4955 + $0x10] sm:$0xff]
        %v4959 = vld [vmem:[%s4955 + $0x18] sm:$0xff]
        %v4960 = vld [vmem:[%s4955 + $0x20] sm:$0xff]
        %v4961 = vld [vmem:[%s4955 + $0x28] sm:$0xff]
        %v4962 = vld [vmem:[%s4955 + $0x30] sm:$0xff]
        %v4963 = vld [vmem:[%s4955 + $0x38] sm:$0xff]
        %v4964 = vld [vmem:[%s4955 + $0x40] sm:$0xff]
        %v4965 = vld [vmem:[%s4955 + $0x48] sm:$0xff]
        %v4966 = vld [vmem:[%s4955 + $0x50] sm:$0xff]
        %v4967 = vld [vmem:[%s4955 + $0x58] sm:$0xff]
        %v4968 = vld [vmem:[%s4955 + $0x60] sm:$0xff]
        %v4969 = vld [vmem:[%s4955 + $0x68] sm:$0xff]
        %v4970 = vld [vmem:[%s4955 + $0x70] sm:$0xff]
        %v4971 = vld [vmem:[%s4955 + $0x78] sm:$0xff]
        %4972 = vmatpush.msra.mxu0 %v4971
        %4973 = vmatpush.msra.mxu0 %v4970
        %4974 = vmatpush.msra.mxu0 %v4969
        %4975 = vmatpush.msra.mxu0 %v4968
        %4976 = vmatpush.msra.mxu0 %v4967
        %4977 = vmatpush.msra.mxu0 %v4966
        %4978 = vmatpush.msra.mxu0 %v4965
        %4979 = vmatpush.msra.mxu0 %v4964
        %4980 = vmatpush.msra.mxu0 %v4963
        %4981 = vmatpush.msra.mxu0 %v4962
        %4982 = vmatpush.msra.mxu0 %v4961
        %4983 = vmatpush.msra.mxu0 %v4960
        %4984 = vmatpush.msra.mxu0 %v4959
        %4985 = vmatpush.msra.mxu0 %v4958
        %4986 = vmatpush.msra.mxu0 %v4957
        %4987 = vmatpush.msra.mxu0 %v4956
        %4988 = vmatmul.f32.gmra.mxu0 %v4921
        %v4989 = vpop.f32.mrf.mxu0
        %v4990 = vadd.f32 0.0, %v4989
        %4991 = vmatmul.f32.gmra.mxu0 %v4922
        %v4992 = vpop.f32.mrf.mxu0
        %v4993 = vadd.f32 0.0, %v4992
        %4994 = vmatmul.f32.gmra.mxu0 %v4923
        %v4995 = vpop.f32.mrf.mxu0
        %v4996 = vadd.f32 0.0, %v4995
        %4997 = vmatmul.f32.gmra.mxu0 %v4924
        %v4998 = vpop.f32.mrf.mxu0
        %v4999 = vadd.f32 0.0, %v4998
        %5000 = vmatmul.f32.gmra.mxu0 %v4925
        %v5001 = vpop.f32.mrf.mxu0
        %v5002 = vadd.f32 0.0, %v5001
        %5003 = vmatmul.f32.gmra.mxu0 %v4926
        %v5004 = vpop.f32.mrf.mxu0
        %v5005 = vadd.f32 0.0, %v5004
        %5006 = vmatmul.f32.gmra.mxu0 %v4927
        %v5007 = vpop.f32.mrf.mxu0
        %v5008 = vadd.f32 0.0, %v5007
        %5009 = vmatmul.f32.gmra.mxu0 %v4928
        %v5010 = vpop.f32.mrf.mxu0
        %v5011 = vadd.f32 0.0, %v5010
        %5012 = vmatmul.f32.gmra.mxu0 %v4929
        %v5013 = vpop.f32.mrf.mxu0
        %v5014 = vadd.f32 0.0, %v5013
        %5015 = vmatmul.f32.gmra.mxu0 %v4930
        %v5016 = vpop.f32.mrf.mxu0
        %v5017 = vadd.f32 0.0, %v5016
        %5018 = vmatmul.f32.gmra.mxu0 %v4931
        %v5019 = vpop.f32.mrf.mxu0
        %v5020 = vadd.f32 0.0, %v5019
        %5021 = vmatmul.f32.gmra.mxu0 %v4932
        %v5022 = vpop.f32.mrf.mxu0
        %v5023 = vadd.f32 0.0, %v5022
        %5024 = vmatmul.f32.gmra.mxu0 %v4933
        %v5025 = vpop.f32.mrf.mxu0
        %v5026 = vadd.f32 0.0, %v5025
        %5027 = vmatmul.f32.gmra.mxu0 %v4934
        %v5028 = vpop.f32.mrf.mxu0
        %v5029 = vadd.f32 0.0, %v5028
        %5030 = vmatmul.f32.gmra.mxu0 %v4935
        %v5031 = vpop.f32.mrf.mxu0
        %v5032 = vadd.f32 0.0, %v5031
        %5033 = vmatmul.f32.gmra.mxu0 %v4936
        %v5034 = vpop.f32.mrf.mxu0
        %v5035 = vadd.f32 0.0, %v5034
        %5036 = vmatmul.f32.gmra.mxu0 %v4937
        %v5037 = vpop.f32.mrf.mxu0
        %v5038 = vadd.f32 0.0, %v5037
        %5039 = vmatmul.f32.gmra.mxu0 %v4938
        %v5040 = vpop.f32.mrf.mxu0
        %v5041 = vadd.f32 0.0, %v5040
        %5042 = vmatmul.f32.gmra.mxu0 %v4939
        %v5043 = vpop.f32.mrf.mxu0
        %v5044 = vadd.f32 0.0, %v5043
        %5045 = vmatmul.f32.gmra.mxu0 %v4940
        %v5046 = vpop.f32.mrf.mxu0
        %v5047 = vadd.f32 0.0, %v5046
        %5048 = vmatmul.f32.gmra.mxu0 %v4941
        %v5049 = vpop.f32.mrf.mxu0
        %v5050 = vadd.f32 0.0, %v5049
        %5051 = vmatmul.f32.gmra.mxu0 %v4942
        %v5052 = vpop.f32.mrf.mxu0
        %v5053 = vadd.f32 0.0, %v5052
        %5054 = vmatmul.f32.gmra.mxu0 %v4943
        %v5055 = vpop.f32.mrf.mxu0
        %v5056 = vadd.f32 0.0, %v5055
        %5057 = vmatmul.f32.gmra.mxu0 %v4944
        %v5058 = vpop.f32.mrf.mxu0
        %v5059 = vadd.f32 0.0, %v5058
        %5060 = vmatmul.f32.gmra.mxu0 %v4945
        %v5061 = vpop.f32.mrf.mxu0
        %v5062 = vadd.f32 0.0, %v5061
        %5063 = vmatmul.f32.gmra.mxu0 %v4946
        %v5064 = vpop.f32.mrf.mxu0
        %v5065 = vadd.f32 0.0, %v5064
        %5066 = vmatmul.f32.gmra.mxu0 %v4947
        %v5067 = vpop.f32.mrf.mxu0
        %v5068 = vadd.f32 0.0, %v5067
        %5069 = vmatmul.f32.gmra.mxu0 %v4948
        %v5070 = vpop.f32.mrf.mxu0
        %v5071 = vadd.f32 0.0, %v5070
        %5072 = vmatmul.f32.gmra.mxu0 %v4949
        %v5073 = vpop.f32.mrf.mxu0
        %v5074 = vadd.f32 0.0, %v5073
        %5075 = vmatmul.f32.gmra.mxu0 %v4950
        %v5076 = vpop.f32.mrf.mxu0
        %v5077 = vadd.f32 0.0, %v5076
        %5078 = vmatmul.f32.gmra.mxu0 %v4951
        %v5079 = vpop.f32.mrf.mxu0
        %v5080 = vadd.f32 0.0, %v5079
        %5081 = vmatmul.f32.gmra.mxu0 %v4952
        %v5082 = vpop.f32.mrf.mxu0
        %v5083 = vadd.f32 0.0, %v5082
        %5084 = vmatmul.f32.gmra.mxu0 %v4953
        %v5085 = vpop.f32.mrf.mxu0
        %v5086 = vadd.f32 0.0, %v5085
        %5087 = vmatmul.f32.gmra.mxu0 %v4954
        %v5088 = vpop.f32.mrf.mxu0
        %v5089 = vadd.f32 0.0, %v5088
        %5090 = vdwg.mxu0
        %v5091 = vadd.f32 %v4887, %v4990
        %v5092 = vadd.f32 %v4888, %v4993
        %v5093 = vadd.f32 %v4889, %v4996
        %v5094 = vadd.f32 %v4890, %v4999
        %v5095 = vadd.f32 %v4891, %v5002
        %v5096 = vadd.f32 %v4892, %v5005
        %v5097 = vadd.f32 %v4893, %v5008
        %v5098 = vadd.f32 %v4894, %v5011
        %v5099 = vadd.f32 %v4895, %v5014
        %v5100 = vadd.f32 %v4896, %v5017
        %v5101 = vadd.f32 %v4897, %v5020
        %v5102 = vadd.f32 %v4898, %v5023
        %v5103 = vadd.f32 %v4899, %v5026
        %v5104 = vadd.f32 %v4900, %v5029
        %v5105 = vadd.f32 %v4901, %v5032
        %v5106 = vadd.f32 %v4902, %v5035
        %v5107 = vadd.f32 %v4903, %v5038
        %v5108 = vadd.f32 %v4904, %v5041
        %v5109 = vadd.f32 %v4905, %v5044
        %v5110 = vadd.f32 %v4906, %v5047
        %v5111 = vadd.f32 %v4907, %v5050
        %v5112 = vadd.f32 %v4908, %v5053
        %v5113 = vadd.f32 %v4909, %v5056
        %v5114 = vadd.f32 %v4910, %v5059
        %v5115 = vadd.f32 %v4911, %v5062
        %v5116 = vadd.f32 %v4912, %v5065
        %v5117 = vadd.f32 %v4913, %v5068
        %v5118 = vadd.f32 %v4914, %v5071
        %v5119 = vadd.f32 %v4915, %v5074
        %v5120 = vadd.f32 %v4916, %v5077
        %v5121 = vadd.f32 %v4917, %v5080
        %v5122 = vadd.f32 %v4918, %v5083
        %v5123 = vadd.f32 %v4919, %v5086
        %v5124 = vadd.f32 %v4920, %v5089
        %v5125 = vld [vmem:[#allocation3 + $0x4c] sm:$0xff]
        %v5126 = vld [vmem:[#allocation3 + $0x54] sm:$0xff]
        %v5127 = vld [vmem:[#allocation3 + $0x5c] sm:$0xff]
        %v5128 = vld [vmem:[#allocation3 + $0x64] sm:$0xff]
        %v5129 = vld [vmem:[#allocation3 + $0x6c] sm:$0xff]
        %v5130 = vld [vmem:[#allocation3 + $0x74] sm:$0xff]
        %v5131 = vld [vmem:[#allocation3 + $0x7c] sm:$0xff]
        %v5132 = vld [vmem:[#allocation3 + $0x84] sm:$0xff]
        %v5133 = vld [vmem:[#allocation3 + $0x8c] sm:$0xff]
        %v5134 = vld [vmem:[#allocation3 + $0x94] sm:$0xff]
        %v5135 = vld [vmem:[#allocation3 + $0x9c] sm:$0xff]
        %v5136 = vld [vmem:[#allocation3 + $0xa4] sm:$0xff]
        %v5137 = vld [vmem:[#allocation3 + $0xac] sm:$0xff]
        %v5138 = vld [vmem:[#allocation3 + $0xb4] sm:$0xff]
        %v5139 = vld [vmem:[#allocation3 + $0xbc] sm:$0xff]
        %v5140 = vld [vmem:[#allocation3 + $0xc4] sm:$0xff]
        %v5141 = vld [vmem:[#allocation3 + $0xcc] sm:$0xff]
        %v5142 = vld [vmem:[#allocation3 + $0xd4] sm:$0xff]
        %v5143 = vld [vmem:[#allocation3 + $0xdc] sm:$0xff]
        %v5144 = vld [vmem:[#allocation3 + $0xe4] sm:$0xff]
        %v5145 = vld [vmem:[#allocation3 + $0xec] sm:$0xff]
        %v5146 = vld [vmem:[#allocation3 + $0xf4] sm:$0xff]
        %v5147 = vld [vmem:[#allocation3 + $0xfc] sm:$0xff]
        %v5148 = vld [vmem:[#allocation3 + $0x104] sm:$0xff]
        %v5149 = vld [vmem:[#allocation3 + $0x10c] sm:$0xff]
        %v5150 = vld [vmem:[#allocation3 + $0x114] sm:$0xff]
        %v5151 = vld [vmem:[#allocation3 + $0x11c] sm:$0xff]
        %v5152 = vld [vmem:[#allocation3 + $0x124] sm:$0xff]
        %v5153 = vld [vmem:[#allocation3 + $0x12c] sm:$0xff]
        %v5154 = vld [vmem:[#allocation3 + $0x134] sm:$0xff]
        %v5155 = vld [vmem:[#allocation3 + $0x13c] sm:$0xff]
        %v5156 = vld [vmem:[#allocation3 + $0x144] sm:$0xff]
        %v5157 = vld [vmem:[#allocation3 + $0x14c] sm:$0xff]
        %v5158 = vld [vmem:[#allocation3 + $0x154] sm:$0xff]
        %s5159 = scalar_lea.vmem [#allocation5], 896
        %v5160 = vld [vmem:[%s5159] sm:$0xff]
        %v5161 = vld [vmem:[%s5159 + $0x8] sm:$0xff]
        %v5162 = vld [vmem:[%s5159 + $0x10] sm:$0xff]
        %v5163 = vld [vmem:[%s5159 + $0x18] sm:$0xff]
        %v5164 = vld [vmem:[%s5159 + $0x20] sm:$0xff]
        %v5165 = vld [vmem:[%s5159 + $0x28] sm:$0xff]
        %v5166 = vld [vmem:[%s5159 + $0x30] sm:$0xff]
        %v5167 = vld [vmem:[%s5159 + $0x38] sm:$0xff]
        %v5168 = vld [vmem:[%s5159 + $0x40] sm:$0xff]
        %v5169 = vld [vmem:[%s5159 + $0x48] sm:$0xff]
        %v5170 = vld [vmem:[%s5159 + $0x50] sm:$0xff]
        %v5171 = vld [vmem:[%s5159 + $0x58] sm:$0xff]
        %v5172 = vld [vmem:[%s5159 + $0x60] sm:$0xff]
        %v5173 = vld [vmem:[%s5159 + $0x68] sm:$0xff]
        %v5174 = vld [vmem:[%s5159 + $0x70] sm:$0xff]
        %v5175 = vld [vmem:[%s5159 + $0x78] sm:$0xff]
        %5176 = vmatpush.msra.mxu0 %v5175
        %5177 = vmatpush.msra.mxu0 %v5174
        %5178 = vmatpush.msra.mxu0 %v5173
        %5179 = vmatpush.msra.mxu0 %v5172
        %5180 = vmatpush.msra.mxu0 %v5171
        %5181 = vmatpush.msra.mxu0 %v5170
        %5182 = vmatpush.msra.mxu0 %v5169
        %5183 = vmatpush.msra.mxu0 %v5168
        %5184 = vmatpush.msra.mxu0 %v5167
        %5185 = vmatpush.msra.mxu0 %v5166
        %5186 = vmatpush.msra.mxu0 %v5165
        %5187 = vmatpush.msra.mxu0 %v5164
        %5188 = vmatpush.msra.mxu0 %v5163
        %5189 = vmatpush.msra.mxu0 %v5162
        %5190 = vmatpush.msra.mxu0 %v5161
        %5191 = vmatpush.msra.mxu0 %v5160
        %5192 = vmatmul.f32.gmra.mxu0 %v5125
        %v5193 = vpop.f32.mrf.mxu0
        %v5194 = vadd.f32 0.0, %v5193
        %5195 = vmatmul.f32.gmra.mxu0 %v5126
        %v5196 = vpop.f32.mrf.mxu0
        %v5197 = vadd.f32 0.0, %v5196
        %5198 = vmatmul.f32.gmra.mxu0 %v5127
        %v5199 = vpop.f32.mrf.mxu0
        %v5200 = vadd.f32 0.0, %v5199
        %5201 = vmatmul.f32.gmra.mxu0 %v5128
        %v5202 = vpop.f32.mrf.mxu0
        %v5203 = vadd.f32 0.0, %v5202
        %5204 = vmatmul.f32.gmra.mxu0 %v5129
        %v5205 = vpop.f32.mrf.mxu0
        %v5206 = vadd.f32 0.0, %v5205
        %5207 = vmatmul.f32.gmra.mxu0 %v5130
        %v5208 = vpop.f32.mrf.mxu0
        %v5209 = vadd.f32 0.0, %v5208
        %5210 = vmatmul.f32.gmra.mxu0 %v5131
        %v5211 = vpop.f32.mrf.mxu0
        %v5212 = vadd.f32 0.0, %v5211
        %5213 = vmatmul.f32.gmra.mxu0 %v5132
        %v5214 = vpop.f32.mrf.mxu0
        %v5215 = vadd.f32 0.0, %v5214
        %5216 = vmatmul.f32.gmra.mxu0 %v5133
        %v5217 = vpop.f32.mrf.mxu0
        %v5218 = vadd.f32 0.0, %v5217
        %5219 = vmatmul.f32.gmra.mxu0 %v5134
        %v5220 = vpop.f32.mrf.mxu0
        %v5221 = vadd.f32 0.0, %v5220
        %5222 = vmatmul.f32.gmra.mxu0 %v5135
        %v5223 = vpop.f32.mrf.mxu0
        %v5224 = vadd.f32 0.0, %v5223
        %5225 = vmatmul.f32.gmra.mxu0 %v5136
        %v5226 = vpop.f32.mrf.mxu0
        %v5227 = vadd.f32 0.0, %v5226
        %5228 = vmatmul.f32.gmra.mxu0 %v5137
        %v5229 = vpop.f32.mrf.mxu0
        %v5230 = vadd.f32 0.0, %v5229
        %5231 = vmatmul.f32.gmra.mxu0 %v5138
        %v5232 = vpop.f32.mrf.mxu0
        %v5233 = vadd.f32 0.0, %v5232
        %5234 = vmatmul.f32.gmra.mxu0 %v5139
        %v5235 = vpop.f32.mrf.mxu0
        %v5236 = vadd.f32 0.0, %v5235
        %5237 = vmatmul.f32.gmra.mxu0 %v5140
        %v5238 = vpop.f32.mrf.mxu0
        %v5239 = vadd.f32 0.0, %v5238
        %5240 = vmatmul.f32.gmra.mxu0 %v5141
        %v5241 = vpop.f32.mrf.mxu0
        %v5242 = vadd.f32 0.0, %v5241
        %5243 = vmatmul.f32.gmra.mxu0 %v5142
        %v5244 = vpop.f32.mrf.mxu0
        %v5245 = vadd.f32 0.0, %v5244
        %5246 = vmatmul.f32.gmra.mxu0 %v5143
        %v5247 = vpop.f32.mrf.mxu0
        %v5248 = vadd.f32 0.0, %v5247
        %5249 = vmatmul.f32.gmra.mxu0 %v5144
        %v5250 = vpop.f32.mrf.mxu0
        %v5251 = vadd.f32 0.0, %v5250
        %5252 = vmatmul.f32.gmra.mxu0 %v5145
        %v5253 = vpop.f32.mrf.mxu0
        %v5254 = vadd.f32 0.0, %v5253
        %5255 = vmatmul.f32.gmra.mxu0 %v5146
        %v5256 = vpop.f32.mrf.mxu0
        %v5257 = vadd.f32 0.0, %v5256
        %5258 = vmatmul.f32.gmra.mxu0 %v5147
        %v5259 = vpop.f32.mrf.mxu0
        %v5260 = vadd.f32 0.0, %v5259
        %5261 = vmatmul.f32.gmra.mxu0 %v5148
        %v5262 = vpop.f32.mrf.mxu0
        %v5263 = vadd.f32 0.0, %v5262
        %5264 = vmatmul.f32.gmra.mxu0 %v5149
        %v5265 = vpop.f32.mrf.mxu0
        %v5266 = vadd.f32 0.0, %v5265
        %5267 = vmatmul.f32.gmra.mxu0 %v5150
        %v5268 = vpop.f32.mrf.mxu0
        %v5269 = vadd.f32 0.0, %v5268
        %5270 = vmatmul.f32.gmra.mxu0 %v5151
        %v5271 = vpop.f32.mrf.mxu0
        %v5272 = vadd.f32 0.0, %v5271
        %5273 = vmatmul.f32.gmra.mxu0 %v5152
        %v5274 = vpop.f32.mrf.mxu0
        %v5275 = vadd.f32 0.0, %v5274
        %5276 = vmatmul.f32.gmra.mxu0 %v5153
        %v5277 = vpop.f32.mrf.mxu0
        %v5278 = vadd.f32 0.0, %v5277
        %5279 = vmatmul.f32.gmra.mxu0 %v5154
        %v5280 = vpop.f32.mrf.mxu0
        %v5281 = vadd.f32 0.0, %v5280
        %5282 = vmatmul.f32.gmra.mxu0 %v5155
        %v5283 = vpop.f32.mrf.mxu0
        %v5284 = vadd.f32 0.0, %v5283
        %5285 = vmatmul.f32.gmra.mxu0 %v5156
        %v5286 = vpop.f32.mrf.mxu0
        %v5287 = vadd.f32 0.0, %v5286
        %5288 = vmatmul.f32.gmra.mxu0 %v5157
        %v5289 = vpop.f32.mrf.mxu0
        %v5290 = vadd.f32 0.0, %v5289
        %5291 = vmatmul.f32.gmra.mxu0 %v5158
        %v5292 = vpop.f32.mrf.mxu0
        %v5293 = vadd.f32 0.0, %v5292
        %5294 = vdwg.mxu0
        %v5295 = vadd.f32 %v5091, %v5194
        %v5296 = vadd.f32 %v5092, %v5197
        %v5297 = vadd.f32 %v5093, %v5200
        %v5298 = vadd.f32 %v5094, %v5203
        %v5299 = vadd.f32 %v5095, %v5206
        %v5300 = vadd.f32 %v5096, %v5209
        %v5301 = vadd.f32 %v5097, %v5212
        %v5302 = vadd.f32 %v5098, %v5215
        %v5303 = vadd.f32 %v5099, %v5218
        %v5304 = vadd.f32 %v5100, %v5221
        %v5305 = vadd.f32 %v5101, %v5224
        %v5306 = vadd.f32 %v5102, %v5227
        %v5307 = vadd.f32 %v5103, %v5230
        %v5308 = vadd.f32 %v5104, %v5233
        %v5309 = vadd.f32 %v5105, %v5236
        %v5310 = vadd.f32 %v5106, %v5239
        %v5311 = vadd.f32 %v5107, %v5242
        %v5312 = vadd.f32 %v5108, %v5245
        %v5313 = vadd.f32 %v5109, %v5248
        %v5314 = vadd.f32 %v5110, %v5251
        %v5315 = vadd.f32 %v5111, %v5254
        %v5316 = vadd.f32 %v5112, %v5257
        %v5317 = vadd.f32 %v5113, %v5260
        %v5318 = vadd.f32 %v5114, %v5263
        %v5319 = vadd.f32 %v5115, %v5266
        %v5320 = vadd.f32 %v5116, %v5269
        %v5321 = vadd.f32 %v5117, %v5272
        %v5322 = vadd.f32 %v5118, %v5275
        %v5323 = vadd.f32 %v5119, %v5278
        %v5324 = vadd.f32 %v5120, %v5281
        %v5325 = vadd.f32 %v5121, %v5284
        %v5326 = vadd.f32 %v5122, %v5287
        %v5327 = vadd.f32 %v5123, %v5290
        %v5328 = vadd.f32 %v5124, %v5293
        %v5329 = vld [vmem:[#allocation3 + $0x4e] sm:$0xff]
        %v5330 = vld [vmem:[#allocation3 + $0x56] sm:$0xff]
        %v5331 = vld [vmem:[#allocation3 + $0x5e] sm:$0xff]
        %v5332 = vld [vmem:[#allocation3 + $0x66] sm:$0xff]
        %v5333 = vld [vmem:[#allocation3 + $0x6e] sm:$0xff]
        %v5334 = vld [vmem:[#allocation3 + $0x76] sm:$0xff]
        %v5335 = vld [vmem:[#allocation3 + $0x7e] sm:$0xff]
        %v5336 = vld [vmem:[#allocation3 + $0x86] sm:$0xff]
        %v5337 = vld [vmem:[#allocation3 + $0x8e] sm:$0xff]
        %v5338 = vld [vmem:[#allocation3 + $0x96] sm:$0xff]
        %v5339 = vld [vmem:[#allocation3 + $0x9e] sm:$0xff]
        %v5340 = vld [vmem:[#allocation3 + $0xa6] sm:$0xff]
        %v5341 = vld [vmem:[#allocation3 + $0xae] sm:$0xff]
        %v5342 = vld [vmem:[#allocation3 + $0xb6] sm:$0xff]
        %v5343 = vld [vmem:[#allocation3 + $0xbe] sm:$0xff]
        %v5344 = vld [vmem:[#allocation3 + $0xc6] sm:$0xff]
        %v5345 = vld [vmem:[#allocation3 + $0xce] sm:$0xff]
        %v5346 = vld [vmem:[#allocation3 + $0xd6] sm:$0xff]
        %v5347 = vld [vmem:[#allocation3 + $0xde] sm:$0xff]
        %v5348 = vld [vmem:[#allocation3 + $0xe6] sm:$0xff]
        %v5349 = vld [vmem:[#allocation3 + $0xee] sm:$0xff]
        %v5350 = vld [vmem:[#allocation3 + $0xf6] sm:$0xff]
        %v5351 = vld [vmem:[#allocation3 + $0xfe] sm:$0xff]
        %v5352 = vld [vmem:[#allocation3 + $0x106] sm:$0xff]
        %v5353 = vld [vmem:[#allocation3 + $0x10e] sm:$0xff]
        %v5354 = vld [vmem:[#allocation3 + $0x116] sm:$0xff]
        %v5355 = vld [vmem:[#allocation3 + $0x11e] sm:$0xff]
        %v5356 = vld [vmem:[#allocation3 + $0x126] sm:$0xff]
        %v5357 = vld [vmem:[#allocation3 + $0x12e] sm:$0xff]
        %v5358 = vld [vmem:[#allocation3 + $0x136] sm:$0xff]
        %v5359 = vld [vmem:[#allocation3 + $0x13e] sm:$0xff]
        %v5360 = vld [vmem:[#allocation3 + $0x146] sm:$0xff]
        %v5361 = vld [vmem:[#allocation3 + $0x14e] sm:$0xff]
        %v5362 = vld [vmem:[#allocation3 + $0x156] sm:$0xff]
        %s5363 = scalar_lea.vmem [#allocation5], 1024
        %v5364 = vld [vmem:[%s5363] sm:$0xff]
        %v5365 = vld [vmem:[%s5363 + $0x8] sm:$0xff]
        %v5366 = vld [vmem:[%s5363 + $0x10] sm:$0xff]
        %v5367 = vld [vmem:[%s5363 + $0x18] sm:$0xff]
        %v5368 = vld [vmem:[%s5363 + $0x20] sm:$0xff]
        %v5369 = vld [vmem:[%s5363 + $0x28] sm:$0xff]
        %v5370 = vld [vmem:[%s5363 + $0x30] sm:$0xff]
        %v5371 = vld [vmem:[%s5363 + $0x38] sm:$0xff]
        %v5372 = vld [vmem:[%s5363 + $0x40] sm:$0xff]
        %v5373 = vld [vmem:[%s5363 + $0x48] sm:$0xff]
        %v5374 = vld [vmem:[%s5363 + $0x50] sm:$0xff]
        %v5375 = vld [vmem:[%s5363 + $0x58] sm:$0xff]
        %v5376 = vld [vmem:[%s5363 + $0x60] sm:$0xff]
        %v5377 = vld [vmem:[%s5363 + $0x68] sm:$0xff]
        %v5378 = vld [vmem:[%s5363 + $0x70] sm:$0xff]
        %v5379 = vld [vmem:[%s5363 + $0x78] sm:$0xff]
        %5380 = vmatpush.msra.mxu0 %v5379
        %5381 = vmatpush.msra.mxu0 %v5378
        %5382 = vmatpush.msra.mxu0 %v5377
        %5383 = vmatpush.msra.mxu0 %v5376
        %5384 = vmatpush.msra.mxu0 %v5375
        %5385 = vmatpush.msra.mxu0 %v5374
        %5386 = vmatpush.msra.mxu0 %v5373
        %5387 = vmatpush.msra.mxu0 %v5372
        %5388 = vmatpush.msra.mxu0 %v5371
        %5389 = vmatpush.msra.mxu0 %v5370
        %5390 = vmatpush.msra.mxu0 %v5369
        %5391 = vmatpush.msra.mxu0 %v5368
        %5392 = vmatpush.msra.mxu0 %v5367
        %5393 = vmatpush.msra.mxu0 %v5366
        %5394 = vmatpush.msra.mxu0 %v5365
        %5395 = vmatpush.msra.mxu0 %v5364
        %5396 = vmatmul.f32.gmra.mxu0 %v5329
        %v5397 = vpop.f32.mrf.mxu0
        %v5398 = vadd.f32 0.0, %v5397
        %5399 = vmatmul.f32.gmra.mxu0 %v5330
        %v5400 = vpop.f32.mrf.mxu0
        %v5401 = vadd.f32 0.0, %v5400
        %5402 = vmatmul.f32.gmra.mxu0 %v5331
        %v5403 = vpop.f32.mrf.mxu0
        %v5404 = vadd.f32 0.0, %v5403
        %5405 = vmatmul.f32.gmra.mxu0 %v5332
        %v5406 = vpop.f32.mrf.mxu0
        %v5407 = vadd.f32 0.0, %v5406
        %5408 = vmatmul.f32.gmra.mxu0 %v5333
        %v5409 = vpop.f32.mrf.mxu0
        %v5410 = vadd.f32 0.0, %v5409
        %5411 = vmatmul.f32.gmra.mxu0 %v5334
        %v5412 = vpop.f32.mrf.mxu0
        %v5413 = vadd.f32 0.0, %v5412
        %5414 = vmatmul.f32.gmra.mxu0 %v5335
        %v5415 = vpop.f32.mrf.mxu0
        %v5416 = vadd.f32 0.0, %v5415
        %5417 = vmatmul.f32.gmra.mxu0 %v5336
        %v5418 = vpop.f32.mrf.mxu0
        %v5419 = vadd.f32 0.0, %v5418
        %5420 = vmatmul.f32.gmra.mxu0 %v5337
        %v5421 = vpop.f32.mrf.mxu0
        %v5422 = vadd.f32 0.0, %v5421
        %5423 = vmatmul.f32.gmra.mxu0 %v5338
        %v5424 = vpop.f32.mrf.mxu0
        %v5425 = vadd.f32 0.0, %v5424
        %5426 = vmatmul.f32.gmra.mxu0 %v5339
        %v5427 = vpop.f32.mrf.mxu0
        %v5428 = vadd.f32 0.0, %v5427
        %5429 = vmatmul.f32.gmra.mxu0 %v5340
        %v5430 = vpop.f32.mrf.mxu0
        %v5431 = vadd.f32 0.0, %v5430
        %5432 = vmatmul.f32.gmra.mxu0 %v5341
        %v5433 = vpop.f32.mrf.mxu0
        %v5434 = vadd.f32 0.0, %v5433
        %5435 = vmatmul.f32.gmra.mxu0 %v5342
        %v5436 = vpop.f32.mrf.mxu0
        %v5437 = vadd.f32 0.0, %v5436
        %5438 = vmatmul.f32.gmra.mxu0 %v5343
        %v5439 = vpop.f32.mrf.mxu0
        %v5440 = vadd.f32 0.0, %v5439
        %5441 = vmatmul.f32.gmra.mxu0 %v5344
        %v5442 = vpop.f32.mrf.mxu0
        %v5443 = vadd.f32 0.0, %v5442
        %5444 = vmatmul.f32.gmra.mxu0 %v5345
        %v5445 = vpop.f32.mrf.mxu0
        %v5446 = vadd.f32 0.0, %v5445
        %5447 = vmatmul.f32.gmra.mxu0 %v5346
        %v5448 = vpop.f32.mrf.mxu0
        %v5449 = vadd.f32 0.0, %v5448
        %5450 = vmatmul.f32.gmra.mxu0 %v5347
        %v5451 = vpop.f32.mrf.mxu0
        %v5452 = vadd.f32 0.0, %v5451
        %5453 = vmatmul.f32.gmra.mxu0 %v5348
        %v5454 = vpop.f32.mrf.mxu0
        %v5455 = vadd.f32 0.0, %v5454
        %5456 = vmatmul.f32.gmra.mxu0 %v5349
        %v5457 = vpop.f32.mrf.mxu0
        %v5458 = vadd.f32 0.0, %v5457
        %5459 = vmatmul.f32.gmra.mxu0 %v5350
        %v5460 = vpop.f32.mrf.mxu0
        %v5461 = vadd.f32 0.0, %v5460
        %5462 = vmatmul.f32.gmra.mxu0 %v5351
        %v5463 = vpop.f32.mrf.mxu0
        %v5464 = vadd.f32 0.0, %v5463
        %5465 = vmatmul.f32.gmra.mxu0 %v5352
        %v5466 = vpop.f32.mrf.mxu0
        %v5467 = vadd.f32 0.0, %v5466
        %5468 = vmatmul.f32.gmra.mxu0 %v5353
        %v5469 = vpop.f32.mrf.mxu0
        %v5470 = vadd.f32 0.0, %v5469
        %5471 = vmatmul.f32.gmra.mxu0 %v5354
        %v5472 = vpop.f32.mrf.mxu0
        %v5473 = vadd.f32 0.0, %v5472
        %5474 = vmatmul.f32.gmra.mxu0 %v5355
        %v5475 = vpop.f32.mrf.mxu0
        %v5476 = vadd.f32 0.0, %v5475
        %5477 = vmatmul.f32.gmra.mxu0 %v5356
        %v5478 = vpop.f32.mrf.mxu0
        %v5479 = vadd.f32 0.0, %v5478
        %5480 = vmatmul.f32.gmra.mxu0 %v5357
        %v5481 = vpop.f32.mrf.mxu0
        %v5482 = vadd.f32 0.0, %v5481
        %5483 = vmatmul.f32.gmra.mxu0 %v5358
        %v5484 = vpop.f32.mrf.mxu0
        %v5485 = vadd.f32 0.0, %v5484
        %5486 = vmatmul.f32.gmra.mxu0 %v5359
        %v5487 = vpop.f32.mrf.mxu0
        %v5488 = vadd.f32 0.0, %v5487
        %5489 = vmatmul.f32.gmra.mxu0 %v5360
        %v5490 = vpop.f32.mrf.mxu0
        %v5491 = vadd.f32 0.0, %v5490
        %5492 = vmatmul.f32.gmra.mxu0 %v5361
        %v5493 = vpop.f32.mrf.mxu0
        %v5494 = vadd.f32 0.0, %v5493
        %5495 = vmatmul.f32.gmra.mxu0 %v5362
        %v5496 = vpop.f32.mrf.mxu0
        %v5497 = vadd.f32 0.0, %v5496
        %5498 = vdwg.mxu0
        %v5499 = vadd.f32 %v5295, %v5398
        %v5500 = vadd.f32 %v5296, %v5401
        %v5501 = vadd.f32 %v5297, %v5404
        %v5502 = vadd.f32 %v5298, %v5407
        %v5503 = vadd.f32 %v5299, %v5410
        %v5504 = vadd.f32 %v5300, %v5413
        %v5505 = vadd.f32 %v5301, %v5416
        %v5506 = vadd.f32 %v5302, %v5419
        %v5507 = vadd.f32 %v5303, %v5422
        %v5508 = vadd.f32 %v5304, %v5425
        %v5509 = vadd.f32 %v5305, %v5428
        %v5510 = vadd.f32 %v5306, %v5431
        %v5511 = vadd.f32 %v5307, %v5434
        %v5512 = vadd.f32 %v5308, %v5437
        %v5513 = vadd.f32 %v5309, %v5440
        %v5514 = vadd.f32 %v5310, %v5443
        %v5515 = vadd.f32 %v5311, %v5446
        %v5516 = vadd.f32 %v5312, %v5449
        %v5517 = vadd.f32 %v5313, %v5452
        %v5518 = vadd.f32 %v5314, %v5455
        %v5519 = vadd.f32 %v5315, %v5458
        %v5520 = vadd.f32 %v5316, %v5461
        %v5521 = vadd.f32 %v5317, %v5464
        %v5522 = vadd.f32 %v5318, %v5467
        %v5523 = vadd.f32 %v5319, %v5470
        %v5524 = vadd.f32 %v5320, %v5473
        %v5525 = vadd.f32 %v5321, %v5476
        %v5526 = vadd.f32 %v5322, %v5479
        %v5527 = vadd.f32 %v5323, %v5482
        %v5528 = vadd.f32 %v5324, %v5485
        %v5529 = vadd.f32 %v5325, %v5488
        %v5530 = vadd.f32 %v5326, %v5491
        %v5531 = vadd.f32 %v5327, %v5494
        %v5532 = vadd.f32 %v5328, %v5497
        %v5533 = vld [vmem:[%s5] sm:$0x1]
        %v5535 = vperm.slane %v5533, 0
        %v5537 = vadd.f32 %v5499, %v5535
        %v5538 = vadd.f32 %v5500, %v5535
        %v5539 = vadd.f32 %v5501, %v5535
        %v5540 = vadd.f32 %v5502, %v5535
        %v5541 = vadd.f32 %v5503, %v5535
        %v5542 = vadd.f32 %v5504, %v5535
        %v5543 = vadd.f32 %v5505, %v5535
        %v5544 = vadd.f32 %v5506, %v5535
        %v5545 = vadd.f32 %v5507, %v5535
        %v5546 = vadd.f32 %v5508, %v5535
        %v5547 = vadd.f32 %v5509, %v5535
        %v5548 = vadd.f32 %v5510, %v5535
        %v5549 = vadd.f32 %v5511, %v5535
        %v5550 = vadd.f32 %v5512, %v5535
        %v5551 = vadd.f32 %v5513, %v5535
        %v5552 = vadd.f32 %v5514, %v5535
        %v5553 = vadd.f32 %v5515, %v5535
        %v5554 = vadd.f32 %v5516, %v5535
        %v5555 = vadd.f32 %v5517, %v5535
        %v5556 = vadd.f32 %v5518, %v5535
        %v5557 = vadd.f32 %v5519, %v5535
        %v5558 = vadd.f32 %v5520, %v5535
        %v5559 = vadd.f32 %v5521, %v5535
        %v5560 = vadd.f32 %v5522, %v5535
        %v5561 = vadd.f32 %v5523, %v5535
        %v5562 = vadd.f32 %v5524, %v5535
        %v5563 = vadd.f32 %v5525, %v5535
        %v5564 = vadd.f32 %v5526, %v5535
        %v5565 = vadd.f32 %v5527, %v5535
        %v5566 = vadd.f32 %v5528, %v5535
        %v5567 = vadd.f32 %v5529, %v5535
        %v5568 = vadd.f32 %v5530, %v5535
        %v5569 = vadd.f32 %v5531, %v5535
        %v5570 = vadd.f32 %v5532, %v5535
        %v5571 = vmax.f32 %v5537, 0.0
        %v5572 = vmax.f32 %v5538, 0.0
        %v5573 = vmax.f32 %v5539, 0.0
        %v5574 = vmax.f32 %v5540, 0.0
        %v5575 = vmax.f32 %v5541, 0.0
        %v5576 = vmax.f32 %v5542, 0.0
        %v5577 = vmax.f32 %v5543, 0.0
        %v5578 = vmax.f32 %v5544, 0.0
        %v5579 = vmax.f32 %v5545, 0.0
        %v5580 = vmax.f32 %v5546, 0.0
        %v5581 = vmax.f32 %v5547, 0.0
        %v5582 = vmax.f32 %v5548, 0.0
        %v5583 = vmax.f32 %v5549, 0.0
        %v5584 = vmax.f32 %v5550, 0.0
        %v5585 = vmax.f32 %v5551, 0.0
        %v5586 = vmax.f32 %v5552, 0.0
        %v5587 = vmax.f32 %v5553, 0.0
        %v5588 = vmax.f32 %v5554, 0.0
        %v5589 = vmax.f32 %v5555, 0.0
        %v5590 = vmax.f32 %v5556, 0.0
        %v5591 = vmax.f32 %v5557, 0.0
        %v5592 = vmax.f32 %v5558, 0.0
        %v5593 = vmax.f32 %v5559, 0.0
        %v5594 = vmax.f32 %v5560, 0.0
        %v5595 = vmax.f32 %v5561, 0.0
        %v5596 = vmax.f32 %v5562, 0.0
        %v5597 = vmax.f32 %v5563, 0.0
        %v5598 = vmax.f32 %v5564, 0.0
        %v5599 = vmax.f32 %v5565, 0.0
        %v5600 = vmax.f32 %v5566, 0.0
        %v5601 = vmax.f32 %v5567, 0.0
        %v5602 = vmax.f32 %v5568, 0.0
        %v5603 = vmax.f32 %v5569, 0.0
        %v5604 = vmax.f32 %v5570, 0.0
        %5605 = vst [vmem:[#allocation4] sm:$0xff] %v5571
        %5606 = vst [vmem:[#allocation4 + $0x8] sm:$0xff] %v5572
        %5607 = vst [vmem:[#allocation4 + $0x10] sm:$0xff] %v5573
        %5608 = vst [vmem:[#allocation4 + $0x18] sm:$0xff] %v5574
        %5609 = vst [vmem:[#allocation4 + $0x20] sm:$0xff] %v5575
        %5610 = vst [vmem:[#allocation4 + $0x28] sm:$0xff] %v5576
        %5611 = vst [vmem:[#allocation4 + $0x30] sm:$0xff] %v5577
        %5612 = vst [vmem:[#allocation4 + $0x38] sm:$0xff] %v5578
        %5613 = vst [vmem:[#allocation4 + $0x40] sm:$0xff] %v5579
        %5614 = vst [vmem:[#allocation4 + $0x48] sm:$0xff] %v5580
        %5615 = vst [vmem:[#allocation4 + $0x50] sm:$0xff] %v5581
        %5616 = vst [vmem:[#allocation4 + $0x58] sm:$0xff] %v5582
        %5617 = vst [vmem:[#allocation4 + $0x60] sm:$0xff] %v5583
        %5618 = vst [vmem:[#allocation4 + $0x68] sm:$0xff] %v5584
        %5619 = vst [vmem:[#allocation4 + $0x70] sm:$0xff] %v5585
        %5620 = vst [vmem:[#allocation4 + $0x78] sm:$0xff] %v5586
        %5621 = vst [vmem:[#allocation4 + $0x80] sm:$0xff] %v5587
        %5622 = vst [vmem:[#allocation4 + $0x88] sm:$0xff] %v5588
        %5623 = vst [vmem:[#allocation4 + $0x90] sm:$0xff] %v5589
        %5624 = vst [vmem:[#allocation4 + $0x98] sm:$0xff] %v5590
        %5625 = vst [vmem:[#allocation4 + $0xa0] sm:$0xff] %v5591
        %5626 = vst [vmem:[#allocation4 + $0xa8] sm:$0xff] %v5592
        %5627 = vst [vmem:[#allocation4 + $0xb0] sm:$0xff] %v5593
        %5628 = vst [vmem:[#allocation4 + $0xb8] sm:$0xff] %v5594
        %5629 = vst [vmem:[#allocation4 + $0xc0] sm:$0xff] %v5595
        %5630 = vst [vmem:[#allocation4 + $0xc8] sm:$0xff] %v5596
        %5631 = vst [vmem:[#allocation4 + $0xd0] sm:$0xff] %v5597
        %5632 = vst [vmem:[#allocation4 + $0xd8] sm:$0xff] %v5598
        %5633 = vst [vmem:[#allocation4 + $0xe0] sm:$0xff] %v5599
        %5634 = vst [vmem:[#allocation4 + $0xe8] sm:$0xff] %v5600
        %5635 = vst [vmem:[#allocation4 + $0xf0] sm:$0xff] %v5601
        %5636 = vst [vmem:[#allocation4 + $0xf8] sm:$0xff] %v5602
        %5637 = vst [vmem:[#allocation4 + $0x100] sm:$0xff] %v5603
        %5638 = vst [vmem:[#allocation4 + $0x108] sm:$0xff] %v5604
        %v5639 = vld [vmem:[#allocation4] sm:$0x1]
        %v5640 = vld [vmem:[#allocation4 + $0x2] sm:$0x1]
        %v5641 = vmax.f32 %v5639, %v5640
        %v5642 = vld [vmem:[#allocation4 + $0x24] sm:$0x1]
        %v5643 = vld [vmem:[#allocation4 + $0x26] sm:$0x1]
        %v5644 = vmax.f32 %v5642, %v5643
        %v5645 = vmax.f32 %v5641, %v5644
        %v5646 = vld [vmem:[%s6] sm:$0xff]
        %v5647 = vld [vmem:[%s6 + $0x8] sm:$0xff]
        %v5648 = vld [vmem:[%s6 + $0x10] sm:$0xff]
        %v5649 = vld [vmem:[%s6 + $0x18] sm:$0xff]
        %v5650 = vld [vmem:[%s6 + $0x20] sm:$0xff]
        %v5651 = vld [vmem:[%s6 + $0x28] sm:$0xff]
        %v5652 = vld [vmem:[%s6 + $0x30] sm:$0xff]
        %v5653 = vld [vmem:[%s6 + $0x38] sm:$0xff]
        %v5654 = vld [vmem:[%s6 + $0x40] sm:$0xff]
        %v5655 = vld [vmem:[%s6 + $0x48] sm:$0xff]
        %v5656 = vld [vmem:[%s6 + $0x50] sm:$0xff]
        %v5657 = vld [vmem:[%s6 + $0x58] sm:$0xff]
        %v5658 = vld [vmem:[%s6 + $0x60] sm:$0xff]
        %v5659 = vld [vmem:[%s6 + $0x68] sm:$0xff]
        %v5660 = vld [vmem:[%s6 + $0x70] sm:$0xff]
        %v5661 = vld [vmem:[%s6 + $0x78] sm:$0xff]
        %v5662 = vld [vmem:[#allocation4 + $0x4] sm:$0x1]
        %v5663 = vld [vmem:[#allocation4 + $0x6] sm:$0x1]
        %v5664 = vmax.f32 %v5662, %v5663
        %v5665 = vld [vmem:[#allocation4 + $0x28] sm:$0x1]
        %v5666 = vld [vmem:[#allocation4 + $0x2a] sm:$0x1]
        %v5667 = vmax.f32 %v5665, %v5666
        %v5668 = vmax.f32 %v5664, %v5667
        %s5669 = scalar_lea.vmem %s6, 128
        %v5670 = vld [vmem:[%s5669] sm:$0xff]
        %v5671 = vld [vmem:[%s5669 + $0x8] sm:$0xff]
        %v5672 = vld [vmem:[%s5669 + $0x10] sm:$0xff]
        %v5673 = vld [vmem:[%s5669 + $0x18] sm:$0xff]
        %v5674 = vld [vmem:[%s5669 + $0x20] sm:$0xff]
        %v5675 = vld [vmem:[%s5669 + $0x28] sm:$0xff]
        %v5676 = vld [vmem:[%s5669 + $0x30] sm:$0xff]
        %v5677 = vld [vmem:[%s5669 + $0x38] sm:$0xff]
        %v5678 = vld [vmem:[%s5669 + $0x40] sm:$0xff]
        %v5679 = vld [vmem:[%s5669 + $0x48] sm:$0xff]
        %v5680 = vld [vmem:[%s5669 + $0x50] sm:$0xff]
        %v5681 = vld [vmem:[%s5669 + $0x58] sm:$0xff]
        %v5682 = vld [vmem:[%s5669 + $0x60] sm:$0xff]
        %v5683 = vld [vmem:[%s5669 + $0x68] sm:$0xff]
        %v5684 = vld [vmem:[%s5669 + $0x70] sm:$0xff]
        %v5685 = vld [vmem:[%s5669 + $0x78] sm:$0xff]
        %5686 = vmatpush.msra.mxu0 %v5685
        %5687 = vmatpush.msra.mxu0 %v5684
        %5688 = vmatpush.msra.mxu0 %v5683
        %5689 = vmatpush.msra.mxu0 %v5682
        %5690 = vmatpush.msra.mxu0 %v5681
        %5691 = vmatpush.msra.mxu0 %v5680
        %5692 = vmatpush.msra.mxu0 %v5679
        %5693 = vmatpush.msra.mxu0 %v5678
        %5694 = vmatpush.msra.mxu0 %v5677
        %5695 = vmatpush.msra.mxu0 %v5676
        %5696 = vmatpush.msra.mxu0 %v5675
        %5697 = vmatpush.msra.mxu0 %v5674
        %5698 = vmatpush.msra.mxu0 %v5673
        %5699 = vmatpush.msra.mxu0 %v5672
        %5700 = vmatpush.msra.mxu0 %v5671
        %5701 = vmatpush.msra.mxu0 %v5670
        %5702 = vmatmul.f32.gmra.mxu0 %v5668
        %v5703 = vpop.f32.mrf.mxu0
        %v5704 = vadd.f32 0.0, %v5703
        %5705 = vdwg.mxu0
        %5706 = vmatpush.msra.mxu0 %v5661
        %5707 = vmatpush.msra.mxu0 %v5660
        %5708 = vmatpush.msra.mxu0 %v5659
        %5709 = vmatpush.msra.mxu0 %v5658
        %5710 = vmatpush.msra.mxu0 %v5657
        %5711 = vmatpush.msra.mxu0 %v5656
        %5712 = vmatpush.msra.mxu0 %v5655
        %5713 = vmatpush.msra.mxu0 %v5654
        %5714 = vmatpush.msra.mxu0 %v5653
        %5715 = vmatpush.msra.mxu0 %v5652
        %5716 = vmatpush.msra.mxu0 %v5651
        %5717 = vmatpush.msra.mxu0 %v5650
        %5718 = vmatpush.msra.mxu0 %v5649
        %5719 = vmatpush.msra.mxu0 %v5648
        %5720 = vmatpush.msra.mxu0 %v5647
        %5721 = vmatpush.msra.mxu0 %v5646
        %5722 = vmatmul.f32.gmra.mxu0 %v5645
        %v5723 = vpop.f32.mrf.mxu0
        %v5724 = vadd.f32 %v5704, %v5723
        %5725 = vdwg.mxu0
        %v5726 = vld [vmem:[#allocation4 + $0x8] sm:$0x1]
        %v5727 = vld [vmem:[#allocation4 + $0xa] sm:$0x1]
        %v5728 = vmax.f32 %v5726, %v5727
        %v5729 = vld [vmem:[#allocation4 + $0x2c] sm:$0x1]
        %v5730 = vld [vmem:[#allocation4 + $0x2e] sm:$0x1]
        %v5731 = vmax.f32 %v5729, %v5730
        %v5732 = vmax.f32 %v5728, %v5731
        %s5733 = scalar_lea.vmem %s6, 256
        %v5734 = vld [vmem:[%s5733] sm:$0xff]
        %v5735 = vld [vmem:[%s5733 + $0x8] sm:$0xff]
        %v5736 = vld [vmem:[%s5733 + $0x10] sm:$0xff]
        %v5737 = vld [vmem:[%s5733 + $0x18] sm:$0xff]
        %v5738 = vld [vmem:[%s5733 + $0x20] sm:$0xff]
        %v5739 = vld [vmem:[%s5733 + $0x28] sm:$0xff]
        %v5740 = vld [vmem:[%s5733 + $0x30] sm:$0xff]
        %v5741 = vld [vmem:[%s5733 + $0x38] sm:$0xff]
        %v5742 = vld [vmem:[%s5733 + $0x40] sm:$0xff]
        %v5743 = vld [vmem:[%s5733 + $0x48] sm:$0xff]
        %v5744 = vld [vmem:[%s5733 + $0x50] sm:$0xff]
        %v5745 = vld [vmem:[%s5733 + $0x58] sm:$0xff]
        %v5746 = vld [vmem:[%s5733 + $0x60] sm:$0xff]
        %v5747 = vld [vmem:[%s5733 + $0x68] sm:$0xff]
        %v5748 = vld [vmem:[%s5733 + $0x70] sm:$0xff]
        %v5749 = vld [vmem:[%s5733 + $0x78] sm:$0xff]
        %5750 = vmatpush.msra.mxu0 %v5749
        %5751 = vmatpush.msra.mxu0 %v5748
        %5752 = vmatpush.msra.mxu0 %v5747
        %5753 = vmatpush.msra.mxu0 %v5746
        %5754 = vmatpush.msra.mxu0 %v5745
        %5755 = vmatpush.msra.mxu0 %v5744
        %5756 = vmatpush.msra.mxu0 %v5743
        %5757 = vmatpush.msra.mxu0 %v5742
        %5758 = vmatpush.msra.mxu0 %v5741
        %5759 = vmatpush.msra.mxu0 %v5740
        %5760 = vmatpush.msra.mxu0 %v5739
        %5761 = vmatpush.msra.mxu0 %v5738
        %5762 = vmatpush.msra.mxu0 %v5737
        %5763 = vmatpush.msra.mxu0 %v5736
        %5764 = vmatpush.msra.mxu0 %v5735
        %5765 = vmatpush.msra.mxu0 %v5734
        %5766 = vmatmul.f32.gmra.mxu0 %v5732
        %v5767 = vpop.f32.mrf.mxu0
        %v5768 = vadd.f32 0.0, %v5767
        %5769 = vdwg.mxu0
        %v5770 = vadd.f32 %v5724, %v5768
        %v5771 = vld [vmem:[#allocation4 + $0xc] sm:$0x1]
        %v5772 = vld [vmem:[#allocation4 + $0xe] sm:$0x1]
        %v5773 = vmax.f32 %v5771, %v5772
        %v5774 = vld [vmem:[#allocation4 + $0x30] sm:$0x1]
        %v5775 = vld [vmem:[#allocation4 + $0x32] sm:$0x1]
        %v5776 = vmax.f32 %v5774, %v5775
        %v5777 = vmax.f32 %v5773, %v5776
        %s5778 = scalar_lea.vmem %s6, 384
        %v5779 = vld [vmem:[%s5778] sm:$0xff]
        %v5780 = vld [vmem:[%s5778 + $0x8] sm:$0xff]
        %v5781 = vld [vmem:[%s5778 + $0x10] sm:$0xff]
        %v5782 = vld [vmem:[%s5778 + $0x18] sm:$0xff]
        %v5783 = vld [vmem:[%s5778 + $0x20] sm:$0xff]
        %v5784 = vld [vmem:[%s5778 + $0x28] sm:$0xff]
        %v5785 = vld [vmem:[%s5778 + $0x30] sm:$0xff]
        %v5786 = vld [vmem:[%s5778 + $0x38] sm:$0xff]
        %v5787 = vld [vmem:[%s5778 + $0x40] sm:$0xff]
        %v5788 = vld [vmem:[%s5778 + $0x48] sm:$0xff]
        %v5789 = vld [vmem:[%s5778 + $0x50] sm:$0xff]
        %v5790 = vld [vmem:[%s5778 + $0x58] sm:$0xff]
        %v5791 = vld [vmem:[%s5778 + $0x60] sm:$0xff]
        %v5792 = vld [vmem:[%s5778 + $0x68] sm:$0xff]
        %v5793 = vld [vmem:[%s5778 + $0x70] sm:$0xff]
        %v5794 = vld [vmem:[%s5778 + $0x78] sm:$0xff]
        %5795 = vmatpush.msra.mxu0 %v5794
        %5796 = vmatpush.msra.mxu0 %v5793
        %5797 = vmatpush.msra.mxu0 %v5792
        %5798 = vmatpush.msra.mxu0 %v5791
        %5799 = vmatpush.msra.mxu0 %v5790
        %5800 = vmatpush.msra.mxu0 %v5789
        %5801 = vmatpush.msra.mxu0 %v5788
        %5802 = vmatpush.msra.mxu0 %v5787
        %5803 = vmatpush.msra.mxu0 %v5786
        %5804 = vmatpush.msra.mxu0 %v5785
        %5805 = vmatpush.msra.mxu0 %v5784
        %5806 = vmatpush.msra.mxu0 %v5783
        %5807 = vmatpush.msra.mxu0 %v5782
        %5808 = vmatpush.msra.mxu0 %v5781
        %5809 = vmatpush.msra.mxu0 %v5780
        %5810 = vmatpush.msra.mxu0 %v5779
        %5811 = vmatmul.f32.gmra.mxu0 %v5777
        %v5812 = vpop.f32.mrf.mxu0
        %v5813 = vadd.f32 0.0, %v5812
        %5814 = vdwg.mxu0
        %v5815 = vadd.f32 %v5770, %v5813
        %v5816 = vld [vmem:[#allocation4 + $0x48] sm:$0x1]
        %v5817 = vld [vmem:[#allocation4 + $0x4a] sm:$0x1]
        %v5818 = vmax.f32 %v5816, %v5817
        %v5819 = vld [vmem:[#allocation4 + $0x6c] sm:$0x1]
        %v5820 = vld [vmem:[#allocation4 + $0x6e] sm:$0x1]
        %v5821 = vmax.f32 %v5819, %v5820
        %v5822 = vmax.f32 %v5818, %v5821
        %s5823 = scalar_lea.vmem %s6, 512
        %v5824 = vld [vmem:[%s5823] sm:$0xff]
        %v5825 = vld [vmem:[%s5823 + $0x8] sm:$0xff]
        %v5826 = vld [vmem:[%s5823 + $0x10] sm:$0xff]
        %v5827 = vld [vmem:[%s5823 + $0x18] sm:$0xff]
        %v5828 = vld [vmem:[%s5823 + $0x20] sm:$0xff]
        %v5829 = vld [vmem:[%s5823 + $0x28] sm:$0xff]
        %v5830 = vld [vmem:[%s5823 + $0x30] sm:$0xff]
        %v5831 = vld [vmem:[%s5823 + $0x38] sm:$0xff]
        %v5832 = vld [vmem:[%s5823 + $0x40] sm:$0xff]
        %v5833 = vld [vmem:[%s5823 + $0x48] sm:$0xff]
        %v5834 = vld [vmem:[%s5823 + $0x50] sm:$0xff]
        %v5835 = vld [vmem:[%s5823 + $0x58] sm:$0xff]
        %v5836 = vld [vmem:[%s5823 + $0x60] sm:$0xff]
        %v5837 = vld [vmem:[%s5823 + $0x68] sm:$0xff]
        %v5838 = vld [vmem:[%s5823 + $0x70] sm:$0xff]
        %v5839 = vld [vmem:[%s5823 + $0x78] sm:$0xff]
        %5840 = vmatpush.msra.mxu0 %v5839
        %5841 = vmatpush.msra.mxu0 %v5838
        %5842 = vmatpush.msra.mxu0 %v5837
        %5843 = vmatpush.msra.mxu0 %v5836
        %5844 = vmatpush.msra.mxu0 %v5835
        %5845 = vmatpush.msra.mxu0 %v5834
        %5846 = vmatpush.msra.mxu0 %v5833
        %5847 = vmatpush.msra.mxu0 %v5832
        %5848 = vmatpush.msra.mxu0 %v5831
        %5849 = vmatpush.msra.mxu0 %v5830
        %5850 = vmatpush.msra.mxu0 %v5829
        %5851 = vmatpush.msra.mxu0 %v5828
        %5852 = vmatpush.msra.mxu0 %v5827
        %5853 = vmatpush.msra.mxu0 %v5826
        %5854 = vmatpush.msra.mxu0 %v5825
        %5855 = vmatpush.msra.mxu0 %v5824
        %5856 = vmatmul.f32.gmra.mxu0 %v5822
        %v5857 = vpop.f32.mrf.mxu0
        %v5858 = vadd.f32 0.0, %v5857
        %5859 = vdwg.mxu0
        %v5860 = vadd.f32 %v5815, %v5858
        %v5861 = vld [vmem:[#allocation4 + $0x4c] sm:$0x1]
        %v5862 = vld [vmem:[#allocation4 + $0x4e] sm:$0x1]
        %v5863 = vmax.f32 %v5861, %v5862
        %v5864 = vld [vmem:[#allocation4 + $0x70] sm:$0x1]
        %v5865 = vld [vmem:[#allocation4 + $0x72] sm:$0x1]
        %v5866 = vmax.f32 %v5864, %v5865
        %v5867 = vmax.f32 %v5863, %v5866
        %s5868 = scalar_lea.vmem %s6, 640
        %v5869 = vld [vmem:[%s5868] sm:$0xff]
        %v5870 = vld [vmem:[%s5868 + $0x8] sm:$0xff]
        %v5871 = vld [vmem:[%s5868 + $0x10] sm:$0xff]
        %v5872 = vld [vmem:[%s5868 + $0x18] sm:$0xff]
        %v5873 = vld [vmem:[%s5868 + $0x20] sm:$0xff]
        %v5874 = vld [vmem:[%s5868 + $0x28] sm:$0xff]
        %v5875 = vld [vmem:[%s5868 + $0x30] sm:$0xff]
        %v5876 = vld [vmem:[%s5868 + $0x38] sm:$0xff]
        %v5877 = vld [vmem:[%s5868 + $0x40] sm:$0xff]
        %v5878 = vld [vmem:[%s5868 + $0x48] sm:$0xff]
        %v5879 = vld [vmem:[%s5868 + $0x50] sm:$0xff]
        %v5880 = vld [vmem:[%s5868 + $0x58] sm:$0xff]
        %v5881 = vld [vmem:[%s5868 + $0x60] sm:$0xff]
        %v5882 = vld [vmem:[%s5868 + $0x68] sm:$0xff]
        %v5883 = vld [vmem:[%s5868 + $0x70] sm:$0xff]
        %v5884 = vld [vmem:[%s5868 + $0x78] sm:$0xff]
        %5885 = vmatpush.msra.mxu0 %v5884
        %5886 = vmatpush.msra.mxu0 %v5883
        %5887 = vmatpush.msra.mxu0 %v5882
        %5888 = vmatpush.msra.mxu0 %v5881
        %5889 = vmatpush.msra.mxu0 %v5880
        %5890 = vmatpush.msra.mxu0 %v5879
        %5891 = vmatpush.msra.mxu0 %v5878
        %5892 = vmatpush.msra.mxu0 %v5877
        %5893 = vmatpush.msra.mxu0 %v5876
        %5894 = vmatpush.msra.mxu0 %v5875
        %5895 = vmatpush.msra.mxu0 %v5874
        %5896 = vmatpush.msra.mxu0 %v5873
        %5897 = vmatpush.msra.mxu0 %v5872
        %5898 = vmatpush.msra.mxu0 %v5871
        %5899 = vmatpush.msra.mxu0 %v5870
        %5900 = vmatpush.msra.mxu0 %v5869
        %5901 = vmatmul.f32.gmra.mxu0 %v5867
        %v5902 = vpop.f32.mrf.mxu0
        %v5903 = vadd.f32 0.0, %v5902
        %5904 = vdwg.mxu0
        %v5905 = vadd.f32 %v5860, %v5903
        %v5906 = vld [vmem:[#allocation4 + $0x50] sm:$0x1]
        %v5907 = vld [vmem:[#allocation4 + $0x52] sm:$0x1]
        %v5908 = vmax.f32 %v5906, %v5907
        %v5909 = vld [vmem:[#allocation4 + $0x74] sm:$0x1]
        %v5910 = vld [vmem:[#allocation4 + $0x76] sm:$0x1]
        %v5911 = vmax.f32 %v5909, %v5910
        %v5912 = vmax.f32 %v5908, %v5911
        %s5913 = scalar_lea.vmem %s6, 768
        %v5914 = vld [vmem:[%s5913] sm:$0xff]
        %v5915 = vld [vmem:[%s5913 + $0x8] sm:$0xff]
        %v5916 = vld [vmem:[%s5913 + $0x10] sm:$0xff]
        %v5917 = vld [vmem:[%s5913 + $0x18] sm:$0xff]
        %v5918 = vld [vmem:[%s5913 + $0x20] sm:$0xff]
        %v5919 = vld [vmem:[%s5913 + $0x28] sm:$0xff]
        %v5920 = vld [vmem:[%s5913 + $0x30] sm:$0xff]
        %v5921 = vld [vmem:[%s5913 + $0x38] sm:$0xff]
        %v5922 = vld [vmem:[%s5913 + $0x40] sm:$0xff]
        %v5923 = vld [vmem:[%s5913 + $0x48] sm:$0xff]
        %v5924 = vld [vmem:[%s5913 + $0x50] sm:$0xff]
        %v5925 = vld [vmem:[%s5913 + $0x58] sm:$0xff]
        %v5926 = vld [vmem:[%s5913 + $0x60] sm:$0xff]
        %v5927 = vld [vmem:[%s5913 + $0x68] sm:$0xff]
        %v5928 = vld [vmem:[%s5913 + $0x70] sm:$0xff]
        %v5929 = vld [vmem:[%s5913 + $0x78] sm:$0xff]
        %5930 = vmatpush.msra.mxu0 %v5929
        %5931 = vmatpush.msra.mxu0 %v5928
        %5932 = vmatpush.msra.mxu0 %v5927
        %5933 = vmatpush.msra.mxu0 %v5926
        %5934 = vmatpush.msra.mxu0 %v5925
        %5935 = vmatpush.msra.mxu0 %v5924
        %5936 = vmatpush.msra.mxu0 %v5923
        %5937 = vmatpush.msra.mxu0 %v5922
        %5938 = vmatpush.msra.mxu0 %v5921
        %5939 = vmatpush.msra.mxu0 %v5920
        %5940 = vmatpush.msra.mxu0 %v5919
        %5941 = vmatpush.msra.mxu0 %v5918
        %5942 = vmatpush.msra.mxu0 %v5917
        %5943 = vmatpush.msra.mxu0 %v5916
        %5944 = vmatpush.msra.mxu0 %v5915
        %5945 = vmatpush.msra.mxu0 %v5914
        %5946 = vmatmul.f32.gmra.mxu0 %v5912
        %v5947 = vpop.f32.mrf.mxu0
        %v5948 = vadd.f32 0.0, %v5947
        %5949 = vdwg.mxu0
        %v5950 = vadd.f32 %v5905, %v5948
        %v5951 = vld [vmem:[#allocation4 + $0x54] sm:$0x1]
        %v5952 = vld [vmem:[#allocation4 + $0x56] sm:$0x1]
        %v5953 = vmax.f32 %v5951, %v5952
        %v5954 = vld [vmem:[#allocation4 + $0x78] sm:$0x1]
        %v5955 = vld [vmem:[#allocation4 + $0x7a] sm:$0x1]
        %v5956 = vmax.f32 %v5954, %v5955
        %v5957 = vmax.f32 %v5953, %v5956
        %s5958 = scalar_lea.vmem %s6, 896
        %v5959 = vld [vmem:[%s5958] sm:$0xff]
        %v5960 = vld [vmem:[%s5958 + $0x8] sm:$0xff]
        %v5961 = vld [vmem:[%s5958 + $0x10] sm:$0xff]
        %v5962 = vld [vmem:[%s5958 + $0x18] sm:$0xff]
        %v5963 = vld [vmem:[%s5958 + $0x20] sm:$0xff]
        %v5964 = vld [vmem:[%s5958 + $0x28] sm:$0xff]
        %v5965 = vld [vmem:[%s5958 + $0x30] sm:$0xff]
        %v5966 = vld [vmem:[%s5958 + $0x38] sm:$0xff]
        %v5967 = vld [vmem:[%s5958 + $0x40] sm:$0xff]
        %v5968 = vld [vmem:[%s5958 + $0x48] sm:$0xff]
        %v5969 = vld [vmem:[%s5958 + $0x50] sm:$0xff]
        %v5970 = vld [vmem:[%s5958 + $0x58] sm:$0xff]
        %v5971 = vld [vmem:[%s5958 + $0x60] sm:$0xff]
        %v5972 = vld [vmem:[%s5958 + $0x68] sm:$0xff]
        %v5973 = vld [vmem:[%s5958 + $0x70] sm:$0xff]
        %v5974 = vld [vmem:[%s5958 + $0x78] sm:$0xff]
        %5975 = vmatpush.msra.mxu0 %v5974
        %5976 = vmatpush.msra.mxu0 %v5973
        %5977 = vmatpush.msra.mxu0 %v5972
        %5978 = vmatpush.msra.mxu0 %v5971
        %5979 = vmatpush.msra.mxu0 %v5970
        %5980 = vmatpush.msra.mxu0 %v5969
        %5981 = vmatpush.msra.mxu0 %v5968
        %5982 = vmatpush.msra.mxu0 %v5967
        %5983 = vmatpush.msra.mxu0 %v5966
        %5984 = vmatpush.msra.mxu0 %v5965
        %5985 = vmatpush.msra.mxu0 %v5964
        %5986 = vmatpush.msra.mxu0 %v5963
        %5987 = vmatpush.msra.mxu0 %v5962
        %5988 = vmatpush.msra.mxu0 %v5961
        %5989 = vmatpush.msra.mxu0 %v5960
        %5990 = vmatpush.msra.mxu0 %v5959
        %5991 = vmatmul.f32.gmra.mxu0 %v5957
        %v5992 = vpop.f32.mrf.mxu0
        %v5993 = vadd.f32 0.0, %v5992
        %5994 = vdwg.mxu0
        %v5995 = vadd.f32 %v5950, %v5993
        %v5996 = vld [vmem:[#allocation4 + $0x90] sm:$0x1]
        %v5997 = vld [vmem:[#allocation4 + $0x92] sm:$0x1]
        %v5998 = vmax.f32 %v5996, %v5997
        %v5999 = vld [vmem:[#allocation4 + $0xb4] sm:$0x1]
        %v6000 = vld [vmem:[#allocation4 + $0xb6] sm:$0x1]
        %v6001 = vmax.f32 %v5999, %v6000
        %v6002 = vmax.f32 %v5998, %v6001
        %s6003 = scalar_lea.vmem %s6, 1024
        %v6004 = vld [vmem:[%s6003] sm:$0xff]
        %v6005 = vld [vmem:[%s6003 + $0x8] sm:$0xff]
        %v6006 = vld [vmem:[%s6003 + $0x10] sm:$0xff]
        %v6007 = vld [vmem:[%s6003 + $0x18] sm:$0xff]
        %v6008 = vld [vmem:[%s6003 + $0x20] sm:$0xff]
        %v6009 = vld [vmem:[%s6003 + $0x28] sm:$0xff]
        %v6010 = vld [vmem:[%s6003 + $0x30] sm:$0xff]
        %v6011 = vld [vmem:[%s6003 + $0x38] sm:$0xff]
        %v6012 = vld [vmem:[%s6003 + $0x40] sm:$0xff]
        %v6013 = vld [vmem:[%s6003 + $0x48] sm:$0xff]
        %v6014 = vld [vmem:[%s6003 + $0x50] sm:$0xff]
        %v6015 = vld [vmem:[%s6003 + $0x58] sm:$0xff]
        %v6016 = vld [vmem:[%s6003 + $0x60] sm:$0xff]
        %v6017 = vld [vmem:[%s6003 + $0x68] sm:$0xff]
        %v6018 = vld [vmem:[%s6003 + $0x70] sm:$0xff]
        %v6019 = vld [vmem:[%s6003 + $0x78] sm:$0xff]
        %6020 = vmatpush.msra.mxu0 %v6019
        %6021 = vmatpush.msra.mxu0 %v6018
        %6022 = vmatpush.msra.mxu0 %v6017
        %6023 = vmatpush.msra.mxu0 %v6016
        %6024 = vmatpush.msra.mxu0 %v6015
        %6025 = vmatpush.msra.mxu0 %v6014
        %6026 = vmatpush.msra.mxu0 %v6013
        %6027 = vmatpush.msra.mxu0 %v6012
        %6028 = vmatpush.msra.mxu0 %v6011
        %6029 = vmatpush.msra.mxu0 %v6010
        %6030 = vmatpush.msra.mxu0 %v6009
        %6031 = vmatpush.msra.mxu0 %v6008
        %6032 = vmatpush.msra.mxu0 %v6007
        %6033 = vmatpush.msra.mxu0 %v6006
        %6034 = vmatpush.msra.mxu0 %v6005
        %6035 = vmatpush.msra.mxu0 %v6004
        %6036 = vmatmul.f32.gmra.mxu0 %v6002
        %v6037 = vpop.f32.mrf.mxu0
        %v6038 = vadd.f32 0.0, %v6037
        %6039 = vdwg.mxu0
        %v6040 = vadd.f32 %v5995, %v6038
        %v6041 = vld [vmem:[#allocation4 + $0x94] sm:$0x1]
        %v6042 = vld [vmem:[#allocation4 + $0x96] sm:$0x1]
        %v6043 = vmax.f32 %v6041, %v6042
        %v6044 = vld [vmem:[#allocation4 + $0xb8] sm:$0x1]
        %v6045 = vld [vmem:[#allocation4 + $0xba] sm:$0x1]
        %v6046 = vmax.f32 %v6044, %v6045
        %v6047 = vmax.f32 %v6043, %v6046
        %s6048 = scalar_lea.vmem %s6, 1152
        %v6049 = vld [vmem:[%s6048] sm:$0xff]
        %v6050 = vld [vmem:[%s6048 + $0x8] sm:$0xff]
        %v6051 = vld [vmem:[%s6048 + $0x10] sm:$0xff]
        %v6052 = vld [vmem:[%s6048 + $0x18] sm:$0xff]
        %v6053 = vld [vmem:[%s6048 + $0x20] sm:$0xff]
        %v6054 = vld [vmem:[%s6048 + $0x28] sm:$0xff]
        %v6055 = vld [vmem:[%s6048 + $0x30] sm:$0xff]
        %v6056 = vld [vmem:[%s6048 + $0x38] sm:$0xff]
        %v6057 = vld [vmem:[%s6048 + $0x40] sm:$0xff]
        %v6058 = vld [vmem:[%s6048 + $0x48] sm:$0xff]
        %v6059 = vld [vmem:[%s6048 + $0x50] sm:$0xff]
        %v6060 = vld [vmem:[%s6048 + $0x58] sm:$0xff]
        %v6061 = vld [vmem:[%s6048 + $0x60] sm:$0xff]
        %v6062 = vld [vmem:[%s6048 + $0x68] sm:$0xff]
        %v6063 = vld [vmem:[%s6048 + $0x70] sm:$0xff]
        %v6064 = vld [vmem:[%s6048 + $0x78] sm:$0xff]
        %6065 = vmatpush.msra.mxu0 %v6064
        %6066 = vmatpush.msra.mxu0 %v6063
        %6067 = vmatpush.msra.mxu0 %v6062
        %6068 = vmatpush.msra.mxu0 %v6061
        %6069 = vmatpush.msra.mxu0 %v6060
        %6070 = vmatpush.msra.mxu0 %v6059
        %6071 = vmatpush.msra.mxu0 %v6058
        %6072 = vmatpush.msra.mxu0 %v6057
        %6073 = vmatpush.msra.mxu0 %v6056
        %6074 = vmatpush.msra.mxu0 %v6055
        %6075 = vmatpush.msra.mxu0 %v6054
        %6076 = vmatpush.msra.mxu0 %v6053
        %6077 = vmatpush.msra.mxu0 %v6052
        %6078 = vmatpush.msra.mxu0 %v6051
        %6079 = vmatpush.msra.mxu0 %v6050
        %6080 = vmatpush.msra.mxu0 %v6049
        %6081 = vmatmul.f32.gmra.mxu0 %v6047
        %v6082 = vpop.f32.mrf.mxu0
        %v6083 = vadd.f32 0.0, %v6082
        %6084 = vdwg.mxu0
        %v6085 = vadd.f32 %v6040, %v6083
        %v6086 = vld [vmem:[#allocation4 + $0x98] sm:$0x1]
        %v6087 = vld [vmem:[#allocation4 + $0x9a] sm:$0x1]
        %v6088 = vmax.f32 %v6086, %v6087
        %v6089 = vld [vmem:[#allocation4 + $0xbc] sm:$0x1]
        %v6090 = vld [vmem:[#allocation4 + $0xbe] sm:$0x1]
        %v6091 = vmax.f32 %v6089, %v6090
        %v6092 = vmax.f32 %v6088, %v6091
        %s6093 = scalar_lea.vmem %s6, 1280
        %v6094 = vld [vmem:[%s6093] sm:$0xff]
        %v6095 = vld [vmem:[%s6093 + $0x8] sm:$0xff]
        %v6096 = vld [vmem:[%s6093 + $0x10] sm:$0xff]
        %v6097 = vld [vmem:[%s6093 + $0x18] sm:$0xff]
        %v6098 = vld [vmem:[%s6093 + $0x20] sm:$0xff]
        %v6099 = vld [vmem:[%s6093 + $0x28] sm:$0xff]
        %v6100 = vld [vmem:[%s6093 + $0x30] sm:$0xff]
        %v6101 = vld [vmem:[%s6093 + $0x38] sm:$0xff]
        %v6102 = vld [vmem:[%s6093 + $0x40] sm:$0xff]
        %v6103 = vld [vmem:[%s6093 + $0x48] sm:$0xff]
        %v6104 = vld [vmem:[%s6093 + $0x50] sm:$0xff]
        %v6105 = vld [vmem:[%s6093 + $0x58] sm:$0xff]
        %v6106 = vld [vmem:[%s6093 + $0x60] sm:$0xff]
        %v6107 = vld [vmem:[%s6093 + $0x68] sm:$0xff]
        %v6108 = vld [vmem:[%s6093 + $0x70] sm:$0xff]
        %v6109 = vld [vmem:[%s6093 + $0x78] sm:$0xff]
        %6110 = vmatpush.msra.mxu0 %v6109
        %6111 = vmatpush.msra.mxu0 %v6108
        %6112 = vmatpush.msra.mxu0 %v6107
        %6113 = vmatpush.msra.mxu0 %v6106
        %6114 = vmatpush.msra.mxu0 %v6105
        %6115 = vmatpush.msra.mxu0 %v6104
        %6116 = vmatpush.msra.mxu0 %v6103
        %6117 = vmatpush.msra.mxu0 %v6102
        %6118 = vmatpush.msra.mxu0 %v6101
        %6119 = vmatpush.msra.mxu0 %v6100
        %6120 = vmatpush.msra.mxu0 %v6099
        %6121 = vmatpush.msra.mxu0 %v6098
        %6122 = vmatpush.msra.mxu0 %v6097
        %6123 = vmatpush.msra.mxu0 %v6096
        %6124 = vmatpush.msra.mxu0 %v6095
        %6125 = vmatpush.msra.mxu0 %v6094
        %6126 = vmatmul.f32.gmra.mxu0 %v6092
        %v6127 = vpop.f32.mrf.mxu0
        %v6128 = vadd.f32 0.0, %v6127
        %6129 = vdwg.mxu0
        %v6130 = vadd.f32 %v6085, %v6128
        %v6131 = vld [vmem:[#allocation4 + $0x9c] sm:$0x1]
        %v6132 = vld [vmem:[#allocation4 + $0x9e] sm:$0x1]
        %v6133 = vmax.f32 %v6131, %v6132
        %v6134 = vld [vmem:[#allocation4 + $0xc0] sm:$0x1]
        %v6135 = vld [vmem:[#allocation4 + $0xc2] sm:$0x1]
        %v6136 = vmax.f32 %v6134, %v6135
        %v6137 = vmax.f32 %v6133, %v6136
        %s6138 = scalar_lea.vmem %s6, 1408
        %v6139 = vld [vmem:[%s6138] sm:$0xff]
        %v6140 = vld [vmem:[%s6138 + $0x8] sm:$0xff]
        %v6141 = vld [vmem:[%s6138 + $0x10] sm:$0xff]
        %v6142 = vld [vmem:[%s6138 + $0x18] sm:$0xff]
        %v6143 = vld [vmem:[%s6138 + $0x20] sm:$0xff]
        %v6144 = vld [vmem:[%s6138 + $0x28] sm:$0xff]
        %v6145 = vld [vmem:[%s6138 + $0x30] sm:$0xff]
        %v6146 = vld [vmem:[%s6138 + $0x38] sm:$0xff]
        %v6147 = vld [vmem:[%s6138 + $0x40] sm:$0xff]
        %v6148 = vld [vmem:[%s6138 + $0x48] sm:$0xff]
        %v6149 = vld [vmem:[%s6138 + $0x50] sm:$0xff]
        %v6150 = vld [vmem:[%s6138 + $0x58] sm:$0xff]
        %v6151 = vld [vmem:[%s6138 + $0x60] sm:$0xff]
        %v6152 = vld [vmem:[%s6138 + $0x68] sm:$0xff]
        %v6153 = vld [vmem:[%s6138 + $0x70] sm:$0xff]
        %v6154 = vld [vmem:[%s6138 + $0x78] sm:$0xff]
        %6155 = vmatpush.msra.mxu0 %v6154
        %6156 = vmatpush.msra.mxu0 %v6153
        %6157 = vmatpush.msra.mxu0 %v6152
        %6158 = vmatpush.msra.mxu0 %v6151
        %6159 = vmatpush.msra.mxu0 %v6150
        %6160 = vmatpush.msra.mxu0 %v6149
        %6161 = vmatpush.msra.mxu0 %v6148
        %6162 = vmatpush.msra.mxu0 %v6147
        %6163 = vmatpush.msra.mxu0 %v6146
        %6164 = vmatpush.msra.mxu0 %v6145
        %6165 = vmatpush.msra.mxu0 %v6144
        %6166 = vmatpush.msra.mxu0 %v6143
        %6167 = vmatpush.msra.mxu0 %v6142
        %6168 = vmatpush.msra.mxu0 %v6141
        %6169 = vmatpush.msra.mxu0 %v6140
        %6170 = vmatpush.msra.mxu0 %v6139
        %6171 = vmatmul.f32.gmra.mxu0 %v6137
        %v6172 = vpop.f32.mrf.mxu0
        %v6173 = vadd.f32 0.0, %v6172
        %6174 = vdwg.mxu0
        %v6175 = vadd.f32 %v6130, %v6173
        %v6176 = vld [vmem:[#allocation4 + $0xd8] sm:$0x1]
        %v6177 = vld [vmem:[#allocation4 + $0xda] sm:$0x1]
        %v6178 = vmax.f32 %v6176, %v6177
        %v6179 = vld [vmem:[#allocation4 + $0xfc] sm:$0x1]
        %v6180 = vld [vmem:[#allocation4 + $0xfe] sm:$0x1]
        %v6181 = vmax.f32 %v6179, %v6180
        %v6182 = vmax.f32 %v6178, %v6181
        %s6183 = scalar_lea.vmem %s6, 1536
        %v6184 = vld [vmem:[%s6183] sm:$0xff]
        %v6185 = vld [vmem:[%s6183 + $0x8] sm:$0xff]
        %v6186 = vld [vmem:[%s6183 + $0x10] sm:$0xff]
        %v6187 = vld [vmem:[%s6183 + $0x18] sm:$0xff]
        %v6188 = vld [vmem:[%s6183 + $0x20] sm:$0xff]
        %v6189 = vld [vmem:[%s6183 + $0x28] sm:$0xff]
        %v6190 = vld [vmem:[%s6183 + $0x30] sm:$0xff]
        %v6191 = vld [vmem:[%s6183 + $0x38] sm:$0xff]
        %v6192 = vld [vmem:[%s6183 + $0x40] sm:$0xff]
        %v6193 = vld [vmem:[%s6183 + $0x48] sm:$0xff]
        %v6194 = vld [vmem:[%s6183 + $0x50] sm:$0xff]
        %v6195 = vld [vmem:[%s6183 + $0x58] sm:$0xff]
        %v6196 = vld [vmem:[%s6183 + $0x60] sm:$0xff]
        %v6197 = vld [vmem:[%s6183 + $0x68] sm:$0xff]
        %v6198 = vld [vmem:[%s6183 + $0x70] sm:$0xff]
        %v6199 = vld [vmem:[%s6183 + $0x78] sm:$0xff]
        %6200 = vmatpush.msra.mxu0 %v6199
        %6201 = vmatpush.msra.mxu0 %v6198
        %6202 = vmatpush.msra.mxu0 %v6197
        %6203 = vmatpush.msra.mxu0 %v6196
        %6204 = vmatpush.msra.mxu0 %v6195
        %6205 = vmatpush.msra.mxu0 %v6194
        %6206 = vmatpush.msra.mxu0 %v6193
        %6207 = vmatpush.msra.mxu0 %v6192
        %6208 = vmatpush.msra.mxu0 %v6191
        %6209 = vmatpush.msra.mxu0 %v6190
        %6210 = vmatpush.msra.mxu0 %v6189
        %6211 = vmatpush.msra.mxu0 %v6188
        %6212 = vmatpush.msra.mxu0 %v6187
        %6213 = vmatpush.msra.mxu0 %v6186
        %6214 = vmatpush.msra.mxu0 %v6185
        %6215 = vmatpush.msra.mxu0 %v6184
        %6216 = vmatmul.f32.gmra.mxu0 %v6182
        %v6217 = vpop.f32.mrf.mxu0
        %v6218 = vadd.f32 0.0, %v6217
        %6219 = vdwg.mxu0
        %v6220 = vadd.f32 %v6175, %v6218
        %v6221 = vld [vmem:[#allocation4 + $0xdc] sm:$0x1]
        %v6222 = vld [vmem:[#allocation4 + $0xde] sm:$0x1]
        %v6223 = vmax.f32 %v6221, %v6222
        %v6224 = vld [vmem:[#allocation4 + $0x100] sm:$0x1]
        %v6225 = vld [vmem:[#allocation4 + $0x102] sm:$0x1]
        %v6226 = vmax.f32 %v6224, %v6225
        %v6227 = vmax.f32 %v6223, %v6226
        %s6228 = scalar_lea.vmem %s6, 1664
        %v6229 = vld [vmem:[%s6228] sm:$0xff]
        %v6230 = vld [vmem:[%s6228 + $0x8] sm:$0xff]
        %v6231 = vld [vmem:[%s6228 + $0x10] sm:$0xff]
        %v6232 = vld [vmem:[%s6228 + $0x18] sm:$0xff]
        %v6233 = vld [vmem:[%s6228 + $0x20] sm:$0xff]
        %v6234 = vld [vmem:[%s6228 + $0x28] sm:$0xff]
        %v6235 = vld [vmem:[%s6228 + $0x30] sm:$0xff]
        %v6236 = vld [vmem:[%s6228 + $0x38] sm:$0xff]
        %v6237 = vld [vmem:[%s6228 + $0x40] sm:$0xff]
        %v6238 = vld [vmem:[%s6228 + $0x48] sm:$0xff]
        %v6239 = vld [vmem:[%s6228 + $0x50] sm:$0xff]
        %v6240 = vld [vmem:[%s6228 + $0x58] sm:$0xff]
        %v6241 = vld [vmem:[%s6228 + $0x60] sm:$0xff]
        %v6242 = vld [vmem:[%s6228 + $0x68] sm:$0xff]
        %v6243 = vld [vmem:[%s6228 + $0x70] sm:$0xff]
        %v6244 = vld [vmem:[%s6228 + $0x78] sm:$0xff]
        %6245 = vmatpush.msra.mxu0 %v6244
        %6246 = vmatpush.msra.mxu0 %v6243
        %6247 = vmatpush.msra.mxu0 %v6242
        %6248 = vmatpush.msra.mxu0 %v6241
        %6249 = vmatpush.msra.mxu0 %v6240
        %6250 = vmatpush.msra.mxu0 %v6239
        %6251 = vmatpush.msra.mxu0 %v6238
        %6252 = vmatpush.msra.mxu0 %v6237
        %6253 = vmatpush.msra.mxu0 %v6236
        %6254 = vmatpush.msra.mxu0 %v6235
        %6255 = vmatpush.msra.mxu0 %v6234
        %6256 = vmatpush.msra.mxu0 %v6233
        %6257 = vmatpush.msra.mxu0 %v6232
        %6258 = vmatpush.msra.mxu0 %v6231
        %6259 = vmatpush.msra.mxu0 %v6230
        %6260 = vmatpush.msra.mxu0 %v6229
        %6261 = vmatmul.f32.gmra.mxu0 %v6227
        %v6262 = vpop.f32.mrf.mxu0
        %v6263 = vadd.f32 0.0, %v6262
        %6264 = vdwg.mxu0
        %v6265 = vadd.f32 %v6220, %v6263
        %v6266 = vld [vmem:[#allocation4 + $0xe0] sm:$0x1]
        %v6267 = vld [vmem:[#allocation4 + $0xe2] sm:$0x1]
        %v6268 = vmax.f32 %v6266, %v6267
        %v6269 = vld [vmem:[#allocation4 + $0x104] sm:$0x1]
        %v6270 = vld [vmem:[#allocation4 + $0x106] sm:$0x1]
        %v6271 = vmax.f32 %v6269, %v6270
        %v6272 = vmax.f32 %v6268, %v6271
        %s6273 = scalar_lea.vmem %s6, 1792
        %v6274 = vld [vmem:[%s6273] sm:$0xff]
        %v6275 = vld [vmem:[%s6273 + $0x8] sm:$0xff]
        %v6276 = vld [vmem:[%s6273 + $0x10] sm:$0xff]
        %v6277 = vld [vmem:[%s6273 + $0x18] sm:$0xff]
        %v6278 = vld [vmem:[%s6273 + $0x20] sm:$0xff]
        %v6279 = vld [vmem:[%s6273 + $0x28] sm:$0xff]
        %v6280 = vld [vmem:[%s6273 + $0x30] sm:$0xff]
        %v6281 = vld [vmem:[%s6273 + $0x38] sm:$0xff]
        %v6282 = vld [vmem:[%s6273 + $0x40] sm:$0xff]
        %v6283 = vld [vmem:[%s6273 + $0x48] sm:$0xff]
        %v6284 = vld [vmem:[%s6273 + $0x50] sm:$0xff]
        %v6285 = vld [vmem:[%s6273 + $0x58] sm:$0xff]
        %v6286 = vld [vmem:[%s6273 + $0x60] sm:$0xff]
        %v6287 = vld [vmem:[%s6273 + $0x68] sm:$0xff]
        %v6288 = vld [vmem:[%s6273 + $0x70] sm:$0xff]
        %v6289 = vld [vmem:[%s6273 + $0x78] sm:$0xff]
        %6290 = vmatpush.msra.mxu0 %v6289
        %6291 = vmatpush.msra.mxu0 %v6288
        %6292 = vmatpush.msra.mxu0 %v6287
        %6293 = vmatpush.msra.mxu0 %v6286
        %6294 = vmatpush.msra.mxu0 %v6285
        %6295 = vmatpush.msra.mxu0 %v6284
        %6296 = vmatpush.msra.mxu0 %v6283
        %6297 = vmatpush.msra.mxu0 %v6282
        %6298 = vmatpush.msra.mxu0 %v6281
        %6299 = vmatpush.msra.mxu0 %v6280
        %6300 = vmatpush.msra.mxu0 %v6279
        %6301 = vmatpush.msra.mxu0 %v6278
        %6302 = vmatpush.msra.mxu0 %v6277
        %6303 = vmatpush.msra.mxu0 %v6276
        %6304 = vmatpush.msra.mxu0 %v6275
        %6305 = vmatpush.msra.mxu0 %v6274
        %6306 = vmatmul.f32.gmra.mxu0 %v6272
        %v6307 = vpop.f32.mrf.mxu0
        %v6308 = vadd.f32 0.0, %v6307
        %6309 = vdwg.mxu0
        %v6310 = vadd.f32 %v6265, %v6308
        %v6311 = vld [vmem:[#allocation4 + $0xe4] sm:$0x1]
        %v6312 = vld [vmem:[#allocation4 + $0xe6] sm:$0x1]
        %v6313 = vmax.f32 %v6311, %v6312
        %v6314 = vld [vmem:[#allocation4 + $0x108] sm:$0x1]
        %v6315 = vld [vmem:[#allocation4 + $0x10a] sm:$0x1]
        %v6316 = vmax.f32 %v6314, %v6315
        %v6317 = vmax.f32 %v6313, %v6316
        %s6318 = scalar_lea.vmem %s6, 1920
        %v6319 = vld [vmem:[%s6318] sm:$0xff]
        %v6320 = vld [vmem:[%s6318 + $0x8] sm:$0xff]
        %v6321 = vld [vmem:[%s6318 + $0x10] sm:$0xff]
        %v6322 = vld [vmem:[%s6318 + $0x18] sm:$0xff]
        %v6323 = vld [vmem:[%s6318 + $0x20] sm:$0xff]
        %v6324 = vld [vmem:[%s6318 + $0x28] sm:$0xff]
        %v6325 = vld [vmem:[%s6318 + $0x30] sm:$0xff]
        %v6326 = vld [vmem:[%s6318 + $0x38] sm:$0xff]
        %v6327 = vld [vmem:[%s6318 + $0x40] sm:$0xff]
        %v6328 = vld [vmem:[%s6318 + $0x48] sm:$0xff]
        %v6329 = vld [vmem:[%s6318 + $0x50] sm:$0xff]
        %v6330 = vld [vmem:[%s6318 + $0x58] sm:$0xff]
        %v6331 = vld [vmem:[%s6318 + $0x60] sm:$0xff]
        %v6332 = vld [vmem:[%s6318 + $0x68] sm:$0xff]
        %v6333 = vld [vmem:[%s6318 + $0x70] sm:$0xff]
        %v6334 = vld [vmem:[%s6318 + $0x78] sm:$0xff]
        %6335 = vmatpush.msra.mxu0 %v6334
        %6336 = vmatpush.msra.mxu0 %v6333
        %6337 = vmatpush.msra.mxu0 %v6332
        %6338 = vmatpush.msra.mxu0 %v6331
        %6339 = vmatpush.msra.mxu0 %v6330
        %6340 = vmatpush.msra.mxu0 %v6329
        %6341 = vmatpush.msra.mxu0 %v6328
        %6342 = vmatpush.msra.mxu0 %v6327
        %6343 = vmatpush.msra.mxu0 %v6326
        %6344 = vmatpush.msra.mxu0 %v6325
        %6345 = vmatpush.msra.mxu0 %v6324
        %6346 = vmatpush.msra.mxu0 %v6323
        %6347 = vmatpush.msra.mxu0 %v6322
        %6348 = vmatpush.msra.mxu0 %v6321
        %6349 = vmatpush.msra.mxu0 %v6320
        %6350 = vmatpush.msra.mxu0 %v6319
        %6351 = vmatmul.f32.gmra.mxu0 %v6317
        %v6352 = vpop.f32.mrf.mxu0
        %v6353 = vadd.f32 0.0, %v6352
        %6354 = vdwg.mxu0
        %v6355 = vadd.f32 %v6310, %v6353
        %v6356 = vld [vmem:[%s7] sm:$0x1]
        %v6357 = vadd.f32 %v6355, %v6356
        %v6358 = vmax.f32 %v6357, 0.0
        %v6359 = vld [vmem:[%s8] sm:$0xff]
        %v6360 = vld [vmem:[%s8 + $0x8] sm:$0xff]
        %v6361 = vld [vmem:[%s8 + $0x10] sm:$0xff]
        %v6362 = vld [vmem:[%s8 + $0x18] sm:$0xff]
        %v6363 = vld [vmem:[%s8 + $0x20] sm:$0xff]
        %v6364 = vld [vmem:[%s8 + $0x28] sm:$0xff]
        %v6365 = vld [vmem:[%s8 + $0x30] sm:$0xff]
        %v6366 = vld [vmem:[%s8 + $0x38] sm:$0xff]
        %v6367 = vld [vmem:[%s8 + $0x40] sm:$0xff]
        %v6368 = vld [vmem:[%s8 + $0x48] sm:$0xff]
        %v6369 = vld [vmem:[%s8 + $0x50] sm:$0xff]
        %v6370 = vld [vmem:[%s8 + $0x58] sm:$0xff]
        %v6371 = vld [vmem:[%s8 + $0x60] sm:$0xff]
        %v6372 = vld [vmem:[%s8 + $0x68] sm:$0xff]
        %v6373 = vld [vmem:[%s8 + $0x70] sm:$0xff]
        %v6374 = vld [vmem:[%s8 + $0x78] sm:$0xff]
        %v6375 = vld [vmem:[%s9] sm:$0x1]
        %6376 = vmatpush.msra.mxu0 %v6374
        %6377 = vmatpush.msra.mxu0 %v6373
        %6378 = vmatpush.msra.mxu0 %v6372
        %6379 = vmatpush.msra.mxu0 %v6371
        %6380 = vmatpush.msra.mxu0 %v6370
        %6381 = vmatpush.msra.mxu0 %v6369
        %6382 = vmatpush.msra.mxu0 %v6368
        %6383 = vmatpush.msra.mxu0 %v6367
        %6384 = vmatpush.msra.mxu0 %v6366
        %6385 = vmatpush.msra.mxu0 %v6365
        %6386 = vmatpush.msra.mxu0 %v6364
        %6387 = vmatpush.msra.mxu0 %v6363
        %6388 = vmatpush.msra.mxu0 %v6362
        %6389 = vmatpush.msra.mxu0 %v6361
        %6390 = vmatpush.msra.mxu0 %v6360
        %6391 = vmatpush.msra.mxu0 %v6359
        %6392 = vmatmul.f32.gmra.mxu0 %v6358
        %v6393 = vpop.f32.mrf.mxu0
        %v6394 = vadd.f32 %v6375, %v6393
        %6395 = vdwg.mxu0
        %v6396 = vmax.f32 %v6394, 0.0
        %v6397 = vld [vmem:[%s10] sm:$0xff]
        %v6398 = vld [vmem:[%s10 + $0x8] sm:$0xff]
        %v6399 = vld [vmem:[%s10 + $0x10] sm:$0xff]
        %v6400 = vld [vmem:[%s10 + $0x18] sm:$0xff]
        %v6401 = vld [vmem:[%s10 + $0x20] sm:$0xff]
        %v6402 = vld [vmem:[%s10 + $0x28] sm:$0xff]
        %v6403 = vld [vmem:[%s10 + $0x30] sm:$0xff]
        %v6404 = vld [vmem:[%s10 + $0x38] sm:$0xff]
        %v6405 = vld [vmem:[%s10 + $0x40] sm:$0xff]
        %v6406 = vld [vmem:[%s10 + $0x48] sm:$0xff]
        %v6407 = vld [vmem:[%s10 + $0x50] sm:$0xff]
        %v6408 = vld [vmem:[%s10 + $0x58] sm:$0xff]
        %v6409 = vld [vmem:[%s10 + $0x60] sm:$0xff]
        %v6410 = vld [vmem:[%s10 + $0x68] sm:$0xff]
        %v6411 = vld [vmem:[%s10 + $0x70] sm:$0xff]
        %v6412 = vld [vmem:[%s10 + $0x78] sm:$0xff]
        %v6413 = vld [vmem:[%s11] sm:$0x1]
        %6414 = vmatpush.msra.mxu0 %v6412
        %6415 = vmatpush.msra.mxu0 %v6411
        %6416 = vmatpush.msra.mxu0 %v6410
        %6417 = vmatpush.msra.mxu0 %v6409
        %6418 = vmatpush.msra.mxu0 %v6408
        %6419 = vmatpush.msra.mxu0 %v6407
        %6420 = vmatpush.msra.mxu0 %v6406
        %6421 = vmatpush.msra.mxu0 %v6405
        %6422 = vmatpush.msra.mxu0 %v6404
        %6423 = vmatpush.msra.mxu0 %v6403
        %6424 = vmatpush.msra.mxu0 %v6402
        %6425 = vmatpush.msra.mxu0 %v6401
        %6426 = vmatpush.msra.mxu0 %v6400
        %6427 = vmatpush.msra.mxu0 %v6399
        %6428 = vmatpush.msra.mxu0 %v6398
        %6429 = vmatpush.msra.mxu0 %v6397
        %6430 = vmatmul.f32.gmra.mxu0 %v6396
        %v6431 = vpop.f32.mrf.mxu0
        %v6432 = vadd.f32 %v6413, %v6431
        %6433 = vdwg.mxu0
        %v6434 = vmul.f32 %v6432, %v6432
        %vm6435 = vcmask 1040384
        %v6436 = vsel %vm6435, %v6434, 0.0
        %6437 = vadd.xlane.f32.xlu0 %v6436
        %v6438 = vpop.xlane.xlu0 %6437
        %v6439 = vrsqrt.pop %v6438
        %v6440 = vmul.f32 %v6439, %v6438
        %v6441 = vmul.f32 %v6440, %v6439
        %v6442 = vmul.f32 0.5, %v6441
        %v6443 = vsub.f32 1.5, %v6442
        %v6444 = vmul.f32 %v6439, %v6443
        %v6445 = vmul.f32 %v6438, %v6444
        %vm6446 = vcmp.eq.f32.partialorder %v6438, inf
        %v6447 = vsel %vm6446, %v6438, %v6445
        %vm6448 = vcmp.eq.f32.partialorder %v6438, 0.0
        %v6449 = vand.u32 %v6438, 2147483648
        %v6450 = vsel %vm6448, %v6449, %v6447
        %vm6451 = vcmp.ge.f32.partialorder %v6450, 1.0
        %v6452 = vsel %vm6451, 1.0, 0.0
        %v6453 = vsel %vm6451, %v6450, 1.0
        %v6454 = vrcp.pop %v6453
        %v6455 = vmul.f32 %v6453, %v6454
        %v6456 = vsub.f32 1.0, %v6455
        %v6457 = vmul.f32 %v6454, %v6456
        %v6458 = vadd.f32 %v6454, %v6457
        %vm6459 = vweird.f32 %v6453
        %vm6460 = vweird.f32 %v6454
        %vm6461 = vmor %vm6459, %vm6460
        %v6462 = vsel %vm6461, %v6454, %v6458
        %v6463 = vand.u32 2147483647, %v6453
        %vm6464 = vcmp.eq.f32.partialorder %v6463, 8.507059e+37
        %v6465 = vand.u32 %v6453, 2147483648
        %v6466 = vor.u32 1.1754944e-38, %v6465
        %v6467 = vsel %vm6464, %v6466, %v6462
        %v6468 = vmul.f32 %v6432, %v6467
        %v6469 = vmul.f32 %v6452, 1e-05
        %v6470 = vsub.f32 %v6468, %v6469
        %6471 = vst [vmem:[%s422] sm:$0x1] %v6470
        %s6472 = sand.u32 %s292, 1
        %s6473 = scalar_lea.sflag [#allocation7], %s6472
        %s6474 = sand.u32 %s292, 1
        %s6475 = scalar_lea.vmem [#allocation8], %s6474
        // Predicated region
        $region73: #{poincare_vgg_forward.1} parent=67 // pred_check
          %p6476 = pneg %p302
        $region74: #{poincare_vgg_forward.1} parent=67 // pred_check_branch
          %6478 = sbr.rel (%p6476) target = $region76
        $region75: #{poincare_vgg_forward.1} parent=67 // pred_region
          %6480 = vsyncadd %s6473, 0
          %s6481 = scalar_lea.hbm %s12, %s27
          %s6483 = sshll.u32 %s6475, 4
          %s6484 = int_to_ptr.vmem [resolvable:$true] %s6483
          %s6485 = sshll.u32 %s6481, 4
          %s6486 = int_to_ptr.hbm [resolvable:$true] %s6485
          %6488 = dma.vmem_to_hbm [thread:$0]  %s6484, 16, %s6486, %s6473
        $region76: #{poincare_vgg_forward.1} parent=67 // pred_fallthru
          _
      $region68: #{poincare_vgg_forward.1} parent=5 // pred_fallthru
        _
      %p6489 = scmp.le.s32.totalorder 2, %s22
      // Predicated region
      $region77: #{poincare_vgg_forward.1} parent=5 // pred_check
        %p6490 = pneg %p6489
      $region78: #{poincare_vgg_forward.1} parent=5 // pred_check_branch
        %6492 = sbr.rel (%p6490) target = $region80
      $region79: #{poincare_vgg_forward.1} parent=5 // pred_region
        %s6493 = ssub.s32 %s22, 2
        // Predicated region
        $region81: #{poincare_vgg_forward.1} parent=79 // pred_check
          %p6494 = pneg %p308
        $region82: #{poincare_vgg_forward.1} parent=79 // pred_check_branch
          %6496 = sbr.rel (%p6494) target = $region84
        $region83: #{poincare_vgg_forward.1} parent=79 // pred_region
          %s6497 = sand.u32 %s293, 1
          %s6498 = scalar_lea.sflag [#allocation7], %s6497
          %s6499 = sand.u32 %s293, 1
          %s6500 = scalar_lea.vmem [#allocation8], %s6499
          %6502 = dma.done %s6498, 16
        $region84: #{poincare_vgg_forward.1} parent=79 // pred_fallthru
          _
      $region80: #{poincare_vgg_forward.1} parent=5 // pred_fallthru
        _
    $region6: #{poincare_vgg_forward.1} parent=1 // loop_footer
      %s26 = sadd.s32 1, %s22
    $region7: #{poincare_vgg_forward.1} parent=1 // loop_footer_branch
      %21 = sbr.rel target = $region3
    $region8: #{poincare_vgg_forward.1} parent=1 // loop_exit
      _
    %6503 = vsyncpa [#allocation6], 1
    %s6504 = scalar_lea.sflag [#allocation6], 1
    %6505 = vsyncpa %s6504, 1
    %6506 = vsyncpa [#allocation7], 1
    %s6507 = scalar_lea.sflag [#allocation7], 1
    %6508 = vsyncpa %s6507, 1

</llo_original>
